<compile_context>
chip_gen: v6e
topology: v6e:2x2x1
jax: 0.10.0
libtpu: 0.0.40
codegen_flags: <defaults>
</compile_context>

<pallas_src>
import functools

import jax
import jax.numpy as jnp
from jax.experimental import pallas as pl
from jax.experimental.pallas import tpu as pltpu


def _regression_kernel(x_ref, w1_ref, b1_ref, s1_ref, w2_ref, s2_ref, b2_ref, o_ref):
    """Grid = (core, hidden_tile).  For core c, step j (hidden tile = c*spc + j):

        h     = sigmoid((x @ dq(W1q[tile])) * s1[tile] + b1[tile])   # (B, tn), f32
        o[c] += h.bf16 @ dq(W2q[tile])                               # (B, C),  f32 acc
        at the last j:  o[c] = o[c] * s2  (+ b2 on core 0 only)

    dq() = int8 -> bf16 cast on the VPU (hidden under the weight DMA).  The per-core
    output block (block index constant along j) is resident in VMEM and serves as the
    accumulator; the wrapper sums the per-core slabs.
    """
    c = pl.program_id(0)
    j = pl.program_id(1)

    @pl.when(j == 0)
    def _():
        o_ref[...] = jnp.zeros_like(o_ref)

    # fc1 partial: full K contraction for one tile of the hidden dim (bf16 MXU, f32 acc).
    w1_bf = w1_ref[...].astype(jnp.bfloat16)                 # int8 -> bf16 dequant (VPU)
    h = jnp.dot(x_ref[...], w1_bf, preferred_element_type=jnp.float32)
    h = jax.nn.sigmoid(h * s1_ref[...] + b1_ref[...])        # per-channel scale + bias, f32

    # fc2 partial contraction over this hidden tile; f32 accumulate into the output.
    w2_bf = w2_ref[...].astype(jnp.bfloat16)
    o_ref[...] += jnp.dot(h.astype(jnp.bfloat16), w2_bf,
                          preferred_element_type=jnp.float32)

    # Epilogue folded into the kernel: apply the fc2 per-channel scale once, and add b2
    # exactly once (core 0 only) so the wrapper's cross-core sum counts it a single time.
    @pl.when(j == pl.num_programs(1) - 1)
    def _():
        bias = jnp.where(c == 0, b2_ref[...], jnp.zeros_like(b2_ref[...]))
        o_ref[...] = o_ref[...] * s2_ref[...] + bias


@functools.partial(jax.jit, static_argnames=("tn", "num_cores", "vmem_limit_bytes"))
def regression_model(x, w1_q, b1, s1, w2_q, s2, b2, *,
                     tn=1024, num_cores=1, vmem_limit_bytes=40 << 20):
    """x: (B, K); w1_q: (H//tn, K, tn) int8 pre-blocked; b1, s1: (H,) f32;
    w2_q: (H, C) int8; s2, b2: (C,) f32.  Returns (B, C) in x.dtype."""
    B, K = x.shape
    n_blk, Kw, tn_w = w1_q.shape
    H = n_blk * tn_w
    C = w2_q.shape[1]
    assert K == Kw and tn_w == tn and w2_q.shape[0] == H
    assert H % (num_cores * tn) == 0
    spc = H // (num_cores * tn)                        # hidden-tile steps per core

    x_bf = x.astype(jnp.bfloat16)                      # 8x4096 bf16 -> 64 KiB, negligible
    b1_2d = b1.reshape(1, H).astype(jnp.float32)
    s1_2d = s1.reshape(1, H).astype(jnp.float32)
    s2_2d = s2.reshape(1, C).astype(jnp.float32)
    b2_2d = b2.reshape(1, C).astype(jnp.float32)

    cost = pl.CostEstimate(
        flops=2 * B * K * H + 2 * B * H * C,
        transcendentals=B * H,
        bytes_accessed=(K * H + H * C                  # int8 weights (dominant)
                        + 2 * B * K                    # bf16 activations
                        + 4 * (2 * H + 2 * C)          # f32 biases + scales
                        + 4 * num_cores * B * C),      # f32 output slabs
    )

    partial = pl.pallas_call(
        _regression_kernel,
        out_shape=jax.ShapeDtypeStruct((num_cores, B, C), jnp.float32),
        grid_spec=pltpu.PrefetchScalarGridSpec(
            num_scalar_prefetch=0,
            grid=(num_cores, spc),
            in_specs=[
                pl.BlockSpec((B, K), lambda c, j: (0, 0)),                      # x (whole)
                pl.BlockSpec((None, K, tn), lambda c, j: (c * spc + j, 0, 0)),  # W1q tile (contiguous)
                pl.BlockSpec((1, tn), lambda c, j: (0, c * spc + j)),           # b1 tile
                pl.BlockSpec((1, tn), lambda c, j: (0, c * spc + j)),           # s1 tile
                pl.BlockSpec((tn, C), lambda c, j: (c * spc + j, 0)),           # W2q row tile
                pl.BlockSpec((1, C), lambda c, j: (0, 0)),                      # s2
                pl.BlockSpec((1, C), lambda c, j: (0, 0)),                      # b2
            ],
            out_specs=pl.BlockSpec((None, B, C), lambda c, j: (c, 0, 0)),
        ),
        compiler_params=pltpu.CompilerParams(
            # core axis splits the hidden dim across TCs on v7x; hidden axis is the
            # fc2 reduction (resident-output accumulator) so it stays "arbitrary".
            dimension_semantics=("parallel", "arbitrary"),
            vmem_limit_bytes=vmem_limit_bytes,
        ),
        cost_estimate=cost,
    )(x_bf, w1_q, b1_2d, s1_2d, w2_q, s2_2d, b2_2d)

    out = partial.sum(axis=0)                          # single tiny (B, C) cross-core add
    return out.astype(x.dtype)


def _device_config():
    """(num_cores, tn, vmem_limit_bytes) per TPU generation."""
    kind = jax.devices()[0].device_kind.lower()
    if "v7" in kind or "7x" in kind:
        # 2 TensorCores per chip, 64 MiB VMEM per TC: split the hidden dim across cores.
        return 2, 1024, 40 << 20
    if any(t in kind for t in ("v5 lite", "v5e", "v6 lite", "v6e")):
        # Single TC, 128 MiB VMEM: bigger tiles -> fewer grid steps, larger DMAs.
        return 1, 2048, 64 << 20
    return 1, 1024, 40 << 20                           # conservative default elsewhere


def quantize_int8(w):
    """Symmetric per-output-channel int8 quantization of an (in, out) weight matrix."""
    s = jnp.maximum(jnp.max(jnp.abs(w), axis=0), 1e-8) / 127.0          # (out,) f32
    w_q = jnp.clip(jnp.round(w / s), -127, 127).astype(jnp.int8)
    return w_q, s.astype(jnp.float32)


def regression_model_ref(x, w1_q, s1, b1, w2_q, s2, b2):
    """Pure-JAX reference with the same int8-weight / bf16-dot / f32-accumulate numerics."""
    xb = x.astype(jnp.bfloat16)
    h = jnp.dot(xb, w1_q.astype(jnp.bfloat16), preferred_element_type=jnp.float32)
    h = jax.nn.sigmoid(h * s1 + b1)
    o = jnp.dot(h.astype(jnp.bfloat16), w2_q.astype(jnp.bfloat16),
                preferred_element_type=jnp.float32)
    return o * s2 + b2


if __name__ == "__main__":
    B = 8            # batch (small)
    F = 4096         # in_features / hidden size, fixed by the module
    C = 128          # config.R_num_class (synthetic choice)

    key = jax.random.PRNGKey(0)
    kx, kw1, kb1, kw2, kb2 = jax.random.split(key, 5)

    # Deterministic synthetic parameters (scale ~ PyTorch default 1/sqrt(fan_in)).
    scale = 1.0 / jnp.sqrt(jnp.float32(F))
    x = jax.random.normal(kx, (B, F), dtype=jnp.float32)
    w1t = jax.random.uniform(kw1, (F, F), jnp.float32, -scale, scale)   # (in, out)
    b1 = jax.random.uniform(kb1, (F,), jnp.float32, -scale, scale)
    w2t = jax.random.uniform(kw2, (F, C), jnp.float32, -scale, scale)   # (in, out)
    b2 = jax.random.uniform(kb2, (C,), jnp.float32, -scale, scale)

    num_cores, tn, vmem_limit = _device_config()

    # One-time weight prep (weights are static): int8 per-channel quantization, plus
    # pre-blocking W1 so every (K, tn) hidden tile is one contiguous HBM read.
    w1_q, s1 = quantize_int8(w1t)                                       # (F, F) int8, (F,)
    w2_q, s2 = quantize_int8(w2t)                                       # (F, C) int8, (C,)
    w1_q_blk = w1_q.reshape(F, F // tn, tn).transpose(1, 0, 2)          # (F//tn, F, tn)

    out = regression_model(x, w1_q_blk, b1, s1, w2_q, s2, b2,
                           tn=tn, num_cores=num_cores, vmem_limit_bytes=vmem_limit)
    out = jax.block_until_ready(out)

    ref = regression_model_ref(x, w1_q, s1, b1, w2_q, s2, b2)
    assert out.shape == (B, C)
    err = float(jnp.max(jnp.abs(out - ref)))
    assert jnp.allclose(out, ref, atol=5e-3, rtol=5e-3), err

    print("KERNEL_OK")
</pallas_src>

<mosaic_0001>
module attributes {stable_mosaic.version = 11 : i64} {
  func.func @_regression_kernel(%arg0: i32, %arg1: i32, %arg2: memref<8x4096xbf16, #tpu.memory_space<vmem>>, %arg3: memref<1x4096x1024xi8, #tpu.memory_space<vmem>>, %arg4: memref<1x1024xf32, #tpu.memory_space<vmem>>, %arg5: memref<1x1024xf32, #tpu.memory_space<vmem>>, %arg6: memref<1024x128xi8, #tpu.memory_space<vmem>>, %arg7: memref<1x128xf32, #tpu.memory_space<vmem>>, %arg8: memref<1x128xf32, #tpu.memory_space<vmem>>, %arg9: memref<1x8x128xf32, #tpu.memory_space<vmem>>) attributes {dimension_semantics = [#tpu.dimension_semantics<parallel>, #tpu.dimension_semantics<arbitrary>], iteration_bounds = array<i64: 1, 4>, scalar_prefetch = 0 : i64, scratch_operands = 0 : i64, tpu.core_type = #tpu.core_type<tc>, window_params = [{pipeline_mode = #tpu.pipeline_mode<synchronous>, transform_indices = @transform_0, window_bounds = array<i64: 8, 4096>}, {transform_indices = @transform_1, window_bounds = array<i64: 1, 4096, 1024>}, {transform_indices = @transform_2, window_bounds = array<i64: 1, 1024>}, {transform_indices = @transform_3, window_bounds = array<i64: 1, 1024>}, {transform_indices = @transform_4, window_bounds = array<i64: 1024, 128>}, {pipeline_mode = #tpu.pipeline_mode<synchronous>, transform_indices = @transform_5, window_bounds = array<i64: 1, 128>}, {pipeline_mode = #tpu.pipeline_mode<synchronous>, transform_indices = @transform_6, window_bounds = array<i64: 1, 128>}, {transform_indices = @transform_7, window_bounds = array<i64: 1, 8, 128>}]} {
    %c0_i32 = arith.constant 0 : i32
    %0 = arith.cmpi eq, %arg1, %c0_i32 : i32
    %1 = arith.extui %0 : i1 to i32
    %c0_i32_0 = arith.constant 0 : i32
    %2 = arith.cmpi ne, %1, %c0_i32_0 : i32
    scf.if %2 {
      %cst_20 = arith.constant 0.000000e+00 : f32
      %32 = vector.broadcast %cst_20 : f32 to vector<8x128xf32>
      %c0_21 = arith.constant 0 : index
      %c0_22 = arith.constant 0 : index
      %c0_23 = arith.constant 0 : index
      %33 = vector.load %arg9[%c0_21, %c0_22, %c0_23] : memref<1x8x128xf32, #tpu.memory_space<vmem>>, vector<1x8x128xf32>
      %34 = vector.shape_cast %33 : vector<1x8x128xf32> to vector<8x128xf32>
      %35 = vector.shape_cast %32 : vector<8x128xf32> to vector<1x8x128xf32>
      tpu.vector_store %arg9[%c0_21, %c0_22, %c0_23], %35 {strides = array<i32>} : memref<1x8x128xf32, #tpu.memory_space<vmem>>, vector<1x8x128xf32>,
    } else {
    }
    %c0 = arith.constant 0 : index
    %c0_1 = arith.constant 0 : index
    %c0_2 = arith.constant 0 : index
    %3 = vector.load %arg3[%c0, %c0_1, %c0_2] : memref<1x4096x1024xi8, #tpu.memory_space<vmem>>, vector<1x4096x1024xi8>
    %4 = vector.shape_cast %3 : vector<1x4096x1024xi8> to vector<4096x1024xi8>
    %5 = arith.sitofp %4 : vector<4096x1024xi8> to vector<4096x1024xbf16>
    %c0_3 = arith.constant 0 : index
    %c0_4 = arith.constant 0 : index
    %6 = vector.load %arg2[%c0_3, %c0_4] : memref<8x4096xbf16, #tpu.memory_space<vmem>>, vector<8x4096xbf16>
    %cst = arith.constant dense<0.000000e+00> : vector<8x1024xf32>
    %7 = tpu.matmul %6, %5, %cst {dimension_numbers = #tpu.dot_dimension_numbers<[1], [0], [0], [1], [0, 0, 1, 1], [], []>} : vector<8x4096xbf16>, vector<4096x1024xbf16>, vector<8x1024xf32> -> vector<8x1024xf32>
    %c0_5 = arith.constant 0 : index
    %c0_6 = arith.constant 0 : index
    %8 = vector.load %arg5[%c0_5, %c0_6] : memref<1x1024xf32, #tpu.memory_space<vmem>>, vector<1x1024xf32>
    %9 = vector.broadcast %8 : vector<1x1024xf32> to vector<8x1024xf32>
    %10 = arith.mulf %7, %9 : vector<8x1024xf32>
    %c0_7 = arith.constant 0 : index
    %c0_8 = arith.constant 0 : index
    %11 = vector.load %arg4[%c0_7, %c0_8] : memref<1x1024xf32, #tpu.memory_space<vmem>>, vector<1x1024xf32>
    %12 = vector.broadcast %11 : vector<1x1024xf32> to vector<8x1024xf32>
    %13 = arith.addf %10, %12 : vector<8x1024xf32>
    %14 = arith.negf %13 : vector<8x1024xf32>
    %15 = math.exp %14 : vector<8x1024xf32>
    %cst_9 = arith.constant 1.000000e+00 : f32
    %16 = vector.broadcast %cst_9 : f32 to vector<8x1024xf32>
    %17 = arith.addf %16, %15 : vector<8x1024xf32>
    %18 = arith.divf %16, %17 : vector<8x1024xf32>
    %c0_10 = arith.constant 0 : index
    %c0_11 = arith.constant 0 : index
    %19 = vector.load %arg6[%c0_10, %c0_11] : memref<1024x128xi8, #tpu.memory_space<vmem>>, vector<1024x128xi8>
    %20 = arith.sitofp %19 : vector<1024x128xi8> to vector<1024x128xbf16>
    %c0_12 = arith.constant 0 : index
    %c0_13 = arith.constant 0 : index
    %c0_14 = arith.constant 0 : index
    %21 = vector.load %arg9[%c0_12, %c0_13, %c0_14] : memref<1x8x128xf32, #tpu.memory_space<vmem>>, vector<1x8x128xf32>
    %22 = vector.shape_cast %21 : vector<1x8x128xf32> to vector<8x128xf32>
    %23 = arith.truncf %18 : vector<8x1024xf32> to vector<8x1024xbf16>
    %cst_15 = arith.constant dense<0.000000e+00> : vector<8x128xf32>
    %24 = tpu.matmul %23, %20, %cst_15 {dimension_numbers = #tpu.dot_dimension_numbers<[1], [0], [0], [1], [0, 0, 1, 1], [], []>} : vector<8x1024xbf16>, vector<1024x128xbf16>, vector<8x128xf32> -> vector<8x128xf32>
    %25 = arith.addf %22, %24 : vector<8x128xf32>
    %c0_16 = arith.constant 0 : index
    %c0_17 = arith.constant 0 : index
    %c0_18 = arith.constant 0 : index
    %26 = vector.load %arg9[%c0_16, %c0_17, %c0_18] : memref<1x8x128xf32, #tpu.memory_space<vmem>>, vector<1x8x128xf32>
    %27 = vector.shape_cast %26 : vector<1x8x128xf32> to vector<8x128xf32>
    %28 = vector.shape_cast %25 : vector<8x128xf32> to vector<1x8x128xf32>
    tpu.vector_store %arg9[%c0_16, %c0_17, %c0_18], %28 {strides = array<i32>} : memref<1x8x128xf32, #tpu.memory_space<vmem>>, vector<1x8x128xf32>,
    %c3_i32 = arith.constant 3 : i32
    %29 = arith.cmpi eq, %arg1, %c3_i32 : i32
    %30 = arith.extui %29 : i1 to i32
    %c0_i32_19 = arith.constant 0 : i32
    %31 = arith.cmpi ne, %30, %c0_i32_19 : i32
    scf.if %31 {
      %c0_i32_20 = arith.constant 0 : i32
      %32 = arith.cmpi eq, %arg0, %c0_i32_20 : i32
      %c0_21 = arith.constant 0 : index
      %c0_22 = arith.constant 0 : index
      %33 = vector.load %arg8[%c0_21, %c0_22] : memref<1x128xf32, #tpu.memory_space<vmem>>, vector<1x128xf32>
      %cst_23 = arith.constant 0.000000e+00 : f32
      %34 = vector.broadcast %cst_23 : f32 to vector<1x128xf32>
      %35 = arith.select %32, %33, %34 : vector<1x128xf32>
      %c0_24 = arith.constant 0 : index
      %c0_25 = arith.constant 0 : index
      %c0_26 = arith.constant 0 : index
      %36 = vector.load %arg9[%c0_24, %c0_25, %c0_26] : memref<1x8x128xf32, #tpu.memory_space<vmem>>, vector<1x8x128xf32>
      %37 = vector.shape_cast %36 : vector<1x8x128xf32> to vector<8x128xf32>
      %c0_27 = arith.constant 0 : index
      %c0_28 = arith.constant 0 : index
      %38 = vector.load %arg7[%c0_27, %c0_28] : memref<1x128xf32, #tpu.memory_space<vmem>>, vector<1x128xf32>
      %39 = vector.broadcast %38 : vector<1x128xf32> to vector<8x128xf32>
      %40 = arith.mulf %37, %39 : vector<8x128xf32>
      %41 = vector.broadcast %35 : vector<1x128xf32> to vector<8x128xf32>
      %42 = arith.addf %40, %41 : vector<8x128xf32>
      %c0_29 = arith.constant 0 : index
      %c0_30 = arith.constant 0 : index
      %c0_31 = arith.constant 0 : index
      %43 = vector.load %arg9[%c0_29, %c0_30, %c0_31] : memref<1x8x128xf32, #tpu.memory_space<vmem>>, vector<1x8x128xf32>
      %44 = vector.shape_cast %43 : vector<1x8x128xf32> to vector<8x128xf32>
      %45 = vector.shape_cast %42 : vector<8x128xf32> to vector<1x8x128xf32>
      tpu.vector_store %arg9[%c0_29, %c0_30, %c0_31], %45 {strides = array<i32>} : memref<1x8x128xf32, #tpu.memory_space<vmem>>, vector<1x8x128xf32>,
    } else {
    }
    return
  }
  func.func @transform_0(%arg0: i32, %arg1: i32) -> (i32, i32) {
    %c0_i32 = arith.constant 0 : i32
    %c0_i32_0 = arith.constant 0 : i32
    %c0_i32_1 = arith.constant 0 : i32
    return %c0_i32, %c0_i32_0 : i32, i32
  }
  func.func @transform_1(%arg0: i32, %arg1: i32) -> (i32, i32, i32) {
    %c4_i32 = arith.constant 4 : i32
    %0 = arith.muli %arg0, %c4_i32 : i32
    %1 = arith.addi %0, %arg1 : i32
    %c0_i32 = arith.constant 0 : i32
    %c0_i32_0 = arith.constant 0 : i32
    %c0_i32_1 = arith.constant 0 : i32
    return %1, %c0_i32, %c0_i32_0 : i32, i32, i32
  }
  func.func @transform_2(%arg0: i32, %arg1: i32) -> (i32, i32) {
    %c4_i32 = arith.constant 4 : i32
    %0 = arith.muli %arg0, %c4_i32 : i32
    %1 = arith.addi %0, %arg1 : i32
    %c0_i32 = arith.constant 0 : i32
    %c0_i32_0 = arith.constant 0 : i32
    return %c0_i32, %1 : i32, i32
  }
  func.func @transform_3(%arg0: i32, %arg1: i32) -> (i32, i32) {
    %c4_i32 = arith.constant 4 : i32
    %0 = arith.muli %arg0, %c4_i32 : i32
    %1 = arith.addi %0, %arg1 : i32
    %c0_i32 = arith.constant 0 : i32
    %c0_i32_0 = arith.constant 0 : i32
    return %c0_i32, %1 : i32, i32
  }
  func.func @transform_4(%arg0: i32, %arg1: i32) -> (i32, i32) {
    %c4_i32 = arith.constant 4 : i32
    %0 = arith.muli %arg0, %c4_i32 : i32
    %1 = arith.addi %0, %arg1 : i32
    %c0_i32 = arith.constant 0 : i32
    %c0_i32_0 = arith.constant 0 : i32
    return %1, %c0_i32 : i32, i32
  }
  func.func @transform_5(%arg0: i32, %arg1: i32) -> (i32, i32) {
    %c0_i32 = arith.constant 0 : i32
    %c0_i32_0 = arith.constant 0 : i32
    %c0_i32_1 = arith.constant 0 : i32
    return %c0_i32, %c0_i32_0 : i32, i32
  }
  func.func @transform_6(%arg0: i32, %arg1: i32) -> (i32, i32) {
    %c0_i32 = arith.constant 0 : i32
    %c0_i32_0 = arith.constant 0 : i32
    %c0_i32_1 = arith.constant 0 : i32
    return %c0_i32, %c0_i32_0 : i32, i32
  }
  func.func @transform_7(%arg0: i32, %arg1: i32) -> (i32, i32, i32) {
    %c0_i32 = arith.constant 0 : i32
    %c0_i32_0 = arith.constant 0 : i32
    %c0_i32_1 = arith.constant 0 : i32
    return %arg0, %c0_i32, %c0_i32_0 : i32, i32, i32
  }
}

</mosaic_0001>

<llo_original>
// kernel: regression_model.1
$region0: #{regression_model.1}
  #allocation0 [shape = 'u32[]', space=smem, size = 0x4, offset = 0x4, fixed_abs, tag = 'smem constant byte address 0x4 - core index']
  #allocation1 [shape = 'u32[144,128]{1,0:T(1,128)}', space=vmem, size = 0x12000, scoped, tag = 'internal scratch']
  %s0 = inlined_call_operand.vmem [shape: bf16[8,4096], index: 0, kind: input, shape index: {}]
  %s1 = inlined_call_operand.hbm [shape: s8[4,4096,1024], index: 1, kind: input, shape index: {}]
  %s2 = inlined_call_operand.hbm [shape: f32[1,4096], index: 2, kind: input, shape index: {}]
  %s3 = inlined_call_operand.hbm [shape: f32[1,4096], index: 3, kind: input, shape index: {}]
  %s4 = inlined_call_operand.hbm [shape: s8[4096,128], index: 4, kind: input, shape index: {}]
  %s5 = inlined_call_operand.hbm [shape: f32[1,128], index: 5, kind: input, shape index: {}]
  %s6 = inlined_call_operand.hbm [shape: f32[1,128], index: 6, kind: input, shape index: {}]
  %s7 = inlined_call_operand.hbm [shape: f32[1,8,128], index: 7, kind: output, shape index: {}]
  %s8 = sld [smem:[#allocation0]]
  $region93: #{regression_model.1} parent=0
    _
  %s10 = ssub.s32 1, %s8
  %s11 = scalar_select 0, %s10, %s8
  $region1: #{regression_model.1} parent=0
    #allocation2 [shape = 'u8[8388608]{0}', space=vmem, size = 0x800000, scoped, tag = 'input window, operand 1']
    #allocation3 [shape = 's32[2]{0}', space=sflag, size = 0x8, scoped, tag = 'scoped memory for regression_model.1']
    #allocation4 [shape = 's32[2]{0}', space=sflag, size = 0x8, scoped, tag = 'scoped memory for regression_model.1']
    #allocation5 [shape = 'u8[8192]{0}', space=vmem, size = 0x2000, scoped, tag = 'input window, operand 2']
    #allocation6 [shape = 's32[2]{0}', space=sflag, size = 0x8, scoped, tag = 'scoped memory for regression_model.1']
    #allocation7 [shape = 'u8[8192]{0}', space=vmem, size = 0x2000, scoped, tag = 'input window, operand 3']
    #allocation8 [shape = 'u8[262144]{0}', space=vmem, size = 0x40000, scoped, tag = 'input window, operand 4']
    #allocation9 [shape = 's32[2]{0}', space=sflag, size = 0x8, scoped, tag = 'scoped memory for regression_model.1']
    #allocation10 [shape = 'u8[512]{0}', space=vmem, size = 0x400, scoped, tag = 'input window, operand 5, single buffered']
    #allocation11 [shape = 'u8[512]{0}', space=vmem, size = 0x400, scoped, tag = 'input window, operand 6, single buffered']
    #allocation12 [shape = 's32[1]{0}', space=sflag, size = 0x4, scoped, tag = 'scoped memory for regression_model.1']
    #allocation13 [shape = 'u8[4096]{0}', space=vmem, size = 0x1000, scoped, tag = 'output window, operand 0, single buffered']
    %12 = vsyncpa [#allocation3], 0
    %s13 = scalar_lea.sflag [#allocation3], 1
    %14 = vsyncpa %s13, 0
    %15 = vsyncpa [#allocation6], 0
    %s16 = scalar_lea.sflag [#allocation6], 1
    %17 = vsyncpa %s16, 0
    %18 = vsyncpa [#allocation9], 0
    %s19 = scalar_lea.sflag [#allocation9], 1
    %20 = vsyncpa %s19, 0
    %21 = vsyncpa [#allocation12], 0
    %22 = vsyncpa [#allocation4], 0
    loop: start=0, step=1, limit=6
    $region2: #{regression_model.1} parent=1 // loop_pre_header
      _
    $region3: #{regression_model.1} parent=1 // loop_header
      %s24 = sphi 0, %s28
      %p25 = scmp.ge.s32.totalorder %s24, 6
      %s31 = sphi 0, %s43
      %s32 = sphi 0, %s39
      %s33 = sphi 0, %s31
      %s34 = sphi 0, %s32
      %s35 = sphi 0, %s33
      %s36 = sphi 0, %s34
      %s44 = sphi 0, %s44
      %s46 = sphi 0, %s44
      %s47 = sphi 0, %s46
      %s61 = sphi 0, %s47
      %s71 = sphi 0, %s73
      %s74 = sphi 0, %s71
      %s75 = sphi 0, %s74
      %s91 = sphi 0, %s75
      %s101 = sphi 0, %s103
      %s104 = sphi 0, %s101
      %s105 = sphi 0, %s104
      %s121 = sphi 0, %s105
      %s131 = sphi 0, %s133
      %s134 = sphi 0, %s131
      %s135 = sphi 0, %s134
      %s151 = sphi 0, %s135
      %s161 = sphi 0, %s163
      %s164 = sphi 0, %s161
      %s165 = sphi 0, %s164
      %s181 = sphi 0, %s165
      %s185 = sphi 0, %s185
      %s187 = sphi 0, %s185
      %s188 = sphi 0, %s187
      %s202 = sphi 0, %s188
      %s206 = sphi 0, %s206
      %s208 = sphi 0, %s206
      %s209 = sphi 0, %s208
      %s223 = sphi 0, %s209
      %s229 = sphi 0, %s231
      %s232 = sphi 0, %s229
      %s233 = sphi 0, %s232
      %s249 = sphi 0, %s233
    $region4: #{regression_model.1} parent=1 // loop_header_branch
      %27 = sbr.rel (%p25) target = $region8
    $region5: #{regression_model.1} parent=1 // loop_body
      %s29 = ssub.s32 %s24, 1
      %s30 = ssub.s32 %s24, 2
      %s37 = sadd.s32 1, %s32
      %p38 = scmp.ge.s32.totalorder %s37, 4
      %s39 = scalar_select %p38, 0, %s37
      %s40 = sadd.s32 1, %s31
      %s41 = scalar_select %p38, %s40, %s31
      %p42 = scmp.ge.s32.totalorder %s41, 1
      %s43 = scalar_select %p42, 0, %s41
      %s45 = sadd.s32 %s44, 1
      %p48 = scmp.eq.s32.totalorder %s24, 3
      %p49 = scmp.ne.s32.totalorder %s44, %s46
      %p50 = scmp.eq.s32.totalorder %s24, 0
      %p51 = por %p49, %p50
      %p52 = scmp.ne.s32.totalorder %s44, %s46
      %p53 = scmp.eq.s32.totalorder %s29, 3
      %p54 = por %p52, %p53
      %p55 = scmp.ne.s32.totalorder %s46, %s47
      %p56 = scmp.eq.s32.totalorder %s29, 0
      %p57 = por %p55, %p56
      %p58 = scmp.ne.s32.totalorder %s46, %s47
      %p59 = scmp.eq.s32.totalorder %s30, 3
      %p60 = por %p58, %p59
      %p62 = scmp.ne.s32.totalorder %s47, %s61
      %p63 = scmp.eq.s32.totalorder %s30, 0
      %p64 = por %p62, %p63
      %s65 = smul.u32 %s31, 4
      %s66 = sadd.s32 %s65, %s32
      %s67 = smul.u32 %s43, 4
      %s68 = sadd.s32 %s67, %s39
      %s69 = ssub.s32 %s66, %s68
      %p70 = scmp.eq.s32.totalorder %s69, 0
      %s72 = sadd.s32 %s71, 1
      %s73 = scalar_select %p70, %s71, %s72
      %p76 = pneg %p70
      %p77 = scmp.eq.s32.totalorder %s24, 3
      %p78 = por %p76, %p77
      %p79 = scmp.ne.s32.totalorder %s71, %s74
      %p80 = scmp.eq.s32.totalorder %s24, 0
      %p81 = por %p79, %p80
      %p82 = scmp.ne.s32.totalorder %s71, %s74
      %p83 = scmp.eq.s32.totalorder %s29, 3
      %p84 = por %p82, %p83
      %p85 = scmp.ne.s32.totalorder %s74, %s75
      %p86 = scmp.eq.s32.totalorder %s29, 0
      %p87 = por %p85, %p86
      %p88 = scmp.ne.s32.totalorder %s74, %s75
      %p89 = scmp.eq.s32.totalorder %s30, 3
      %p90 = por %p88, %p89
      %p92 = scmp.ne.s32.totalorder %s75, %s91
      %p93 = scmp.eq.s32.totalorder %s30, 0
      %p94 = por %p92, %p93
      %s95 = smul.u32 %s31, 4
      %s96 = sadd.s32 %s95, %s32
      %s97 = smul.u32 %s43, 4
      %s98 = sadd.s32 %s97, %s39
      %s99 = ssub.s32 %s96, %s98
      %p100 = scmp.eq.s32.totalorder %s99, 0
      %s102 = sadd.s32 %s101, 1
      %s103 = scalar_select %p100, %s101, %s102
      %p106 = pneg %p100
      %p107 = scmp.eq.s32.totalorder %s24, 3
      %p108 = por %p106, %p107
      %p109 = scmp.ne.s32.totalorder %s101, %s104
      %p110 = scmp.eq.s32.totalorder %s24, 0
      %p111 = por %p109, %p110
      %p112 = scmp.ne.s32.totalorder %s101, %s104
      %p113 = scmp.eq.s32.totalorder %s29, 3
      %p114 = por %p112, %p113
      %p115 = scmp.ne.s32.totalorder %s104, %s105
      %p116 = scmp.eq.s32.totalorder %s29, 0
      %p117 = por %p115, %p116
      %p118 = scmp.ne.s32.totalorder %s104, %s105
      %p119 = scmp.eq.s32.totalorder %s30, 3
      %p120 = por %p118, %p119
      %p122 = scmp.ne.s32.totalorder %s105, %s121
      %p123 = scmp.eq.s32.totalorder %s30, 0
      %p124 = por %p122, %p123
      %s125 = smul.u32 %s31, 4
      %s126 = sadd.s32 %s125, %s32
      %s127 = smul.u32 %s43, 4
      %s128 = sadd.s32 %s127, %s39
      %s129 = ssub.s32 %s126, %s128
      %p130 = scmp.eq.s32.totalorder %s129, 0
      %s132 = sadd.s32 %s131, 1
      %s133 = scalar_select %p130, %s131, %s132
      %p136 = pneg %p130
      %p137 = scmp.eq.s32.totalorder %s24, 3
      %p138 = por %p136, %p137
      %p139 = scmp.ne.s32.totalorder %s131, %s134
      %p140 = scmp.eq.s32.totalorder %s24, 0
      %p141 = por %p139, %p140
      %p142 = scmp.ne.s32.totalorder %s131, %s134
      %p143 = scmp.eq.s32.totalorder %s29, 3
      %p144 = por %p142, %p143
      %p145 = scmp.ne.s32.totalorder %s134, %s135
      %p146 = scmp.eq.s32.totalorder %s29, 0
      %p147 = por %p145, %p146
      %p148 = scmp.ne.s32.totalorder %s134, %s135
      %p149 = scmp.eq.s32.totalorder %s30, 3
      %p150 = por %p148, %p149
      %p152 = scmp.ne.s32.totalorder %s135, %s151
      %p153 = scmp.eq.s32.totalorder %s30, 0
      %p154 = por %p152, %p153
      %s155 = smul.u32 %s31, 4
      %s156 = sadd.s32 %s155, %s32
      %s157 = smul.u32 %s43, 4
      %s158 = sadd.s32 %s157, %s39
      %s159 = ssub.s32 %s156, %s158
      %p160 = scmp.eq.s32.totalorder %s159, 0
      %s162 = sadd.s32 %s161, 1
      %s163 = scalar_select %p160, %s161, %s162
      %p166 = pneg %p160
      %p167 = scmp.eq.s32.totalorder %s24, 3
      %p168 = por %p166, %p167
      %p169 = scmp.ne.s32.totalorder %s161, %s164
      %p170 = scmp.eq.s32.totalorder %s24, 0
      %p171 = por %p169, %p170
      %p172 = scmp.ne.s32.totalorder %s161, %s164
      %p173 = scmp.eq.s32.totalorder %s29, 3
      %p174 = por %p172, %p173
      %p175 = scmp.ne.s32.totalorder %s164, %s165
      %p176 = scmp.eq.s32.totalorder %s29, 0
      %p177 = por %p175, %p176
      %p178 = scmp.ne.s32.totalorder %s164, %s165
      %p179 = scmp.eq.s32.totalorder %s30, 3
      %p180 = por %p178, %p179
      %p182 = scmp.ne.s32.totalorder %s165, %s181
      %p183 = scmp.eq.s32.totalorder %s30, 0
      %p184 = por %p182, %p183
      %s186 = sadd.s32 %s185, 1
      %p189 = scmp.eq.s32.totalorder %s24, 3
      %p190 = scmp.ne.s32.totalorder %s185, %s187
      %p191 = scmp.eq.s32.totalorder %s24, 0
      %p192 = por %p190, %p191
      %p193 = scmp.ne.s32.totalorder %s185, %s187
      %p194 = scmp.eq.s32.totalorder %s29, 3
      %p195 = por %p193, %p194
      %p196 = scmp.ne.s32.totalorder %s187, %s188
      %p197 = scmp.eq.s32.totalorder %s29, 0
      %p198 = por %p196, %p197
      %p199 = scmp.ne.s32.totalorder %s187, %s188
      %p200 = scmp.eq.s32.totalorder %s30, 3
      %p201 = por %p199, %p200
      %p203 = scmp.ne.s32.totalorder %s188, %s202
      %p204 = scmp.eq.s32.totalorder %s30, 0
      %p205 = por %p203, %p204
      %s207 = sadd.s32 %s206, 1
      %p210 = scmp.eq.s32.totalorder %s24, 3
      %p211 = scmp.ne.s32.totalorder %s206, %s208
      %p212 = scmp.eq.s32.totalorder %s24, 0
      %p213 = por %p211, %p212
      %p214 = scmp.ne.s32.totalorder %s206, %s208
      %p215 = scmp.eq.s32.totalorder %s29, 3
      %p216 = por %p214, %p215
      %p217 = scmp.ne.s32.totalorder %s208, %s209
      %p218 = scmp.eq.s32.totalorder %s29, 0
      %p219 = por %p217, %p218
      %p220 = scmp.ne.s32.totalorder %s208, %s209
      %p221 = scmp.eq.s32.totalorder %s30, 3
      %p222 = por %p220, %p221
      %p224 = scmp.ne.s32.totalorder %s209, %s223
      %p225 = scmp.eq.s32.totalorder %s30, 0
      %p226 = por %p224, %p225
      %s227 = ssub.s32 %s31, %s43
      %p228 = scmp.eq.s32.totalorder %s227, 0
      %s230 = sadd.s32 %s229, 1
      %s231 = scalar_select %p228, %s229, %s230
      %p234 = pneg %p228
      %p235 = scmp.eq.s32.totalorder %s24, 3
      %p236 = por %p234, %p235
      %p237 = scmp.ne.s32.totalorder %s229, %s232
      %p238 = scmp.eq.s32.totalorder %s24, 0
      %p239 = por %p237, %p238
      %p240 = scmp.ne.s32.totalorder %s229, %s232
      %p241 = scmp.eq.s32.totalorder %s29, 3
      %p242 = por %p240, %p241
      %p243 = scmp.ne.s32.totalorder %s232, %s233
      %p244 = scmp.eq.s32.totalorder %s29, 0
      %p245 = por %p243, %p244
      %p246 = scmp.ne.s32.totalorder %s232, %s233
      %p247 = scmp.eq.s32.totalorder %s30, 3
      %p248 = por %p246, %p247
      %p250 = scmp.ne.s32.totalorder %s233, %s249
      %p251 = scmp.eq.s32.totalorder %s30, 0
      %p252 = por %p250, %p251
      %p253 = scmp.le.s32.totalorder 1, %s24
      %p254 = scmp.lt.s32.totalorder %s24, 5
      %p255 = pnand %p253, %p254
      %p256 = pneg %p255
      // Predicated region
      $region9: #{regression_model.1} parent=5 // pred_check
        _
      $region10: #{regression_model.1} parent=5 // pred_check_branch
        %258 = sbr.rel (%p255) target = $region12
      $region11: #{regression_model.1} parent=5 // pred_region
        %s259 = ssub.s32 %s24, 1
        // Predicated region
        $region13: #{regression_model.1} parent=11 // pred_check
          %p260 = pneg %p57
        $region14: #{regression_model.1} parent=11 // pred_check_branch
          %262 = sbr.rel (%p260) target = $region16
        $region15: #{regression_model.1} parent=11 // pred_region
          _
        $region16: #{regression_model.1} parent=11 // pred_fallthru
          _
        // Predicated region
        $region17: #{regression_model.1} parent=11 // pred_check
          %p263 = pneg %p198
        $region18: #{regression_model.1} parent=11 // pred_check_branch
          %265 = sbr.rel (%p263) target = $region20
        $region19: #{regression_model.1} parent=11 // pred_region
          %s267 = ssub.s32 16, 16
          %268 = vsyncadd [#allocation9], %s267
          %s270 = sshll.u32 [#allocation10], 4
          %s271 = int_to_ptr.vmem [resolvable:$true] %s270
          %273 = dma.hbm_to_vmem [thread:$0]  %s5, 16, %s271, [#allocation9]
        $region20: #{regression_model.1} parent=11 // pred_fallthru
          _
        // Predicated region
        $region21: #{regression_model.1} parent=11 // pred_check
          %p274 = pneg %p219
        $region22: #{regression_model.1} parent=11 // pred_check_branch
          %276 = sbr.rel (%p274) target = $region24
        $region23: #{regression_model.1} parent=11 // pred_region
          %s278 = ssub.s32 16, 16
          %279 = vsyncadd [#allocation12], %s278
          %s281 = sshll.u32 [#allocation11], 4
          %s282 = int_to_ptr.vmem [resolvable:$true] %s281
          %284 = dma.hbm_to_vmem [thread:$0]  %s6, 16, %s282, [#allocation12]
        $region24: #{regression_model.1} parent=11 // pred_fallthru
          _
      $region12: #{regression_model.1} parent=5 // pred_fallthru
        _
      %p285 = scmp.lt.s32.totalorder %s24, 4
      // Predicated region
      $region25: #{regression_model.1} parent=5 // pred_check
        %p286 = pneg %p285
      $region26: #{regression_model.1} parent=5 // pred_check_branch
        %288 = sbr.rel (%p286) target = $region28
      $region27: #{regression_model.1} parent=5 // pred_region
        // Predicated region
        $region29: #{regression_model.1} parent=27 // pred_check
          %p289 = pneg %p81
        $region30: #{regression_model.1} parent=27 // pred_check_branch
          %291 = sbr.rel (%p289) target = $region32
        $region31: #{regression_model.1} parent=27 // pred_region
          %s292 = sand.u32 %s71, 1
          %s293 = scalar_lea.sflag [#allocation3], %s292
          %s294 = sand.u32 %s71, 1
          %s295 = smul.addr %s294, 8192
          %s296 = scalar_lea.vmem [#allocation2], %s295
          %s297 = smul.u32 %s31, 4
          %s298 = sadd.s32 %s297, %s32
          %s300 = ssub.s32 131072, 131072
          %301 = vsyncadd %s293, %s300
          %s302 = smul.addr %s298, 1024
          %s303 = smul.addr %s302, 128
          %s304 = scalar_lea.hbm %s1, %s303
          %s305 = sshll.u32 %s296, 4
          %s306 = int_to_ptr.vmem [resolvable:$true] %s305
          %311 = dma.hbm_to_vmem [thread:$0]  %s304, 131072, %s306, %s293, 1024, 1024, 64
        $region32: #{regression_model.1} parent=27 // pred_fallthru
          _
        // Predicated region
        $region33: #{regression_model.1} parent=27 // pred_check
          %p312 = pneg %p111
        $region34: #{regression_model.1} parent=27 // pred_check_branch
          %314 = sbr.rel (%p312) target = $region36
        $region35: #{regression_model.1} parent=27 // pred_region
          %s315 = sand.u32 %s24, 1
          %s316 = scalar_lea.sflag [#allocation6], %s315
          %s317 = sand.u32 %s101, 1
          %s318 = smul.addr %s317, 8
          %s319 = scalar_lea.vmem [#allocation5], %s318
          %s320 = smul.u32 %s31, 4
          %s321 = sadd.s32 %s320, %s32
          %s322 = smul.u32 8, %s321
          %s324 = ssub.s32 128, 128
          %325 = vsyncadd %s316, %s324
          %s326 = smul.addr %s322, 16
          %s327 = scalar_lea.hbm %s2, %s326
          %s329 = sshll.u32 %s319, 4
          %s330 = int_to_ptr.vmem [resolvable:$true] %s329
          %332 = dma.hbm_to_vmem [thread:$0]  %s327, 128, %s330, %s316
        $region36: #{regression_model.1} parent=27 // pred_fallthru
          _
        // Predicated region
        $region37: #{regression_model.1} parent=27 // pred_check
          %p333 = pneg %p141
        $region38: #{regression_model.1} parent=27 // pred_check_branch
          %335 = sbr.rel (%p333) target = $region40
        $region39: #{regression_model.1} parent=27 // pred_region
          %s336 = sand.u32 %s24, 1
          %s337 = scalar_lea.sflag [#allocation6], %s336
          %s338 = sand.u32 %s131, 1
          %s339 = smul.addr %s338, 8
          %s340 = scalar_lea.vmem [#allocation7], %s339
          %s341 = smul.u32 %s31, 4
          %s342 = sadd.s32 %s341, %s32
          %s343 = smul.u32 8, %s342
          %s345 = ssub.s32 128, 128
          %346 = vsyncadd %s337, %s345
          %s347 = smul.addr %s343, 16
          %s348 = scalar_lea.hbm %s3, %s347
          %s350 = sshll.u32 %s340, 4
          %s351 = int_to_ptr.vmem [resolvable:$true] %s350
          %353 = dma.hbm_to_vmem [thread:$0]  %s348, 128, %s351, %s337
        $region40: #{regression_model.1} parent=27 // pred_fallthru
          _
        // Predicated region
        $region41: #{regression_model.1} parent=27 // pred_check
          %p354 = pneg %p171
        $region42: #{regression_model.1} parent=27 // pred_check_branch
          %356 = sbr.rel (%p354) target = $region44
        $region43: #{regression_model.1} parent=27 // pred_region
          %s357 = sand.u32 %s24, 1
          %s358 = scalar_lea.sflag [#allocation9], %s357
          %s359 = sand.u32 %s161, 1
          %s360 = smul.addr %s359, 256
          %s361 = scalar_lea.vmem [#allocation8], %s360
          %s362 = smul.u32 %s31, 4
          %s363 = sadd.s32 %s362, %s32
          %s364 = smul.u32 32, %s363
          %s366 = ssub.s32 4096, 4096
          %367 = vsyncadd %s358, %s366
          %s368 = smul.addr %s364, 128
          %s369 = scalar_lea.hbm %s4, %s368
          %s370 = sshll.u32 %s361, 4
          %s371 = int_to_ptr.vmem [resolvable:$true] %s370
          %376 = dma.hbm_to_vmem [thread:$0]  %s369, 4096, %s371, %s358, 128, 128, 8
        $region44: #{regression_model.1} parent=27 // pred_fallthru
          _
      $region28: #{regression_model.1} parent=5 // pred_fallthru
        _
      %p377 = scmp.le.s32.totalorder 1, %s24
      %p378 = scmp.lt.s32.totalorder %s24, 5
      %p379 = pnand %p377, %p378
      %p380 = pneg %p379
      // Predicated region
      $region45: #{regression_model.1} parent=5 // pred_check
        _
      $region46: #{regression_model.1} parent=5 // pred_check_branch
        %382 = sbr.rel (%p379) target = $region48
      $region47: #{regression_model.1} parent=5 // pred_region
        %s383 = ssub.s32 %s24, 1
        %s384 = sand.u32 %s74, 1
        %s385 = scalar_lea.sflag [#allocation3], %s384
        %s386 = sand.u32 %s74, 1
        %s387 = smul.addr %s386, 8192
        %s388 = scalar_lea.vmem [#allocation2], %s387
        // Predicated region
        $region49: #{regression_model.1} parent=47 // pred_check
          %p389 = pneg %p87
        $region50: #{regression_model.1} parent=47 // pred_check_branch
          %391 = sbr.rel (%p389) target = $region52
        $region51: #{regression_model.1} parent=47 // pred_region
          %392 = dma.done %s385, 131072
        $region52: #{regression_model.1} parent=47 // pred_fallthru
          _
        %s393 = sand.u32 %s29, 1
        %s394 = scalar_lea.sflag [#allocation6], %s393
        %s395 = sand.u32 %s104, 1
        %s396 = smul.addr %s395, 8
        %s397 = scalar_lea.vmem [#allocation5], %s396
        // Predicated region
        $region53: #{regression_model.1} parent=47 // pred_check
          %p398 = pneg %p117
        $region54: #{regression_model.1} parent=47 // pred_check_branch
          %400 = sbr.rel (%p398) target = $region56
        $region55: #{regression_model.1} parent=47 // pred_region
          %401 = dma.done %s394, 128
        $region56: #{regression_model.1} parent=47 // pred_fallthru
          _
        %s402 = sand.u32 %s29, 1
        %s403 = scalar_lea.sflag [#allocation6], %s402
        %s404 = sand.u32 %s134, 1
        %s405 = smul.addr %s404, 8
        %s406 = scalar_lea.vmem [#allocation7], %s405
        // Predicated region
        $region57: #{regression_model.1} parent=47 // pred_check
          %p407 = pneg %p147
        $region58: #{regression_model.1} parent=47 // pred_check_branch
          %409 = sbr.rel (%p407) target = $region60
        $region59: #{regression_model.1} parent=47 // pred_region
          %410 = dma.done %s403, 128
        $region60: #{regression_model.1} parent=47 // pred_fallthru
          _
        %s411 = sand.u32 %s29, 1
        %s412 = scalar_lea.sflag [#allocation9], %s411
        %s413 = sand.u32 %s164, 1
        %s414 = smul.addr %s413, 256
        %s415 = scalar_lea.vmem [#allocation8], %s414
        // Predicated region
        $region61: #{regression_model.1} parent=47 // pred_check
          %p416 = pneg %p177
        $region62: #{regression_model.1} parent=47 // pred_check_branch
          %418 = sbr.rel (%p416) target = $region64
        $region63: #{regression_model.1} parent=47 // pred_region
          %419 = dma.done %s412, 4096
        $region64: #{regression_model.1} parent=47 // pred_fallthru
          _
        // Predicated region
        $region65: #{regression_model.1} parent=47 // pred_check
          %p420 = pneg %p198
        $region66: #{regression_model.1} parent=47 // pred_check_branch
          %422 = sbr.rel (%p420) target = $region68
        $region67: #{regression_model.1} parent=47 // pred_region
          %423 = dma.done [#allocation9], 16
        $region68: #{regression_model.1} parent=47 // pred_fallthru
          _
        // Predicated region
        $region69: #{regression_model.1} parent=47 // pred_check
          %p424 = pneg %p219
        $region70: #{regression_model.1} parent=47 // pred_check_branch
          %426 = sbr.rel (%p424) target = $region72
        $region71: #{regression_model.1} parent=47 // pred_region
          %427 = dma.done [#allocation12], 16
        $region72: #{regression_model.1} parent=47 // pred_fallthru
          _
        %p428 = pneg %p57
        %p429 = pneg %p54
        %s430 = sand.u32 %s74, 1
        %s431 = scalar_lea.sflag [#allocation3], %s430
        %s432 = sand.u32 %s74, 1
        %s433 = smul.addr %s432, 8192
        %s434 = scalar_lea.vmem [#allocation2], %s433
        %p435 = pneg %p87
        %p436 = pneg %p84
        %s437 = sand.u32 %s29, 1
        %s438 = scalar_lea.sflag [#allocation6], %s437
        %s439 = sand.u32 %s104, 1
        %s440 = smul.addr %s439, 8
        %s441 = scalar_lea.vmem [#allocation5], %s440
        %p442 = pneg %p117
        %p443 = pneg %p114
        %s444 = sand.u32 %s29, 1
        %s445 = scalar_lea.sflag [#allocation6], %s444
        %s446 = sand.u32 %s134, 1
        %s447 = smul.addr %s446, 8
        %s448 = scalar_lea.vmem [#allocation7], %s447
        %p449 = pneg %p147
        %p450 = pneg %p144
        %s451 = sand.u32 %s29, 1
        %s452 = scalar_lea.sflag [#allocation9], %s451
        %s453 = sand.u32 %s164, 1
        %s454 = smul.addr %s453, 256
        %s455 = scalar_lea.vmem [#allocation8], %s454
        %p456 = pneg %p177
        %p457 = pneg %p174
        %p458 = pneg %p198
        %p459 = pneg %p195
        %p460 = pneg %p219
        %p461 = pneg %p216
        %p462 = pneg %p245
        %p463 = pneg %p242
        %s464 = smul.u32 %s33, 4
        %s465 = sadd.s32 %s464, %s34
        %s466 = smul.u32 %s33, 4
        %s467 = sadd.s32 %s466, %s34
        %s468 = smul.u32 8, %s467
        %s469 = smul.u32 %s33, 4
        %s470 = sadd.s32 %s469, %s34
        %s471 = smul.u32 8, %s470
        %s472 = smul.u32 %s33, 4
        %s473 = sadd.s32 %s472, %s34
        %s474 = smul.u32 32, %s473
        %p476 = scmp.eq.s32.totalorder %s34, 0
        // Predicated region
        $region73: #{regression_model.1} parent=47 // pred_check
          %p477 = pneg %p476
        $region74: #{regression_model.1} parent=47 // pred_check_branch
          %479 = sbr.rel (%p477) target = $region76
        $region75: #{regression_model.1} parent=47 // pred_region
          %480 = vst [vmem:[#allocation13] sm:$0xff] 0.0
        $region76: #{regression_model.1} parent=47 // pred_fallthru
          _
        %v481 = vld [vmem:[%s388] sm:$0xff]
        %v482 = vld [vmem:[%s388 + $0x8] sm:$0xff]
        %v483 = vld [vmem:[%s388 + $0x10] sm:$0xff]
        %v484 = vld [vmem:[%s388 + $0x18] sm:$0xff]
        %v485 = vld [vmem:[%s388 + $0x20] sm:$0xff]
        %v486 = vld [vmem:[%s388 + $0x28] sm:$0xff]
        %v487 = vld [vmem:[%s388 + $0x30] sm:$0xff]
        %v488 = vld [vmem:[%s388 + $0x38] sm:$0xff]
        %v489 = vld [vmem:[%s388 + $0x40] sm:$0xff]
        %v490 = vld [vmem:[%s388 + $0x48] sm:$0xff]
        %v491 = vld [vmem:[%s388 + $0x50] sm:$0xff]
        %v492 = vld [vmem:[%s388 + $0x58] sm:$0xff]
        %v493 = vld [vmem:[%s388 + $0x60] sm:$0xff]
        %v494 = vld [vmem:[%s388 + $0x68] sm:$0xff]
        %v495 = vld [vmem:[%s388 + $0x70] sm:$0xff]
        %v496 = vld [vmem:[%s388 + $0x78] sm:$0xff]
        %v497 = vld [vmem:[%s388 + $0x80] sm:$0xff]
        %v498 = vld [vmem:[%s388 + $0x88] sm:$0xff]
        %v499 = vld [vmem:[%s388 + $0x90] sm:$0xff]
        %v500 = vld [vmem:[%s388 + $0x98] sm:$0xff]
        %v501 = vld [vmem:[%s388 + $0xa0] sm:$0xff]
        %v502 = vld [vmem:[%s388 + $0xa8] sm:$0xff]
        %v503 = vld [vmem:[%s388 + $0xb0] sm:$0xff]
        %v504 = vld [vmem:[%s388 + $0xb8] sm:$0xff]
        %v505 = vld [vmem:[%s388 + $0xc0] sm:$0xff]
        %v506 = vld [vmem:[%s388 + $0xc8] sm:$0xff]
        %v507 = vld [vmem:[%s388 + $0xd0] sm:$0xff]
        %v508 = vld [vmem:[%s388 + $0xd8] sm:$0xff]
        %v509 = vld [vmem:[%s388 + $0xe0] sm:$0xff]
        %v510 = vld [vmem:[%s388 + $0xe8] sm:$0xff]
        %v511 = vld [vmem:[%s388 + $0xf0] sm:$0xff]
        %v512 = vld [vmem:[%s388 + $0xf8] sm:$0xff]
        %v513 = vld [vmem:[%s388 + $0x100] sm:$0xff]
        %v514 = vld [vmem:[%s388 + $0x108] sm:$0xff]
        %v515 = vld [vmem:[%s388 + $0x110] sm:$0xff]
        %v516 = vld [vmem:[%s388 + $0x118] sm:$0xff]
        %v517 = vld [vmem:[%s388 + $0x120] sm:$0xff]
        %v518 = vld [vmem:[%s388 + $0x128] sm:$0xff]
        %v519 = vld [vmem:[%s388 + $0x130] sm:$0xff]
        %v520 = vld [vmem:[%s388 + $0x138] sm:$0xff]
        %v521 = vld [vmem:[%s388 + $0x140] sm:$0xff]
        %v522 = vld [vmem:[%s388 + $0x148] sm:$0xff]
        %v523 = vld [vmem:[%s388 + $0x150] sm:$0xff]
        %v524 = vld [vmem:[%s388 + $0x158] sm:$0xff]
        %v525 = vld [vmem:[%s388 + $0x160] sm:$0xff]
        %v526 = vld [vmem:[%s388 + $0x168] sm:$0xff]
        %v527 = vld [vmem:[%s388 + $0x170] sm:$0xff]
        %v528 = vld [vmem:[%s388 + $0x178] sm:$0xff]
        %v529 = vld [vmem:[%s388 + $0x180] sm:$0xff]
        %v530 = vld [vmem:[%s388 + $0x188] sm:$0xff]
        %v531 = vld [vmem:[%s388 + $0x190] sm:$0xff]
        %v532 = vld [vmem:[%s388 + $0x198] sm:$0xff]
        %v533 = vld [vmem:[%s388 + $0x1a0] sm:$0xff]
        %v534 = vld [vmem:[%s388 + $0x1a8] sm:$0xff]
        %v535 = vld [vmem:[%s388 + $0x1b0] sm:$0xff]
        %v536 = vld [vmem:[%s388 + $0x1b8] sm:$0xff]
        %v537 = vld [vmem:[%s388 + $0x1c0] sm:$0xff]
        %v538 = vld [vmem:[%s388 + $0x1c8] sm:$0xff]
        %v539 = vld [vmem:[%s388 + $0x1d0] sm:$0xff]
        %v540 = vld [vmem:[%s388 + $0x1d8] sm:$0xff]
        %v541 = vld [vmem:[%s388 + $0x1e0] sm:$0xff]
        %v542 = vld [vmem:[%s388 + $0x1e8] sm:$0xff]
        %v543 = vld [vmem:[%s388 + $0x1f0] sm:$0xff]
        %v544 = vld [vmem:[%s388 + $0x1f8] sm:$0xff]
        %v545 = vld [vmem:[%s388 + $0x200] sm:$0xff]
        %v546 = vld [vmem:[%s388 + $0x208] sm:$0xff]
        %v547 = vld [vmem:[%s388 + $0x210] sm:$0xff]
        %v548 = vld [vmem:[%s388 + $0x218] sm:$0xff]
        %v549 = vld [vmem:[%s388 + $0x220] sm:$0xff]
        %v550 = vld [vmem:[%s388 + $0x228] sm:$0xff]
        %v551 = vld [vmem:[%s388 + $0x230] sm:$0xff]
        %v552 = vld [vmem:[%s388 + $0x238] sm:$0xff]
        %v553 = vld [vmem:[%s388 + $0x240] sm:$0xff]
        %v554 = vld [vmem:[%s388 + $0x248] sm:$0xff]
        %v555 = vld [vmem:[%s388 + $0x250] sm:$0xff]
        %v556 = vld [vmem:[%s388 + $0x258] sm:$0xff]
        %v557 = vld [vmem:[%s388 + $0x260] sm:$0xff]
        %v558 = vld [vmem:[%s388 + $0x268] sm:$0xff]
        %v559 = vld [vmem:[%s388 + $0x270] sm:$0xff]
        %v560 = vld [vmem:[%s388 + $0x278] sm:$0xff]
        %v561 = vld [vmem:[%s388 + $0x280] sm:$0xff]
        %v562 = vld [vmem:[%s388 + $0x288] sm:$0xff]
        %v563 = vld [vmem:[%s388 + $0x290] sm:$0xff]
        %v564 = vld [vmem:[%s388 + $0x298] sm:$0xff]
        %v565 = vld [vmem:[%s388 + $0x2a0] sm:$0xff]
        %v566 = vld [vmem:[%s388 + $0x2a8] sm:$0xff]
        %v567 = vld [vmem:[%s388 + $0x2b0] sm:$0xff]
        %v568 = vld [vmem:[%s388 + $0x2b8] sm:$0xff]
        %v569 = vld [vmem:[%s388 + $0x2c0] sm:$0xff]
        %v570 = vld [vmem:[%s388 + $0x2c8] sm:$0xff]
        %v571 = vld [vmem:[%s388 + $0x2d0] sm:$0xff]
        %v572 = vld [vmem:[%s388 + $0x2d8] sm:$0xff]
        %v573 = vld [vmem:[%s388 + $0x2e0] sm:$0xff]
        %v574 = vld [vmem:[%s388 + $0x2e8] sm:$0xff]
        %v575 = vld [vmem:[%s388 + $0x2f0] sm:$0xff]
        %v576 = vld [vmem:[%s388 + $0x2f8] sm:$0xff]
        %v577 = vld [vmem:[%s388 + $0x300] sm:$0xff]
        %v578 = vld [vmem:[%s388 + $0x308] sm:$0xff]
        %v579 = vld [vmem:[%s388 + $0x310] sm:$0xff]
        %v580 = vld [vmem:[%s388 + $0x318] sm:$0xff]
        %v581 = vld [vmem:[%s388 + $0x320] sm:$0xff]
        %v582 = vld [vmem:[%s388 + $0x328] sm:$0xff]
        %v583 = vld [vmem:[%s388 + $0x330] sm:$0xff]
        %v584 = vld [vmem:[%s388 + $0x338] sm:$0xff]
        %v585 = vld [vmem:[%s388 + $0x340] sm:$0xff]
        %v586 = vld [vmem:[%s388 + $0x348] sm:$0xff]
        %v587 = vld [vmem:[%s388 + $0x350] sm:$0xff]
        %v588 = vld [vmem:[%s388 + $0x358] sm:$0xff]
        %v589 = vld [vmem:[%s388 + $0x360] sm:$0xff]
        %v590 = vld [vmem:[%s388 + $0x368] sm:$0xff]
        %v591 = vld [vmem:[%s388 + $0x370] sm:$0xff]
        %v592 = vld [vmem:[%s388 + $0x378] sm:$0xff]
        %v593 = vld [vmem:[%s388 + $0x380] sm:$0xff]
        %v594 = vld [vmem:[%s388 + $0x388] sm:$0xff]
        %v595 = vld [vmem:[%s388 + $0x390] sm:$0xff]
        %v596 = vld [vmem:[%s388 + $0x398] sm:$0xff]
        %v597 = vld [vmem:[%s388 + $0x3a0] sm:$0xff]
        %v598 = vld [vmem:[%s388 + $0x3a8] sm:$0xff]
        %v599 = vld [vmem:[%s388 + $0x3b0] sm:$0xff]
        %v600 = vld [vmem:[%s388 + $0x3b8] sm:$0xff]
        %v601 = vld [vmem:[%s388 + $0x3c0] sm:$0xff]
        %v602 = vld [vmem:[%s388 + $0x3c8] sm:$0xff]
        %v603 = vld [vmem:[%s388 + $0x3d0] sm:$0xff]
        %v604 = vld [vmem:[%s388 + $0x3d8] sm:$0xff]
        %v605 = vld [vmem:[%s388 + $0x3e0] sm:$0xff]
        %v606 = vld [vmem:[%s388 + $0x3e8] sm:$0xff]
        %v607 = vld [vmem:[%s388 + $0x3f0] sm:$0xff]
        %v608 = vld [vmem:[%s388 + $0x3f8] sm:$0xff]
        %v609 = vld [vmem:[%s388 + $0x400] sm:$0xff]
        %v610 = vld [vmem:[%s388 + $0x408] sm:$0xff]
        %v611 = vld [vmem:[%s388 + $0x410] sm:$0xff]
        %v612 = vld [vmem:[%s388 + $0x418] sm:$0xff]
        %v613 = vld [vmem:[%s388 + $0x420] sm:$0xff]
        %v614 = vld [vmem:[%s388 + $0x428] sm:$0xff]
        %v615 = vld [vmem:[%s388 + $0x430] sm:$0xff]
        %v616 = vld [vmem:[%s388 + $0x438] sm:$0xff]
        %v617 = vld [vmem:[%s388 + $0x440] sm:$0xff]
        %v618 = vld [vmem:[%s388 + $0x448] sm:$0xff]
        %v619 = vld [vmem:[%s388 + $0x450] sm:$0xff]
        %v620 = vld [vmem:[%s388 + $0x458] sm:$0xff]
        %v621 = vld [vmem:[%s388 + $0x460] sm:$0xff]
        %v622 = vld [vmem:[%s388 + $0x468] sm:$0xff]
        %v623 = vld [vmem:[%s388 + $0x470] sm:$0xff]
        %v624 = vld [vmem:[%s388 + $0x478] sm:$0xff]
        %v625 = vld [vmem:[%s388 + $0x480] sm:$0xff]
        %v626 = vld [vmem:[%s388 + $0x488] sm:$0xff]
        %v627 = vld [vmem:[%s388 + $0x490] sm:$0xff]
        %v628 = vld [vmem:[%s388 + $0x498] sm:$0xff]
        %v629 = vld [vmem:[%s388 + $0x4a0] sm:$0xff]
        %v630 = vld [vmem:[%s388 + $0x4a8] sm:$0xff]
        %v631 = vld [vmem:[%s388 + $0x4b0] sm:$0xff]
        %v632 = vld [vmem:[%s388 + $0x4b8] sm:$0xff]
        %v633 = vld [vmem:[%s388 + $0x4c0] sm:$0xff]
        %v634 = vld [vmem:[%s388 + $0x4c8] sm:$0xff]
        %v635 = vld [vmem:[%s388 + $0x4d0] sm:$0xff]
        %v636 = vld [vmem:[%s388 + $0x4d8] sm:$0xff]
        %v637 = vld [vmem:[%s388 + $0x4e0] sm:$0xff]
        %v638 = vld [vmem:[%s388 + $0x4e8] sm:$0xff]
        %v639 = vld [vmem:[%s388 + $0x4f0] sm:$0xff]
        %v640 = vld [vmem:[%s388 + $0x4f8] sm:$0xff]
        %v641 = vld [vmem:[%s388 + $0x500] sm:$0xff]
        %v642 = vld [vmem:[%s388 + $0x508] sm:$0xff]
        %v643 = vld [vmem:[%s388 + $0x510] sm:$0xff]
        %v644 = vld [vmem:[%s388 + $0x518] sm:$0xff]
        %v645 = vld [vmem:[%s388 + $0x520] sm:$0xff]
        %v646 = vld [vmem:[%s388 + $0x528] sm:$0xff]
        %v647 = vld [vmem:[%s388 + $0x530] sm:$0xff]
        %v648 = vld [vmem:[%s388 + $0x538] sm:$0xff]
        %v649 = vld [vmem:[%s388 + $0x540] sm:$0xff]
        %v650 = vld [vmem:[%s388 + $0x548] sm:$0xff]
        %v651 = vld [vmem:[%s388 + $0x550] sm:$0xff]
        %v652 = vld [vmem:[%s388 + $0x558] sm:$0xff]
        %v653 = vld [vmem:[%s388 + $0x560] sm:$0xff]
        %v654 = vld [vmem:[%s388 + $0x568] sm:$0xff]
        %v655 = vld [vmem:[%s388 + $0x570] sm:$0xff]
        %v656 = vld [vmem:[%s388 + $0x578] sm:$0xff]
        %v657 = vld [vmem:[%s388 + $0x580] sm:$0xff]
        %v658 = vld [vmem:[%s388 + $0x588] sm:$0xff]
        %v659 = vld [vmem:[%s388 + $0x590] sm:$0xff]
        %v660 = vld [vmem:[%s388 + $0x598] sm:$0xff]
        %v661 = vld [vmem:[%s388 + $0x5a0] sm:$0xff]
        %v662 = vld [vmem:[%s388 + $0x5a8] sm:$0xff]
        %v663 = vld [vmem:[%s388 + $0x5b0] sm:$0xff]
        %v664 = vld [vmem:[%s388 + $0x5b8] sm:$0xff]
        %v665 = vld [vmem:[%s388 + $0x5c0] sm:$0xff]
        %v666 = vld [vmem:[%s388 + $0x5c8] sm:$0xff]
        %v667 = vld [vmem:[%s388 + $0x5d0] sm:$0xff]
        %v668 = vld [vmem:[%s388 + $0x5d8] sm:$0xff]
        %v669 = vld [vmem:[%s388 + $0x5e0] sm:$0xff]
        %v670 = vld [vmem:[%s388 + $0x5e8] sm:$0xff]
        %v671 = vld [vmem:[%s388 + $0x5f0] sm:$0xff]
        %v672 = vld [vmem:[%s388 + $0x5f8] sm:$0xff]
        %v673 = vld [vmem:[%s388 + $0x600] sm:$0xff]
        %v674 = vld [vmem:[%s388 + $0x608] sm:$0xff]
        %v675 = vld [vmem:[%s388 + $0x610] sm:$0xff]
        %v676 = vld [vmem:[%s388 + $0x618] sm:$0xff]
        %v677 = vld [vmem:[%s388 + $0x620] sm:$0xff]
        %v678 = vld [vmem:[%s388 + $0x628] sm:$0xff]
        %v679 = vld [vmem:[%s388 + $0x630] sm:$0xff]
        %v680 = vld [vmem:[%s388 + $0x638] sm:$0xff]
        %v681 = vld [vmem:[%s388 + $0x640] sm:$0xff]
        %v682 = vld [vmem:[%s388 + $0x648] sm:$0xff]
        %v683 = vld [vmem:[%s388 + $0x650] sm:$0xff]
        %v684 = vld [vmem:[%s388 + $0x658] sm:$0xff]
        %v685 = vld [vmem:[%s388 + $0x660] sm:$0xff]
        %v686 = vld [vmem:[%s388 + $0x668] sm:$0xff]
        %v687 = vld [vmem:[%s388 + $0x670] sm:$0xff]
        %v688 = vld [vmem:[%s388 + $0x678] sm:$0xff]
        %v689 = vld [vmem:[%s388 + $0x680] sm:$0xff]
        %v690 = vld [vmem:[%s388 + $0x688] sm:$0xff]
        %v691 = vld [vmem:[%s388 + $0x690] sm:$0xff]
        %v692 = vld [vmem:[%s388 + $0x698] sm:$0xff]
        %v693 = vld [vmem:[%s388 + $0x6a0] sm:$0xff]
        %v694 = vld [vmem:[%s388 + $0x6a8] sm:$0xff]
        %v695 = vld [vmem:[%s388 + $0x6b0] sm:$0xff]
        %v696 = vld [vmem:[%s388 + $0x6b8] sm:$0xff]
        %v697 = vld [vmem:[%s388 + $0x6c0] sm:$0xff]
        %v698 = vld [vmem:[%s388 + $0x6c8] sm:$0xff]
        %v699 = vld [vmem:[%s388 + $0x6d0] sm:$0xff]
        %v700 = vld [vmem:[%s388 + $0x6d8] sm:$0xff]
        %v701 = vld [vmem:[%s388 + $0x6e0] sm:$0xff]
        %v702 = vld [vmem:[%s388 + $0x6e8] sm:$0xff]
        %v703 = vld [vmem:[%s388 + $0x6f0] sm:$0xff]
        %v704 = vld [vmem:[%s388 + $0x6f8] sm:$0xff]
        %v705 = vld [vmem:[%s388 + $0x700] sm:$0xff]
        %v706 = vld [vmem:[%s388 + $0x708] sm:$0xff]
        %v707 = vld [vmem:[%s388 + $0x710] sm:$0xff]
        %v708 = vld [vmem:[%s388 + $0x718] sm:$0xff]
        %v709 = vld [vmem:[%s388 + $0x720] sm:$0xff]
        %v710 = vld [vmem:[%s388 + $0x728] sm:$0xff]
        %v711 = vld [vmem:[%s388 + $0x730] sm:$0xff]
        %v712 = vld [vmem:[%s388 + $0x738] sm:$0xff]
        %v713 = vld [vmem:[%s388 + $0x740] sm:$0xff]
        %v714 = vld [vmem:[%s388 + $0x748] sm:$0xff]
        %v715 = vld [vmem:[%s388 + $0x750] sm:$0xff]
        %v716 = vld [vmem:[%s388 + $0x758] sm:$0xff]
        %v717 = vld [vmem:[%s388 + $0x760] sm:$0xff]
        %v718 = vld [vmem:[%s388 + $0x768] sm:$0xff]
        %v719 = vld [vmem:[%s388 + $0x770] sm:$0xff]
        %v720 = vld [vmem:[%s388 + $0x778] sm:$0xff]
        %v721 = vld [vmem:[%s388 + $0x780] sm:$0xff]
        %v722 = vld [vmem:[%s388 + $0x788] sm:$0xff]
        %v723 = vld [vmem:[%s388 + $0x790] sm:$0xff]
        %v724 = vld [vmem:[%s388 + $0x798] sm:$0xff]
        %v725 = vld [vmem:[%s388 + $0x7a0] sm:$0xff]
        %v726 = vld [vmem:[%s388 + $0x7a8] sm:$0xff]
        %v727 = vld [vmem:[%s388 + $0x7b0] sm:$0xff]
        %v728 = vld [vmem:[%s388 + $0x7b8] sm:$0xff]
        %v729 = vld [vmem:[%s388 + $0x7c0] sm:$0xff]
        %v730 = vld [vmem:[%s388 + $0x7c8] sm:$0xff]
        %v731 = vld [vmem:[%s388 + $0x7d0] sm:$0xff]
        %v732 = vld [vmem:[%s388 + $0x7d8] sm:$0xff]
        %v733 = vld [vmem:[%s388 + $0x7e0] sm:$0xff]
        %v734 = vld [vmem:[%s388 + $0x7e8] sm:$0xff]
        %v735 = vld [vmem:[%s388 + $0x7f0] sm:$0xff]
        %v736 = vld [vmem:[%s388 + $0x7f8] sm:$0xff]
        %v737 = vld [vmem:[%s388 + $0x800] sm:$0xff]
        %v738 = vld [vmem:[%s388 + $0x808] sm:$0xff]
        %v739 = vld [vmem:[%s388 + $0x810] sm:$0xff]
        %v740 = vld [vmem:[%s388 + $0x818] sm:$0xff]
        %v741 = vld [vmem:[%s388 + $0x820] sm:$0xff]
        %v742 = vld [vmem:[%s388 + $0x828] sm:$0xff]
        %v743 = vld [vmem:[%s388 + $0x830] sm:$0xff]
        %v744 = vld [vmem:[%s388 + $0x838] sm:$0xff]
        %v745 = vld [vmem:[%s388 + $0x840] sm:$0xff]
        %v746 = vld [vmem:[%s388 + $0x848] sm:$0xff]
        %v747 = vld [vmem:[%s388 + $0x850] sm:$0xff]
        %v748 = vld [vmem:[%s388 + $0x858] sm:$0xff]
        %v749 = vld [vmem:[%s388 + $0x860] sm:$0xff]
        %v750 = vld [vmem:[%s388 + $0x868] sm:$0xff]
        %v751 = vld [vmem:[%s388 + $0x870] sm:$0xff]
        %v752 = vld [vmem:[%s388 + $0x878] sm:$0xff]
        %v753 = vld [vmem:[%s388 + $0x880] sm:$0xff]
        %v754 = vld [vmem:[%s388 + $0x888] sm:$0xff]
        %v755 = vld [vmem:[%s388 + $0x890] sm:$0xff]
        %v756 = vld [vmem:[%s388 + $0x898] sm:$0xff]
        %v757 = vld [vmem:[%s388 + $0x8a0] sm:$0xff]
        %v758 = vld [vmem:[%s388 + $0x8a8] sm:$0xff]
        %v759 = vld [vmem:[%s388 + $0x8b0] sm:$0xff]
        %v760 = vld [vmem:[%s388 + $0x8b8] sm:$0xff]
        %v761 = vld [vmem:[%s388 + $0x8c0] sm:$0xff]
        %v762 = vld [vmem:[%s388 + $0x8c8] sm:$0xff]
        %v763 = vld [vmem:[%s388 + $0x8d0] sm:$0xff]
        %v764 = vld [vmem:[%s388 + $0x8d8] sm:$0xff]
        %v765 = vld [vmem:[%s388 + $0x8e0] sm:$0xff]
        %v766 = vld [vmem:[%s388 + $0x8e8] sm:$0xff]
        %v767 = vld [vmem:[%s388 + $0x8f0] sm:$0xff]
        %v768 = vld [vmem:[%s388 + $0x8f8] sm:$0xff]
        %v769 = vld [vmem:[%s388 + $0x900] sm:$0xff]
        %v770 = vld [vmem:[%s388 + $0x908] sm:$0xff]
        %v771 = vld [vmem:[%s388 + $0x910] sm:$0xff]
        %v772 = vld [vmem:[%s388 + $0x918] sm:$0xff]
        %v773 = vld [vmem:[%s388 + $0x920] sm:$0xff]
        %v774 = vld [vmem:[%s388 + $0x928] sm:$0xff]
        %v775 = vld [vmem:[%s388 + $0x930] sm:$0xff]
        %v776 = vld [vmem:[%s388 + $0x938] sm:$0xff]
        %v777 = vld [vmem:[%s388 + $0x940] sm:$0xff]
        %v778 = vld [vmem:[%s388 + $0x948] sm:$0xff]
        %v779 = vld [vmem:[%s388 + $0x950] sm:$0xff]
        %v780 = vld [vmem:[%s388 + $0x958] sm:$0xff]
        %v781 = vld [vmem:[%s388 + $0x960] sm:$0xff]
        %v782 = vld [vmem:[%s388 + $0x968] sm:$0xff]
        %v783 = vld [vmem:[%s388 + $0x970] sm:$0xff]
        %v784 = vld [vmem:[%s388 + $0x978] sm:$0xff]
        %v785 = vld [vmem:[%s388 + $0x980] sm:$0xff]
        %v786 = vld [vmem:[%s388 + $0x988] sm:$0xff]
        %v787 = vld [vmem:[%s388 + $0x990] sm:$0xff]
        %v788 = vld [vmem:[%s388 + $0x998] sm:$0xff]
        %v789 = vld [vmem:[%s388 + $0x9a0] sm:$0xff]
        %v790 = vld [vmem:[%s388 + $0x9a8] sm:$0xff]
        %v791 = vld [vmem:[%s388 + $0x9b0] sm:$0xff]
        %v792 = vld [vmem:[%s388 + $0x9b8] sm:$0xff]
        %v793 = vld [vmem:[%s388 + $0x9c0] sm:$0xff]
        %v794 = vld [vmem:[%s388 + $0x9c8] sm:$0xff]
        %v795 = vld [vmem:[%s388 + $0x9d0] sm:$0xff]
        %v796 = vld [vmem:[%s388 + $0x9d8] sm:$0xff]
        %v797 = vld [vmem:[%s388 + $0x9e0] sm:$0xff]
        %v798 = vld [vmem:[%s388 + $0x9e8] sm:$0xff]
        %v799 = vld [vmem:[%s388 + $0x9f0] sm:$0xff]
        %v800 = vld [vmem:[%s388 + $0x9f8] sm:$0xff]
        %v801 = vld [vmem:[%s388 + $0xa00] sm:$0xff]
        %v802 = vld [vmem:[%s388 + $0xa08] sm:$0xff]
        %v803 = vld [vmem:[%s388 + $0xa10] sm:$0xff]
        %v804 = vld [vmem:[%s388 + $0xa18] sm:$0xff]
        %v805 = vld [vmem:[%s388 + $0xa20] sm:$0xff]
        %v806 = vld [vmem:[%s388 + $0xa28] sm:$0xff]
        %v807 = vld [vmem:[%s388 + $0xa30] sm:$0xff]
        %v808 = vld [vmem:[%s388 + $0xa38] sm:$0xff]
        %v809 = vld [vmem:[%s388 + $0xa40] sm:$0xff]
        %v810 = vld [vmem:[%s388 + $0xa48] sm:$0xff]
        %v811 = vld [vmem:[%s388 + $0xa50] sm:$0xff]
        %v812 = vld [vmem:[%s388 + $0xa58] sm:$0xff]
        %v813 = vld [vmem:[%s388 + $0xa60] sm:$0xff]
        %v814 = vld [vmem:[%s388 + $0xa68] sm:$0xff]
        %v815 = vld [vmem:[%s388 + $0xa70] sm:$0xff]
        %v816 = vld [vmem:[%s388 + $0xa78] sm:$0xff]
        %v817 = vld [vmem:[%s388 + $0xa80] sm:$0xff]
        %v818 = vld [vmem:[%s388 + $0xa88] sm:$0xff]
        %v819 = vld [vmem:[%s388 + $0xa90] sm:$0xff]
        %v820 = vld [vmem:[%s388 + $0xa98] sm:$0xff]
        %v821 = vld [vmem:[%s388 + $0xaa0] sm:$0xff]
        %v822 = vld [vmem:[%s388 + $0xaa8] sm:$0xff]
        %v823 = vld [vmem:[%s388 + $0xab0] sm:$0xff]
        %v824 = vld [vmem:[%s388 + $0xab8] sm:$0xff]
        %v825 = vld [vmem:[%s388 + $0xac0] sm:$0xff]
        %v826 = vld [vmem:[%s388 + $0xac8] sm:$0xff]
        %v827 = vld [vmem:[%s388 + $0xad0] sm:$0xff]
        %v828 = vld [vmem:[%s388 + $0xad8] sm:$0xff]
        %v829 = vld [vmem:[%s388 + $0xae0] sm:$0xff]
        %v830 = vld [vmem:[%s388 + $0xae8] sm:$0xff]
        %v831 = vld [vmem:[%s388 + $0xaf0] sm:$0xff]
        %v832 = vld [vmem:[%s388 + $0xaf8] sm:$0xff]
        %v833 = vld [vmem:[%s388 + $0xb00] sm:$0xff]
        %v834 = vld [vmem:[%s388 + $0xb08] sm:$0xff]
        %v835 = vld [vmem:[%s388 + $0xb10] sm:$0xff]
        %v836 = vld [vmem:[%s388 + $0xb18] sm:$0xff]
        %v837 = vld [vmem:[%s388 + $0xb20] sm:$0xff]
        %v838 = vld [vmem:[%s388 + $0xb28] sm:$0xff]
        %v839 = vld [vmem:[%s388 + $0xb30] sm:$0xff]
        %v840 = vld [vmem:[%s388 + $0xb38] sm:$0xff]
        %v841 = vld [vmem:[%s388 + $0xb40] sm:$0xff]
        %v842 = vld [vmem:[%s388 + $0xb48] sm:$0xff]
        %v843 = vld [vmem:[%s388 + $0xb50] sm:$0xff]
        %v844 = vld [vmem:[%s388 + $0xb58] sm:$0xff]
        %v845 = vld [vmem:[%s388 + $0xb60] sm:$0xff]
        %v846 = vld [vmem:[%s388 + $0xb68] sm:$0xff]
        %v847 = vld [vmem:[%s388 + $0xb70] sm:$0xff]
        %v848 = vld [vmem:[%s388 + $0xb78] sm:$0xff]
        %v849 = vld [vmem:[%s388 + $0xb80] sm:$0xff]
        %v850 = vld [vmem:[%s388 + $0xb88] sm:$0xff]
        %v851 = vld [vmem:[%s388 + $0xb90] sm:$0xff]
        %v852 = vld [vmem:[%s388 + $0xb98] sm:$0xff]
        %v853 = vld [vmem:[%s388 + $0xba0] sm:$0xff]
        %v854 = vld [vmem:[%s388 + $0xba8] sm:$0xff]
        %v855 = vld [vmem:[%s388 + $0xbb0] sm:$0xff]
        %v856 = vld [vmem:[%s388 + $0xbb8] sm:$0xff]
        %v857 = vld [vmem:[%s388 + $0xbc0] sm:$0xff]
        %v858 = vld [vmem:[%s388 + $0xbc8] sm:$0xff]
        %v859 = vld [vmem:[%s388 + $0xbd0] sm:$0xff]
        %v860 = vld [vmem:[%s388 + $0xbd8] sm:$0xff]
        %v861 = vld [vmem:[%s388 + $0xbe0] sm:$0xff]
        %v862 = vld [vmem:[%s388 + $0xbe8] sm:$0xff]
        %v863 = vld [vmem:[%s388 + $0xbf0] sm:$0xff]
        %v864 = vld [vmem:[%s388 + $0xbf8] sm:$0xff]
        %v865 = vld [vmem:[%s388 + $0xc00] sm:$0xff]
        %v866 = vld [vmem:[%s388 + $0xc08] sm:$0xff]
        %v867 = vld [vmem:[%s388 + $0xc10] sm:$0xff]
        %v868 = vld [vmem:[%s388 + $0xc18] sm:$0xff]
        %v869 = vld [vmem:[%s388 + $0xc20] sm:$0xff]
        %v870 = vld [vmem:[%s388 + $0xc28] sm:$0xff]
        %v871 = vld [vmem:[%s388 + $0xc30] sm:$0xff]
        %v872 = vld [vmem:[%s388 + $0xc38] sm:$0xff]
        %v873 = vld [vmem:[%s388 + $0xc40] sm:$0xff]
        %v874 = vld [vmem:[%s388 + $0xc48] sm:$0xff]
        %v875 = vld [vmem:[%s388 + $0xc50] sm:$0xff]
        %v876 = vld [vmem:[%s388 + $0xc58] sm:$0xff]
        %v877 = vld [vmem:[%s388 + $0xc60] sm:$0xff]
        %v878 = vld [vmem:[%s388 + $0xc68] sm:$0xff]
        %v879 = vld [vmem:[%s388 + $0xc70] sm:$0xff]
        %v880 = vld [vmem:[%s388 + $0xc78] sm:$0xff]
        %v881 = vld [vmem:[%s388 + $0xc80] sm:$0xff]
        %v882 = vld [vmem:[%s388 + $0xc88] sm:$0xff]
        %v883 = vld [vmem:[%s388 + $0xc90] sm:$0xff]
        %v884 = vld [vmem:[%s388 + $0xc98] sm:$0xff]
        %v885 = vld [vmem:[%s388 + $0xca0] sm:$0xff]
        %v886 = vld [vmem:[%s388 + $0xca8] sm:$0xff]
        %v887 = vld [vmem:[%s388 + $0xcb0] sm:$0xff]
        %v888 = vld [vmem:[%s388 + $0xcb8] sm:$0xff]
        %v889 = vld [vmem:[%s388 + $0xcc0] sm:$0xff]
        %v890 = vld [vmem:[%s388 + $0xcc8] sm:$0xff]
        %v891 = vld [vmem:[%s388 + $0xcd0] sm:$0xff]
        %v892 = vld [vmem:[%s388 + $0xcd8] sm:$0xff]
        %v893 = vld [vmem:[%s388 + $0xce0] sm:$0xff]
        %v894 = vld [vmem:[%s388 + $0xce8] sm:$0xff]
        %v895 = vld [vmem:[%s388 + $0xcf0] sm:$0xff]
        %v896 = vld [vmem:[%s388 + $0xcf8] sm:$0xff]
        %v897 = vld [vmem:[%s388 + $0xd00] sm:$0xff]
        %v898 = vld [vmem:[%s388 + $0xd08] sm:$0xff]
        %v899 = vld [vmem:[%s388 + $0xd10] sm:$0xff]
        %v900 = vld [vmem:[%s388 + $0xd18] sm:$0xff]
        %v901 = vld [vmem:[%s388 + $0xd20] sm:$0xff]
        %v902 = vld [vmem:[%s388 + $0xd28] sm:$0xff]
        %v903 = vld [vmem:[%s388 + $0xd30] sm:$0xff]
        %v904 = vld [vmem:[%s388 + $0xd38] sm:$0xff]
        %v905 = vld [vmem:[%s388 + $0xd40] sm:$0xff]
        %v906 = vld [vmem:[%s388 + $0xd48] sm:$0xff]
        %v907 = vld [vmem:[%s388 + $0xd50] sm:$0xff]
        %v908 = vld [vmem:[%s388 + $0xd58] sm:$0xff]
        %v909 = vld [vmem:[%s388 + $0xd60] sm:$0xff]
        %v910 = vld [vmem:[%s388 + $0xd68] sm:$0xff]
        %v911 = vld [vmem:[%s388 + $0xd70] sm:$0xff]
        %v912 = vld [vmem:[%s388 + $0xd78] sm:$0xff]
        %v913 = vld [vmem:[%s388 + $0xd80] sm:$0xff]
        %v914 = vld [vmem:[%s388 + $0xd88] sm:$0xff]
        %v915 = vld [vmem:[%s388 + $0xd90] sm:$0xff]
        %v916 = vld [vmem:[%s388 + $0xd98] sm:$0xff]
        %v917 = vld [vmem:[%s388 + $0xda0] sm:$0xff]
        %v918 = vld [vmem:[%s388 + $0xda8] sm:$0xff]
        %v919 = vld [vmem:[%s388 + $0xdb0] sm:$0xff]
        %v920 = vld [vmem:[%s388 + $0xdb8] sm:$0xff]
        %v921 = vld [vmem:[%s388 + $0xdc0] sm:$0xff]
        %v922 = vld [vmem:[%s388 + $0xdc8] sm:$0xff]
        %v923 = vld [vmem:[%s388 + $0xdd0] sm:$0xff]
        %v924 = vld [vmem:[%s388 + $0xdd8] sm:$0xff]
        %v925 = vld [vmem:[%s388 + $0xde0] sm:$0xff]
        %v926 = vld [vmem:[%s388 + $0xde8] sm:$0xff]
        %v927 = vld [vmem:[%s388 + $0xdf0] sm:$0xff]
        %v928 = vld [vmem:[%s388 + $0xdf8] sm:$0xff]
        %v929 = vld [vmem:[%s388 + $0xe00] sm:$0xff]
        %v930 = vld [vmem:[%s388 + $0xe08] sm:$0xff]
        %v931 = vld [vmem:[%s388 + $0xe10] sm:$0xff]
        %v932 = vld [vmem:[%s388 + $0xe18] sm:$0xff]
        %v933 = vld [vmem:[%s388 + $0xe20] sm:$0xff]
        %v934 = vld [vmem:[%s388 + $0xe28] sm:$0xff]
        %v935 = vld [vmem:[%s388 + $0xe30] sm:$0xff]
        %v936 = vld [vmem:[%s388 + $0xe38] sm:$0xff]
        %v937 = vld [vmem:[%s388 + $0xe40] sm:$0xff]
        %v938 = vld [vmem:[%s388 + $0xe48] sm:$0xff]
        %v939 = vld [vmem:[%s388 + $0xe50] sm:$0xff]
        %v940 = vld [vmem:[%s388 + $0xe58] sm:$0xff]
        %v941 = vld [vmem:[%s388 + $0xe60] sm:$0xff]
        %v942 = vld [vmem:[%s388 + $0xe68] sm:$0xff]
        %v943 = vld [vmem:[%s388 + $0xe70] sm:$0xff]
        %v944 = vld [vmem:[%s388 + $0xe78] sm:$0xff]
        %v945 = vld [vmem:[%s388 + $0xe80] sm:$0xff]
        %v946 = vld [vmem:[%s388 + $0xe88] sm:$0xff]
        %v947 = vld [vmem:[%s388 + $0xe90] sm:$0xff]
        %v948 = vld [vmem:[%s388 + $0xe98] sm:$0xff]
        %v949 = vld [vmem:[%s388 + $0xea0] sm:$0xff]
        %v950 = vld [vmem:[%s388 + $0xea8] sm:$0xff]
        %v951 = vld [vmem:[%s388 + $0xeb0] sm:$0xff]
        %v952 = vld [vmem:[%s388 + $0xeb8] sm:$0xff]
        %v953 = vld [vmem:[%s388 + $0xec0] sm:$0xff]
        %v954 = vld [vmem:[%s388 + $0xec8] sm:$0xff]
        %v955 = vld [vmem:[%s388 + $0xed0] sm:$0xff]
        %v956 = vld [vmem:[%s388 + $0xed8] sm:$0xff]
        %v957 = vld [vmem:[%s388 + $0xee0] sm:$0xff]
        %v958 = vld [vmem:[%s388 + $0xee8] sm:$0xff]
        %v959 = vld [vmem:[%s388 + $0xef0] sm:$0xff]
        %v960 = vld [vmem:[%s388 + $0xef8] sm:$0xff]
        %v961 = vld [vmem:[%s388 + $0xf00] sm:$0xff]
        %v962 = vld [vmem:[%s388 + $0xf08] sm:$0xff]
        %v963 = vld [vmem:[%s388 + $0xf10] sm:$0xff]
        %v964 = vld [vmem:[%s388 + $0xf18] sm:$0xff]
        %v965 = vld [vmem:[%s388 + $0xf20] sm:$0xff]
        %v966 = vld [vmem:[%s388 + $0xf28] sm:$0xff]
        %v967 = vld [vmem:[%s388 + $0xf30] sm:$0xff]
        %v968 = vld [vmem:[%s388 + $0xf38] sm:$0xff]
        %v969 = vld [vmem:[%s388 + $0xf40] sm:$0xff]
        %v970 = vld [vmem:[%s388 + $0xf48] sm:$0xff]
        %v971 = vld [vmem:[%s388 + $0xf50] sm:$0xff]
        %v972 = vld [vmem:[%s388 + $0xf58] sm:$0xff]
        %v973 = vld [vmem:[%s388 + $0xf60] sm:$0xff]
        %v974 = vld [vmem:[%s388 + $0xf68] sm:$0xff]
        %v975 = vld [vmem:[%s388 + $0xf70] sm:$0xff]
        %v976 = vld [vmem:[%s388 + $0xf78] sm:$0xff]
        %v977 = vld [vmem:[%s388 + $0xf80] sm:$0xff]
        %v978 = vld [vmem:[%s388 + $0xf88] sm:$0xff]
        %v979 = vld [vmem:[%s388 + $0xf90] sm:$0xff]
        %v980 = vld [vmem:[%s388 + $0xf98] sm:$0xff]
        %v981 = vld [vmem:[%s388 + $0xfa0] sm:$0xff]
        %v982 = vld [vmem:[%s388 + $0xfa8] sm:$0xff]
        %v983 = vld [vmem:[%s388 + $0xfb0] sm:$0xff]
        %v984 = vld [vmem:[%s388 + $0xfb8] sm:$0xff]
        %v985 = vld [vmem:[%s388 + $0xfc0] sm:$0xff]
        %v986 = vld [vmem:[%s388 + $0xfc8] sm:$0xff]
        %v987 = vld [vmem:[%s388 + $0xfd0] sm:$0xff]
        %v988 = vld [vmem:[%s388 + $0xfd8] sm:$0xff]
        %v989 = vld [vmem:[%s388 + $0xfe0] sm:$0xff]
        %v990 = vld [vmem:[%s388 + $0xfe8] sm:$0xff]
        %v991 = vld [vmem:[%s388 + $0xff0] sm:$0xff]
        %v992 = vld [vmem:[%s388 + $0xff8] sm:$0xff]
        %v993 = vld [vmem:[%s388 + $0x1000] sm:$0xff]
        %v994 = vld [vmem:[%s388 + $0x1008] sm:$0xff]
        %v995 = vld [vmem:[%s388 + $0x1010] sm:$0xff]
        %v996 = vld [vmem:[%s388 + $0x1018] sm:$0xff]
        %v997 = vld [vmem:[%s388 + $0x1020] sm:$0xff]
        %v998 = vld [vmem:[%s388 + $0x1028] sm:$0xff]
        %v999 = vld [vmem:[%s388 + $0x1030] sm:$0xff]
        %v1000 = vld [vmem:[%s388 + $0x1038] sm:$0xff]
        %v1001 = vld [vmem:[%s388 + $0x1040] sm:$0xff]
        %v1002 = vld [vmem:[%s388 + $0x1048] sm:$0xff]
        %v1003 = vld [vmem:[%s388 + $0x1050] sm:$0xff]
        %v1004 = vld [vmem:[%s388 + $0x1058] sm:$0xff]
        %v1005 = vld [vmem:[%s388 + $0x1060] sm:$0xff]
        %v1006 = vld [vmem:[%s388 + $0x1068] sm:$0xff]
        %v1007 = vld [vmem:[%s388 + $0x1070] sm:$0xff]
        %v1008 = vld [vmem:[%s388 + $0x1078] sm:$0xff]
        %v1009 = vld [vmem:[%s388 + $0x1080] sm:$0xff]
        %v1010 = vld [vmem:[%s388 + $0x1088] sm:$0xff]
        %v1011 = vld [vmem:[%s388 + $0x1090] sm:$0xff]
        %v1012 = vld [vmem:[%s388 + $0x1098] sm:$0xff]
        %v1013 = vld [vmem:[%s388 + $0x10a0] sm:$0xff]
        %v1014 = vld [vmem:[%s388 + $0x10a8] sm:$0xff]
        %v1015 = vld [vmem:[%s388 + $0x10b0] sm:$0xff]
        %v1016 = vld [vmem:[%s388 + $0x10b8] sm:$0xff]
        %v1017 = vld [vmem:[%s388 + $0x10c0] sm:$0xff]
        %v1018 = vld [vmem:[%s388 + $0x10c8] sm:$0xff]
        %v1019 = vld [vmem:[%s388 + $0x10d0] sm:$0xff]
        %v1020 = vld [vmem:[%s388 + $0x10d8] sm:$0xff]
        %v1021 = vld [vmem:[%s388 + $0x10e0] sm:$0xff]
        %v1022 = vld [vmem:[%s388 + $0x10e8] sm:$0xff]
        %v1023 = vld [vmem:[%s388 + $0x10f0] sm:$0xff]
        %v1024 = vld [vmem:[%s388 + $0x10f8] sm:$0xff]
        %v1025 = vld [vmem:[%s388 + $0x1100] sm:$0xff]
        %v1026 = vld [vmem:[%s388 + $0x1108] sm:$0xff]
        %v1027 = vld [vmem:[%s388 + $0x1110] sm:$0xff]
        %v1028 = vld [vmem:[%s388 + $0x1118] sm:$0xff]
        %v1029 = vld [vmem:[%s388 + $0x1120] sm:$0xff]
        %v1030 = vld [vmem:[%s388 + $0x1128] sm:$0xff]
        %v1031 = vld [vmem:[%s388 + $0x1130] sm:$0xff]
        %v1032 = vld [vmem:[%s388 + $0x1138] sm:$0xff]
        %v1033 = vld [vmem:[%s388 + $0x1140] sm:$0xff]
        %v1034 = vld [vmem:[%s388 + $0x1148] sm:$0xff]
        %v1035 = vld [vmem:[%s388 + $0x1150] sm:$0xff]
        %v1036 = vld [vmem:[%s388 + $0x1158] sm:$0xff]
        %v1037 = vld [vmem:[%s388 + $0x1160] sm:$0xff]
        %v1038 = vld [vmem:[%s388 + $0x1168] sm:$0xff]
        %v1039 = vld [vmem:[%s388 + $0x1170] sm:$0xff]
        %v1040 = vld [vmem:[%s388 + $0x1178] sm:$0xff]
        %v1041 = vld [vmem:[%s388 + $0x1180] sm:$0xff]
        %v1042 = vld [vmem:[%s388 + $0x1188] sm:$0xff]
        %v1043 = vld [vmem:[%s388 + $0x1190] sm:$0xff]
        %v1044 = vld [vmem:[%s388 + $0x1198] sm:$0xff]
        %v1045 = vld [vmem:[%s388 + $0x11a0] sm:$0xff]
        %v1046 = vld [vmem:[%s388 + $0x11a8] sm:$0xff]
        %v1047 = vld [vmem:[%s388 + $0x11b0] sm:$0xff]
        %v1048 = vld [vmem:[%s388 + $0x11b8] sm:$0xff]
        %v1049 = vld [vmem:[%s388 + $0x11c0] sm:$0xff]
        %v1050 = vld [vmem:[%s388 + $0x11c8] sm:$0xff]
        %v1051 = vld [vmem:[%s388 + $0x11d0] sm:$0xff]
        %v1052 = vld [vmem:[%s388 + $0x11d8] sm:$0xff]
        %v1053 = vld [vmem:[%s388 + $0x11e0] sm:$0xff]
        %v1054 = vld [vmem:[%s388 + $0x11e8] sm:$0xff]
        %v1055 = vld [vmem:[%s388 + $0x11f0] sm:$0xff]
        %v1056 = vld [vmem:[%s388 + $0x11f8] sm:$0xff]
        %v1057 = vld [vmem:[%s388 + $0x1200] sm:$0xff]
        %v1058 = vld [vmem:[%s388 + $0x1208] sm:$0xff]
        %v1059 = vld [vmem:[%s388 + $0x1210] sm:$0xff]
        %v1060 = vld [vmem:[%s388 + $0x1218] sm:$0xff]
        %v1061 = vld [vmem:[%s388 + $0x1220] sm:$0xff]
        %v1062 = vld [vmem:[%s388 + $0x1228] sm:$0xff]
        %v1063 = vld [vmem:[%s388 + $0x1230] sm:$0xff]
        %v1064 = vld [vmem:[%s388 + $0x1238] sm:$0xff]
        %v1065 = vld [vmem:[%s388 + $0x1240] sm:$0xff]
        %v1066 = vld [vmem:[%s388 + $0x1248] sm:$0xff]
        %v1067 = vld [vmem:[%s388 + $0x1250] sm:$0xff]
        %v1068 = vld [vmem:[%s388 + $0x1258] sm:$0xff]
        %v1069 = vld [vmem:[%s388 + $0x1260] sm:$0xff]
        %v1070 = vld [vmem:[%s388 + $0x1268] sm:$0xff]
        %v1071 = vld [vmem:[%s388 + $0x1270] sm:$0xff]
        %v1072 = vld [vmem:[%s388 + $0x1278] sm:$0xff]
        %v1073 = vld [vmem:[%s388 + $0x1280] sm:$0xff]
        %v1074 = vld [vmem:[%s388 + $0x1288] sm:$0xff]
        %v1075 = vld [vmem:[%s388 + $0x1290] sm:$0xff]
        %v1076 = vld [vmem:[%s388 + $0x1298] sm:$0xff]
        %v1077 = vld [vmem:[%s388 + $0x12a0] sm:$0xff]
        %v1078 = vld [vmem:[%s388 + $0x12a8] sm:$0xff]
        %v1079 = vld [vmem:[%s388 + $0x12b0] sm:$0xff]
        %v1080 = vld [vmem:[%s388 + $0x12b8] sm:$0xff]
        %v1081 = vld [vmem:[%s388 + $0x12c0] sm:$0xff]
        %v1082 = vld [vmem:[%s388 + $0x12c8] sm:$0xff]
        %v1083 = vld [vmem:[%s388 + $0x12d0] sm:$0xff]
        %v1084 = vld [vmem:[%s388 + $0x12d8] sm:$0xff]
        %v1085 = vld [vmem:[%s388 + $0x12e0] sm:$0xff]
        %v1086 = vld [vmem:[%s388 + $0x12e8] sm:$0xff]
        %v1087 = vld [vmem:[%s388 + $0x12f0] sm:$0xff]
        %v1088 = vld [vmem:[%s388 + $0x12f8] sm:$0xff]
        %v1089 = vld [vmem:[%s388 + $0x1300] sm:$0xff]
        %v1090 = vld [vmem:[%s388 + $0x1308] sm:$0xff]
        %v1091 = vld [vmem:[%s388 + $0x1310] sm:$0xff]
        %v1092 = vld [vmem:[%s388 + $0x1318] sm:$0xff]
        %v1093 = vld [vmem:[%s388 + $0x1320] sm:$0xff]
        %v1094 = vld [vmem:[%s388 + $0x1328] sm:$0xff]
        %v1095 = vld [vmem:[%s388 + $0x1330] sm:$0xff]
        %v1096 = vld [vmem:[%s388 + $0x1338] sm:$0xff]
        %v1097 = vld [vmem:[%s388 + $0x1340] sm:$0xff]
        %v1098 = vld [vmem:[%s388 + $0x1348] sm:$0xff]
        %v1099 = vld [vmem:[%s388 + $0x1350] sm:$0xff]
        %v1100 = vld [vmem:[%s388 + $0x1358] sm:$0xff]
        %v1101 = vld [vmem:[%s388 + $0x1360] sm:$0xff]
        %v1102 = vld [vmem:[%s388 + $0x1368] sm:$0xff]
        %v1103 = vld [vmem:[%s388 + $0x1370] sm:$0xff]
        %v1104 = vld [vmem:[%s388 + $0x1378] sm:$0xff]
        %v1105 = vld [vmem:[%s388 + $0x1380] sm:$0xff]
        %v1106 = vld [vmem:[%s388 + $0x1388] sm:$0xff]
        %v1107 = vld [vmem:[%s388 + $0x1390] sm:$0xff]
        %v1108 = vld [vmem:[%s388 + $0x1398] sm:$0xff]
        %v1109 = vld [vmem:[%s388 + $0x13a0] sm:$0xff]
        %v1110 = vld [vmem:[%s388 + $0x13a8] sm:$0xff]
        %v1111 = vld [vmem:[%s388 + $0x13b0] sm:$0xff]
        %v1112 = vld [vmem:[%s388 + $0x13b8] sm:$0xff]
        %v1113 = vld [vmem:[%s388 + $0x13c0] sm:$0xff]
        %v1114 = vld [vmem:[%s388 + $0x13c8] sm:$0xff]
        %v1115 = vld [vmem:[%s388 + $0x13d0] sm:$0xff]
        %v1116 = vld [vmem:[%s388 + $0x13d8] sm:$0xff]
        %v1117 = vld [vmem:[%s388 + $0x13e0] sm:$0xff]
        %v1118 = vld [vmem:[%s388 + $0x13e8] sm:$0xff]
        %v1119 = vld [vmem:[%s388 + $0x13f0] sm:$0xff]
        %v1120 = vld [vmem:[%s388 + $0x13f8] sm:$0xff]
        %v1121 = vld [vmem:[%s388 + $0x1400] sm:$0xff]
        %v1122 = vld [vmem:[%s388 + $0x1408] sm:$0xff]
        %v1123 = vld [vmem:[%s388 + $0x1410] sm:$0xff]
        %v1124 = vld [vmem:[%s388 + $0x1418] sm:$0xff]
        %v1125 = vld [vmem:[%s388 + $0x1420] sm:$0xff]
        %v1126 = vld [vmem:[%s388 + $0x1428] sm:$0xff]
        %v1127 = vld [vmem:[%s388 + $0x1430] sm:$0xff]
        %v1128 = vld [vmem:[%s388 + $0x1438] sm:$0xff]
        %v1129 = vld [vmem:[%s388 + $0x1440] sm:$0xff]
        %v1130 = vld [vmem:[%s388 + $0x1448] sm:$0xff]
        %v1131 = vld [vmem:[%s388 + $0x1450] sm:$0xff]
        %v1132 = vld [vmem:[%s388 + $0x1458] sm:$0xff]
        %v1133 = vld [vmem:[%s388 + $0x1460] sm:$0xff]
        %v1134 = vld [vmem:[%s388 + $0x1468] sm:$0xff]
        %v1135 = vld [vmem:[%s388 + $0x1470] sm:$0xff]
        %v1136 = vld [vmem:[%s388 + $0x1478] sm:$0xff]
        %v1137 = vld [vmem:[%s388 + $0x1480] sm:$0xff]
        %v1138 = vld [vmem:[%s388 + $0x1488] sm:$0xff]
        %v1139 = vld [vmem:[%s388 + $0x1490] sm:$0xff]
        %v1140 = vld [vmem:[%s388 + $0x1498] sm:$0xff]
        %v1141 = vld [vmem:[%s388 + $0x14a0] sm:$0xff]
        %v1142 = vld [vmem:[%s388 + $0x14a8] sm:$0xff]
        %v1143 = vld [vmem:[%s388 + $0x14b0] sm:$0xff]
        %v1144 = vld [vmem:[%s388 + $0x14b8] sm:$0xff]
        %v1145 = vld [vmem:[%s388 + $0x14c0] sm:$0xff]
        %v1146 = vld [vmem:[%s388 + $0x14c8] sm:$0xff]
        %v1147 = vld [vmem:[%s388 + $0x14d0] sm:$0xff]
        %v1148 = vld [vmem:[%s388 + $0x14d8] sm:$0xff]
        %v1149 = vld [vmem:[%s388 + $0x14e0] sm:$0xff]
        %v1150 = vld [vmem:[%s388 + $0x14e8] sm:$0xff]
        %v1151 = vld [vmem:[%s388 + $0x14f0] sm:$0xff]
        %v1152 = vld [vmem:[%s388 + $0x14f8] sm:$0xff]
        %v1153 = vld [vmem:[%s388 + $0x1500] sm:$0xff]
        %v1154 = vld [vmem:[%s388 + $0x1508] sm:$0xff]
        %v1155 = vld [vmem:[%s388 + $0x1510] sm:$0xff]
        %v1156 = vld [vmem:[%s388 + $0x1518] sm:$0xff]
        %v1157 = vld [vmem:[%s388 + $0x1520] sm:$0xff]
        %v1158 = vld [vmem:[%s388 + $0x1528] sm:$0xff]
        %v1159 = vld [vmem:[%s388 + $0x1530] sm:$0xff]
        %v1160 = vld [vmem:[%s388 + $0x1538] sm:$0xff]
        %v1161 = vld [vmem:[%s388 + $0x1540] sm:$0xff]
        %v1162 = vld [vmem:[%s388 + $0x1548] sm:$0xff]
        %v1163 = vld [vmem:[%s388 + $0x1550] sm:$0xff]
        %v1164 = vld [vmem:[%s388 + $0x1558] sm:$0xff]
        %v1165 = vld [vmem:[%s388 + $0x1560] sm:$0xff]
        %v1166 = vld [vmem:[%s388 + $0x1568] sm:$0xff]
        %v1167 = vld [vmem:[%s388 + $0x1570] sm:$0xff]
        %v1168 = vld [vmem:[%s388 + $0x1578] sm:$0xff]
        %v1169 = vld [vmem:[%s388 + $0x1580] sm:$0xff]
        %v1170 = vld [vmem:[%s388 + $0x1588] sm:$0xff]
        %v1171 = vld [vmem:[%s388 + $0x1590] sm:$0xff]
        %v1172 = vld [vmem:[%s388 + $0x1598] sm:$0xff]
        %v1173 = vld [vmem:[%s388 + $0x15a0] sm:$0xff]
        %v1174 = vld [vmem:[%s388 + $0x15a8] sm:$0xff]
        %v1175 = vld [vmem:[%s388 + $0x15b0] sm:$0xff]
        %v1176 = vld [vmem:[%s388 + $0x15b8] sm:$0xff]
        %v1177 = vld [vmem:[%s388 + $0x15c0] sm:$0xff]
        %v1178 = vld [vmem:[%s388 + $0x15c8] sm:$0xff]
        %v1179 = vld [vmem:[%s388 + $0x15d0] sm:$0xff]
        %v1180 = vld [vmem:[%s388 + $0x15d8] sm:$0xff]
        %v1181 = vld [vmem:[%s388 + $0x15e0] sm:$0xff]
        %v1182 = vld [vmem:[%s388 + $0x15e8] sm:$0xff]
        %v1183 = vld [vmem:[%s388 + $0x15f0] sm:$0xff]
        %v1184 = vld [vmem:[%s388 + $0x15f8] sm:$0xff]
        %v1185 = vld [vmem:[%s388 + $0x1600] sm:$0xff]
        %v1186 = vld [vmem:[%s388 + $0x1608] sm:$0xff]
        %v1187 = vld [vmem:[%s388 + $0x1610] sm:$0xff]
        %v1188 = vld [vmem:[%s388 + $0x1618] sm:$0xff]
        %v1189 = vld [vmem:[%s388 + $0x1620] sm:$0xff]
        %v1190 = vld [vmem:[%s388 + $0x1628] sm:$0xff]
        %v1191 = vld [vmem:[%s388 + $0x1630] sm:$0xff]
        %v1192 = vld [vmem:[%s388 + $0x1638] sm:$0xff]
        %v1193 = vld [vmem:[%s388 + $0x1640] sm:$0xff]
        %v1194 = vld [vmem:[%s388 + $0x1648] sm:$0xff]
        %v1195 = vld [vmem:[%s388 + $0x1650] sm:$0xff]
        %v1196 = vld [vmem:[%s388 + $0x1658] sm:$0xff]
        %v1197 = vld [vmem:[%s388 + $0x1660] sm:$0xff]
        %v1198 = vld [vmem:[%s388 + $0x1668] sm:$0xff]
        %v1199 = vld [vmem:[%s388 + $0x1670] sm:$0xff]
        %v1200 = vld [vmem:[%s388 + $0x1678] sm:$0xff]
        %v1201 = vld [vmem:[%s388 + $0x1680] sm:$0xff]
        %v1202 = vld [vmem:[%s388 + $0x1688] sm:$0xff]
        %v1203 = vld [vmem:[%s388 + $0x1690] sm:$0xff]
        %v1204 = vld [vmem:[%s388 + $0x1698] sm:$0xff]
        %v1205 = vld [vmem:[%s388 + $0x16a0] sm:$0xff]
        %v1206 = vld [vmem:[%s388 + $0x16a8] sm:$0xff]
        %v1207 = vld [vmem:[%s388 + $0x16b0] sm:$0xff]
        %v1208 = vld [vmem:[%s388 + $0x16b8] sm:$0xff]
        %v1209 = vld [vmem:[%s388 + $0x16c0] sm:$0xff]
        %v1210 = vld [vmem:[%s388 + $0x16c8] sm:$0xff]
        %v1211 = vld [vmem:[%s388 + $0x16d0] sm:$0xff]
        %v1212 = vld [vmem:[%s388 + $0x16d8] sm:$0xff]
        %v1213 = vld [vmem:[%s388 + $0x16e0] sm:$0xff]
        %v1214 = vld [vmem:[%s388 + $0x16e8] sm:$0xff]
        %v1215 = vld [vmem:[%s388 + $0x16f0] sm:$0xff]
        %v1216 = vld [vmem:[%s388 + $0x16f8] sm:$0xff]
        %v1217 = vld [vmem:[%s388 + $0x1700] sm:$0xff]
        %v1218 = vld [vmem:[%s388 + $0x1708] sm:$0xff]
        %v1219 = vld [vmem:[%s388 + $0x1710] sm:$0xff]
        %v1220 = vld [vmem:[%s388 + $0x1718] sm:$0xff]
        %v1221 = vld [vmem:[%s388 + $0x1720] sm:$0xff]
        %v1222 = vld [vmem:[%s388 + $0x1728] sm:$0xff]
        %v1223 = vld [vmem:[%s388 + $0x1730] sm:$0xff]
        %v1224 = vld [vmem:[%s388 + $0x1738] sm:$0xff]
        %v1225 = vld [vmem:[%s388 + $0x1740] sm:$0xff]
        %v1226 = vld [vmem:[%s388 + $0x1748] sm:$0xff]
        %v1227 = vld [vmem:[%s388 + $0x1750] sm:$0xff]
        %v1228 = vld [vmem:[%s388 + $0x1758] sm:$0xff]
        %v1229 = vld [vmem:[%s388 + $0x1760] sm:$0xff]
        %v1230 = vld [vmem:[%s388 + $0x1768] sm:$0xff]
        %v1231 = vld [vmem:[%s388 + $0x1770] sm:$0xff]
        %v1232 = vld [vmem:[%s388 + $0x1778] sm:$0xff]
        %v1233 = vld [vmem:[%s388 + $0x1780] sm:$0xff]
        %v1234 = vld [vmem:[%s388 + $0x1788] sm:$0xff]
        %v1235 = vld [vmem:[%s388 + $0x1790] sm:$0xff]
        %v1236 = vld [vmem:[%s388 + $0x1798] sm:$0xff]
        %v1237 = vld [vmem:[%s388 + $0x17a0] sm:$0xff]
        %v1238 = vld [vmem:[%s388 + $0x17a8] sm:$0xff]
        %v1239 = vld [vmem:[%s388 + $0x17b0] sm:$0xff]
        %v1240 = vld [vmem:[%s388 + $0x17b8] sm:$0xff]
        %v1241 = vld [vmem:[%s388 + $0x17c0] sm:$0xff]
        %v1242 = vld [vmem:[%s388 + $0x17c8] sm:$0xff]
        %v1243 = vld [vmem:[%s388 + $0x17d0] sm:$0xff]
        %v1244 = vld [vmem:[%s388 + $0x17d8] sm:$0xff]
        %v1245 = vld [vmem:[%s388 + $0x17e0] sm:$0xff]
        %v1246 = vld [vmem:[%s388 + $0x17e8] sm:$0xff]
        %v1247 = vld [vmem:[%s388 + $0x17f0] sm:$0xff]
        %v1248 = vld [vmem:[%s388 + $0x17f8] sm:$0xff]
        %v1249 = vld [vmem:[%s388 + $0x1800] sm:$0xff]
        %v1250 = vld [vmem:[%s388 + $0x1808] sm:$0xff]
        %v1251 = vld [vmem:[%s388 + $0x1810] sm:$0xff]
        %v1252 = vld [vmem:[%s388 + $0x1818] sm:$0xff]
        %v1253 = vld [vmem:[%s388 + $0x1820] sm:$0xff]
        %v1254 = vld [vmem:[%s388 + $0x1828] sm:$0xff]
        %v1255 = vld [vmem:[%s388 + $0x1830] sm:$0xff]
        %v1256 = vld [vmem:[%s388 + $0x1838] sm:$0xff]
        %v1257 = vld [vmem:[%s388 + $0x1840] sm:$0xff]
        %v1258 = vld [vmem:[%s388 + $0x1848] sm:$0xff]
        %v1259 = vld [vmem:[%s388 + $0x1850] sm:$0xff]
        %v1260 = vld [vmem:[%s388 + $0x1858] sm:$0xff]
        %v1261 = vld [vmem:[%s388 + $0x1860] sm:$0xff]
        %v1262 = vld [vmem:[%s388 + $0x1868] sm:$0xff]
        %v1263 = vld [vmem:[%s388 + $0x1870] sm:$0xff]
        %v1264 = vld [vmem:[%s388 + $0x1878] sm:$0xff]
        %v1265 = vld [vmem:[%s388 + $0x1880] sm:$0xff]
        %v1266 = vld [vmem:[%s388 + $0x1888] sm:$0xff]
        %v1267 = vld [vmem:[%s388 + $0x1890] sm:$0xff]
        %v1268 = vld [vmem:[%s388 + $0x1898] sm:$0xff]
        %v1269 = vld [vmem:[%s388 + $0x18a0] sm:$0xff]
        %v1270 = vld [vmem:[%s388 + $0x18a8] sm:$0xff]
        %v1271 = vld [vmem:[%s388 + $0x18b0] sm:$0xff]
        %v1272 = vld [vmem:[%s388 + $0x18b8] sm:$0xff]
        %v1273 = vld [vmem:[%s388 + $0x18c0] sm:$0xff]
        %v1274 = vld [vmem:[%s388 + $0x18c8] sm:$0xff]
        %v1275 = vld [vmem:[%s388 + $0x18d0] sm:$0xff]
        %v1276 = vld [vmem:[%s388 + $0x18d8] sm:$0xff]
        %v1277 = vld [vmem:[%s388 + $0x18e0] sm:$0xff]
        %v1278 = vld [vmem:[%s388 + $0x18e8] sm:$0xff]
        %v1279 = vld [vmem:[%s388 + $0x18f0] sm:$0xff]
        %v1280 = vld [vmem:[%s388 + $0x18f8] sm:$0xff]
        %v1281 = vld [vmem:[%s388 + $0x1900] sm:$0xff]
        %v1282 = vld [vmem:[%s388 + $0x1908] sm:$0xff]
        %v1283 = vld [vmem:[%s388 + $0x1910] sm:$0xff]
        %v1284 = vld [vmem:[%s388 + $0x1918] sm:$0xff]
        %v1285 = vld [vmem:[%s388 + $0x1920] sm:$0xff]
        %v1286 = vld [vmem:[%s388 + $0x1928] sm:$0xff]
        %v1287 = vld [vmem:[%s388 + $0x1930] sm:$0xff]
        %v1288 = vld [vmem:[%s388 + $0x1938] sm:$0xff]
        %v1289 = vld [vmem:[%s388 + $0x1940] sm:$0xff]
        %v1290 = vld [vmem:[%s388 + $0x1948] sm:$0xff]
        %v1291 = vld [vmem:[%s388 + $0x1950] sm:$0xff]
        %v1292 = vld [vmem:[%s388 + $0x1958] sm:$0xff]
        %v1293 = vld [vmem:[%s388 + $0x1960] sm:$0xff]
        %v1294 = vld [vmem:[%s388 + $0x1968] sm:$0xff]
        %v1295 = vld [vmem:[%s388 + $0x1970] sm:$0xff]
        %v1296 = vld [vmem:[%s388 + $0x1978] sm:$0xff]
        %v1297 = vld [vmem:[%s388 + $0x1980] sm:$0xff]
        %v1298 = vld [vmem:[%s388 + $0x1988] sm:$0xff]
        %v1299 = vld [vmem:[%s388 + $0x1990] sm:$0xff]
        %v1300 = vld [vmem:[%s388 + $0x1998] sm:$0xff]
        %v1301 = vld [vmem:[%s388 + $0x19a0] sm:$0xff]
        %v1302 = vld [vmem:[%s388 + $0x19a8] sm:$0xff]
        %v1303 = vld [vmem:[%s388 + $0x19b0] sm:$0xff]
        %v1304 = vld [vmem:[%s388 + $0x19b8] sm:$0xff]
        %v1305 = vld [vmem:[%s388 + $0x19c0] sm:$0xff]
        %v1306 = vld [vmem:[%s388 + $0x19c8] sm:$0xff]
        %v1307 = vld [vmem:[%s388 + $0x19d0] sm:$0xff]
        %v1308 = vld [vmem:[%s388 + $0x19d8] sm:$0xff]
        %v1309 = vld [vmem:[%s388 + $0x19e0] sm:$0xff]
        %v1310 = vld [vmem:[%s388 + $0x19e8] sm:$0xff]
        %v1311 = vld [vmem:[%s388 + $0x19f0] sm:$0xff]
        %v1312 = vld [vmem:[%s388 + $0x19f8] sm:$0xff]
        %v1313 = vld [vmem:[%s388 + $0x1a00] sm:$0xff]
        %v1314 = vld [vmem:[%s388 + $0x1a08] sm:$0xff]
        %v1315 = vld [vmem:[%s388 + $0x1a10] sm:$0xff]
        %v1316 = vld [vmem:[%s388 + $0x1a18] sm:$0xff]
        %v1317 = vld [vmem:[%s388 + $0x1a20] sm:$0xff]
        %v1318 = vld [vmem:[%s388 + $0x1a28] sm:$0xff]
        %v1319 = vld [vmem:[%s388 + $0x1a30] sm:$0xff]
        %v1320 = vld [vmem:[%s388 + $0x1a38] sm:$0xff]
        %v1321 = vld [vmem:[%s388 + $0x1a40] sm:$0xff]
        %v1322 = vld [vmem:[%s388 + $0x1a48] sm:$0xff]
        %v1323 = vld [vmem:[%s388 + $0x1a50] sm:$0xff]
        %v1324 = vld [vmem:[%s388 + $0x1a58] sm:$0xff]
        %v1325 = vld [vmem:[%s388 + $0x1a60] sm:$0xff]
        %v1326 = vld [vmem:[%s388 + $0x1a68] sm:$0xff]
        %v1327 = vld [vmem:[%s388 + $0x1a70] sm:$0xff]
        %v1328 = vld [vmem:[%s388 + $0x1a78] sm:$0xff]
        %v1329 = vld [vmem:[%s388 + $0x1a80] sm:$0xff]
        %v1330 = vld [vmem:[%s388 + $0x1a88] sm:$0xff]
        %v1331 = vld [vmem:[%s388 + $0x1a90] sm:$0xff]
        %v1332 = vld [vmem:[%s388 + $0x1a98] sm:$0xff]
        %v1333 = vld [vmem:[%s388 + $0x1aa0] sm:$0xff]
        %v1334 = vld [vmem:[%s388 + $0x1aa8] sm:$0xff]
        %v1335 = vld [vmem:[%s388 + $0x1ab0] sm:$0xff]
        %v1336 = vld [vmem:[%s388 + $0x1ab8] sm:$0xff]
        %v1337 = vld [vmem:[%s388 + $0x1ac0] sm:$0xff]
        %v1338 = vld [vmem:[%s388 + $0x1ac8] sm:$0xff]
        %v1339 = vld [vmem:[%s388 + $0x1ad0] sm:$0xff]
        %v1340 = vld [vmem:[%s388 + $0x1ad8] sm:$0xff]
        %v1341 = vld [vmem:[%s388 + $0x1ae0] sm:$0xff]
        %v1342 = vld [vmem:[%s388 + $0x1ae8] sm:$0xff]
        %v1343 = vld [vmem:[%s388 + $0x1af0] sm:$0xff]
        %v1344 = vld [vmem:[%s388 + $0x1af8] sm:$0xff]
        %v1345 = vld [vmem:[%s388 + $0x1b00] sm:$0xff]
        %v1346 = vld [vmem:[%s388 + $0x1b08] sm:$0xff]
        %v1347 = vld [vmem:[%s388 + $0x1b10] sm:$0xff]
        %v1348 = vld [vmem:[%s388 + $0x1b18] sm:$0xff]
        %v1349 = vld [vmem:[%s388 + $0x1b20] sm:$0xff]
        %v1350 = vld [vmem:[%s388 + $0x1b28] sm:$0xff]
        %v1351 = vld [vmem:[%s388 + $0x1b30] sm:$0xff]
        %v1352 = vld [vmem:[%s388 + $0x1b38] sm:$0xff]
        %v1353 = vld [vmem:[%s388 + $0x1b40] sm:$0xff]
        %v1354 = vld [vmem:[%s388 + $0x1b48] sm:$0xff]
        %v1355 = vld [vmem:[%s388 + $0x1b50] sm:$0xff]
        %v1356 = vld [vmem:[%s388 + $0x1b58] sm:$0xff]
        %v1357 = vld [vmem:[%s388 + $0x1b60] sm:$0xff]
        %v1358 = vld [vmem:[%s388 + $0x1b68] sm:$0xff]
        %v1359 = vld [vmem:[%s388 + $0x1b70] sm:$0xff]
        %v1360 = vld [vmem:[%s388 + $0x1b78] sm:$0xff]
        %v1361 = vld [vmem:[%s388 + $0x1b80] sm:$0xff]
        %v1362 = vld [vmem:[%s388 + $0x1b88] sm:$0xff]
        %v1363 = vld [vmem:[%s388 + $0x1b90] sm:$0xff]
        %v1364 = vld [vmem:[%s388 + $0x1b98] sm:$0xff]
        %v1365 = vld [vmem:[%s388 + $0x1ba0] sm:$0xff]
        %v1366 = vld [vmem:[%s388 + $0x1ba8] sm:$0xff]
        %v1367 = vld [vmem:[%s388 + $0x1bb0] sm:$0xff]
        %v1368 = vld [vmem:[%s388 + $0x1bb8] sm:$0xff]
        %v1369 = vld [vmem:[%s388 + $0x1bc0] sm:$0xff]
        %v1370 = vld [vmem:[%s388 + $0x1bc8] sm:$0xff]
        %v1371 = vld [vmem:[%s388 + $0x1bd0] sm:$0xff]
        %v1372 = vld [vmem:[%s388 + $0x1bd8] sm:$0xff]
        %v1373 = vld [vmem:[%s388 + $0x1be0] sm:$0xff]
        %v1374 = vld [vmem:[%s388 + $0x1be8] sm:$0xff]
        %v1375 = vld [vmem:[%s388 + $0x1bf0] sm:$0xff]
        %v1376 = vld [vmem:[%s388 + $0x1bf8] sm:$0xff]
        %v1377 = vld [vmem:[%s388 + $0x1c00] sm:$0xff]
        %v1378 = vld [vmem:[%s388 + $0x1c08] sm:$0xff]
        %v1379 = vld [vmem:[%s388 + $0x1c10] sm:$0xff]
        %v1380 = vld [vmem:[%s388 + $0x1c18] sm:$0xff]
        %v1381 = vld [vmem:[%s388 + $0x1c20] sm:$0xff]
        %v1382 = vld [vmem:[%s388 + $0x1c28] sm:$0xff]
        %v1383 = vld [vmem:[%s388 + $0x1c30] sm:$0xff]
        %v1384 = vld [vmem:[%s388 + $0x1c38] sm:$0xff]
        %v1385 = vld [vmem:[%s388 + $0x1c40] sm:$0xff]
        %v1386 = vld [vmem:[%s388 + $0x1c48] sm:$0xff]
        %v1387 = vld [vmem:[%s388 + $0x1c50] sm:$0xff]
        %v1388 = vld [vmem:[%s388 + $0x1c58] sm:$0xff]
        %v1389 = vld [vmem:[%s388 + $0x1c60] sm:$0xff]
        %v1390 = vld [vmem:[%s388 + $0x1c68] sm:$0xff]
        %v1391 = vld [vmem:[%s388 + $0x1c70] sm:$0xff]
        %v1392 = vld [vmem:[%s388 + $0x1c78] sm:$0xff]
        %v1393 = vld [vmem:[%s388 + $0x1c80] sm:$0xff]
        %v1394 = vld [vmem:[%s388 + $0x1c88] sm:$0xff]
        %v1395 = vld [vmem:[%s388 + $0x1c90] sm:$0xff]
        %v1396 = vld [vmem:[%s388 + $0x1c98] sm:$0xff]
        %v1397 = vld [vmem:[%s388 + $0x1ca0] sm:$0xff]
        %v1398 = vld [vmem:[%s388 + $0x1ca8] sm:$0xff]
        %v1399 = vld [vmem:[%s388 + $0x1cb0] sm:$0xff]
        %v1400 = vld [vmem:[%s388 + $0x1cb8] sm:$0xff]
        %v1401 = vld [vmem:[%s388 + $0x1cc0] sm:$0xff]
        %v1402 = vld [vmem:[%s388 + $0x1cc8] sm:$0xff]
        %v1403 = vld [vmem:[%s388 + $0x1cd0] sm:$0xff]
        %v1404 = vld [vmem:[%s388 + $0x1cd8] sm:$0xff]
        %v1405 = vld [vmem:[%s388 + $0x1ce0] sm:$0xff]
        %v1406 = vld [vmem:[%s388 + $0x1ce8] sm:$0xff]
        %v1407 = vld [vmem:[%s388 + $0x1cf0] sm:$0xff]
        %v1408 = vld [vmem:[%s388 + $0x1cf8] sm:$0xff]
        %v1409 = vld [vmem:[%s388 + $0x1d00] sm:$0xff]
        %v1410 = vld [vmem:[%s388 + $0x1d08] sm:$0xff]
        %v1411 = vld [vmem:[%s388 + $0x1d10] sm:$0xff]
        %v1412 = vld [vmem:[%s388 + $0x1d18] sm:$0xff]
        %v1413 = vld [vmem:[%s388 + $0x1d20] sm:$0xff]
        %v1414 = vld [vmem:[%s388 + $0x1d28] sm:$0xff]
        %v1415 = vld [vmem:[%s388 + $0x1d30] sm:$0xff]
        %v1416 = vld [vmem:[%s388 + $0x1d38] sm:$0xff]
        %v1417 = vld [vmem:[%s388 + $0x1d40] sm:$0xff]
        %v1418 = vld [vmem:[%s388 + $0x1d48] sm:$0xff]
        %v1419 = vld [vmem:[%s388 + $0x1d50] sm:$0xff]
        %v1420 = vld [vmem:[%s388 + $0x1d58] sm:$0xff]
        %v1421 = vld [vmem:[%s388 + $0x1d60] sm:$0xff]
        %v1422 = vld [vmem:[%s388 + $0x1d68] sm:$0xff]
        %v1423 = vld [vmem:[%s388 + $0x1d70] sm:$0xff]
        %v1424 = vld [vmem:[%s388 + $0x1d78] sm:$0xff]
        %v1425 = vld [vmem:[%s388 + $0x1d80] sm:$0xff]
        %v1426 = vld [vmem:[%s388 + $0x1d88] sm:$0xff]
        %v1427 = vld [vmem:[%s388 + $0x1d90] sm:$0xff]
        %v1428 = vld [vmem:[%s388 + $0x1d98] sm:$0xff]
        %v1429 = vld [vmem:[%s388 + $0x1da0] sm:$0xff]
        %v1430 = vld [vmem:[%s388 + $0x1da8] sm:$0xff]
        %v1431 = vld [vmem:[%s388 + $0x1db0] sm:$0xff]
        %v1432 = vld [vmem:[%s388 + $0x1db8] sm:$0xff]
        %v1433 = vld [vmem:[%s388 + $0x1dc0] sm:$0xff]
        %v1434 = vld [vmem:[%s388 + $0x1dc8] sm:$0xff]
        %v1435 = vld [vmem:[%s388 + $0x1dd0] sm:$0xff]
        %v1436 = vld [vmem:[%s388 + $0x1dd8] sm:$0xff]
        %v1437 = vld [vmem:[%s388 + $0x1de0] sm:$0xff]
        %v1438 = vld [vmem:[%s388 + $0x1de8] sm:$0xff]
        %v1439 = vld [vmem:[%s388 + $0x1df0] sm:$0xff]
        %v1440 = vld [vmem:[%s388 + $0x1df8] sm:$0xff]
        %v1441 = vld [vmem:[%s388 + $0x1e00] sm:$0xff]
        %v1442 = vld [vmem:[%s388 + $0x1e08] sm:$0xff]
        %v1443 = vld [vmem:[%s388 + $0x1e10] sm:$0xff]
        %v1444 = vld [vmem:[%s388 + $0x1e18] sm:$0xff]
        %v1445 = vld [vmem:[%s388 + $0x1e20] sm:$0xff]
        %v1446 = vld [vmem:[%s388 + $0x1e28] sm:$0xff]
        %v1447 = vld [vmem:[%s388 + $0x1e30] sm:$0xff]
        %v1448 = vld [vmem:[%s388 + $0x1e38] sm:$0xff]
        %v1449 = vld [vmem:[%s388 + $0x1e40] sm:$0xff]
        %v1450 = vld [vmem:[%s388 + $0x1e48] sm:$0xff]
        %v1451 = vld [vmem:[%s388 + $0x1e50] sm:$0xff]
        %v1452 = vld [vmem:[%s388 + $0x1e58] sm:$0xff]
        %v1453 = vld [vmem:[%s388 + $0x1e60] sm:$0xff]
        %v1454 = vld [vmem:[%s388 + $0x1e68] sm:$0xff]
        %v1455 = vld [vmem:[%s388 + $0x1e70] sm:$0xff]
        %v1456 = vld [vmem:[%s388 + $0x1e78] sm:$0xff]
        %v1457 = vld [vmem:[%s388 + $0x1e80] sm:$0xff]
        %v1458 = vld [vmem:[%s388 + $0x1e88] sm:$0xff]
        %v1459 = vld [vmem:[%s388 + $0x1e90] sm:$0xff]
        %v1460 = vld [vmem:[%s388 + $0x1e98] sm:$0xff]
        %v1461 = vld [vmem:[%s388 + $0x1ea0] sm:$0xff]
        %v1462 = vld [vmem:[%s388 + $0x1ea8] sm:$0xff]
        %v1463 = vld [vmem:[%s388 + $0x1eb0] sm:$0xff]
        %v1464 = vld [vmem:[%s388 + $0x1eb8] sm:$0xff]
        %v1465 = vld [vmem:[%s388 + $0x1ec0] sm:$0xff]
        %v1466 = vld [vmem:[%s388 + $0x1ec8] sm:$0xff]
        %v1467 = vld [vmem:[%s388 + $0x1ed0] sm:$0xff]
        %v1468 = vld [vmem:[%s388 + $0x1ed8] sm:$0xff]
        %v1469 = vld [vmem:[%s388 + $0x1ee0] sm:$0xff]
        %v1470 = vld [vmem:[%s388 + $0x1ee8] sm:$0xff]
        %v1471 = vld [vmem:[%s388 + $0x1ef0] sm:$0xff]
        %v1472 = vld [vmem:[%s388 + $0x1ef8] sm:$0xff]
        %v1473 = vld [vmem:[%s388 + $0x1f00] sm:$0xff]
        %v1474 = vld [vmem:[%s388 + $0x1f08] sm:$0xff]
        %v1475 = vld [vmem:[%s388 + $0x1f10] sm:$0xff]
        %v1476 = vld [vmem:[%s388 + $0x1f18] sm:$0xff]
        %v1477 = vld [vmem:[%s388 + $0x1f20] sm:$0xff]
        %v1478 = vld [vmem:[%s388 + $0x1f28] sm:$0xff]
        %v1479 = vld [vmem:[%s388 + $0x1f30] sm:$0xff]
        %v1480 = vld [vmem:[%s388 + $0x1f38] sm:$0xff]
        %v1481 = vld [vmem:[%s388 + $0x1f40] sm:$0xff]
        %v1482 = vld [vmem:[%s388 + $0x1f48] sm:$0xff]
        %v1483 = vld [vmem:[%s388 + $0x1f50] sm:$0xff]
        %v1484 = vld [vmem:[%s388 + $0x1f58] sm:$0xff]
        %v1485 = vld [vmem:[%s388 + $0x1f60] sm:$0xff]
        %v1486 = vld [vmem:[%s388 + $0x1f68] sm:$0xff]
        %v1487 = vld [vmem:[%s388 + $0x1f70] sm:$0xff]
        %v1488 = vld [vmem:[%s388 + $0x1f78] sm:$0xff]
        %v1489 = vld [vmem:[%s388 + $0x1f80] sm:$0xff]
        %v1490 = vld [vmem:[%s388 + $0x1f88] sm:$0xff]
        %v1491 = vld [vmem:[%s388 + $0x1f90] sm:$0xff]
        %v1492 = vld [vmem:[%s388 + $0x1f98] sm:$0xff]
        %v1493 = vld [vmem:[%s388 + $0x1fa0] sm:$0xff]
        %v1494 = vld [vmem:[%s388 + $0x1fa8] sm:$0xff]
        %v1495 = vld [vmem:[%s388 + $0x1fb0] sm:$0xff]
        %v1496 = vld [vmem:[%s388 + $0x1fb8] sm:$0xff]
        %v1497 = vld [vmem:[%s388 + $0x1fc0] sm:$0xff]
        %v1498 = vld [vmem:[%s388 + $0x1fc8] sm:$0xff]
        %v1499 = vld [vmem:[%s388 + $0x1fd0] sm:$0xff]
        %v1500 = vld [vmem:[%s388 + $0x1fd8] sm:$0xff]
        %v1501 = vld [vmem:[%s388 + $0x1fe0] sm:$0xff]
        %v1502 = vld [vmem:[%s388 + $0x1fe8] sm:$0xff]
        %v1503 = vld [vmem:[%s388 + $0x1ff0] sm:$0xff]
        %v1504 = vld [vmem:[%s388 + $0x1ff8] sm:$0xff]
        %v1505 = vunpack.c.l.s8.bf16 %v481
        %v1506 = vunpack.c.l.s8.bf16 %v482
        %v1507 = vunpack.c.l.s8.bf16 %v483
        %v1508 = vunpack.c.l.s8.bf16 %v484
        %v1509 = vunpack.c.l.s8.bf16 %v485
        %v1510 = vunpack.c.l.s8.bf16 %v486
        %v1511 = vunpack.c.l.s8.bf16 %v487
        %v1512 = vunpack.c.l.s8.bf16 %v488
        %v1513 = vunpack.c.h.s8.bf16 %v481
        %v1514 = vunpack.c.h.s8.bf16 %v482
        %v1515 = vunpack.c.h.s8.bf16 %v483
        %v1516 = vunpack.c.h.s8.bf16 %v484
        %v1517 = vunpack.c.h.s8.bf16 %v485
        %v1518 = vunpack.c.h.s8.bf16 %v486
        %v1519 = vunpack.c.h.s8.bf16 %v487
        %v1520 = vunpack.c.h.s8.bf16 %v488
        %v1521 = vunpack.c.l.s8.bf16 %v489
        %v1522 = vunpack.c.l.s8.bf16 %v490
        %v1523 = vunpack.c.l.s8.bf16 %v491
        %v1524 = vunpack.c.l.s8.bf16 %v492
        %v1525 = vunpack.c.l.s8.bf16 %v493
        %v1526 = vunpack.c.l.s8.bf16 %v494
        %v1527 = vunpack.c.l.s8.bf16 %v495
        %v1528 = vunpack.c.l.s8.bf16 %v496
        %v1529 = vunpack.c.h.s8.bf16 %v489
        %v1530 = vunpack.c.h.s8.bf16 %v490
        %v1531 = vunpack.c.h.s8.bf16 %v491
        %v1532 = vunpack.c.h.s8.bf16 %v492
        %v1533 = vunpack.c.h.s8.bf16 %v493
        %v1534 = vunpack.c.h.s8.bf16 %v494
        %v1535 = vunpack.c.h.s8.bf16 %v495
        %v1536 = vunpack.c.h.s8.bf16 %v496
        %v1537 = vunpack.c.l.s8.bf16 %v497
        %v1538 = vunpack.c.l.s8.bf16 %v498
        %v1539 = vunpack.c.l.s8.bf16 %v499
        %v1540 = vunpack.c.l.s8.bf16 %v500
        %v1541 = vunpack.c.l.s8.bf16 %v501
        %v1542 = vunpack.c.l.s8.bf16 %v502
        %v1543 = vunpack.c.l.s8.bf16 %v503
        %v1544 = vunpack.c.l.s8.bf16 %v504
        %v1545 = vunpack.c.h.s8.bf16 %v497
        %v1546 = vunpack.c.h.s8.bf16 %v498
        %v1547 = vunpack.c.h.s8.bf16 %v499
        %v1548 = vunpack.c.h.s8.bf16 %v500
        %v1549 = vunpack.c.h.s8.bf16 %v501
        %v1550 = vunpack.c.h.s8.bf16 %v502
        %v1551 = vunpack.c.h.s8.bf16 %v503
        %v1552 = vunpack.c.h.s8.bf16 %v504
        %v1553 = vunpack.c.l.s8.bf16 %v505
        %v1554 = vunpack.c.l.s8.bf16 %v506
        %v1555 = vunpack.c.l.s8.bf16 %v507
        %v1556 = vunpack.c.l.s8.bf16 %v508
        %v1557 = vunpack.c.l.s8.bf16 %v509
        %v1558 = vunpack.c.l.s8.bf16 %v510
        %v1559 = vunpack.c.l.s8.bf16 %v511
        %v1560 = vunpack.c.l.s8.bf16 %v512
        %v1561 = vunpack.c.h.s8.bf16 %v505
        %v1562 = vunpack.c.h.s8.bf16 %v506
        %v1563 = vunpack.c.h.s8.bf16 %v507
        %v1564 = vunpack.c.h.s8.bf16 %v508
        %v1565 = vunpack.c.h.s8.bf16 %v509
        %v1566 = vunpack.c.h.s8.bf16 %v510
        %v1567 = vunpack.c.h.s8.bf16 %v511
        %v1568 = vunpack.c.h.s8.bf16 %v512
        %v1569 = vunpack.c.l.s8.bf16 %v513
        %v1570 = vunpack.c.l.s8.bf16 %v514
        %v1571 = vunpack.c.l.s8.bf16 %v515
        %v1572 = vunpack.c.l.s8.bf16 %v516
        %v1573 = vunpack.c.l.s8.bf16 %v517
        %v1574 = vunpack.c.l.s8.bf16 %v518
        %v1575 = vunpack.c.l.s8.bf16 %v519
        %v1576 = vunpack.c.l.s8.bf16 %v520
        %v1577 = vunpack.c.h.s8.bf16 %v513
        %v1578 = vunpack.c.h.s8.bf16 %v514
        %v1579 = vunpack.c.h.s8.bf16 %v515
        %v1580 = vunpack.c.h.s8.bf16 %v516
        %v1581 = vunpack.c.h.s8.bf16 %v517
        %v1582 = vunpack.c.h.s8.bf16 %v518
        %v1583 = vunpack.c.h.s8.bf16 %v519
        %v1584 = vunpack.c.h.s8.bf16 %v520
        %v1585 = vunpack.c.l.s8.bf16 %v521
        %v1586 = vunpack.c.l.s8.bf16 %v522
        %v1587 = vunpack.c.l.s8.bf16 %v523
        %v1588 = vunpack.c.l.s8.bf16 %v524
        %v1589 = vunpack.c.l.s8.bf16 %v525
        %v1590 = vunpack.c.l.s8.bf16 %v526
        %v1591 = vunpack.c.l.s8.bf16 %v527
        %v1592 = vunpack.c.l.s8.bf16 %v528
        %v1593 = vunpack.c.h.s8.bf16 %v521
        %v1594 = vunpack.c.h.s8.bf16 %v522
        %v1595 = vunpack.c.h.s8.bf16 %v523
        %v1596 = vunpack.c.h.s8.bf16 %v524
        %v1597 = vunpack.c.h.s8.bf16 %v525
        %v1598 = vunpack.c.h.s8.bf16 %v526
        %v1599 = vunpack.c.h.s8.bf16 %v527
        %v1600 = vunpack.c.h.s8.bf16 %v528
        %v1601 = vunpack.c.l.s8.bf16 %v529
        %v1602 = vunpack.c.l.s8.bf16 %v530
        %v1603 = vunpack.c.l.s8.bf16 %v531
        %v1604 = vunpack.c.l.s8.bf16 %v532
        %v1605 = vunpack.c.l.s8.bf16 %v533
        %v1606 = vunpack.c.l.s8.bf16 %v534
        %v1607 = vunpack.c.l.s8.bf16 %v535
        %v1608 = vunpack.c.l.s8.bf16 %v536
        %v1609 = vunpack.c.h.s8.bf16 %v529
        %v1610 = vunpack.c.h.s8.bf16 %v530
        %v1611 = vunpack.c.h.s8.bf16 %v531
        %v1612 = vunpack.c.h.s8.bf16 %v532
        %v1613 = vunpack.c.h.s8.bf16 %v533
        %v1614 = vunpack.c.h.s8.bf16 %v534
        %v1615 = vunpack.c.h.s8.bf16 %v535
        %v1616 = vunpack.c.h.s8.bf16 %v536
        %v1617 = vunpack.c.l.s8.bf16 %v537
        %v1618 = vunpack.c.l.s8.bf16 %v538
        %v1619 = vunpack.c.l.s8.bf16 %v539
        %v1620 = vunpack.c.l.s8.bf16 %v540
        %v1621 = vunpack.c.l.s8.bf16 %v541
        %v1622 = vunpack.c.l.s8.bf16 %v542
        %v1623 = vunpack.c.l.s8.bf16 %v543
        %v1624 = vunpack.c.l.s8.bf16 %v544
        %v1625 = vunpack.c.h.s8.bf16 %v537
        %v1626 = vunpack.c.h.s8.bf16 %v538
        %v1627 = vunpack.c.h.s8.bf16 %v539
        %v1628 = vunpack.c.h.s8.bf16 %v540
        %v1629 = vunpack.c.h.s8.bf16 %v541
        %v1630 = vunpack.c.h.s8.bf16 %v542
        %v1631 = vunpack.c.h.s8.bf16 %v543
        %v1632 = vunpack.c.h.s8.bf16 %v544
        %v1633 = vunpack.c.l.s8.bf16 %v545
        %v1634 = vunpack.c.l.s8.bf16 %v546
        %v1635 = vunpack.c.l.s8.bf16 %v547
        %v1636 = vunpack.c.l.s8.bf16 %v548
        %v1637 = vunpack.c.l.s8.bf16 %v549
        %v1638 = vunpack.c.l.s8.bf16 %v550
        %v1639 = vunpack.c.l.s8.bf16 %v551
        %v1640 = vunpack.c.l.s8.bf16 %v552
        %v1641 = vunpack.c.h.s8.bf16 %v545
        %v1642 = vunpack.c.h.s8.bf16 %v546
        %v1643 = vunpack.c.h.s8.bf16 %v547
        %v1644 = vunpack.c.h.s8.bf16 %v548
        %v1645 = vunpack.c.h.s8.bf16 %v549
        %v1646 = vunpack.c.h.s8.bf16 %v550
        %v1647 = vunpack.c.h.s8.bf16 %v551
        %v1648 = vunpack.c.h.s8.bf16 %v552
        %v1649 = vunpack.c.l.s8.bf16 %v553
        %v1650 = vunpack.c.l.s8.bf16 %v554
        %v1651 = vunpack.c.l.s8.bf16 %v555
        %v1652 = vunpack.c.l.s8.bf16 %v556
        %v1653 = vunpack.c.l.s8.bf16 %v557
        %v1654 = vunpack.c.l.s8.bf16 %v558
        %v1655 = vunpack.c.l.s8.bf16 %v559
        %v1656 = vunpack.c.l.s8.bf16 %v560
        %v1657 = vunpack.c.h.s8.bf16 %v553
        %v1658 = vunpack.c.h.s8.bf16 %v554
        %v1659 = vunpack.c.h.s8.bf16 %v555
        %v1660 = vunpack.c.h.s8.bf16 %v556
        %v1661 = vunpack.c.h.s8.bf16 %v557
        %v1662 = vunpack.c.h.s8.bf16 %v558
        %v1663 = vunpack.c.h.s8.bf16 %v559
        %v1664 = vunpack.c.h.s8.bf16 %v560
        %v1665 = vunpack.c.l.s8.bf16 %v561
        %v1666 = vunpack.c.l.s8.bf16 %v562
        %v1667 = vunpack.c.l.s8.bf16 %v563
        %v1668 = vunpack.c.l.s8.bf16 %v564
        %v1669 = vunpack.c.l.s8.bf16 %v565
        %v1670 = vunpack.c.l.s8.bf16 %v566
        %v1671 = vunpack.c.l.s8.bf16 %v567
        %v1672 = vunpack.c.l.s8.bf16 %v568
        %v1673 = vunpack.c.h.s8.bf16 %v561
        %v1674 = vunpack.c.h.s8.bf16 %v562
        %v1675 = vunpack.c.h.s8.bf16 %v563
        %v1676 = vunpack.c.h.s8.bf16 %v564
        %v1677 = vunpack.c.h.s8.bf16 %v565
        %v1678 = vunpack.c.h.s8.bf16 %v566
        %v1679 = vunpack.c.h.s8.bf16 %v567
        %v1680 = vunpack.c.h.s8.bf16 %v568
        %v1681 = vunpack.c.l.s8.bf16 %v569
        %v1682 = vunpack.c.l.s8.bf16 %v570
        %v1683 = vunpack.c.l.s8.bf16 %v571
        %v1684 = vunpack.c.l.s8.bf16 %v572
        %v1685 = vunpack.c.l.s8.bf16 %v573
        %v1686 = vunpack.c.l.s8.bf16 %v574
        %v1687 = vunpack.c.l.s8.bf16 %v575
        %v1688 = vunpack.c.l.s8.bf16 %v576
        %v1689 = vunpack.c.h.s8.bf16 %v569
        %v1690 = vunpack.c.h.s8.bf16 %v570
        %v1691 = vunpack.c.h.s8.bf16 %v571
        %v1692 = vunpack.c.h.s8.bf16 %v572
        %v1693 = vunpack.c.h.s8.bf16 %v573
        %v1694 = vunpack.c.h.s8.bf16 %v574
        %v1695 = vunpack.c.h.s8.bf16 %v575
        %v1696 = vunpack.c.h.s8.bf16 %v576
        %v1697 = vunpack.c.l.s8.bf16 %v577
        %v1698 = vunpack.c.l.s8.bf16 %v578
        %v1699 = vunpack.c.l.s8.bf16 %v579
        %v1700 = vunpack.c.l.s8.bf16 %v580
        %v1701 = vunpack.c.l.s8.bf16 %v581
        %v1702 = vunpack.c.l.s8.bf16 %v582
        %v1703 = vunpack.c.l.s8.bf16 %v583
        %v1704 = vunpack.c.l.s8.bf16 %v584
        %v1705 = vunpack.c.h.s8.bf16 %v577
        %v1706 = vunpack.c.h.s8.bf16 %v578
        %v1707 = vunpack.c.h.s8.bf16 %v579
        %v1708 = vunpack.c.h.s8.bf16 %v580
        %v1709 = vunpack.c.h.s8.bf16 %v581
        %v1710 = vunpack.c.h.s8.bf16 %v582
        %v1711 = vunpack.c.h.s8.bf16 %v583
        %v1712 = vunpack.c.h.s8.bf16 %v584
        %v1713 = vunpack.c.l.s8.bf16 %v585
        %v1714 = vunpack.c.l.s8.bf16 %v586
        %v1715 = vunpack.c.l.s8.bf16 %v587
        %v1716 = vunpack.c.l.s8.bf16 %v588
        %v1717 = vunpack.c.l.s8.bf16 %v589
        %v1718 = vunpack.c.l.s8.bf16 %v590
        %v1719 = vunpack.c.l.s8.bf16 %v591
        %v1720 = vunpack.c.l.s8.bf16 %v592
        %v1721 = vunpack.c.h.s8.bf16 %v585
        %v1722 = vunpack.c.h.s8.bf16 %v586
        %v1723 = vunpack.c.h.s8.bf16 %v587
        %v1724 = vunpack.c.h.s8.bf16 %v588
        %v1725 = vunpack.c.h.s8.bf16 %v589
        %v1726 = vunpack.c.h.s8.bf16 %v590
        %v1727 = vunpack.c.h.s8.bf16 %v591
        %v1728 = vunpack.c.h.s8.bf16 %v592
        %v1729 = vunpack.c.l.s8.bf16 %v593
        %v1730 = vunpack.c.l.s8.bf16 %v594
        %v1731 = vunpack.c.l.s8.bf16 %v595
        %v1732 = vunpack.c.l.s8.bf16 %v596
        %v1733 = vunpack.c.l.s8.bf16 %v597
        %v1734 = vunpack.c.l.s8.bf16 %v598
        %v1735 = vunpack.c.l.s8.bf16 %v599
        %v1736 = vunpack.c.l.s8.bf16 %v600
        %v1737 = vunpack.c.h.s8.bf16 %v593
        %v1738 = vunpack.c.h.s8.bf16 %v594
        %v1739 = vunpack.c.h.s8.bf16 %v595
        %v1740 = vunpack.c.h.s8.bf16 %v596
        %v1741 = vunpack.c.h.s8.bf16 %v597
        %v1742 = vunpack.c.h.s8.bf16 %v598
        %v1743 = vunpack.c.h.s8.bf16 %v599
        %v1744 = vunpack.c.h.s8.bf16 %v600
        %v1745 = vunpack.c.l.s8.bf16 %v601
        %v1746 = vunpack.c.l.s8.bf16 %v602
        %v1747 = vunpack.c.l.s8.bf16 %v603
        %v1748 = vunpack.c.l.s8.bf16 %v604
        %v1749 = vunpack.c.l.s8.bf16 %v605
        %v1750 = vunpack.c.l.s8.bf16 %v606
        %v1751 = vunpack.c.l.s8.bf16 %v607
        %v1752 = vunpack.c.l.s8.bf16 %v608
        %v1753 = vunpack.c.h.s8.bf16 %v601
        %v1754 = vunpack.c.h.s8.bf16 %v602
        %v1755 = vunpack.c.h.s8.bf16 %v603
        %v1756 = vunpack.c.h.s8.bf16 %v604
        %v1757 = vunpack.c.h.s8.bf16 %v605
        %v1758 = vunpack.c.h.s8.bf16 %v606
        %v1759 = vunpack.c.h.s8.bf16 %v607
        %v1760 = vunpack.c.h.s8.bf16 %v608
        %v1761 = vunpack.c.l.s8.bf16 %v609
        %v1762 = vunpack.c.l.s8.bf16 %v610
        %v1763 = vunpack.c.l.s8.bf16 %v611
        %v1764 = vunpack.c.l.s8.bf16 %v612
        %v1765 = vunpack.c.l.s8.bf16 %v613
        %v1766 = vunpack.c.l.s8.bf16 %v614
        %v1767 = vunpack.c.l.s8.bf16 %v615
        %v1768 = vunpack.c.l.s8.bf16 %v616
        %v1769 = vunpack.c.h.s8.bf16 %v609
        %v1770 = vunpack.c.h.s8.bf16 %v610
        %v1771 = vunpack.c.h.s8.bf16 %v611
        %v1772 = vunpack.c.h.s8.bf16 %v612
        %v1773 = vunpack.c.h.s8.bf16 %v613
        %v1774 = vunpack.c.h.s8.bf16 %v614
        %v1775 = vunpack.c.h.s8.bf16 %v615
        %v1776 = vunpack.c.h.s8.bf16 %v616
        %v1777 = vunpack.c.l.s8.bf16 %v617
        %v1778 = vunpack.c.l.s8.bf16 %v618
        %v1779 = vunpack.c.l.s8.bf16 %v619
        %v1780 = vunpack.c.l.s8.bf16 %v620
        %v1781 = vunpack.c.l.s8.bf16 %v621
        %v1782 = vunpack.c.l.s8.bf16 %v622
        %v1783 = vunpack.c.l.s8.bf16 %v623
        %v1784 = vunpack.c.l.s8.bf16 %v624
        %v1785 = vunpack.c.h.s8.bf16 %v617
        %v1786 = vunpack.c.h.s8.bf16 %v618
        %v1787 = vunpack.c.h.s8.bf16 %v619
        %v1788 = vunpack.c.h.s8.bf16 %v620
        %v1789 = vunpack.c.h.s8.bf16 %v621
        %v1790 = vunpack.c.h.s8.bf16 %v622
        %v1791 = vunpack.c.h.s8.bf16 %v623
        %v1792 = vunpack.c.h.s8.bf16 %v624
        %v1793 = vunpack.c.l.s8.bf16 %v625
        %v1794 = vunpack.c.l.s8.bf16 %v626
        %v1795 = vunpack.c.l.s8.bf16 %v627
        %v1796 = vunpack.c.l.s8.bf16 %v628
        %v1797 = vunpack.c.l.s8.bf16 %v629
        %v1798 = vunpack.c.l.s8.bf16 %v630
        %v1799 = vunpack.c.l.s8.bf16 %v631
        %v1800 = vunpack.c.l.s8.bf16 %v632
        %v1801 = vunpack.c.h.s8.bf16 %v625
        %v1802 = vunpack.c.h.s8.bf16 %v626
        %v1803 = vunpack.c.h.s8.bf16 %v627
        %v1804 = vunpack.c.h.s8.bf16 %v628
        %v1805 = vunpack.c.h.s8.bf16 %v629
        %v1806 = vunpack.c.h.s8.bf16 %v630
        %v1807 = vunpack.c.h.s8.bf16 %v631
        %v1808 = vunpack.c.h.s8.bf16 %v632
        %v1809 = vunpack.c.l.s8.bf16 %v633
        %v1810 = vunpack.c.l.s8.bf16 %v634
        %v1811 = vunpack.c.l.s8.bf16 %v635
        %v1812 = vunpack.c.l.s8.bf16 %v636
        %v1813 = vunpack.c.l.s8.bf16 %v637
        %v1814 = vunpack.c.l.s8.bf16 %v638
        %v1815 = vunpack.c.l.s8.bf16 %v639
        %v1816 = vunpack.c.l.s8.bf16 %v640
        %v1817 = vunpack.c.h.s8.bf16 %v633
        %v1818 = vunpack.c.h.s8.bf16 %v634
        %v1819 = vunpack.c.h.s8.bf16 %v635
        %v1820 = vunpack.c.h.s8.bf16 %v636
        %v1821 = vunpack.c.h.s8.bf16 %v637
        %v1822 = vunpack.c.h.s8.bf16 %v638
        %v1823 = vunpack.c.h.s8.bf16 %v639
        %v1824 = vunpack.c.h.s8.bf16 %v640
        %v1825 = vunpack.c.l.s8.bf16 %v641
        %v1826 = vunpack.c.l.s8.bf16 %v642
        %v1827 = vunpack.c.l.s8.bf16 %v643
        %v1828 = vunpack.c.l.s8.bf16 %v644
        %v1829 = vunpack.c.l.s8.bf16 %v645
        %v1830 = vunpack.c.l.s8.bf16 %v646
        %v1831 = vunpack.c.l.s8.bf16 %v647
        %v1832 = vunpack.c.l.s8.bf16 %v648
        %v1833 = vunpack.c.h.s8.bf16 %v641
        %v1834 = vunpack.c.h.s8.bf16 %v642
        %v1835 = vunpack.c.h.s8.bf16 %v643
        %v1836 = vunpack.c.h.s8.bf16 %v644
        %v1837 = vunpack.c.h.s8.bf16 %v645
        %v1838 = vunpack.c.h.s8.bf16 %v646
        %v1839 = vunpack.c.h.s8.bf16 %v647
        %v1840 = vunpack.c.h.s8.bf16 %v648
        %v1841 = vunpack.c.l.s8.bf16 %v649
        %v1842 = vunpack.c.l.s8.bf16 %v650
        %v1843 = vunpack.c.l.s8.bf16 %v651
        %v1844 = vunpack.c.l.s8.bf16 %v652
        %v1845 = vunpack.c.l.s8.bf16 %v653
        %v1846 = vunpack.c.l.s8.bf16 %v654
        %v1847 = vunpack.c.l.s8.bf16 %v655
        %v1848 = vunpack.c.l.s8.bf16 %v656
        %v1849 = vunpack.c.h.s8.bf16 %v649
        %v1850 = vunpack.c.h.s8.bf16 %v650
        %v1851 = vunpack.c.h.s8.bf16 %v651
        %v1852 = vunpack.c.h.s8.bf16 %v652
        %v1853 = vunpack.c.h.s8.bf16 %v653
        %v1854 = vunpack.c.h.s8.bf16 %v654
        %v1855 = vunpack.c.h.s8.bf16 %v655
        %v1856 = vunpack.c.h.s8.bf16 %v656
        %v1857 = vunpack.c.l.s8.bf16 %v657
        %v1858 = vunpack.c.l.s8.bf16 %v658
        %v1859 = vunpack.c.l.s8.bf16 %v659
        %v1860 = vunpack.c.l.s8.bf16 %v660
        %v1861 = vunpack.c.l.s8.bf16 %v661
        %v1862 = vunpack.c.l.s8.bf16 %v662
        %v1863 = vunpack.c.l.s8.bf16 %v663
        %v1864 = vunpack.c.l.s8.bf16 %v664
        %v1865 = vunpack.c.h.s8.bf16 %v657
        %v1866 = vunpack.c.h.s8.bf16 %v658
        %v1867 = vunpack.c.h.s8.bf16 %v659
        %v1868 = vunpack.c.h.s8.bf16 %v660
        %v1869 = vunpack.c.h.s8.bf16 %v661
        %v1870 = vunpack.c.h.s8.bf16 %v662
        %v1871 = vunpack.c.h.s8.bf16 %v663
        %v1872 = vunpack.c.h.s8.bf16 %v664
        %v1873 = vunpack.c.l.s8.bf16 %v665
        %v1874 = vunpack.c.l.s8.bf16 %v666
        %v1875 = vunpack.c.l.s8.bf16 %v667
        %v1876 = vunpack.c.l.s8.bf16 %v668
        %v1877 = vunpack.c.l.s8.bf16 %v669
        %v1878 = vunpack.c.l.s8.bf16 %v670
        %v1879 = vunpack.c.l.s8.bf16 %v671
        %v1880 = vunpack.c.l.s8.bf16 %v672
        %v1881 = vunpack.c.h.s8.bf16 %v665
        %v1882 = vunpack.c.h.s8.bf16 %v666
        %v1883 = vunpack.c.h.s8.bf16 %v667
        %v1884 = vunpack.c.h.s8.bf16 %v668
        %v1885 = vunpack.c.h.s8.bf16 %v669
        %v1886 = vunpack.c.h.s8.bf16 %v670
        %v1887 = vunpack.c.h.s8.bf16 %v671
        %v1888 = vunpack.c.h.s8.bf16 %v672
        %v1889 = vunpack.c.l.s8.bf16 %v673
        %v1890 = vunpack.c.l.s8.bf16 %v674
        %v1891 = vunpack.c.l.s8.bf16 %v675
        %v1892 = vunpack.c.l.s8.bf16 %v676
        %v1893 = vunpack.c.l.s8.bf16 %v677
        %v1894 = vunpack.c.l.s8.bf16 %v678
        %v1895 = vunpack.c.l.s8.bf16 %v679
        %v1896 = vunpack.c.l.s8.bf16 %v680
        %v1897 = vunpack.c.h.s8.bf16 %v673
        %v1898 = vunpack.c.h.s8.bf16 %v674
        %v1899 = vunpack.c.h.s8.bf16 %v675
        %v1900 = vunpack.c.h.s8.bf16 %v676
        %v1901 = vunpack.c.h.s8.bf16 %v677
        %v1902 = vunpack.c.h.s8.bf16 %v678
        %v1903 = vunpack.c.h.s8.bf16 %v679
        %v1904 = vunpack.c.h.s8.bf16 %v680
        %v1905 = vunpack.c.l.s8.bf16 %v681
        %v1906 = vunpack.c.l.s8.bf16 %v682
        %v1907 = vunpack.c.l.s8.bf16 %v683
        %v1908 = vunpack.c.l.s8.bf16 %v684
        %v1909 = vunpack.c.l.s8.bf16 %v685
        %v1910 = vunpack.c.l.s8.bf16 %v686
        %v1911 = vunpack.c.l.s8.bf16 %v687
        %v1912 = vunpack.c.l.s8.bf16 %v688
        %v1913 = vunpack.c.h.s8.bf16 %v681
        %v1914 = vunpack.c.h.s8.bf16 %v682
        %v1915 = vunpack.c.h.s8.bf16 %v683
        %v1916 = vunpack.c.h.s8.bf16 %v684
        %v1917 = vunpack.c.h.s8.bf16 %v685
        %v1918 = vunpack.c.h.s8.bf16 %v686
        %v1919 = vunpack.c.h.s8.bf16 %v687
        %v1920 = vunpack.c.h.s8.bf16 %v688
        %v1921 = vunpack.c.l.s8.bf16 %v689
        %v1922 = vunpack.c.l.s8.bf16 %v690
        %v1923 = vunpack.c.l.s8.bf16 %v691
        %v1924 = vunpack.c.l.s8.bf16 %v692
        %v1925 = vunpack.c.l.s8.bf16 %v693
        %v1926 = vunpack.c.l.s8.bf16 %v694
        %v1927 = vunpack.c.l.s8.bf16 %v695
        %v1928 = vunpack.c.l.s8.bf16 %v696
        %v1929 = vunpack.c.h.s8.bf16 %v689
        %v1930 = vunpack.c.h.s8.bf16 %v690
        %v1931 = vunpack.c.h.s8.bf16 %v691
        %v1932 = vunpack.c.h.s8.bf16 %v692
        %v1933 = vunpack.c.h.s8.bf16 %v693
        %v1934 = vunpack.c.h.s8.bf16 %v694
        %v1935 = vunpack.c.h.s8.bf16 %v695
        %v1936 = vunpack.c.h.s8.bf16 %v696
        %v1937 = vunpack.c.l.s8.bf16 %v697
        %v1938 = vunpack.c.l.s8.bf16 %v698
        %v1939 = vunpack.c.l.s8.bf16 %v699
        %v1940 = vunpack.c.l.s8.bf16 %v700
        %v1941 = vunpack.c.l.s8.bf16 %v701
        %v1942 = vunpack.c.l.s8.bf16 %v702
        %v1943 = vunpack.c.l.s8.bf16 %v703
        %v1944 = vunpack.c.l.s8.bf16 %v704
        %v1945 = vunpack.c.h.s8.bf16 %v697
        %v1946 = vunpack.c.h.s8.bf16 %v698
        %v1947 = vunpack.c.h.s8.bf16 %v699
        %v1948 = vunpack.c.h.s8.bf16 %v700
        %v1949 = vunpack.c.h.s8.bf16 %v701
        %v1950 = vunpack.c.h.s8.bf16 %v702
        %v1951 = vunpack.c.h.s8.bf16 %v703
        %v1952 = vunpack.c.h.s8.bf16 %v704
        %v1953 = vunpack.c.l.s8.bf16 %v705
        %v1954 = vunpack.c.l.s8.bf16 %v706
        %v1955 = vunpack.c.l.s8.bf16 %v707
        %v1956 = vunpack.c.l.s8.bf16 %v708
        %v1957 = vunpack.c.l.s8.bf16 %v709
        %v1958 = vunpack.c.l.s8.bf16 %v710
        %v1959 = vunpack.c.l.s8.bf16 %v711
        %v1960 = vunpack.c.l.s8.bf16 %v712
        %v1961 = vunpack.c.h.s8.bf16 %v705
        %v1962 = vunpack.c.h.s8.bf16 %v706
        %v1963 = vunpack.c.h.s8.bf16 %v707
        %v1964 = vunpack.c.h.s8.bf16 %v708
        %v1965 = vunpack.c.h.s8.bf16 %v709
        %v1966 = vunpack.c.h.s8.bf16 %v710
        %v1967 = vunpack.c.h.s8.bf16 %v711
        %v1968 = vunpack.c.h.s8.bf16 %v712
        %v1969 = vunpack.c.l.s8.bf16 %v713
        %v1970 = vunpack.c.l.s8.bf16 %v714
        %v1971 = vunpack.c.l.s8.bf16 %v715
        %v1972 = vunpack.c.l.s8.bf16 %v716
        %v1973 = vunpack.c.l.s8.bf16 %v717
        %v1974 = vunpack.c.l.s8.bf16 %v718
        %v1975 = vunpack.c.l.s8.bf16 %v719
        %v1976 = vunpack.c.l.s8.bf16 %v720
        %v1977 = vunpack.c.h.s8.bf16 %v713
        %v1978 = vunpack.c.h.s8.bf16 %v714
        %v1979 = vunpack.c.h.s8.bf16 %v715
        %v1980 = vunpack.c.h.s8.bf16 %v716
        %v1981 = vunpack.c.h.s8.bf16 %v717
        %v1982 = vunpack.c.h.s8.bf16 %v718
        %v1983 = vunpack.c.h.s8.bf16 %v719
        %v1984 = vunpack.c.h.s8.bf16 %v720
        %v1985 = vunpack.c.l.s8.bf16 %v721
        %v1986 = vunpack.c.l.s8.bf16 %v722
        %v1987 = vunpack.c.l.s8.bf16 %v723
        %v1988 = vunpack.c.l.s8.bf16 %v724
        %v1989 = vunpack.c.l.s8.bf16 %v725
        %v1990 = vunpack.c.l.s8.bf16 %v726
        %v1991 = vunpack.c.l.s8.bf16 %v727
        %v1992 = vunpack.c.l.s8.bf16 %v728
        %v1993 = vunpack.c.h.s8.bf16 %v721
        %v1994 = vunpack.c.h.s8.bf16 %v722
        %v1995 = vunpack.c.h.s8.bf16 %v723
        %v1996 = vunpack.c.h.s8.bf16 %v724
        %v1997 = vunpack.c.h.s8.bf16 %v725
        %v1998 = vunpack.c.h.s8.bf16 %v726
        %v1999 = vunpack.c.h.s8.bf16 %v727
        %v2000 = vunpack.c.h.s8.bf16 %v728
        %v2001 = vunpack.c.l.s8.bf16 %v729
        %v2002 = vunpack.c.l.s8.bf16 %v730
        %v2003 = vunpack.c.l.s8.bf16 %v731
        %v2004 = vunpack.c.l.s8.bf16 %v732
        %v2005 = vunpack.c.l.s8.bf16 %v733
        %v2006 = vunpack.c.l.s8.bf16 %v734
        %v2007 = vunpack.c.l.s8.bf16 %v735
        %v2008 = vunpack.c.l.s8.bf16 %v736
        %v2009 = vunpack.c.h.s8.bf16 %v729
        %v2010 = vunpack.c.h.s8.bf16 %v730
        %v2011 = vunpack.c.h.s8.bf16 %v731
        %v2012 = vunpack.c.h.s8.bf16 %v732
        %v2013 = vunpack.c.h.s8.bf16 %v733
        %v2014 = vunpack.c.h.s8.bf16 %v734
        %v2015 = vunpack.c.h.s8.bf16 %v735
        %v2016 = vunpack.c.h.s8.bf16 %v736
        %v2017 = vunpack.c.l.s8.bf16 %v737
        %v2018 = vunpack.c.l.s8.bf16 %v738
        %v2019 = vunpack.c.l.s8.bf16 %v739
        %v2020 = vunpack.c.l.s8.bf16 %v740
        %v2021 = vunpack.c.l.s8.bf16 %v741
        %v2022 = vunpack.c.l.s8.bf16 %v742
        %v2023 = vunpack.c.l.s8.bf16 %v743
        %v2024 = vunpack.c.l.s8.bf16 %v744
        %v2025 = vunpack.c.h.s8.bf16 %v737
        %v2026 = vunpack.c.h.s8.bf16 %v738
        %v2027 = vunpack.c.h.s8.bf16 %v739
        %v2028 = vunpack.c.h.s8.bf16 %v740
        %v2029 = vunpack.c.h.s8.bf16 %v741
        %v2030 = vunpack.c.h.s8.bf16 %v742
        %v2031 = vunpack.c.h.s8.bf16 %v743
        %v2032 = vunpack.c.h.s8.bf16 %v744
        %v2033 = vunpack.c.l.s8.bf16 %v745
        %v2034 = vunpack.c.l.s8.bf16 %v746
        %v2035 = vunpack.c.l.s8.bf16 %v747
        %v2036 = vunpack.c.l.s8.bf16 %v748
        %v2037 = vunpack.c.l.s8.bf16 %v749
        %v2038 = vunpack.c.l.s8.bf16 %v750
        %v2039 = vunpack.c.l.s8.bf16 %v751
        %v2040 = vunpack.c.l.s8.bf16 %v752
        %v2041 = vunpack.c.h.s8.bf16 %v745
        %v2042 = vunpack.c.h.s8.bf16 %v746
        %v2043 = vunpack.c.h.s8.bf16 %v747
        %v2044 = vunpack.c.h.s8.bf16 %v748
        %v2045 = vunpack.c.h.s8.bf16 %v749
        %v2046 = vunpack.c.h.s8.bf16 %v750
        %v2047 = vunpack.c.h.s8.bf16 %v751
        %v2048 = vunpack.c.h.s8.bf16 %v752
        %v2049 = vunpack.c.l.s8.bf16 %v753
        %v2050 = vunpack.c.l.s8.bf16 %v754
        %v2051 = vunpack.c.l.s8.bf16 %v755
        %v2052 = vunpack.c.l.s8.bf16 %v756
        %v2053 = vunpack.c.l.s8.bf16 %v757
        %v2054 = vunpack.c.l.s8.bf16 %v758
        %v2055 = vunpack.c.l.s8.bf16 %v759
        %v2056 = vunpack.c.l.s8.bf16 %v760
        %v2057 = vunpack.c.h.s8.bf16 %v753
        %v2058 = vunpack.c.h.s8.bf16 %v754
        %v2059 = vunpack.c.h.s8.bf16 %v755
        %v2060 = vunpack.c.h.s8.bf16 %v756
        %v2061 = vunpack.c.h.s8.bf16 %v757
        %v2062 = vunpack.c.h.s8.bf16 %v758
        %v2063 = vunpack.c.h.s8.bf16 %v759
        %v2064 = vunpack.c.h.s8.bf16 %v760
        %v2065 = vunpack.c.l.s8.bf16 %v761
        %v2066 = vunpack.c.l.s8.bf16 %v762
        %v2067 = vunpack.c.l.s8.bf16 %v763
        %v2068 = vunpack.c.l.s8.bf16 %v764
        %v2069 = vunpack.c.l.s8.bf16 %v765
        %v2070 = vunpack.c.l.s8.bf16 %v766
        %v2071 = vunpack.c.l.s8.bf16 %v767
        %v2072 = vunpack.c.l.s8.bf16 %v768
        %v2073 = vunpack.c.h.s8.bf16 %v761
        %v2074 = vunpack.c.h.s8.bf16 %v762
        %v2075 = vunpack.c.h.s8.bf16 %v763
        %v2076 = vunpack.c.h.s8.bf16 %v764
        %v2077 = vunpack.c.h.s8.bf16 %v765
        %v2078 = vunpack.c.h.s8.bf16 %v766
        %v2079 = vunpack.c.h.s8.bf16 %v767
        %v2080 = vunpack.c.h.s8.bf16 %v768
        %v2081 = vunpack.c.l.s8.bf16 %v769
        %v2082 = vunpack.c.l.s8.bf16 %v770
        %v2083 = vunpack.c.l.s8.bf16 %v771
        %v2084 = vunpack.c.l.s8.bf16 %v772
        %v2085 = vunpack.c.l.s8.bf16 %v773
        %v2086 = vunpack.c.l.s8.bf16 %v774
        %v2087 = vunpack.c.l.s8.bf16 %v775
        %v2088 = vunpack.c.l.s8.bf16 %v776
        %v2089 = vunpack.c.h.s8.bf16 %v769
        %v2090 = vunpack.c.h.s8.bf16 %v770
        %v2091 = vunpack.c.h.s8.bf16 %v771
        %v2092 = vunpack.c.h.s8.bf16 %v772
        %v2093 = vunpack.c.h.s8.bf16 %v773
        %v2094 = vunpack.c.h.s8.bf16 %v774
        %v2095 = vunpack.c.h.s8.bf16 %v775
        %v2096 = vunpack.c.h.s8.bf16 %v776
        %v2097 = vunpack.c.l.s8.bf16 %v777
        %v2098 = vunpack.c.l.s8.bf16 %v778
        %v2099 = vunpack.c.l.s8.bf16 %v779
        %v2100 = vunpack.c.l.s8.bf16 %v780
        %v2101 = vunpack.c.l.s8.bf16 %v781
        %v2102 = vunpack.c.l.s8.bf16 %v782
        %v2103 = vunpack.c.l.s8.bf16 %v783
        %v2104 = vunpack.c.l.s8.bf16 %v784
        %v2105 = vunpack.c.h.s8.bf16 %v777
        %v2106 = vunpack.c.h.s8.bf16 %v778
        %v2107 = vunpack.c.h.s8.bf16 %v779
        %v2108 = vunpack.c.h.s8.bf16 %v780
        %v2109 = vunpack.c.h.s8.bf16 %v781
        %v2110 = vunpack.c.h.s8.bf16 %v782
        %v2111 = vunpack.c.h.s8.bf16 %v783
        %v2112 = vunpack.c.h.s8.bf16 %v784
        %v2113 = vunpack.c.l.s8.bf16 %v785
        %v2114 = vunpack.c.l.s8.bf16 %v786
        %v2115 = vunpack.c.l.s8.bf16 %v787
        %v2116 = vunpack.c.l.s8.bf16 %v788
        %v2117 = vunpack.c.l.s8.bf16 %v789
        %v2118 = vunpack.c.l.s8.bf16 %v790
        %v2119 = vunpack.c.l.s8.bf16 %v791
        %v2120 = vunpack.c.l.s8.bf16 %v792
        %v2121 = vunpack.c.h.s8.bf16 %v785
        %v2122 = vunpack.c.h.s8.bf16 %v786
        %v2123 = vunpack.c.h.s8.bf16 %v787
        %v2124 = vunpack.c.h.s8.bf16 %v788
        %v2125 = vunpack.c.h.s8.bf16 %v789
        %v2126 = vunpack.c.h.s8.bf16 %v790
        %v2127 = vunpack.c.h.s8.bf16 %v791
        %v2128 = vunpack.c.h.s8.bf16 %v792
        %v2129 = vunpack.c.l.s8.bf16 %v793
        %v2130 = vunpack.c.l.s8.bf16 %v794
        %v2131 = vunpack.c.l.s8.bf16 %v795
        %v2132 = vunpack.c.l.s8.bf16 %v796
        %v2133 = vunpack.c.l.s8.bf16 %v797
        %v2134 = vunpack.c.l.s8.bf16 %v798
        %v2135 = vunpack.c.l.s8.bf16 %v799
        %v2136 = vunpack.c.l.s8.bf16 %v800
        %v2137 = vunpack.c.h.s8.bf16 %v793
        %v2138 = vunpack.c.h.s8.bf16 %v794
        %v2139 = vunpack.c.h.s8.bf16 %v795
        %v2140 = vunpack.c.h.s8.bf16 %v796
        %v2141 = vunpack.c.h.s8.bf16 %v797
        %v2142 = vunpack.c.h.s8.bf16 %v798
        %v2143 = vunpack.c.h.s8.bf16 %v799
        %v2144 = vunpack.c.h.s8.bf16 %v800
        %v2145 = vunpack.c.l.s8.bf16 %v801
        %v2146 = vunpack.c.l.s8.bf16 %v802
        %v2147 = vunpack.c.l.s8.bf16 %v803
        %v2148 = vunpack.c.l.s8.bf16 %v804
        %v2149 = vunpack.c.l.s8.bf16 %v805
        %v2150 = vunpack.c.l.s8.bf16 %v806
        %v2151 = vunpack.c.l.s8.bf16 %v807
        %v2152 = vunpack.c.l.s8.bf16 %v808
        %v2153 = vunpack.c.h.s8.bf16 %v801
        %v2154 = vunpack.c.h.s8.bf16 %v802
        %v2155 = vunpack.c.h.s8.bf16 %v803
        %v2156 = vunpack.c.h.s8.bf16 %v804
        %v2157 = vunpack.c.h.s8.bf16 %v805
        %v2158 = vunpack.c.h.s8.bf16 %v806
        %v2159 = vunpack.c.h.s8.bf16 %v807
        %v2160 = vunpack.c.h.s8.bf16 %v808
        %v2161 = vunpack.c.l.s8.bf16 %v809
        %v2162 = vunpack.c.l.s8.bf16 %v810
        %v2163 = vunpack.c.l.s8.bf16 %v811
        %v2164 = vunpack.c.l.s8.bf16 %v812
        %v2165 = vunpack.c.l.s8.bf16 %v813
        %v2166 = vunpack.c.l.s8.bf16 %v814
        %v2167 = vunpack.c.l.s8.bf16 %v815
        %v2168 = vunpack.c.l.s8.bf16 %v816
        %v2169 = vunpack.c.h.s8.bf16 %v809
        %v2170 = vunpack.c.h.s8.bf16 %v810
        %v2171 = vunpack.c.h.s8.bf16 %v811
        %v2172 = vunpack.c.h.s8.bf16 %v812
        %v2173 = vunpack.c.h.s8.bf16 %v813
        %v2174 = vunpack.c.h.s8.bf16 %v814
        %v2175 = vunpack.c.h.s8.bf16 %v815
        %v2176 = vunpack.c.h.s8.bf16 %v816
        %v2177 = vunpack.c.l.s8.bf16 %v817
        %v2178 = vunpack.c.l.s8.bf16 %v818
        %v2179 = vunpack.c.l.s8.bf16 %v819
        %v2180 = vunpack.c.l.s8.bf16 %v820
        %v2181 = vunpack.c.l.s8.bf16 %v821
        %v2182 = vunpack.c.l.s8.bf16 %v822
        %v2183 = vunpack.c.l.s8.bf16 %v823
        %v2184 = vunpack.c.l.s8.bf16 %v824
        %v2185 = vunpack.c.h.s8.bf16 %v817
        %v2186 = vunpack.c.h.s8.bf16 %v818
        %v2187 = vunpack.c.h.s8.bf16 %v819
        %v2188 = vunpack.c.h.s8.bf16 %v820
        %v2189 = vunpack.c.h.s8.bf16 %v821
        %v2190 = vunpack.c.h.s8.bf16 %v822
        %v2191 = vunpack.c.h.s8.bf16 %v823
        %v2192 = vunpack.c.h.s8.bf16 %v824
        %v2193 = vunpack.c.l.s8.bf16 %v825
        %v2194 = vunpack.c.l.s8.bf16 %v826
        %v2195 = vunpack.c.l.s8.bf16 %v827
        %v2196 = vunpack.c.l.s8.bf16 %v828
        %v2197 = vunpack.c.l.s8.bf16 %v829
        %v2198 = vunpack.c.l.s8.bf16 %v830
        %v2199 = vunpack.c.l.s8.bf16 %v831
        %v2200 = vunpack.c.l.s8.bf16 %v832
        %v2201 = vunpack.c.h.s8.bf16 %v825
        %v2202 = vunpack.c.h.s8.bf16 %v826
        %v2203 = vunpack.c.h.s8.bf16 %v827
        %v2204 = vunpack.c.h.s8.bf16 %v828
        %v2205 = vunpack.c.h.s8.bf16 %v829
        %v2206 = vunpack.c.h.s8.bf16 %v830
        %v2207 = vunpack.c.h.s8.bf16 %v831
        %v2208 = vunpack.c.h.s8.bf16 %v832
        %v2209 = vunpack.c.l.s8.bf16 %v833
        %v2210 = vunpack.c.l.s8.bf16 %v834
        %v2211 = vunpack.c.l.s8.bf16 %v835
        %v2212 = vunpack.c.l.s8.bf16 %v836
        %v2213 = vunpack.c.l.s8.bf16 %v837
        %v2214 = vunpack.c.l.s8.bf16 %v838
        %v2215 = vunpack.c.l.s8.bf16 %v839
        %v2216 = vunpack.c.l.s8.bf16 %v840
        %v2217 = vunpack.c.h.s8.bf16 %v833
        %v2218 = vunpack.c.h.s8.bf16 %v834
        %v2219 = vunpack.c.h.s8.bf16 %v835
        %v2220 = vunpack.c.h.s8.bf16 %v836
        %v2221 = vunpack.c.h.s8.bf16 %v837
        %v2222 = vunpack.c.h.s8.bf16 %v838
        %v2223 = vunpack.c.h.s8.bf16 %v839
        %v2224 = vunpack.c.h.s8.bf16 %v840
        %v2225 = vunpack.c.l.s8.bf16 %v841
        %v2226 = vunpack.c.l.s8.bf16 %v842
        %v2227 = vunpack.c.l.s8.bf16 %v843
        %v2228 = vunpack.c.l.s8.bf16 %v844
        %v2229 = vunpack.c.l.s8.bf16 %v845
        %v2230 = vunpack.c.l.s8.bf16 %v846
        %v2231 = vunpack.c.l.s8.bf16 %v847
        %v2232 = vunpack.c.l.s8.bf16 %v848
        %v2233 = vunpack.c.h.s8.bf16 %v841
        %v2234 = vunpack.c.h.s8.bf16 %v842
        %v2235 = vunpack.c.h.s8.bf16 %v843
        %v2236 = vunpack.c.h.s8.bf16 %v844
        %v2237 = vunpack.c.h.s8.bf16 %v845
        %v2238 = vunpack.c.h.s8.bf16 %v846
        %v2239 = vunpack.c.h.s8.bf16 %v847
        %v2240 = vunpack.c.h.s8.bf16 %v848
        %v2241 = vunpack.c.l.s8.bf16 %v849
        %v2242 = vunpack.c.l.s8.bf16 %v850
        %v2243 = vunpack.c.l.s8.bf16 %v851
        %v2244 = vunpack.c.l.s8.bf16 %v852
        %v2245 = vunpack.c.l.s8.bf16 %v853
        %v2246 = vunpack.c.l.s8.bf16 %v854
        %v2247 = vunpack.c.l.s8.bf16 %v855
        %v2248 = vunpack.c.l.s8.bf16 %v856
        %v2249 = vunpack.c.h.s8.bf16 %v849
        %v2250 = vunpack.c.h.s8.bf16 %v850
        %v2251 = vunpack.c.h.s8.bf16 %v851
        %v2252 = vunpack.c.h.s8.bf16 %v852
        %v2253 = vunpack.c.h.s8.bf16 %v853
        %v2254 = vunpack.c.h.s8.bf16 %v854
        %v2255 = vunpack.c.h.s8.bf16 %v855
        %v2256 = vunpack.c.h.s8.bf16 %v856
        %v2257 = vunpack.c.l.s8.bf16 %v857
        %v2258 = vunpack.c.l.s8.bf16 %v858
        %v2259 = vunpack.c.l.s8.bf16 %v859
        %v2260 = vunpack.c.l.s8.bf16 %v860
        %v2261 = vunpack.c.l.s8.bf16 %v861
        %v2262 = vunpack.c.l.s8.bf16 %v862
        %v2263 = vunpack.c.l.s8.bf16 %v863
        %v2264 = vunpack.c.l.s8.bf16 %v864
        %v2265 = vunpack.c.h.s8.bf16 %v857
        %v2266 = vunpack.c.h.s8.bf16 %v858
        %v2267 = vunpack.c.h.s8.bf16 %v859
        %v2268 = vunpack.c.h.s8.bf16 %v860
        %v2269 = vunpack.c.h.s8.bf16 %v861
        %v2270 = vunpack.c.h.s8.bf16 %v862
        %v2271 = vunpack.c.h.s8.bf16 %v863
        %v2272 = vunpack.c.h.s8.bf16 %v864
        %v2273 = vunpack.c.l.s8.bf16 %v865
        %v2274 = vunpack.c.l.s8.bf16 %v866
        %v2275 = vunpack.c.l.s8.bf16 %v867
        %v2276 = vunpack.c.l.s8.bf16 %v868
        %v2277 = vunpack.c.l.s8.bf16 %v869
        %v2278 = vunpack.c.l.s8.bf16 %v870
        %v2279 = vunpack.c.l.s8.bf16 %v871
        %v2280 = vunpack.c.l.s8.bf16 %v872
        %v2281 = vunpack.c.h.s8.bf16 %v865
        %v2282 = vunpack.c.h.s8.bf16 %v866
        %v2283 = vunpack.c.h.s8.bf16 %v867
        %v2284 = vunpack.c.h.s8.bf16 %v868
        %v2285 = vunpack.c.h.s8.bf16 %v869
        %v2286 = vunpack.c.h.s8.bf16 %v870
        %v2287 = vunpack.c.h.s8.bf16 %v871
        %v2288 = vunpack.c.h.s8.bf16 %v872
        %v2289 = vunpack.c.l.s8.bf16 %v873
        %v2290 = vunpack.c.l.s8.bf16 %v874
        %v2291 = vunpack.c.l.s8.bf16 %v875
        %v2292 = vunpack.c.l.s8.bf16 %v876
        %v2293 = vunpack.c.l.s8.bf16 %v877
        %v2294 = vunpack.c.l.s8.bf16 %v878
        %v2295 = vunpack.c.l.s8.bf16 %v879
        %v2296 = vunpack.c.l.s8.bf16 %v880
        %v2297 = vunpack.c.h.s8.bf16 %v873
        %v2298 = vunpack.c.h.s8.bf16 %v874
        %v2299 = vunpack.c.h.s8.bf16 %v875
        %v2300 = vunpack.c.h.s8.bf16 %v876
        %v2301 = vunpack.c.h.s8.bf16 %v877
        %v2302 = vunpack.c.h.s8.bf16 %v878
        %v2303 = vunpack.c.h.s8.bf16 %v879
        %v2304 = vunpack.c.h.s8.bf16 %v880
        %v2305 = vunpack.c.l.s8.bf16 %v881
        %v2306 = vunpack.c.l.s8.bf16 %v882
        %v2307 = vunpack.c.l.s8.bf16 %v883
        %v2308 = vunpack.c.l.s8.bf16 %v884
        %v2309 = vunpack.c.l.s8.bf16 %v885
        %v2310 = vunpack.c.l.s8.bf16 %v886
        %v2311 = vunpack.c.l.s8.bf16 %v887
        %v2312 = vunpack.c.l.s8.bf16 %v888
        %v2313 = vunpack.c.h.s8.bf16 %v881
        %v2314 = vunpack.c.h.s8.bf16 %v882
        %v2315 = vunpack.c.h.s8.bf16 %v883
        %v2316 = vunpack.c.h.s8.bf16 %v884
        %v2317 = vunpack.c.h.s8.bf16 %v885
        %v2318 = vunpack.c.h.s8.bf16 %v886
        %v2319 = vunpack.c.h.s8.bf16 %v887
        %v2320 = vunpack.c.h.s8.bf16 %v888
        %v2321 = vunpack.c.l.s8.bf16 %v889
        %v2322 = vunpack.c.l.s8.bf16 %v890
        %v2323 = vunpack.c.l.s8.bf16 %v891
        %v2324 = vunpack.c.l.s8.bf16 %v892
        %v2325 = vunpack.c.l.s8.bf16 %v893
        %v2326 = vunpack.c.l.s8.bf16 %v894
        %v2327 = vunpack.c.l.s8.bf16 %v895
        %v2328 = vunpack.c.l.s8.bf16 %v896
        %v2329 = vunpack.c.h.s8.bf16 %v889
        %v2330 = vunpack.c.h.s8.bf16 %v890
        %v2331 = vunpack.c.h.s8.bf16 %v891
        %v2332 = vunpack.c.h.s8.bf16 %v892
        %v2333 = vunpack.c.h.s8.bf16 %v893
        %v2334 = vunpack.c.h.s8.bf16 %v894
        %v2335 = vunpack.c.h.s8.bf16 %v895
        %v2336 = vunpack.c.h.s8.bf16 %v896
        %v2337 = vunpack.c.l.s8.bf16 %v897
        %v2338 = vunpack.c.l.s8.bf16 %v898
        %v2339 = vunpack.c.l.s8.bf16 %v899
        %v2340 = vunpack.c.l.s8.bf16 %v900
        %v2341 = vunpack.c.l.s8.bf16 %v901
        %v2342 = vunpack.c.l.s8.bf16 %v902
        %v2343 = vunpack.c.l.s8.bf16 %v903
        %v2344 = vunpack.c.l.s8.bf16 %v904
        %v2345 = vunpack.c.h.s8.bf16 %v897
        %v2346 = vunpack.c.h.s8.bf16 %v898
        %v2347 = vunpack.c.h.s8.bf16 %v899
        %v2348 = vunpack.c.h.s8.bf16 %v900
        %v2349 = vunpack.c.h.s8.bf16 %v901
        %v2350 = vunpack.c.h.s8.bf16 %v902
        %v2351 = vunpack.c.h.s8.bf16 %v903
        %v2352 = vunpack.c.h.s8.bf16 %v904
        %v2353 = vunpack.c.l.s8.bf16 %v905
        %v2354 = vunpack.c.l.s8.bf16 %v906
        %v2355 = vunpack.c.l.s8.bf16 %v907
        %v2356 = vunpack.c.l.s8.bf16 %v908
        %v2357 = vunpack.c.l.s8.bf16 %v909
        %v2358 = vunpack.c.l.s8.bf16 %v910
        %v2359 = vunpack.c.l.s8.bf16 %v911
        %v2360 = vunpack.c.l.s8.bf16 %v912
        %v2361 = vunpack.c.h.s8.bf16 %v905
        %v2362 = vunpack.c.h.s8.bf16 %v906
        %v2363 = vunpack.c.h.s8.bf16 %v907
        %v2364 = vunpack.c.h.s8.bf16 %v908
        %v2365 = vunpack.c.h.s8.bf16 %v909
        %v2366 = vunpack.c.h.s8.bf16 %v910
        %v2367 = vunpack.c.h.s8.bf16 %v911
        %v2368 = vunpack.c.h.s8.bf16 %v912
        %v2369 = vunpack.c.l.s8.bf16 %v913
        %v2370 = vunpack.c.l.s8.bf16 %v914
        %v2371 = vunpack.c.l.s8.bf16 %v915
        %v2372 = vunpack.c.l.s8.bf16 %v916
        %v2373 = vunpack.c.l.s8.bf16 %v917
        %v2374 = vunpack.c.l.s8.bf16 %v918
        %v2375 = vunpack.c.l.s8.bf16 %v919
        %v2376 = vunpack.c.l.s8.bf16 %v920
        %v2377 = vunpack.c.h.s8.bf16 %v913
        %v2378 = vunpack.c.h.s8.bf16 %v914
        %v2379 = vunpack.c.h.s8.bf16 %v915
        %v2380 = vunpack.c.h.s8.bf16 %v916
        %v2381 = vunpack.c.h.s8.bf16 %v917
        %v2382 = vunpack.c.h.s8.bf16 %v918
        %v2383 = vunpack.c.h.s8.bf16 %v919
        %v2384 = vunpack.c.h.s8.bf16 %v920
        %v2385 = vunpack.c.l.s8.bf16 %v921
        %v2386 = vunpack.c.l.s8.bf16 %v922
        %v2387 = vunpack.c.l.s8.bf16 %v923
        %v2388 = vunpack.c.l.s8.bf16 %v924
        %v2389 = vunpack.c.l.s8.bf16 %v925
        %v2390 = vunpack.c.l.s8.bf16 %v926
        %v2391 = vunpack.c.l.s8.bf16 %v927
        %v2392 = vunpack.c.l.s8.bf16 %v928
        %v2393 = vunpack.c.h.s8.bf16 %v921
        %v2394 = vunpack.c.h.s8.bf16 %v922
        %v2395 = vunpack.c.h.s8.bf16 %v923
        %v2396 = vunpack.c.h.s8.bf16 %v924
        %v2397 = vunpack.c.h.s8.bf16 %v925
        %v2398 = vunpack.c.h.s8.bf16 %v926
        %v2399 = vunpack.c.h.s8.bf16 %v927
        %v2400 = vunpack.c.h.s8.bf16 %v928
        %v2401 = vunpack.c.l.s8.bf16 %v929
        %v2402 = vunpack.c.l.s8.bf16 %v930
        %v2403 = vunpack.c.l.s8.bf16 %v931
        %v2404 = vunpack.c.l.s8.bf16 %v932
        %v2405 = vunpack.c.l.s8.bf16 %v933
        %v2406 = vunpack.c.l.s8.bf16 %v934
        %v2407 = vunpack.c.l.s8.bf16 %v935
        %v2408 = vunpack.c.l.s8.bf16 %v936
        %v2409 = vunpack.c.h.s8.bf16 %v929
        %v2410 = vunpack.c.h.s8.bf16 %v930
        %v2411 = vunpack.c.h.s8.bf16 %v931
        %v2412 = vunpack.c.h.s8.bf16 %v932
        %v2413 = vunpack.c.h.s8.bf16 %v933
        %v2414 = vunpack.c.h.s8.bf16 %v934
        %v2415 = vunpack.c.h.s8.bf16 %v935
        %v2416 = vunpack.c.h.s8.bf16 %v936
        %v2417 = vunpack.c.l.s8.bf16 %v937
        %v2418 = vunpack.c.l.s8.bf16 %v938
        %v2419 = vunpack.c.l.s8.bf16 %v939
        %v2420 = vunpack.c.l.s8.bf16 %v940
        %v2421 = vunpack.c.l.s8.bf16 %v941
        %v2422 = vunpack.c.l.s8.bf16 %v942
        %v2423 = vunpack.c.l.s8.bf16 %v943
        %v2424 = vunpack.c.l.s8.bf16 %v944
        %v2425 = vunpack.c.h.s8.bf16 %v937
        %v2426 = vunpack.c.h.s8.bf16 %v938
        %v2427 = vunpack.c.h.s8.bf16 %v939
        %v2428 = vunpack.c.h.s8.bf16 %v940
        %v2429 = vunpack.c.h.s8.bf16 %v941
        %v2430 = vunpack.c.h.s8.bf16 %v942
        %v2431 = vunpack.c.h.s8.bf16 %v943
        %v2432 = vunpack.c.h.s8.bf16 %v944
        %v2433 = vunpack.c.l.s8.bf16 %v945
        %v2434 = vunpack.c.l.s8.bf16 %v946
        %v2435 = vunpack.c.l.s8.bf16 %v947
        %v2436 = vunpack.c.l.s8.bf16 %v948
        %v2437 = vunpack.c.l.s8.bf16 %v949
        %v2438 = vunpack.c.l.s8.bf16 %v950
        %v2439 = vunpack.c.l.s8.bf16 %v951
        %v2440 = vunpack.c.l.s8.bf16 %v952
        %v2441 = vunpack.c.h.s8.bf16 %v945
        %v2442 = vunpack.c.h.s8.bf16 %v946
        %v2443 = vunpack.c.h.s8.bf16 %v947
        %v2444 = vunpack.c.h.s8.bf16 %v948
        %v2445 = vunpack.c.h.s8.bf16 %v949
        %v2446 = vunpack.c.h.s8.bf16 %v950
        %v2447 = vunpack.c.h.s8.bf16 %v951
        %v2448 = vunpack.c.h.s8.bf16 %v952
        %v2449 = vunpack.c.l.s8.bf16 %v953
        %v2450 = vunpack.c.l.s8.bf16 %v954
        %v2451 = vunpack.c.l.s8.bf16 %v955
        %v2452 = vunpack.c.l.s8.bf16 %v956
        %v2453 = vunpack.c.l.s8.bf16 %v957
        %v2454 = vunpack.c.l.s8.bf16 %v958
        %v2455 = vunpack.c.l.s8.bf16 %v959
        %v2456 = vunpack.c.l.s8.bf16 %v960
        %v2457 = vunpack.c.h.s8.bf16 %v953
        %v2458 = vunpack.c.h.s8.bf16 %v954
        %v2459 = vunpack.c.h.s8.bf16 %v955
        %v2460 = vunpack.c.h.s8.bf16 %v956
        %v2461 = vunpack.c.h.s8.bf16 %v957
        %v2462 = vunpack.c.h.s8.bf16 %v958
        %v2463 = vunpack.c.h.s8.bf16 %v959
        %v2464 = vunpack.c.h.s8.bf16 %v960
        %v2465 = vunpack.c.l.s8.bf16 %v961
        %v2466 = vunpack.c.l.s8.bf16 %v962
        %v2467 = vunpack.c.l.s8.bf16 %v963
        %v2468 = vunpack.c.l.s8.bf16 %v964
        %v2469 = vunpack.c.l.s8.bf16 %v965
        %v2470 = vunpack.c.l.s8.bf16 %v966
        %v2471 = vunpack.c.l.s8.bf16 %v967
        %v2472 = vunpack.c.l.s8.bf16 %v968
        %v2473 = vunpack.c.h.s8.bf16 %v961
        %v2474 = vunpack.c.h.s8.bf16 %v962
        %v2475 = vunpack.c.h.s8.bf16 %v963
        %v2476 = vunpack.c.h.s8.bf16 %v964
        %v2477 = vunpack.c.h.s8.bf16 %v965
        %v2478 = vunpack.c.h.s8.bf16 %v966
        %v2479 = vunpack.c.h.s8.bf16 %v967
        %v2480 = vunpack.c.h.s8.bf16 %v968
        %v2481 = vunpack.c.l.s8.bf16 %v969
        %v2482 = vunpack.c.l.s8.bf16 %v970
        %v2483 = vunpack.c.l.s8.bf16 %v971
        %v2484 = vunpack.c.l.s8.bf16 %v972
        %v2485 = vunpack.c.l.s8.bf16 %v973
        %v2486 = vunpack.c.l.s8.bf16 %v974
        %v2487 = vunpack.c.l.s8.bf16 %v975
        %v2488 = vunpack.c.l.s8.bf16 %v976
        %v2489 = vunpack.c.h.s8.bf16 %v969
        %v2490 = vunpack.c.h.s8.bf16 %v970
        %v2491 = vunpack.c.h.s8.bf16 %v971
        %v2492 = vunpack.c.h.s8.bf16 %v972
        %v2493 = vunpack.c.h.s8.bf16 %v973
        %v2494 = vunpack.c.h.s8.bf16 %v974
        %v2495 = vunpack.c.h.s8.bf16 %v975
        %v2496 = vunpack.c.h.s8.bf16 %v976
        %v2497 = vunpack.c.l.s8.bf16 %v977
        %v2498 = vunpack.c.l.s8.bf16 %v978
        %v2499 = vunpack.c.l.s8.bf16 %v979
        %v2500 = vunpack.c.l.s8.bf16 %v980
        %v2501 = vunpack.c.l.s8.bf16 %v981
        %v2502 = vunpack.c.l.s8.bf16 %v982
        %v2503 = vunpack.c.l.s8.bf16 %v983
        %v2504 = vunpack.c.l.s8.bf16 %v984
        %v2505 = vunpack.c.h.s8.bf16 %v977
        %v2506 = vunpack.c.h.s8.bf16 %v978
        %v2507 = vunpack.c.h.s8.bf16 %v979
        %v2508 = vunpack.c.h.s8.bf16 %v980
        %v2509 = vunpack.c.h.s8.bf16 %v981
        %v2510 = vunpack.c.h.s8.bf16 %v982
        %v2511 = vunpack.c.h.s8.bf16 %v983
        %v2512 = vunpack.c.h.s8.bf16 %v984
        %v2513 = vunpack.c.l.s8.bf16 %v985
        %v2514 = vunpack.c.l.s8.bf16 %v986
        %v2515 = vunpack.c.l.s8.bf16 %v987
        %v2516 = vunpack.c.l.s8.bf16 %v988
        %v2517 = vunpack.c.l.s8.bf16 %v989
        %v2518 = vunpack.c.l.s8.bf16 %v990
        %v2519 = vunpack.c.l.s8.bf16 %v991
        %v2520 = vunpack.c.l.s8.bf16 %v992
        %v2521 = vunpack.c.h.s8.bf16 %v985
        %v2522 = vunpack.c.h.s8.bf16 %v986
        %v2523 = vunpack.c.h.s8.bf16 %v987
        %v2524 = vunpack.c.h.s8.bf16 %v988
        %v2525 = vunpack.c.h.s8.bf16 %v989
        %v2526 = vunpack.c.h.s8.bf16 %v990
        %v2527 = vunpack.c.h.s8.bf16 %v991
        %v2528 = vunpack.c.h.s8.bf16 %v992
        %v2529 = vunpack.c.l.s8.bf16 %v993
        %v2530 = vunpack.c.l.s8.bf16 %v994
        %v2531 = vunpack.c.l.s8.bf16 %v995
        %v2532 = vunpack.c.l.s8.bf16 %v996
        %v2533 = vunpack.c.l.s8.bf16 %v997
        %v2534 = vunpack.c.l.s8.bf16 %v998
        %v2535 = vunpack.c.l.s8.bf16 %v999
        %v2536 = vunpack.c.l.s8.bf16 %v1000
        %v2537 = vunpack.c.h.s8.bf16 %v993
        %v2538 = vunpack.c.h.s8.bf16 %v994
        %v2539 = vunpack.c.h.s8.bf16 %v995
        %v2540 = vunpack.c.h.s8.bf16 %v996
        %v2541 = vunpack.c.h.s8.bf16 %v997
        %v2542 = vunpack.c.h.s8.bf16 %v998
        %v2543 = vunpack.c.h.s8.bf16 %v999
        %v2544 = vunpack.c.h.s8.bf16 %v1000
        %v2545 = vunpack.c.l.s8.bf16 %v1001
        %v2546 = vunpack.c.l.s8.bf16 %v1002
        %v2547 = vunpack.c.l.s8.bf16 %v1003
        %v2548 = vunpack.c.l.s8.bf16 %v1004
        %v2549 = vunpack.c.l.s8.bf16 %v1005
        %v2550 = vunpack.c.l.s8.bf16 %v1006
        %v2551 = vunpack.c.l.s8.bf16 %v1007
        %v2552 = vunpack.c.l.s8.bf16 %v1008
        %v2553 = vunpack.c.h.s8.bf16 %v1001
        %v2554 = vunpack.c.h.s8.bf16 %v1002
        %v2555 = vunpack.c.h.s8.bf16 %v1003
        %v2556 = vunpack.c.h.s8.bf16 %v1004
        %v2557 = vunpack.c.h.s8.bf16 %v1005
        %v2558 = vunpack.c.h.s8.bf16 %v1006
        %v2559 = vunpack.c.h.s8.bf16 %v1007
        %v2560 = vunpack.c.h.s8.bf16 %v1008
        %v2561 = vunpack.c.l.s8.bf16 %v1009
        %v2562 = vunpack.c.l.s8.bf16 %v1010
        %v2563 = vunpack.c.l.s8.bf16 %v1011
        %v2564 = vunpack.c.l.s8.bf16 %v1012
        %v2565 = vunpack.c.l.s8.bf16 %v1013
        %v2566 = vunpack.c.l.s8.bf16 %v1014
        %v2567 = vunpack.c.l.s8.bf16 %v1015
        %v2568 = vunpack.c.l.s8.bf16 %v1016
        %v2569 = vunpack.c.h.s8.bf16 %v1009
        %v2570 = vunpack.c.h.s8.bf16 %v1010
        %v2571 = vunpack.c.h.s8.bf16 %v1011
        %v2572 = vunpack.c.h.s8.bf16 %v1012
        %v2573 = vunpack.c.h.s8.bf16 %v1013
        %v2574 = vunpack.c.h.s8.bf16 %v1014
        %v2575 = vunpack.c.h.s8.bf16 %v1015
        %v2576 = vunpack.c.h.s8.bf16 %v1016
        %v2577 = vunpack.c.l.s8.bf16 %v1017
        %v2578 = vunpack.c.l.s8.bf16 %v1018
        %v2579 = vunpack.c.l.s8.bf16 %v1019
        %v2580 = vunpack.c.l.s8.bf16 %v1020
        %v2581 = vunpack.c.l.s8.bf16 %v1021
        %v2582 = vunpack.c.l.s8.bf16 %v1022
        %v2583 = vunpack.c.l.s8.bf16 %v1023
        %v2584 = vunpack.c.l.s8.bf16 %v1024
        %v2585 = vunpack.c.h.s8.bf16 %v1017
        %v2586 = vunpack.c.h.s8.bf16 %v1018
        %v2587 = vunpack.c.h.s8.bf16 %v1019
        %v2588 = vunpack.c.h.s8.bf16 %v1020
        %v2589 = vunpack.c.h.s8.bf16 %v1021
        %v2590 = vunpack.c.h.s8.bf16 %v1022
        %v2591 = vunpack.c.h.s8.bf16 %v1023
        %v2592 = vunpack.c.h.s8.bf16 %v1024
        %v2593 = vunpack.c.l.s8.bf16 %v1025
        %v2594 = vunpack.c.l.s8.bf16 %v1026
        %v2595 = vunpack.c.l.s8.bf16 %v1027
        %v2596 = vunpack.c.l.s8.bf16 %v1028
        %v2597 = vunpack.c.l.s8.bf16 %v1029
        %v2598 = vunpack.c.l.s8.bf16 %v1030
        %v2599 = vunpack.c.l.s8.bf16 %v1031
        %v2600 = vunpack.c.l.s8.bf16 %v1032
        %v2601 = vunpack.c.h.s8.bf16 %v1025
        %v2602 = vunpack.c.h.s8.bf16 %v1026
        %v2603 = vunpack.c.h.s8.bf16 %v1027
        %v2604 = vunpack.c.h.s8.bf16 %v1028
        %v2605 = vunpack.c.h.s8.bf16 %v1029
        %v2606 = vunpack.c.h.s8.bf16 %v1030
        %v2607 = vunpack.c.h.s8.bf16 %v1031
        %v2608 = vunpack.c.h.s8.bf16 %v1032
        %v2609 = vunpack.c.l.s8.bf16 %v1033
        %v2610 = vunpack.c.l.s8.bf16 %v1034
        %v2611 = vunpack.c.l.s8.bf16 %v1035
        %v2612 = vunpack.c.l.s8.bf16 %v1036
        %v2613 = vunpack.c.l.s8.bf16 %v1037
        %v2614 = vunpack.c.l.s8.bf16 %v1038
        %v2615 = vunpack.c.l.s8.bf16 %v1039
        %v2616 = vunpack.c.l.s8.bf16 %v1040
        %v2617 = vunpack.c.h.s8.bf16 %v1033
        %v2618 = vunpack.c.h.s8.bf16 %v1034
        %v2619 = vunpack.c.h.s8.bf16 %v1035
        %v2620 = vunpack.c.h.s8.bf16 %v1036
        %v2621 = vunpack.c.h.s8.bf16 %v1037
        %v2622 = vunpack.c.h.s8.bf16 %v1038
        %v2623 = vunpack.c.h.s8.bf16 %v1039
        %v2624 = vunpack.c.h.s8.bf16 %v1040
        %v2625 = vunpack.c.l.s8.bf16 %v1041
        %v2626 = vunpack.c.l.s8.bf16 %v1042
        %v2627 = vunpack.c.l.s8.bf16 %v1043
        %v2628 = vunpack.c.l.s8.bf16 %v1044
        %v2629 = vunpack.c.l.s8.bf16 %v1045
        %v2630 = vunpack.c.l.s8.bf16 %v1046
        %v2631 = vunpack.c.l.s8.bf16 %v1047
        %v2632 = vunpack.c.l.s8.bf16 %v1048
        %v2633 = vunpack.c.h.s8.bf16 %v1041
        %v2634 = vunpack.c.h.s8.bf16 %v1042
        %v2635 = vunpack.c.h.s8.bf16 %v1043
        %v2636 = vunpack.c.h.s8.bf16 %v1044
        %v2637 = vunpack.c.h.s8.bf16 %v1045
        %v2638 = vunpack.c.h.s8.bf16 %v1046
        %v2639 = vunpack.c.h.s8.bf16 %v1047
        %v2640 = vunpack.c.h.s8.bf16 %v1048
        %v2641 = vunpack.c.l.s8.bf16 %v1049
        %v2642 = vunpack.c.l.s8.bf16 %v1050
        %v2643 = vunpack.c.l.s8.bf16 %v1051
        %v2644 = vunpack.c.l.s8.bf16 %v1052
        %v2645 = vunpack.c.l.s8.bf16 %v1053
        %v2646 = vunpack.c.l.s8.bf16 %v1054
        %v2647 = vunpack.c.l.s8.bf16 %v1055
        %v2648 = vunpack.c.l.s8.bf16 %v1056
        %v2649 = vunpack.c.h.s8.bf16 %v1049
        %v2650 = vunpack.c.h.s8.bf16 %v1050
        %v2651 = vunpack.c.h.s8.bf16 %v1051
        %v2652 = vunpack.c.h.s8.bf16 %v1052
        %v2653 = vunpack.c.h.s8.bf16 %v1053
        %v2654 = vunpack.c.h.s8.bf16 %v1054
        %v2655 = vunpack.c.h.s8.bf16 %v1055
        %v2656 = vunpack.c.h.s8.bf16 %v1056
        %v2657 = vunpack.c.l.s8.bf16 %v1057
        %v2658 = vunpack.c.l.s8.bf16 %v1058
        %v2659 = vunpack.c.l.s8.bf16 %v1059
        %v2660 = vunpack.c.l.s8.bf16 %v1060
        %v2661 = vunpack.c.l.s8.bf16 %v1061
        %v2662 = vunpack.c.l.s8.bf16 %v1062
        %v2663 = vunpack.c.l.s8.bf16 %v1063
        %v2664 = vunpack.c.l.s8.bf16 %v1064
        %v2665 = vunpack.c.h.s8.bf16 %v1057
        %v2666 = vunpack.c.h.s8.bf16 %v1058
        %v2667 = vunpack.c.h.s8.bf16 %v1059
        %v2668 = vunpack.c.h.s8.bf16 %v1060
        %v2669 = vunpack.c.h.s8.bf16 %v1061
        %v2670 = vunpack.c.h.s8.bf16 %v1062
        %v2671 = vunpack.c.h.s8.bf16 %v1063
        %v2672 = vunpack.c.h.s8.bf16 %v1064
        %v2673 = vunpack.c.l.s8.bf16 %v1065
        %v2674 = vunpack.c.l.s8.bf16 %v1066
        %v2675 = vunpack.c.l.s8.bf16 %v1067
        %v2676 = vunpack.c.l.s8.bf16 %v1068
        %v2677 = vunpack.c.l.s8.bf16 %v1069
        %v2678 = vunpack.c.l.s8.bf16 %v1070
        %v2679 = vunpack.c.l.s8.bf16 %v1071
        %v2680 = vunpack.c.l.s8.bf16 %v1072
        %v2681 = vunpack.c.h.s8.bf16 %v1065
        %v2682 = vunpack.c.h.s8.bf16 %v1066
        %v2683 = vunpack.c.h.s8.bf16 %v1067
        %v2684 = vunpack.c.h.s8.bf16 %v1068
        %v2685 = vunpack.c.h.s8.bf16 %v1069
        %v2686 = vunpack.c.h.s8.bf16 %v1070
        %v2687 = vunpack.c.h.s8.bf16 %v1071
        %v2688 = vunpack.c.h.s8.bf16 %v1072
        %v2689 = vunpack.c.l.s8.bf16 %v1073
        %v2690 = vunpack.c.l.s8.bf16 %v1074
        %v2691 = vunpack.c.l.s8.bf16 %v1075
        %v2692 = vunpack.c.l.s8.bf16 %v1076
        %v2693 = vunpack.c.l.s8.bf16 %v1077
        %v2694 = vunpack.c.l.s8.bf16 %v1078
        %v2695 = vunpack.c.l.s8.bf16 %v1079
        %v2696 = vunpack.c.l.s8.bf16 %v1080
        %v2697 = vunpack.c.h.s8.bf16 %v1073
        %v2698 = vunpack.c.h.s8.bf16 %v1074
        %v2699 = vunpack.c.h.s8.bf16 %v1075
        %v2700 = vunpack.c.h.s8.bf16 %v1076
        %v2701 = vunpack.c.h.s8.bf16 %v1077
        %v2702 = vunpack.c.h.s8.bf16 %v1078
        %v2703 = vunpack.c.h.s8.bf16 %v1079
        %v2704 = vunpack.c.h.s8.bf16 %v1080
        %v2705 = vunpack.c.l.s8.bf16 %v1081
        %v2706 = vunpack.c.l.s8.bf16 %v1082
        %v2707 = vunpack.c.l.s8.bf16 %v1083
        %v2708 = vunpack.c.l.s8.bf16 %v1084
        %v2709 = vunpack.c.l.s8.bf16 %v1085
        %v2710 = vunpack.c.l.s8.bf16 %v1086
        %v2711 = vunpack.c.l.s8.bf16 %v1087
        %v2712 = vunpack.c.l.s8.bf16 %v1088
        %v2713 = vunpack.c.h.s8.bf16 %v1081
        %v2714 = vunpack.c.h.s8.bf16 %v1082
        %v2715 = vunpack.c.h.s8.bf16 %v1083
        %v2716 = vunpack.c.h.s8.bf16 %v1084
        %v2717 = vunpack.c.h.s8.bf16 %v1085
        %v2718 = vunpack.c.h.s8.bf16 %v1086
        %v2719 = vunpack.c.h.s8.bf16 %v1087
        %v2720 = vunpack.c.h.s8.bf16 %v1088
        %v2721 = vunpack.c.l.s8.bf16 %v1089
        %v2722 = vunpack.c.l.s8.bf16 %v1090
        %v2723 = vunpack.c.l.s8.bf16 %v1091
        %v2724 = vunpack.c.l.s8.bf16 %v1092
        %v2725 = vunpack.c.l.s8.bf16 %v1093
        %v2726 = vunpack.c.l.s8.bf16 %v1094
        %v2727 = vunpack.c.l.s8.bf16 %v1095
        %v2728 = vunpack.c.l.s8.bf16 %v1096
        %v2729 = vunpack.c.h.s8.bf16 %v1089
        %v2730 = vunpack.c.h.s8.bf16 %v1090
        %v2731 = vunpack.c.h.s8.bf16 %v1091
        %v2732 = vunpack.c.h.s8.bf16 %v1092
        %v2733 = vunpack.c.h.s8.bf16 %v1093
        %v2734 = vunpack.c.h.s8.bf16 %v1094
        %v2735 = vunpack.c.h.s8.bf16 %v1095
        %v2736 = vunpack.c.h.s8.bf16 %v1096
        %v2737 = vunpack.c.l.s8.bf16 %v1097
        %v2738 = vunpack.c.l.s8.bf16 %v1098
        %v2739 = vunpack.c.l.s8.bf16 %v1099
        %v2740 = vunpack.c.l.s8.bf16 %v1100
        %v2741 = vunpack.c.l.s8.bf16 %v1101
        %v2742 = vunpack.c.l.s8.bf16 %v1102
        %v2743 = vunpack.c.l.s8.bf16 %v1103
        %v2744 = vunpack.c.l.s8.bf16 %v1104
        %v2745 = vunpack.c.h.s8.bf16 %v1097
        %v2746 = vunpack.c.h.s8.bf16 %v1098
        %v2747 = vunpack.c.h.s8.bf16 %v1099
        %v2748 = vunpack.c.h.s8.bf16 %v1100
        %v2749 = vunpack.c.h.s8.bf16 %v1101
        %v2750 = vunpack.c.h.s8.bf16 %v1102
        %v2751 = vunpack.c.h.s8.bf16 %v1103
        %v2752 = vunpack.c.h.s8.bf16 %v1104
        %v2753 = vunpack.c.l.s8.bf16 %v1105
        %v2754 = vunpack.c.l.s8.bf16 %v1106
        %v2755 = vunpack.c.l.s8.bf16 %v1107
        %v2756 = vunpack.c.l.s8.bf16 %v1108
        %v2757 = vunpack.c.l.s8.bf16 %v1109
        %v2758 = vunpack.c.l.s8.bf16 %v1110
        %v2759 = vunpack.c.l.s8.bf16 %v1111
        %v2760 = vunpack.c.l.s8.bf16 %v1112
        %v2761 = vunpack.c.h.s8.bf16 %v1105
        %v2762 = vunpack.c.h.s8.bf16 %v1106
        %v2763 = vunpack.c.h.s8.bf16 %v1107
        %v2764 = vunpack.c.h.s8.bf16 %v1108
        %v2765 = vunpack.c.h.s8.bf16 %v1109
        %v2766 = vunpack.c.h.s8.bf16 %v1110
        %v2767 = vunpack.c.h.s8.bf16 %v1111
        %v2768 = vunpack.c.h.s8.bf16 %v1112
        %v2769 = vunpack.c.l.s8.bf16 %v1113
        %v2770 = vunpack.c.l.s8.bf16 %v1114
        %v2771 = vunpack.c.l.s8.bf16 %v1115
        %v2772 = vunpack.c.l.s8.bf16 %v1116
        %v2773 = vunpack.c.l.s8.bf16 %v1117
        %v2774 = vunpack.c.l.s8.bf16 %v1118
        %v2775 = vunpack.c.l.s8.bf16 %v1119
        %v2776 = vunpack.c.l.s8.bf16 %v1120
        %v2777 = vunpack.c.h.s8.bf16 %v1113
        %v2778 = vunpack.c.h.s8.bf16 %v1114
        %v2779 = vunpack.c.h.s8.bf16 %v1115
        %v2780 = vunpack.c.h.s8.bf16 %v1116
        %v2781 = vunpack.c.h.s8.bf16 %v1117
        %v2782 = vunpack.c.h.s8.bf16 %v1118
        %v2783 = vunpack.c.h.s8.bf16 %v1119
        %v2784 = vunpack.c.h.s8.bf16 %v1120
        %v2785 = vunpack.c.l.s8.bf16 %v1121
        %v2786 = vunpack.c.l.s8.bf16 %v1122
        %v2787 = vunpack.c.l.s8.bf16 %v1123
        %v2788 = vunpack.c.l.s8.bf16 %v1124
        %v2789 = vunpack.c.l.s8.bf16 %v1125
        %v2790 = vunpack.c.l.s8.bf16 %v1126
        %v2791 = vunpack.c.l.s8.bf16 %v1127
        %v2792 = vunpack.c.l.s8.bf16 %v1128
        %v2793 = vunpack.c.h.s8.bf16 %v1121
        %v2794 = vunpack.c.h.s8.bf16 %v1122
        %v2795 = vunpack.c.h.s8.bf16 %v1123
        %v2796 = vunpack.c.h.s8.bf16 %v1124
        %v2797 = vunpack.c.h.s8.bf16 %v1125
        %v2798 = vunpack.c.h.s8.bf16 %v1126
        %v2799 = vunpack.c.h.s8.bf16 %v1127
        %v2800 = vunpack.c.h.s8.bf16 %v1128
        %v2801 = vunpack.c.l.s8.bf16 %v1129
        %v2802 = vunpack.c.l.s8.bf16 %v1130
        %v2803 = vunpack.c.l.s8.bf16 %v1131
        %v2804 = vunpack.c.l.s8.bf16 %v1132
        %v2805 = vunpack.c.l.s8.bf16 %v1133
        %v2806 = vunpack.c.l.s8.bf16 %v1134
        %v2807 = vunpack.c.l.s8.bf16 %v1135
        %v2808 = vunpack.c.l.s8.bf16 %v1136
        %v2809 = vunpack.c.h.s8.bf16 %v1129
        %v2810 = vunpack.c.h.s8.bf16 %v1130
        %v2811 = vunpack.c.h.s8.bf16 %v1131
        %v2812 = vunpack.c.h.s8.bf16 %v1132
        %v2813 = vunpack.c.h.s8.bf16 %v1133
        %v2814 = vunpack.c.h.s8.bf16 %v1134
        %v2815 = vunpack.c.h.s8.bf16 %v1135
        %v2816 = vunpack.c.h.s8.bf16 %v1136
        %v2817 = vunpack.c.l.s8.bf16 %v1137
        %v2818 = vunpack.c.l.s8.bf16 %v1138
        %v2819 = vunpack.c.l.s8.bf16 %v1139
        %v2820 = vunpack.c.l.s8.bf16 %v1140
        %v2821 = vunpack.c.l.s8.bf16 %v1141
        %v2822 = vunpack.c.l.s8.bf16 %v1142
        %v2823 = vunpack.c.l.s8.bf16 %v1143
        %v2824 = vunpack.c.l.s8.bf16 %v1144
        %v2825 = vunpack.c.h.s8.bf16 %v1137
        %v2826 = vunpack.c.h.s8.bf16 %v1138
        %v2827 = vunpack.c.h.s8.bf16 %v1139
        %v2828 = vunpack.c.h.s8.bf16 %v1140
        %v2829 = vunpack.c.h.s8.bf16 %v1141
        %v2830 = vunpack.c.h.s8.bf16 %v1142
        %v2831 = vunpack.c.h.s8.bf16 %v1143
        %v2832 = vunpack.c.h.s8.bf16 %v1144
        %v2833 = vunpack.c.l.s8.bf16 %v1145
        %v2834 = vunpack.c.l.s8.bf16 %v1146
        %v2835 = vunpack.c.l.s8.bf16 %v1147
        %v2836 = vunpack.c.l.s8.bf16 %v1148
        %v2837 = vunpack.c.l.s8.bf16 %v1149
        %v2838 = vunpack.c.l.s8.bf16 %v1150
        %v2839 = vunpack.c.l.s8.bf16 %v1151
        %v2840 = vunpack.c.l.s8.bf16 %v1152
        %v2841 = vunpack.c.h.s8.bf16 %v1145
        %v2842 = vunpack.c.h.s8.bf16 %v1146
        %v2843 = vunpack.c.h.s8.bf16 %v1147
        %v2844 = vunpack.c.h.s8.bf16 %v1148
        %v2845 = vunpack.c.h.s8.bf16 %v1149
        %v2846 = vunpack.c.h.s8.bf16 %v1150
        %v2847 = vunpack.c.h.s8.bf16 %v1151
        %v2848 = vunpack.c.h.s8.bf16 %v1152
        %v2849 = vunpack.c.l.s8.bf16 %v1153
        %v2850 = vunpack.c.l.s8.bf16 %v1154
        %v2851 = vunpack.c.l.s8.bf16 %v1155
        %v2852 = vunpack.c.l.s8.bf16 %v1156
        %v2853 = vunpack.c.l.s8.bf16 %v1157
        %v2854 = vunpack.c.l.s8.bf16 %v1158
        %v2855 = vunpack.c.l.s8.bf16 %v1159
        %v2856 = vunpack.c.l.s8.bf16 %v1160
        %v2857 = vunpack.c.h.s8.bf16 %v1153
        %v2858 = vunpack.c.h.s8.bf16 %v1154
        %v2859 = vunpack.c.h.s8.bf16 %v1155
        %v2860 = vunpack.c.h.s8.bf16 %v1156
        %v2861 = vunpack.c.h.s8.bf16 %v1157
        %v2862 = vunpack.c.h.s8.bf16 %v1158
        %v2863 = vunpack.c.h.s8.bf16 %v1159
        %v2864 = vunpack.c.h.s8.bf16 %v1160
        %v2865 = vunpack.c.l.s8.bf16 %v1161
        %v2866 = vunpack.c.l.s8.bf16 %v1162
        %v2867 = vunpack.c.l.s8.bf16 %v1163
        %v2868 = vunpack.c.l.s8.bf16 %v1164
        %v2869 = vunpack.c.l.s8.bf16 %v1165
        %v2870 = vunpack.c.l.s8.bf16 %v1166
        %v2871 = vunpack.c.l.s8.bf16 %v1167
        %v2872 = vunpack.c.l.s8.bf16 %v1168
        %v2873 = vunpack.c.h.s8.bf16 %v1161
        %v2874 = vunpack.c.h.s8.bf16 %v1162
        %v2875 = vunpack.c.h.s8.bf16 %v1163
        %v2876 = vunpack.c.h.s8.bf16 %v1164
        %v2877 = vunpack.c.h.s8.bf16 %v1165
        %v2878 = vunpack.c.h.s8.bf16 %v1166
        %v2879 = vunpack.c.h.s8.bf16 %v1167
        %v2880 = vunpack.c.h.s8.bf16 %v1168
        %v2881 = vunpack.c.l.s8.bf16 %v1169
        %v2882 = vunpack.c.l.s8.bf16 %v1170
        %v2883 = vunpack.c.l.s8.bf16 %v1171
        %v2884 = vunpack.c.l.s8.bf16 %v1172
        %v2885 = vunpack.c.l.s8.bf16 %v1173
        %v2886 = vunpack.c.l.s8.bf16 %v1174
        %v2887 = vunpack.c.l.s8.bf16 %v1175
        %v2888 = vunpack.c.l.s8.bf16 %v1176
        %v2889 = vunpack.c.h.s8.bf16 %v1169
        %v2890 = vunpack.c.h.s8.bf16 %v1170
        %v2891 = vunpack.c.h.s8.bf16 %v1171
        %v2892 = vunpack.c.h.s8.bf16 %v1172
        %v2893 = vunpack.c.h.s8.bf16 %v1173
        %v2894 = vunpack.c.h.s8.bf16 %v1174
        %v2895 = vunpack.c.h.s8.bf16 %v1175
        %v2896 = vunpack.c.h.s8.bf16 %v1176
        %v2897 = vunpack.c.l.s8.bf16 %v1177
        %v2898 = vunpack.c.l.s8.bf16 %v1178
        %v2899 = vunpack.c.l.s8.bf16 %v1179
        %v2900 = vunpack.c.l.s8.bf16 %v1180
        %v2901 = vunpack.c.l.s8.bf16 %v1181
        %v2902 = vunpack.c.l.s8.bf16 %v1182
        %v2903 = vunpack.c.l.s8.bf16 %v1183
        %v2904 = vunpack.c.l.s8.bf16 %v1184
        %v2905 = vunpack.c.h.s8.bf16 %v1177
        %v2906 = vunpack.c.h.s8.bf16 %v1178
        %v2907 = vunpack.c.h.s8.bf16 %v1179
        %v2908 = vunpack.c.h.s8.bf16 %v1180
        %v2909 = vunpack.c.h.s8.bf16 %v1181
        %v2910 = vunpack.c.h.s8.bf16 %v1182
        %v2911 = vunpack.c.h.s8.bf16 %v1183
        %v2912 = vunpack.c.h.s8.bf16 %v1184
        %v2913 = vunpack.c.l.s8.bf16 %v1185
        %v2914 = vunpack.c.l.s8.bf16 %v1186
        %v2915 = vunpack.c.l.s8.bf16 %v1187
        %v2916 = vunpack.c.l.s8.bf16 %v1188
        %v2917 = vunpack.c.l.s8.bf16 %v1189
        %v2918 = vunpack.c.l.s8.bf16 %v1190
        %v2919 = vunpack.c.l.s8.bf16 %v1191
        %v2920 = vunpack.c.l.s8.bf16 %v1192
        %v2921 = vunpack.c.h.s8.bf16 %v1185
        %v2922 = vunpack.c.h.s8.bf16 %v1186
        %v2923 = vunpack.c.h.s8.bf16 %v1187
        %v2924 = vunpack.c.h.s8.bf16 %v1188
        %v2925 = vunpack.c.h.s8.bf16 %v1189
        %v2926 = vunpack.c.h.s8.bf16 %v1190
        %v2927 = vunpack.c.h.s8.bf16 %v1191
        %v2928 = vunpack.c.h.s8.bf16 %v1192
        %v2929 = vunpack.c.l.s8.bf16 %v1193
        %v2930 = vunpack.c.l.s8.bf16 %v1194
        %v2931 = vunpack.c.l.s8.bf16 %v1195
        %v2932 = vunpack.c.l.s8.bf16 %v1196
        %v2933 = vunpack.c.l.s8.bf16 %v1197
        %v2934 = vunpack.c.l.s8.bf16 %v1198
        %v2935 = vunpack.c.l.s8.bf16 %v1199
        %v2936 = vunpack.c.l.s8.bf16 %v1200
        %v2937 = vunpack.c.h.s8.bf16 %v1193
        %v2938 = vunpack.c.h.s8.bf16 %v1194
        %v2939 = vunpack.c.h.s8.bf16 %v1195
        %v2940 = vunpack.c.h.s8.bf16 %v1196
        %v2941 = vunpack.c.h.s8.bf16 %v1197
        %v2942 = vunpack.c.h.s8.bf16 %v1198
        %v2943 = vunpack.c.h.s8.bf16 %v1199
        %v2944 = vunpack.c.h.s8.bf16 %v1200
        %v2945 = vunpack.c.l.s8.bf16 %v1201
        %v2946 = vunpack.c.l.s8.bf16 %v1202
        %v2947 = vunpack.c.l.s8.bf16 %v1203
        %v2948 = vunpack.c.l.s8.bf16 %v1204
        %v2949 = vunpack.c.l.s8.bf16 %v1205
        %v2950 = vunpack.c.l.s8.bf16 %v1206
        %v2951 = vunpack.c.l.s8.bf16 %v1207
        %v2952 = vunpack.c.l.s8.bf16 %v1208
        %v2953 = vunpack.c.h.s8.bf16 %v1201
        %v2954 = vunpack.c.h.s8.bf16 %v1202
        %v2955 = vunpack.c.h.s8.bf16 %v1203
        %v2956 = vunpack.c.h.s8.bf16 %v1204
        %v2957 = vunpack.c.h.s8.bf16 %v1205
        %v2958 = vunpack.c.h.s8.bf16 %v1206
        %v2959 = vunpack.c.h.s8.bf16 %v1207
        %v2960 = vunpack.c.h.s8.bf16 %v1208
        %v2961 = vunpack.c.l.s8.bf16 %v1209
        %v2962 = vunpack.c.l.s8.bf16 %v1210
        %v2963 = vunpack.c.l.s8.bf16 %v1211
        %v2964 = vunpack.c.l.s8.bf16 %v1212
        %v2965 = vunpack.c.l.s8.bf16 %v1213
        %v2966 = vunpack.c.l.s8.bf16 %v1214
        %v2967 = vunpack.c.l.s8.bf16 %v1215
        %v2968 = vunpack.c.l.s8.bf16 %v1216
        %v2969 = vunpack.c.h.s8.bf16 %v1209
        %v2970 = vunpack.c.h.s8.bf16 %v1210
        %v2971 = vunpack.c.h.s8.bf16 %v1211
        %v2972 = vunpack.c.h.s8.bf16 %v1212
        %v2973 = vunpack.c.h.s8.bf16 %v1213
        %v2974 = vunpack.c.h.s8.bf16 %v1214
        %v2975 = vunpack.c.h.s8.bf16 %v1215
        %v2976 = vunpack.c.h.s8.bf16 %v1216
        %v2977 = vunpack.c.l.s8.bf16 %v1217
        %v2978 = vunpack.c.l.s8.bf16 %v1218
        %v2979 = vunpack.c.l.s8.bf16 %v1219
        %v2980 = vunpack.c.l.s8.bf16 %v1220
        %v2981 = vunpack.c.l.s8.bf16 %v1221
        %v2982 = vunpack.c.l.s8.bf16 %v1222
        %v2983 = vunpack.c.l.s8.bf16 %v1223
        %v2984 = vunpack.c.l.s8.bf16 %v1224
        %v2985 = vunpack.c.h.s8.bf16 %v1217
        %v2986 = vunpack.c.h.s8.bf16 %v1218
        %v2987 = vunpack.c.h.s8.bf16 %v1219
        %v2988 = vunpack.c.h.s8.bf16 %v1220
        %v2989 = vunpack.c.h.s8.bf16 %v1221
        %v2990 = vunpack.c.h.s8.bf16 %v1222
        %v2991 = vunpack.c.h.s8.bf16 %v1223
        %v2992 = vunpack.c.h.s8.bf16 %v1224
        %v2993 = vunpack.c.l.s8.bf16 %v1225
        %v2994 = vunpack.c.l.s8.bf16 %v1226
        %v2995 = vunpack.c.l.s8.bf16 %v1227
        %v2996 = vunpack.c.l.s8.bf16 %v1228
        %v2997 = vunpack.c.l.s8.bf16 %v1229
        %v2998 = vunpack.c.l.s8.bf16 %v1230
        %v2999 = vunpack.c.l.s8.bf16 %v1231
        %v3000 = vunpack.c.l.s8.bf16 %v1232
        %v3001 = vunpack.c.h.s8.bf16 %v1225
        %v3002 = vunpack.c.h.s8.bf16 %v1226
        %v3003 = vunpack.c.h.s8.bf16 %v1227
        %v3004 = vunpack.c.h.s8.bf16 %v1228
        %v3005 = vunpack.c.h.s8.bf16 %v1229
        %v3006 = vunpack.c.h.s8.bf16 %v1230
        %v3007 = vunpack.c.h.s8.bf16 %v1231
        %v3008 = vunpack.c.h.s8.bf16 %v1232
        %v3009 = vunpack.c.l.s8.bf16 %v1233
        %v3010 = vunpack.c.l.s8.bf16 %v1234
        %v3011 = vunpack.c.l.s8.bf16 %v1235
        %v3012 = vunpack.c.l.s8.bf16 %v1236
        %v3013 = vunpack.c.l.s8.bf16 %v1237
        %v3014 = vunpack.c.l.s8.bf16 %v1238
        %v3015 = vunpack.c.l.s8.bf16 %v1239
        %v3016 = vunpack.c.l.s8.bf16 %v1240
        %v3017 = vunpack.c.h.s8.bf16 %v1233
        %v3018 = vunpack.c.h.s8.bf16 %v1234
        %v3019 = vunpack.c.h.s8.bf16 %v1235
        %v3020 = vunpack.c.h.s8.bf16 %v1236
        %v3021 = vunpack.c.h.s8.bf16 %v1237
        %v3022 = vunpack.c.h.s8.bf16 %v1238
        %v3023 = vunpack.c.h.s8.bf16 %v1239
        %v3024 = vunpack.c.h.s8.bf16 %v1240
        %v3025 = vunpack.c.l.s8.bf16 %v1241
        %v3026 = vunpack.c.l.s8.bf16 %v1242
        %v3027 = vunpack.c.l.s8.bf16 %v1243
        %v3028 = vunpack.c.l.s8.bf16 %v1244
        %v3029 = vunpack.c.l.s8.bf16 %v1245
        %v3030 = vunpack.c.l.s8.bf16 %v1246
        %v3031 = vunpack.c.l.s8.bf16 %v1247
        %v3032 = vunpack.c.l.s8.bf16 %v1248
        %v3033 = vunpack.c.h.s8.bf16 %v1241
        %v3034 = vunpack.c.h.s8.bf16 %v1242
        %v3035 = vunpack.c.h.s8.bf16 %v1243
        %v3036 = vunpack.c.h.s8.bf16 %v1244
        %v3037 = vunpack.c.h.s8.bf16 %v1245
        %v3038 = vunpack.c.h.s8.bf16 %v1246
        %v3039 = vunpack.c.h.s8.bf16 %v1247
        %v3040 = vunpack.c.h.s8.bf16 %v1248
        %v3041 = vunpack.c.l.s8.bf16 %v1249
        %v3042 = vunpack.c.l.s8.bf16 %v1250
        %v3043 = vunpack.c.l.s8.bf16 %v1251
        %v3044 = vunpack.c.l.s8.bf16 %v1252
        %v3045 = vunpack.c.l.s8.bf16 %v1253
        %v3046 = vunpack.c.l.s8.bf16 %v1254
        %v3047 = vunpack.c.l.s8.bf16 %v1255
        %v3048 = vunpack.c.l.s8.bf16 %v1256
        %v3049 = vunpack.c.h.s8.bf16 %v1249
        %v3050 = vunpack.c.h.s8.bf16 %v1250
        %v3051 = vunpack.c.h.s8.bf16 %v1251
        %v3052 = vunpack.c.h.s8.bf16 %v1252
        %v3053 = vunpack.c.h.s8.bf16 %v1253
        %v3054 = vunpack.c.h.s8.bf16 %v1254
        %v3055 = vunpack.c.h.s8.bf16 %v1255
        %v3056 = vunpack.c.h.s8.bf16 %v1256
        %v3057 = vunpack.c.l.s8.bf16 %v1257
        %v3058 = vunpack.c.l.s8.bf16 %v1258
        %v3059 = vunpack.c.l.s8.bf16 %v1259
        %v3060 = vunpack.c.l.s8.bf16 %v1260
        %v3061 = vunpack.c.l.s8.bf16 %v1261
        %v3062 = vunpack.c.l.s8.bf16 %v1262
        %v3063 = vunpack.c.l.s8.bf16 %v1263
        %v3064 = vunpack.c.l.s8.bf16 %v1264
        %v3065 = vunpack.c.h.s8.bf16 %v1257
        %v3066 = vunpack.c.h.s8.bf16 %v1258
        %v3067 = vunpack.c.h.s8.bf16 %v1259
        %v3068 = vunpack.c.h.s8.bf16 %v1260
        %v3069 = vunpack.c.h.s8.bf16 %v1261
        %v3070 = vunpack.c.h.s8.bf16 %v1262
        %v3071 = vunpack.c.h.s8.bf16 %v1263
        %v3072 = vunpack.c.h.s8.bf16 %v1264
        %v3073 = vunpack.c.l.s8.bf16 %v1265
        %v3074 = vunpack.c.l.s8.bf16 %v1266
        %v3075 = vunpack.c.l.s8.bf16 %v1267
        %v3076 = vunpack.c.l.s8.bf16 %v1268
        %v3077 = vunpack.c.l.s8.bf16 %v1269
        %v3078 = vunpack.c.l.s8.bf16 %v1270
        %v3079 = vunpack.c.l.s8.bf16 %v1271
        %v3080 = vunpack.c.l.s8.bf16 %v1272
        %v3081 = vunpack.c.h.s8.bf16 %v1265
        %v3082 = vunpack.c.h.s8.bf16 %v1266
        %v3083 = vunpack.c.h.s8.bf16 %v1267
        %v3084 = vunpack.c.h.s8.bf16 %v1268
        %v3085 = vunpack.c.h.s8.bf16 %v1269
        %v3086 = vunpack.c.h.s8.bf16 %v1270
        %v3087 = vunpack.c.h.s8.bf16 %v1271
        %v3088 = vunpack.c.h.s8.bf16 %v1272
        %v3089 = vunpack.c.l.s8.bf16 %v1273
        %v3090 = vunpack.c.l.s8.bf16 %v1274
        %v3091 = vunpack.c.l.s8.bf16 %v1275
        %v3092 = vunpack.c.l.s8.bf16 %v1276
        %v3093 = vunpack.c.l.s8.bf16 %v1277
        %v3094 = vunpack.c.l.s8.bf16 %v1278
        %v3095 = vunpack.c.l.s8.bf16 %v1279
        %v3096 = vunpack.c.l.s8.bf16 %v1280
        %v3097 = vunpack.c.h.s8.bf16 %v1273
        %v3098 = vunpack.c.h.s8.bf16 %v1274
        %v3099 = vunpack.c.h.s8.bf16 %v1275
        %v3100 = vunpack.c.h.s8.bf16 %v1276
        %v3101 = vunpack.c.h.s8.bf16 %v1277
        %v3102 = vunpack.c.h.s8.bf16 %v1278
        %v3103 = vunpack.c.h.s8.bf16 %v1279
        %v3104 = vunpack.c.h.s8.bf16 %v1280
        %v3105 = vunpack.c.l.s8.bf16 %v1281
        %v3106 = vunpack.c.l.s8.bf16 %v1282
        %v3107 = vunpack.c.l.s8.bf16 %v1283
        %v3108 = vunpack.c.l.s8.bf16 %v1284
        %v3109 = vunpack.c.l.s8.bf16 %v1285
        %v3110 = vunpack.c.l.s8.bf16 %v1286
        %v3111 = vunpack.c.l.s8.bf16 %v1287
        %v3112 = vunpack.c.l.s8.bf16 %v1288
        %v3113 = vunpack.c.h.s8.bf16 %v1281
        %v3114 = vunpack.c.h.s8.bf16 %v1282
        %v3115 = vunpack.c.h.s8.bf16 %v1283
        %v3116 = vunpack.c.h.s8.bf16 %v1284
        %v3117 = vunpack.c.h.s8.bf16 %v1285
        %v3118 = vunpack.c.h.s8.bf16 %v1286
        %v3119 = vunpack.c.h.s8.bf16 %v1287
        %v3120 = vunpack.c.h.s8.bf16 %v1288
        %v3121 = vunpack.c.l.s8.bf16 %v1289
        %v3122 = vunpack.c.l.s8.bf16 %v1290
        %v3123 = vunpack.c.l.s8.bf16 %v1291
        %v3124 = vunpack.c.l.s8.bf16 %v1292
        %v3125 = vunpack.c.l.s8.bf16 %v1293
        %v3126 = vunpack.c.l.s8.bf16 %v1294
        %v3127 = vunpack.c.l.s8.bf16 %v1295
        %v3128 = vunpack.c.l.s8.bf16 %v1296
        %v3129 = vunpack.c.h.s8.bf16 %v1289
        %v3130 = vunpack.c.h.s8.bf16 %v1290
        %v3131 = vunpack.c.h.s8.bf16 %v1291
        %v3132 = vunpack.c.h.s8.bf16 %v1292
        %v3133 = vunpack.c.h.s8.bf16 %v1293
        %v3134 = vunpack.c.h.s8.bf16 %v1294
        %v3135 = vunpack.c.h.s8.bf16 %v1295
        %v3136 = vunpack.c.h.s8.bf16 %v1296
        %v3137 = vunpack.c.l.s8.bf16 %v1297
        %v3138 = vunpack.c.l.s8.bf16 %v1298
        %v3139 = vunpack.c.l.s8.bf16 %v1299
        %v3140 = vunpack.c.l.s8.bf16 %v1300
        %v3141 = vunpack.c.l.s8.bf16 %v1301
        %v3142 = vunpack.c.l.s8.bf16 %v1302
        %v3143 = vunpack.c.l.s8.bf16 %v1303
        %v3144 = vunpack.c.l.s8.bf16 %v1304
        %v3145 = vunpack.c.h.s8.bf16 %v1297
        %v3146 = vunpack.c.h.s8.bf16 %v1298
        %v3147 = vunpack.c.h.s8.bf16 %v1299
        %v3148 = vunpack.c.h.s8.bf16 %v1300
        %v3149 = vunpack.c.h.s8.bf16 %v1301
        %v3150 = vunpack.c.h.s8.bf16 %v1302
        %v3151 = vunpack.c.h.s8.bf16 %v1303
        %v3152 = vunpack.c.h.s8.bf16 %v1304
        %v3153 = vunpack.c.l.s8.bf16 %v1305
        %v3154 = vunpack.c.l.s8.bf16 %v1306
        %v3155 = vunpack.c.l.s8.bf16 %v1307
        %v3156 = vunpack.c.l.s8.bf16 %v1308
        %v3157 = vunpack.c.l.s8.bf16 %v1309
        %v3158 = vunpack.c.l.s8.bf16 %v1310
        %v3159 = vunpack.c.l.s8.bf16 %v1311
        %v3160 = vunpack.c.l.s8.bf16 %v1312
        %v3161 = vunpack.c.h.s8.bf16 %v1305
        %v3162 = vunpack.c.h.s8.bf16 %v1306
        %v3163 = vunpack.c.h.s8.bf16 %v1307
        %v3164 = vunpack.c.h.s8.bf16 %v1308
        %v3165 = vunpack.c.h.s8.bf16 %v1309
        %v3166 = vunpack.c.h.s8.bf16 %v1310
        %v3167 = vunpack.c.h.s8.bf16 %v1311
        %v3168 = vunpack.c.h.s8.bf16 %v1312
        %v3169 = vunpack.c.l.s8.bf16 %v1313
        %v3170 = vunpack.c.l.s8.bf16 %v1314
        %v3171 = vunpack.c.l.s8.bf16 %v1315
        %v3172 = vunpack.c.l.s8.bf16 %v1316
        %v3173 = vunpack.c.l.s8.bf16 %v1317
        %v3174 = vunpack.c.l.s8.bf16 %v1318
        %v3175 = vunpack.c.l.s8.bf16 %v1319
        %v3176 = vunpack.c.l.s8.bf16 %v1320
        %v3177 = vunpack.c.h.s8.bf16 %v1313
        %v3178 = vunpack.c.h.s8.bf16 %v1314
        %v3179 = vunpack.c.h.s8.bf16 %v1315
        %v3180 = vunpack.c.h.s8.bf16 %v1316
        %v3181 = vunpack.c.h.s8.bf16 %v1317
        %v3182 = vunpack.c.h.s8.bf16 %v1318
        %v3183 = vunpack.c.h.s8.bf16 %v1319
        %v3184 = vunpack.c.h.s8.bf16 %v1320
        %v3185 = vunpack.c.l.s8.bf16 %v1321
        %v3186 = vunpack.c.l.s8.bf16 %v1322
        %v3187 = vunpack.c.l.s8.bf16 %v1323
        %v3188 = vunpack.c.l.s8.bf16 %v1324
        %v3189 = vunpack.c.l.s8.bf16 %v1325
        %v3190 = vunpack.c.l.s8.bf16 %v1326
        %v3191 = vunpack.c.l.s8.bf16 %v1327
        %v3192 = vunpack.c.l.s8.bf16 %v1328
        %v3193 = vunpack.c.h.s8.bf16 %v1321
        %v3194 = vunpack.c.h.s8.bf16 %v1322
        %v3195 = vunpack.c.h.s8.bf16 %v1323
        %v3196 = vunpack.c.h.s8.bf16 %v1324
        %v3197 = vunpack.c.h.s8.bf16 %v1325
        %v3198 = vunpack.c.h.s8.bf16 %v1326
        %v3199 = vunpack.c.h.s8.bf16 %v1327
        %v3200 = vunpack.c.h.s8.bf16 %v1328
        %v3201 = vunpack.c.l.s8.bf16 %v1329
        %v3202 = vunpack.c.l.s8.bf16 %v1330
        %v3203 = vunpack.c.l.s8.bf16 %v1331
        %v3204 = vunpack.c.l.s8.bf16 %v1332
        %v3205 = vunpack.c.l.s8.bf16 %v1333
        %v3206 = vunpack.c.l.s8.bf16 %v1334
        %v3207 = vunpack.c.l.s8.bf16 %v1335
        %v3208 = vunpack.c.l.s8.bf16 %v1336
        %v3209 = vunpack.c.h.s8.bf16 %v1329
        %v3210 = vunpack.c.h.s8.bf16 %v1330
        %v3211 = vunpack.c.h.s8.bf16 %v1331
        %v3212 = vunpack.c.h.s8.bf16 %v1332
        %v3213 = vunpack.c.h.s8.bf16 %v1333
        %v3214 = vunpack.c.h.s8.bf16 %v1334
        %v3215 = vunpack.c.h.s8.bf16 %v1335
        %v3216 = vunpack.c.h.s8.bf16 %v1336
        %v3217 = vunpack.c.l.s8.bf16 %v1337
        %v3218 = vunpack.c.l.s8.bf16 %v1338
        %v3219 = vunpack.c.l.s8.bf16 %v1339
        %v3220 = vunpack.c.l.s8.bf16 %v1340
        %v3221 = vunpack.c.l.s8.bf16 %v1341
        %v3222 = vunpack.c.l.s8.bf16 %v1342
        %v3223 = vunpack.c.l.s8.bf16 %v1343
        %v3224 = vunpack.c.l.s8.bf16 %v1344
        %v3225 = vunpack.c.h.s8.bf16 %v1337
        %v3226 = vunpack.c.h.s8.bf16 %v1338
        %v3227 = vunpack.c.h.s8.bf16 %v1339
        %v3228 = vunpack.c.h.s8.bf16 %v1340
        %v3229 = vunpack.c.h.s8.bf16 %v1341
        %v3230 = vunpack.c.h.s8.bf16 %v1342
        %v3231 = vunpack.c.h.s8.bf16 %v1343
        %v3232 = vunpack.c.h.s8.bf16 %v1344
        %v3233 = vunpack.c.l.s8.bf16 %v1345
        %v3234 = vunpack.c.l.s8.bf16 %v1346
        %v3235 = vunpack.c.l.s8.bf16 %v1347
        %v3236 = vunpack.c.l.s8.bf16 %v1348
        %v3237 = vunpack.c.l.s8.bf16 %v1349
        %v3238 = vunpack.c.l.s8.bf16 %v1350
        %v3239 = vunpack.c.l.s8.bf16 %v1351
        %v3240 = vunpack.c.l.s8.bf16 %v1352
        %v3241 = vunpack.c.h.s8.bf16 %v1345
        %v3242 = vunpack.c.h.s8.bf16 %v1346
        %v3243 = vunpack.c.h.s8.bf16 %v1347
        %v3244 = vunpack.c.h.s8.bf16 %v1348
        %v3245 = vunpack.c.h.s8.bf16 %v1349
        %v3246 = vunpack.c.h.s8.bf16 %v1350
        %v3247 = vunpack.c.h.s8.bf16 %v1351
        %v3248 = vunpack.c.h.s8.bf16 %v1352
        %v3249 = vunpack.c.l.s8.bf16 %v1353
        %v3250 = vunpack.c.l.s8.bf16 %v1354
        %v3251 = vunpack.c.l.s8.bf16 %v1355
        %v3252 = vunpack.c.l.s8.bf16 %v1356
        %v3253 = vunpack.c.l.s8.bf16 %v1357
        %v3254 = vunpack.c.l.s8.bf16 %v1358
        %v3255 = vunpack.c.l.s8.bf16 %v1359
        %v3256 = vunpack.c.l.s8.bf16 %v1360
        %v3257 = vunpack.c.h.s8.bf16 %v1353
        %v3258 = vunpack.c.h.s8.bf16 %v1354
        %v3259 = vunpack.c.h.s8.bf16 %v1355
        %v3260 = vunpack.c.h.s8.bf16 %v1356
        %v3261 = vunpack.c.h.s8.bf16 %v1357
        %v3262 = vunpack.c.h.s8.bf16 %v1358
        %v3263 = vunpack.c.h.s8.bf16 %v1359
        %v3264 = vunpack.c.h.s8.bf16 %v1360
        %v3265 = vunpack.c.l.s8.bf16 %v1361
        %v3266 = vunpack.c.l.s8.bf16 %v1362
        %v3267 = vunpack.c.l.s8.bf16 %v1363
        %v3268 = vunpack.c.l.s8.bf16 %v1364
        %v3269 = vunpack.c.l.s8.bf16 %v1365
        %v3270 = vunpack.c.l.s8.bf16 %v1366
        %v3271 = vunpack.c.l.s8.bf16 %v1367
        %v3272 = vunpack.c.l.s8.bf16 %v1368
        %v3273 = vunpack.c.h.s8.bf16 %v1361
        %v3274 = vunpack.c.h.s8.bf16 %v1362
        %v3275 = vunpack.c.h.s8.bf16 %v1363
        %v3276 = vunpack.c.h.s8.bf16 %v1364
        %v3277 = vunpack.c.h.s8.bf16 %v1365
        %v3278 = vunpack.c.h.s8.bf16 %v1366
        %v3279 = vunpack.c.h.s8.bf16 %v1367
        %v3280 = vunpack.c.h.s8.bf16 %v1368
        %v3281 = vunpack.c.l.s8.bf16 %v1369
        %v3282 = vunpack.c.l.s8.bf16 %v1370
        %v3283 = vunpack.c.l.s8.bf16 %v1371
        %v3284 = vunpack.c.l.s8.bf16 %v1372
        %v3285 = vunpack.c.l.s8.bf16 %v1373
        %v3286 = vunpack.c.l.s8.bf16 %v1374
        %v3287 = vunpack.c.l.s8.bf16 %v1375
        %v3288 = vunpack.c.l.s8.bf16 %v1376
        %v3289 = vunpack.c.h.s8.bf16 %v1369
        %v3290 = vunpack.c.h.s8.bf16 %v1370
        %v3291 = vunpack.c.h.s8.bf16 %v1371
        %v3292 = vunpack.c.h.s8.bf16 %v1372
        %v3293 = vunpack.c.h.s8.bf16 %v1373
        %v3294 = vunpack.c.h.s8.bf16 %v1374
        %v3295 = vunpack.c.h.s8.bf16 %v1375
        %v3296 = vunpack.c.h.s8.bf16 %v1376
        %v3297 = vunpack.c.l.s8.bf16 %v1377
        %v3298 = vunpack.c.l.s8.bf16 %v1378
        %v3299 = vunpack.c.l.s8.bf16 %v1379
        %v3300 = vunpack.c.l.s8.bf16 %v1380
        %v3301 = vunpack.c.l.s8.bf16 %v1381
        %v3302 = vunpack.c.l.s8.bf16 %v1382
        %v3303 = vunpack.c.l.s8.bf16 %v1383
        %v3304 = vunpack.c.l.s8.bf16 %v1384
        %v3305 = vunpack.c.h.s8.bf16 %v1377
        %v3306 = vunpack.c.h.s8.bf16 %v1378
        %v3307 = vunpack.c.h.s8.bf16 %v1379
        %v3308 = vunpack.c.h.s8.bf16 %v1380
        %v3309 = vunpack.c.h.s8.bf16 %v1381
        %v3310 = vunpack.c.h.s8.bf16 %v1382
        %v3311 = vunpack.c.h.s8.bf16 %v1383
        %v3312 = vunpack.c.h.s8.bf16 %v1384
        %v3313 = vunpack.c.l.s8.bf16 %v1385
        %v3314 = vunpack.c.l.s8.bf16 %v1386
        %v3315 = vunpack.c.l.s8.bf16 %v1387
        %v3316 = vunpack.c.l.s8.bf16 %v1388
        %v3317 = vunpack.c.l.s8.bf16 %v1389
        %v3318 = vunpack.c.l.s8.bf16 %v1390
        %v3319 = vunpack.c.l.s8.bf16 %v1391
        %v3320 = vunpack.c.l.s8.bf16 %v1392
        %v3321 = vunpack.c.h.s8.bf16 %v1385
        %v3322 = vunpack.c.h.s8.bf16 %v1386
        %v3323 = vunpack.c.h.s8.bf16 %v1387
        %v3324 = vunpack.c.h.s8.bf16 %v1388
        %v3325 = vunpack.c.h.s8.bf16 %v1389
        %v3326 = vunpack.c.h.s8.bf16 %v1390
        %v3327 = vunpack.c.h.s8.bf16 %v1391
        %v3328 = vunpack.c.h.s8.bf16 %v1392
        %v3329 = vunpack.c.l.s8.bf16 %v1393
        %v3330 = vunpack.c.l.s8.bf16 %v1394
        %v3331 = vunpack.c.l.s8.bf16 %v1395
        %v3332 = vunpack.c.l.s8.bf16 %v1396
        %v3333 = vunpack.c.l.s8.bf16 %v1397
        %v3334 = vunpack.c.l.s8.bf16 %v1398
        %v3335 = vunpack.c.l.s8.bf16 %v1399
        %v3336 = vunpack.c.l.s8.bf16 %v1400
        %v3337 = vunpack.c.h.s8.bf16 %v1393
        %v3338 = vunpack.c.h.s8.bf16 %v1394
        %v3339 = vunpack.c.h.s8.bf16 %v1395
        %v3340 = vunpack.c.h.s8.bf16 %v1396
        %v3341 = vunpack.c.h.s8.bf16 %v1397
        %v3342 = vunpack.c.h.s8.bf16 %v1398
        %v3343 = vunpack.c.h.s8.bf16 %v1399
        %v3344 = vunpack.c.h.s8.bf16 %v1400
        %v3345 = vunpack.c.l.s8.bf16 %v1401
        %v3346 = vunpack.c.l.s8.bf16 %v1402
        %v3347 = vunpack.c.l.s8.bf16 %v1403
        %v3348 = vunpack.c.l.s8.bf16 %v1404
        %v3349 = vunpack.c.l.s8.bf16 %v1405
        %v3350 = vunpack.c.l.s8.bf16 %v1406
        %v3351 = vunpack.c.l.s8.bf16 %v1407
        %v3352 = vunpack.c.l.s8.bf16 %v1408
        %v3353 = vunpack.c.h.s8.bf16 %v1401
        %v3354 = vunpack.c.h.s8.bf16 %v1402
        %v3355 = vunpack.c.h.s8.bf16 %v1403
        %v3356 = vunpack.c.h.s8.bf16 %v1404
        %v3357 = vunpack.c.h.s8.bf16 %v1405
        %v3358 = vunpack.c.h.s8.bf16 %v1406
        %v3359 = vunpack.c.h.s8.bf16 %v1407
        %v3360 = vunpack.c.h.s8.bf16 %v1408
        %v3361 = vunpack.c.l.s8.bf16 %v1409
        %v3362 = vunpack.c.l.s8.bf16 %v1410
        %v3363 = vunpack.c.l.s8.bf16 %v1411
        %v3364 = vunpack.c.l.s8.bf16 %v1412
        %v3365 = vunpack.c.l.s8.bf16 %v1413
        %v3366 = vunpack.c.l.s8.bf16 %v1414
        %v3367 = vunpack.c.l.s8.bf16 %v1415
        %v3368 = vunpack.c.l.s8.bf16 %v1416
        %v3369 = vunpack.c.h.s8.bf16 %v1409
        %v3370 = vunpack.c.h.s8.bf16 %v1410
        %v3371 = vunpack.c.h.s8.bf16 %v1411
        %v3372 = vunpack.c.h.s8.bf16 %v1412
        %v3373 = vunpack.c.h.s8.bf16 %v1413
        %v3374 = vunpack.c.h.s8.bf16 %v1414
        %v3375 = vunpack.c.h.s8.bf16 %v1415
        %v3376 = vunpack.c.h.s8.bf16 %v1416
        %v3377 = vunpack.c.l.s8.bf16 %v1417
        %v3378 = vunpack.c.l.s8.bf16 %v1418
        %v3379 = vunpack.c.l.s8.bf16 %v1419
        %v3380 = vunpack.c.l.s8.bf16 %v1420
        %v3381 = vunpack.c.l.s8.bf16 %v1421
        %v3382 = vunpack.c.l.s8.bf16 %v1422
        %v3383 = vunpack.c.l.s8.bf16 %v1423
        %v3384 = vunpack.c.l.s8.bf16 %v1424
        %v3385 = vunpack.c.h.s8.bf16 %v1417
        %v3386 = vunpack.c.h.s8.bf16 %v1418
        %v3387 = vunpack.c.h.s8.bf16 %v1419
        %v3388 = vunpack.c.h.s8.bf16 %v1420
        %v3389 = vunpack.c.h.s8.bf16 %v1421
        %v3390 = vunpack.c.h.s8.bf16 %v1422
        %v3391 = vunpack.c.h.s8.bf16 %v1423
        %v3392 = vunpack.c.h.s8.bf16 %v1424
        %v3393 = vunpack.c.l.s8.bf16 %v1425
        %v3394 = vunpack.c.l.s8.bf16 %v1426
        %v3395 = vunpack.c.l.s8.bf16 %v1427
        %v3396 = vunpack.c.l.s8.bf16 %v1428
        %v3397 = vunpack.c.l.s8.bf16 %v1429
        %v3398 = vunpack.c.l.s8.bf16 %v1430
        %v3399 = vunpack.c.l.s8.bf16 %v1431
        %v3400 = vunpack.c.l.s8.bf16 %v1432
        %v3401 = vunpack.c.h.s8.bf16 %v1425
        %v3402 = vunpack.c.h.s8.bf16 %v1426
        %v3403 = vunpack.c.h.s8.bf16 %v1427
        %v3404 = vunpack.c.h.s8.bf16 %v1428
        %v3405 = vunpack.c.h.s8.bf16 %v1429
        %v3406 = vunpack.c.h.s8.bf16 %v1430
        %v3407 = vunpack.c.h.s8.bf16 %v1431
        %v3408 = vunpack.c.h.s8.bf16 %v1432
        %v3409 = vunpack.c.l.s8.bf16 %v1433
        %v3410 = vunpack.c.l.s8.bf16 %v1434
        %v3411 = vunpack.c.l.s8.bf16 %v1435
        %v3412 = vunpack.c.l.s8.bf16 %v1436
        %v3413 = vunpack.c.l.s8.bf16 %v1437
        %v3414 = vunpack.c.l.s8.bf16 %v1438
        %v3415 = vunpack.c.l.s8.bf16 %v1439
        %v3416 = vunpack.c.l.s8.bf16 %v1440
        %v3417 = vunpack.c.h.s8.bf16 %v1433
        %v3418 = vunpack.c.h.s8.bf16 %v1434
        %v3419 = vunpack.c.h.s8.bf16 %v1435
        %v3420 = vunpack.c.h.s8.bf16 %v1436
        %v3421 = vunpack.c.h.s8.bf16 %v1437
        %v3422 = vunpack.c.h.s8.bf16 %v1438
        %v3423 = vunpack.c.h.s8.bf16 %v1439
        %v3424 = vunpack.c.h.s8.bf16 %v1440
        %v3425 = vunpack.c.l.s8.bf16 %v1441
        %v3426 = vunpack.c.l.s8.bf16 %v1442
        %v3427 = vunpack.c.l.s8.bf16 %v1443
        %v3428 = vunpack.c.l.s8.bf16 %v1444
        %v3429 = vunpack.c.l.s8.bf16 %v1445
        %v3430 = vunpack.c.l.s8.bf16 %v1446
        %v3431 = vunpack.c.l.s8.bf16 %v1447
        %v3432 = vunpack.c.l.s8.bf16 %v1448
        %v3433 = vunpack.c.h.s8.bf16 %v1441
        %v3434 = vunpack.c.h.s8.bf16 %v1442
        %v3435 = vunpack.c.h.s8.bf16 %v1443
        %v3436 = vunpack.c.h.s8.bf16 %v1444
        %v3437 = vunpack.c.h.s8.bf16 %v1445
        %v3438 = vunpack.c.h.s8.bf16 %v1446
        %v3439 = vunpack.c.h.s8.bf16 %v1447
        %v3440 = vunpack.c.h.s8.bf16 %v1448
        %v3441 = vunpack.c.l.s8.bf16 %v1449
        %v3442 = vunpack.c.l.s8.bf16 %v1450
        %v3443 = vunpack.c.l.s8.bf16 %v1451
        %v3444 = vunpack.c.l.s8.bf16 %v1452
        %v3445 = vunpack.c.l.s8.bf16 %v1453
        %v3446 = vunpack.c.l.s8.bf16 %v1454
        %v3447 = vunpack.c.l.s8.bf16 %v1455
        %v3448 = vunpack.c.l.s8.bf16 %v1456
        %v3449 = vunpack.c.h.s8.bf16 %v1449
        %v3450 = vunpack.c.h.s8.bf16 %v1450
        %v3451 = vunpack.c.h.s8.bf16 %v1451
        %v3452 = vunpack.c.h.s8.bf16 %v1452
        %v3453 = vunpack.c.h.s8.bf16 %v1453
        %v3454 = vunpack.c.h.s8.bf16 %v1454
        %v3455 = vunpack.c.h.s8.bf16 %v1455
        %v3456 = vunpack.c.h.s8.bf16 %v1456
        %v3457 = vunpack.c.l.s8.bf16 %v1457
        %v3458 = vunpack.c.l.s8.bf16 %v1458
        %v3459 = vunpack.c.l.s8.bf16 %v1459
        %v3460 = vunpack.c.l.s8.bf16 %v1460
        %v3461 = vunpack.c.l.s8.bf16 %v1461
        %v3462 = vunpack.c.l.s8.bf16 %v1462
        %v3463 = vunpack.c.l.s8.bf16 %v1463
        %v3464 = vunpack.c.l.s8.bf16 %v1464
        %v3465 = vunpack.c.h.s8.bf16 %v1457
        %v3466 = vunpack.c.h.s8.bf16 %v1458
        %v3467 = vunpack.c.h.s8.bf16 %v1459
        %v3468 = vunpack.c.h.s8.bf16 %v1460
        %v3469 = vunpack.c.h.s8.bf16 %v1461
        %v3470 = vunpack.c.h.s8.bf16 %v1462
        %v3471 = vunpack.c.h.s8.bf16 %v1463
        %v3472 = vunpack.c.h.s8.bf16 %v1464
        %v3473 = vunpack.c.l.s8.bf16 %v1465
        %v3474 = vunpack.c.l.s8.bf16 %v1466
        %v3475 = vunpack.c.l.s8.bf16 %v1467
        %v3476 = vunpack.c.l.s8.bf16 %v1468
        %v3477 = vunpack.c.l.s8.bf16 %v1469
        %v3478 = vunpack.c.l.s8.bf16 %v1470
        %v3479 = vunpack.c.l.s8.bf16 %v1471
        %v3480 = vunpack.c.l.s8.bf16 %v1472
        %v3481 = vunpack.c.h.s8.bf16 %v1465
        %v3482 = vunpack.c.h.s8.bf16 %v1466
        %v3483 = vunpack.c.h.s8.bf16 %v1467
        %v3484 = vunpack.c.h.s8.bf16 %v1468
        %v3485 = vunpack.c.h.s8.bf16 %v1469
        %v3486 = vunpack.c.h.s8.bf16 %v1470
        %v3487 = vunpack.c.h.s8.bf16 %v1471
        %v3488 = vunpack.c.h.s8.bf16 %v1472
        %v3489 = vunpack.c.l.s8.bf16 %v1473
        %v3490 = vunpack.c.l.s8.bf16 %v1474
        %v3491 = vunpack.c.l.s8.bf16 %v1475
        %v3492 = vunpack.c.l.s8.bf16 %v1476
        %v3493 = vunpack.c.l.s8.bf16 %v1477
        %v3494 = vunpack.c.l.s8.bf16 %v1478
        %v3495 = vunpack.c.l.s8.bf16 %v1479
        %v3496 = vunpack.c.l.s8.bf16 %v1480
        %v3497 = vunpack.c.h.s8.bf16 %v1473
        %v3498 = vunpack.c.h.s8.bf16 %v1474
        %v3499 = vunpack.c.h.s8.bf16 %v1475
        %v3500 = vunpack.c.h.s8.bf16 %v1476
        %v3501 = vunpack.c.h.s8.bf16 %v1477
        %v3502 = vunpack.c.h.s8.bf16 %v1478
        %v3503 = vunpack.c.h.s8.bf16 %v1479
        %v3504 = vunpack.c.h.s8.bf16 %v1480
        %v3505 = vunpack.c.l.s8.bf16 %v1481
        %v3506 = vunpack.c.l.s8.bf16 %v1482
        %v3507 = vunpack.c.l.s8.bf16 %v1483
        %v3508 = vunpack.c.l.s8.bf16 %v1484
        %v3509 = vunpack.c.l.s8.bf16 %v1485
        %v3510 = vunpack.c.l.s8.bf16 %v1486
        %v3511 = vunpack.c.l.s8.bf16 %v1487
        %v3512 = vunpack.c.l.s8.bf16 %v1488
        %v3513 = vunpack.c.h.s8.bf16 %v1481
        %v3514 = vunpack.c.h.s8.bf16 %v1482
        %v3515 = vunpack.c.h.s8.bf16 %v1483
        %v3516 = vunpack.c.h.s8.bf16 %v1484
        %v3517 = vunpack.c.h.s8.bf16 %v1485
        %v3518 = vunpack.c.h.s8.bf16 %v1486
        %v3519 = vunpack.c.h.s8.bf16 %v1487
        %v3520 = vunpack.c.h.s8.bf16 %v1488
        %v3521 = vunpack.c.l.s8.bf16 %v1489
        %v3522 = vunpack.c.l.s8.bf16 %v1490
        %v3523 = vunpack.c.l.s8.bf16 %v1491
        %v3524 = vunpack.c.l.s8.bf16 %v1492
        %v3525 = vunpack.c.l.s8.bf16 %v1493
        %v3526 = vunpack.c.l.s8.bf16 %v1494
        %v3527 = vunpack.c.l.s8.bf16 %v1495
        %v3528 = vunpack.c.l.s8.bf16 %v1496
        %v3529 = vunpack.c.h.s8.bf16 %v1489
        %v3530 = vunpack.c.h.s8.bf16 %v1490
        %v3531 = vunpack.c.h.s8.bf16 %v1491
        %v3532 = vunpack.c.h.s8.bf16 %v1492
        %v3533 = vunpack.c.h.s8.bf16 %v1493
        %v3534 = vunpack.c.h.s8.bf16 %v1494
        %v3535 = vunpack.c.h.s8.bf16 %v1495
        %v3536 = vunpack.c.h.s8.bf16 %v1496
        %v3537 = vunpack.c.l.s8.bf16 %v1497
        %v3538 = vunpack.c.l.s8.bf16 %v1498
        %v3539 = vunpack.c.l.s8.bf16 %v1499
        %v3540 = vunpack.c.l.s8.bf16 %v1500
        %v3541 = vunpack.c.l.s8.bf16 %v1501
        %v3542 = vunpack.c.l.s8.bf16 %v1502
        %v3543 = vunpack.c.l.s8.bf16 %v1503
        %v3544 = vunpack.c.l.s8.bf16 %v1504
        %v3545 = vunpack.c.h.s8.bf16 %v1497
        %v3546 = vunpack.c.h.s8.bf16 %v1498
        %v3547 = vunpack.c.h.s8.bf16 %v1499
        %v3548 = vunpack.c.h.s8.bf16 %v1500
        %v3549 = vunpack.c.h.s8.bf16 %v1501
        %v3550 = vunpack.c.h.s8.bf16 %v1502
        %v3551 = vunpack.c.h.s8.bf16 %v1503
        %v3552 = vunpack.c.h.s8.bf16 %v1504
        %v3553 = vld [vmem:[%s0] sm:$0xff]
        %v3554 = vld [vmem:[%s0 + $0x8] sm:$0xff]
        %v3555 = vld [vmem:[%s0 + $0x10] sm:$0xff]
        %v3556 = vld [vmem:[%s0 + $0x18] sm:$0xff]
        %v3557 = vld [vmem:[%s0 + $0x20] sm:$0xff]
        %v3558 = vld [vmem:[%s0 + $0x28] sm:$0xff]
        %v3559 = vld [vmem:[%s0 + $0x30] sm:$0xff]
        %v3560 = vld [vmem:[%s0 + $0x38] sm:$0xff]
        %v3561 = vld [vmem:[%s0 + $0x40] sm:$0xff]
        %v3562 = vld [vmem:[%s0 + $0x48] sm:$0xff]
        %v3563 = vld [vmem:[%s0 + $0x50] sm:$0xff]
        %v3564 = vld [vmem:[%s0 + $0x58] sm:$0xff]
        %v3565 = vld [vmem:[%s0 + $0x60] sm:$0xff]
        %v3566 = vld [vmem:[%s0 + $0x68] sm:$0xff]
        %v3567 = vld [vmem:[%s0 + $0x70] sm:$0xff]
        %v3568 = vld [vmem:[%s0 + $0x78] sm:$0xff]
        %v3585 = vunpack.c.l.b16 %v3553
        %v3586 = vunpack.c.h.b16 %v3553
        %v3587 = vunpack.c.l.b16 %v3554
        %v3588 = vunpack.c.h.b16 %v3554
        %v3589 = vunpack.c.l.b16 %v3555
        %v3590 = vunpack.c.h.b16 %v3555
        %v3591 = vunpack.c.l.b16 %v3556
        %v3592 = vunpack.c.h.b16 %v3556
        %v3593 = vunpack.c.l.b16 %v3557
        %v3594 = vunpack.c.h.b16 %v3557
        %v3595 = vunpack.c.l.b16 %v3558
        %v3596 = vunpack.c.h.b16 %v3558
        %v3597 = vunpack.c.l.b16 %v3559
        %v3598 = vunpack.c.h.b16 %v3559
        %v3599 = vunpack.c.l.b16 %v3560
        %v3600 = vunpack.c.h.b16 %v3560
        %v3601 = vunpack.c.l.b16 %v3561
        %v3602 = vunpack.c.h.b16 %v3561
        %v3603 = vunpack.c.l.b16 %v3562
        %v3604 = vunpack.c.h.b16 %v3562
        %v3605 = vunpack.c.l.b16 %v3563
        %v3606 = vunpack.c.h.b16 %v3563
        %v3607 = vunpack.c.l.b16 %v3564
        %v3608 = vunpack.c.h.b16 %v3564
        %v3609 = vunpack.c.l.b16 %v3565
        %v3610 = vunpack.c.h.b16 %v3565
        %v3611 = vunpack.c.l.b16 %v3566
        %v3612 = vunpack.c.h.b16 %v3566
        %v3613 = vunpack.c.l.b16 %v3567
        %v3614 = vunpack.c.h.b16 %v3567
        %v3615 = vunpack.c.l.b16 %v3568
        %v3616 = vunpack.c.h.b16 %v3568
        %v3617 = vpack.c.b16 %v3585, %v3585
        %v3618 = vpack.c.b16 %v3586, %v3586
        %v3619 = vpack.c.b16 %v3587, %v3587
        %v3620 = vpack.c.b16 %v3588, %v3588
        %v3621 = vpack.c.b16 %v3589, %v3589
        %v3622 = vpack.c.b16 %v3590, %v3590
        %v3623 = vpack.c.b16 %v3591, %v3591
        %v3624 = vpack.c.b16 %v3592, %v3592
        %v3625 = vpack.c.b16 %v3593, %v3593
        %v3626 = vpack.c.b16 %v3594, %v3594
        %v3627 = vpack.c.b16 %v3595, %v3595
        %v3628 = vpack.c.b16 %v3596, %v3596
        %v3629 = vpack.c.b16 %v3597, %v3597
        %v3630 = vpack.c.b16 %v3598, %v3598
        %v3631 = vpack.c.b16 %v3599, %v3599
        %v3632 = vpack.c.b16 %v3600, %v3600
        %v3633 = vpack.c.b16 %v3601, %v3601
        %v3634 = vpack.c.b16 %v3602, %v3602
        %v3635 = vpack.c.b16 %v3603, %v3603
        %v3636 = vpack.c.b16 %v3604, %v3604
        %v3637 = vpack.c.b16 %v3605, %v3605
        %v3638 = vpack.c.b16 %v3606, %v3606
        %v3639 = vpack.c.b16 %v3607, %v3607
        %v3640 = vpack.c.b16 %v3608, %v3608
        %v3641 = vpack.c.b16 %v3609, %v3609
        %v3642 = vpack.c.b16 %v3610, %v3610
        %v3643 = vpack.c.b16 %v3611, %v3611
        %v3644 = vpack.c.b16 %v3612, %v3612
        %v3645 = vpack.c.b16 %v3613, %v3613
        %v3646 = vpack.c.b16 %v3614, %v3614
        %v3647 = vpack.c.b16 %v3615, %v3615
        %v3648 = vpack.c.b16 %v3616, %v3616
        %3681 = vmatprep.subr.bf16.mxu0 %v1562
        %3682 = vmatpush1.bf16.msra.mxu0 %v1561
        %3683 = vmatprep.subr.bf16.mxu0 %v1554
        %3684 = vmatpush1.bf16.msra.mxu0 %v1553
        %3685 = vmatprep.subr.bf16.mxu0 %v1546
        %3686 = vmatpush1.bf16.msra.mxu0 %v1545
        %3687 = vmatprep.subr.bf16.mxu0 %v1538
        %3688 = vmatpush1.bf16.msra.mxu0 %v1537
        %3689 = vmatprep.subr.bf16.mxu0 %v1530
        %3690 = vmatpush1.bf16.msra.mxu0 %v1529
        %3691 = vmatprep.subr.bf16.mxu0 %v1522
        %3692 = vmatpush1.bf16.msra.mxu0 %v1521
        %3693 = vmatprep.subr.bf16.mxu0 %v1514
        %3694 = vmatpush1.bf16.msra.mxu0 %v1513
        %3695 = vmatprep.subr.bf16.mxu0 %v1506
        %3696 = vmatpush1.bf16.msra.mxu0 %v1505
        %3697 = vmatprep.subr.bf16.mxu0 %v1626
        %3698 = vmatpush2.bf16.msra.mxu0 %v1625
        %3699 = vmatprep.subr.bf16.mxu0 %v1618
        %3700 = vmatpush2.bf16.msra.mxu0 %v1617
        %3701 = vmatprep.subr.bf16.mxu0 %v1610
        %3702 = vmatpush2.bf16.msra.mxu0 %v1609
        %3703 = vmatprep.subr.bf16.mxu0 %v1602
        %3704 = vmatpush2.bf16.msra.mxu0 %v1601
        %3705 = vmatprep.subr.bf16.mxu0 %v1594
        %3706 = vmatpush2.bf16.msra.mxu0 %v1593
        %3707 = vmatprep.subr.bf16.mxu0 %v1586
        %3708 = vmatpush2.bf16.msra.mxu0 %v1585
        %3709 = vmatprep.subr.bf16.mxu0 %v1578
        %3710 = vmatpush2.bf16.msra.mxu0 %v1577
        %3711 = vmatprep.subr.bf16.mxu0 %v1570
        %3712 = vmatpush2.bf16.msra.mxu0 %v1569
        %3713 = vmatprep.mubr.bf16.mxu0 %v3618
        %3714 = vmatmul.mubr.bf16.gmra.mxu0 %v3617
        %v3715 = vpop.f32.mrf.mxu0
        %v3716 = vadd.f32 0.0, %v3715
        %v3717 = vpop.f32.mrf.mxu0
        %v3718 = vadd.f32 0.0, %v3717
        %v3719 = vpop.f32.mrf.mxu0
        %v3720 = vpop.f32.mrf.mxu0
        %3721 = vdwg.mxu0
        %3722 = vmatprep.subr.bf16.mxu0 %v1690
        %3723 = vmatpush1.bf16.msra.mxu0 %v1689
        %3724 = vmatprep.subr.bf16.mxu0 %v1682
        %3725 = vmatpush1.bf16.msra.mxu0 %v1681
        %3726 = vmatprep.subr.bf16.mxu0 %v1674
        %3727 = vmatpush1.bf16.msra.mxu0 %v1673
        %3728 = vmatprep.subr.bf16.mxu0 %v1666
        %3729 = vmatpush1.bf16.msra.mxu0 %v1665
        %3730 = vmatprep.subr.bf16.mxu0 %v1658
        %3731 = vmatpush1.bf16.msra.mxu0 %v1657
        %3732 = vmatprep.subr.bf16.mxu0 %v1650
        %3733 = vmatpush1.bf16.msra.mxu0 %v1649
        %3734 = vmatprep.subr.bf16.mxu0 %v1642
        %3735 = vmatpush1.bf16.msra.mxu0 %v1641
        %3736 = vmatprep.subr.bf16.mxu0 %v1634
        %3737 = vmatpush1.bf16.msra.mxu0 %v1633
        %3738 = vmatprep.subr.bf16.mxu0 %v1754
        %3739 = vmatpush2.bf16.msra.mxu0 %v1753
        %3740 = vmatprep.subr.bf16.mxu0 %v1746
        %3741 = vmatpush2.bf16.msra.mxu0 %v1745
        %3742 = vmatprep.subr.bf16.mxu0 %v1738
        %3743 = vmatpush2.bf16.msra.mxu0 %v1737
        %3744 = vmatprep.subr.bf16.mxu0 %v1730
        %3745 = vmatpush2.bf16.msra.mxu0 %v1729
        %3746 = vmatprep.subr.bf16.mxu0 %v1722
        %3747 = vmatpush2.bf16.msra.mxu0 %v1721
        %3748 = vmatprep.subr.bf16.mxu0 %v1714
        %3749 = vmatpush2.bf16.msra.mxu0 %v1713
        %3750 = vmatprep.subr.bf16.mxu0 %v1706
        %3751 = vmatpush2.bf16.msra.mxu0 %v1705
        %3752 = vmatprep.subr.bf16.mxu0 %v1698
        %3753 = vmatpush2.bf16.msra.mxu0 %v1697
        %3754 = vmatprep.mubr.bf16.mxu0 %v3620
        %3755 = vmatmul.mubr.bf16.gmra.mxu0 %v3619
        %v3756 = vpop.f32.mrf.mxu0
        %v3757 = vadd.f32 %v3716, %v3756
        %v3758 = vpop.f32.mrf.mxu0
        %v3759 = vadd.f32 %v3718, %v3758
        %v3760 = vpop.f32.mrf.mxu0
        %v3761 = vpop.f32.mrf.mxu0
        %3762 = vdwg.mxu0
        %3763 = vmatprep.subr.bf16.mxu0 %v1818
        %3764 = vmatpush1.bf16.msra.mxu0 %v1817
        %3765 = vmatprep.subr.bf16.mxu0 %v1810
        %3766 = vmatpush1.bf16.msra.mxu0 %v1809
        %3767 = vmatprep.subr.bf16.mxu0 %v1802
        %3768 = vmatpush1.bf16.msra.mxu0 %v1801
        %3769 = vmatprep.subr.bf16.mxu0 %v1794
        %3770 = vmatpush1.bf16.msra.mxu0 %v1793
        %3771 = vmatprep.subr.bf16.mxu0 %v1786
        %3772 = vmatpush1.bf16.msra.mxu0 %v1785
        %3773 = vmatprep.subr.bf16.mxu0 %v1778
        %3774 = vmatpush1.bf16.msra.mxu0 %v1777
        %3775 = vmatprep.subr.bf16.mxu0 %v1770
        %3776 = vmatpush1.bf16.msra.mxu0 %v1769
        %3777 = vmatprep.subr.bf16.mxu0 %v1762
        %3778 = vmatpush1.bf16.msra.mxu0 %v1761
        %3779 = vmatprep.subr.bf16.mxu0 %v1882
        %3780 = vmatpush2.bf16.msra.mxu0 %v1881
        %3781 = vmatprep.subr.bf16.mxu0 %v1874
        %3782 = vmatpush2.bf16.msra.mxu0 %v1873
        %3783 = vmatprep.subr.bf16.mxu0 %v1866
        %3784 = vmatpush2.bf16.msra.mxu0 %v1865
        %3785 = vmatprep.subr.bf16.mxu0 %v1858
        %3786 = vmatpush2.bf16.msra.mxu0 %v1857
        %3787 = vmatprep.subr.bf16.mxu0 %v1850
        %3788 = vmatpush2.bf16.msra.mxu0 %v1849
        %3789 = vmatprep.subr.bf16.mxu0 %v1842
        %3790 = vmatpush2.bf16.msra.mxu0 %v1841
        %3791 = vmatprep.subr.bf16.mxu0 %v1834
        %3792 = vmatpush2.bf16.msra.mxu0 %v1833
        %3793 = vmatprep.subr.bf16.mxu0 %v1826
        %3794 = vmatpush2.bf16.msra.mxu0 %v1825
        %3795 = vmatprep.mubr.bf16.mxu0 %v3622
        %3796 = vmatmul.mubr.bf16.gmra.mxu0 %v3621
        %v3797 = vpop.f32.mrf.mxu0
        %v3798 = vadd.f32 %v3757, %v3797
        %v3799 = vpop.f32.mrf.mxu0
        %v3800 = vadd.f32 %v3759, %v3799
        %v3801 = vpop.f32.mrf.mxu0
        %v3802 = vpop.f32.mrf.mxu0
        %3803 = vdwg.mxu0
        %3804 = vmatprep.subr.bf16.mxu0 %v1946
        %3805 = vmatpush1.bf16.msra.mxu0 %v1945
        %3806 = vmatprep.subr.bf16.mxu0 %v1938
        %3807 = vmatpush1.bf16.msra.mxu0 %v1937
        %3808 = vmatprep.subr.bf16.mxu0 %v1930
        %3809 = vmatpush1.bf16.msra.mxu0 %v1929
        %3810 = vmatprep.subr.bf16.mxu0 %v1922
        %3811 = vmatpush1.bf16.msra.mxu0 %v1921
        %3812 = vmatprep.subr.bf16.mxu0 %v1914
        %3813 = vmatpush1.bf16.msra.mxu0 %v1913
        %3814 = vmatprep.subr.bf16.mxu0 %v1906
        %3815 = vmatpush1.bf16.msra.mxu0 %v1905
        %3816 = vmatprep.subr.bf16.mxu0 %v1898
        %3817 = vmatpush1.bf16.msra.mxu0 %v1897
        %3818 = vmatprep.subr.bf16.mxu0 %v1890
        %3819 = vmatpush1.bf16.msra.mxu0 %v1889
        %3820 = vmatprep.subr.bf16.mxu0 %v2010
        %3821 = vmatpush2.bf16.msra.mxu0 %v2009
        %3822 = vmatprep.subr.bf16.mxu0 %v2002
        %3823 = vmatpush2.bf16.msra.mxu0 %v2001
        %3824 = vmatprep.subr.bf16.mxu0 %v1994
        %3825 = vmatpush2.bf16.msra.mxu0 %v1993
        %3826 = vmatprep.subr.bf16.mxu0 %v1986
        %3827 = vmatpush2.bf16.msra.mxu0 %v1985
        %3828 = vmatprep.subr.bf16.mxu0 %v1978
        %3829 = vmatpush2.bf16.msra.mxu0 %v1977
        %3830 = vmatprep.subr.bf16.mxu0 %v1970
        %3831 = vmatpush2.bf16.msra.mxu0 %v1969
        %3832 = vmatprep.subr.bf16.mxu0 %v1962
        %3833 = vmatpush2.bf16.msra.mxu0 %v1961
        %3834 = vmatprep.subr.bf16.mxu0 %v1954
        %3835 = vmatpush2.bf16.msra.mxu0 %v1953
        %3836 = vmatprep.mubr.bf16.mxu0 %v3624
        %3837 = vmatmul.mubr.bf16.gmra.mxu0 %v3623
        %v3838 = vpop.f32.mrf.mxu0
        %v3839 = vadd.f32 %v3798, %v3838
        %v3840 = vpop.f32.mrf.mxu0
        %v3841 = vadd.f32 %v3800, %v3840
        %v3842 = vpop.f32.mrf.mxu0
        %v3843 = vpop.f32.mrf.mxu0
        %3844 = vdwg.mxu0
        %3845 = vmatprep.subr.bf16.mxu0 %v2074
        %3846 = vmatpush1.bf16.msra.mxu0 %v2073
        %3847 = vmatprep.subr.bf16.mxu0 %v2066
        %3848 = vmatpush1.bf16.msra.mxu0 %v2065
        %3849 = vmatprep.subr.bf16.mxu0 %v2058
        %3850 = vmatpush1.bf16.msra.mxu0 %v2057
        %3851 = vmatprep.subr.bf16.mxu0 %v2050
        %3852 = vmatpush1.bf16.msra.mxu0 %v2049
        %3853 = vmatprep.subr.bf16.mxu0 %v2042
        %3854 = vmatpush1.bf16.msra.mxu0 %v2041
        %3855 = vmatprep.subr.bf16.mxu0 %v2034
        %3856 = vmatpush1.bf16.msra.mxu0 %v2033
        %3857 = vmatprep.subr.bf16.mxu0 %v2026
        %3858 = vmatpush1.bf16.msra.mxu0 %v2025
        %3859 = vmatprep.subr.bf16.mxu0 %v2018
        %3860 = vmatpush1.bf16.msra.mxu0 %v2017
        %3861 = vmatprep.subr.bf16.mxu0 %v2138
        %3862 = vmatpush2.bf16.msra.mxu0 %v2137
        %3863 = vmatprep.subr.bf16.mxu0 %v2130
        %3864 = vmatpush2.bf16.msra.mxu0 %v2129
        %3865 = vmatprep.subr.bf16.mxu0 %v2122
        %3866 = vmatpush2.bf16.msra.mxu0 %v2121
        %3867 = vmatprep.subr.bf16.mxu0 %v2114
        %3868 = vmatpush2.bf16.msra.mxu0 %v2113
        %3869 = vmatprep.subr.bf16.mxu0 %v2106
        %3870 = vmatpush2.bf16.msra.mxu0 %v2105
        %3871 = vmatprep.subr.bf16.mxu0 %v2098
        %3872 = vmatpush2.bf16.msra.mxu0 %v2097
        %3873 = vmatprep.subr.bf16.mxu0 %v2090
        %3874 = vmatpush2.bf16.msra.mxu0 %v2089
        %3875 = vmatprep.subr.bf16.mxu0 %v2082
        %3876 = vmatpush2.bf16.msra.mxu0 %v2081
        %3877 = vmatprep.mubr.bf16.mxu0 %v3626
        %3878 = vmatmul.mubr.bf16.gmra.mxu0 %v3625
        %v3879 = vpop.f32.mrf.mxu0
        %v3880 = vadd.f32 %v3839, %v3879
        %v3881 = vpop.f32.mrf.mxu0
        %v3882 = vadd.f32 %v3841, %v3881
        %v3883 = vpop.f32.mrf.mxu0
        %v3884 = vpop.f32.mrf.mxu0
        %3885 = vdwg.mxu0
        %3886 = vmatprep.subr.bf16.mxu0 %v2202
        %3887 = vmatpush1.bf16.msra.mxu0 %v2201
        %3888 = vmatprep.subr.bf16.mxu0 %v2194
        %3889 = vmatpush1.bf16.msra.mxu0 %v2193
        %3890 = vmatprep.subr.bf16.mxu0 %v2186
        %3891 = vmatpush1.bf16.msra.mxu0 %v2185
        %3892 = vmatprep.subr.bf16.mxu0 %v2178
        %3893 = vmatpush1.bf16.msra.mxu0 %v2177
        %3894 = vmatprep.subr.bf16.mxu0 %v2170
        %3895 = vmatpush1.bf16.msra.mxu0 %v2169
        %3896 = vmatprep.subr.bf16.mxu0 %v2162
        %3897 = vmatpush1.bf16.msra.mxu0 %v2161
        %3898 = vmatprep.subr.bf16.mxu0 %v2154
        %3899 = vmatpush1.bf16.msra.mxu0 %v2153
        %3900 = vmatprep.subr.bf16.mxu0 %v2146
        %3901 = vmatpush1.bf16.msra.mxu0 %v2145
        %3902 = vmatprep.subr.bf16.mxu0 %v2266
        %3903 = vmatpush2.bf16.msra.mxu0 %v2265
        %3904 = vmatprep.subr.bf16.mxu0 %v2258
        %3905 = vmatpush2.bf16.msra.mxu0 %v2257
        %3906 = vmatprep.subr.bf16.mxu0 %v2250
        %3907 = vmatpush2.bf16.msra.mxu0 %v2249
        %3908 = vmatprep.subr.bf16.mxu0 %v2242
        %3909 = vmatpush2.bf16.msra.mxu0 %v2241
        %3910 = vmatprep.subr.bf16.mxu0 %v2234
        %3911 = vmatpush2.bf16.msra.mxu0 %v2233
        %3912 = vmatprep.subr.bf16.mxu0 %v2226
        %3913 = vmatpush2.bf16.msra.mxu0 %v2225
        %3914 = vmatprep.subr.bf16.mxu0 %v2218
        %3915 = vmatpush2.bf16.msra.mxu0 %v2217
        %3916 = vmatprep.subr.bf16.mxu0 %v2210
        %3917 = vmatpush2.bf16.msra.mxu0 %v2209
        %3918 = vmatprep.mubr.bf16.mxu0 %v3628
        %3919 = vmatmul.mubr.bf16.gmra.mxu0 %v3627
        %v3920 = vpop.f32.mrf.mxu0
        %v3921 = vadd.f32 %v3880, %v3920
        %v3922 = vpop.f32.mrf.mxu0
        %v3923 = vadd.f32 %v3882, %v3922
        %v3924 = vpop.f32.mrf.mxu0
        %v3925 = vpop.f32.mrf.mxu0
        %3926 = vdwg.mxu0
        %3927 = vmatprep.subr.bf16.mxu0 %v2330
        %3928 = vmatpush1.bf16.msra.mxu0 %v2329
        %3929 = vmatprep.subr.bf16.mxu0 %v2322
        %3930 = vmatpush1.bf16.msra.mxu0 %v2321
        %3931 = vmatprep.subr.bf16.mxu0 %v2314
        %3932 = vmatpush1.bf16.msra.mxu0 %v2313
        %3933 = vmatprep.subr.bf16.mxu0 %v2306
        %3934 = vmatpush1.bf16.msra.mxu0 %v2305
        %3935 = vmatprep.subr.bf16.mxu0 %v2298
        %3936 = vmatpush1.bf16.msra.mxu0 %v2297
        %3937 = vmatprep.subr.bf16.mxu0 %v2290
        %3938 = vmatpush1.bf16.msra.mxu0 %v2289
        %3939 = vmatprep.subr.bf16.mxu0 %v2282
        %3940 = vmatpush1.bf16.msra.mxu0 %v2281
        %3941 = vmatprep.subr.bf16.mxu0 %v2274
        %3942 = vmatpush1.bf16.msra.mxu0 %v2273
        %3943 = vmatprep.subr.bf16.mxu0 %v2394
        %3944 = vmatpush2.bf16.msra.mxu0 %v2393
        %3945 = vmatprep.subr.bf16.mxu0 %v2386
        %3946 = vmatpush2.bf16.msra.mxu0 %v2385
        %3947 = vmatprep.subr.bf16.mxu0 %v2378
        %3948 = vmatpush2.bf16.msra.mxu0 %v2377
        %3949 = vmatprep.subr.bf16.mxu0 %v2370
        %3950 = vmatpush2.bf16.msra.mxu0 %v2369
        %3951 = vmatprep.subr.bf16.mxu0 %v2362
        %3952 = vmatpush2.bf16.msra.mxu0 %v2361
        %3953 = vmatprep.subr.bf16.mxu0 %v2354
        %3954 = vmatpush2.bf16.msra.mxu0 %v2353
        %3955 = vmatprep.subr.bf16.mxu0 %v2346
        %3956 = vmatpush2.bf16.msra.mxu0 %v2345
        %3957 = vmatprep.subr.bf16.mxu0 %v2338
        %3958 = vmatpush2.bf16.msra.mxu0 %v2337
        %3959 = vmatprep.mubr.bf16.mxu0 %v3630
        %3960 = vmatmul.mubr.bf16.gmra.mxu0 %v3629
        %v3961 = vpop.f32.mrf.mxu0
        %v3962 = vadd.f32 %v3921, %v3961
        %v3963 = vpop.f32.mrf.mxu0
        %v3964 = vadd.f32 %v3923, %v3963
        %v3965 = vpop.f32.mrf.mxu0
        %v3966 = vpop.f32.mrf.mxu0
        %3967 = vdwg.mxu0
        %3968 = vmatprep.subr.bf16.mxu0 %v2458
        %3969 = vmatpush1.bf16.msra.mxu0 %v2457
        %3970 = vmatprep.subr.bf16.mxu0 %v2450
        %3971 = vmatpush1.bf16.msra.mxu0 %v2449
        %3972 = vmatprep.subr.bf16.mxu0 %v2442
        %3973 = vmatpush1.bf16.msra.mxu0 %v2441
        %3974 = vmatprep.subr.bf16.mxu0 %v2434
        %3975 = vmatpush1.bf16.msra.mxu0 %v2433
        %3976 = vmatprep.subr.bf16.mxu0 %v2426
        %3977 = vmatpush1.bf16.msra.mxu0 %v2425
        %3978 = vmatprep.subr.bf16.mxu0 %v2418
        %3979 = vmatpush1.bf16.msra.mxu0 %v2417
        %3980 = vmatprep.subr.bf16.mxu0 %v2410
        %3981 = vmatpush1.bf16.msra.mxu0 %v2409
        %3982 = vmatprep.subr.bf16.mxu0 %v2402
        %3983 = vmatpush1.bf16.msra.mxu0 %v2401
        %3984 = vmatprep.subr.bf16.mxu0 %v2522
        %3985 = vmatpush2.bf16.msra.mxu0 %v2521
        %3986 = vmatprep.subr.bf16.mxu0 %v2514
        %3987 = vmatpush2.bf16.msra.mxu0 %v2513
        %3988 = vmatprep.subr.bf16.mxu0 %v2506
        %3989 = vmatpush2.bf16.msra.mxu0 %v2505
        %3990 = vmatprep.subr.bf16.mxu0 %v2498
        %3991 = vmatpush2.bf16.msra.mxu0 %v2497
        %3992 = vmatprep.subr.bf16.mxu0 %v2490
        %3993 = vmatpush2.bf16.msra.mxu0 %v2489
        %3994 = vmatprep.subr.bf16.mxu0 %v2482
        %3995 = vmatpush2.bf16.msra.mxu0 %v2481
        %3996 = vmatprep.subr.bf16.mxu0 %v2474
        %3997 = vmatpush2.bf16.msra.mxu0 %v2473
        %3998 = vmatprep.subr.bf16.mxu0 %v2466
        %3999 = vmatpush2.bf16.msra.mxu0 %v2465
        %4000 = vmatprep.mubr.bf16.mxu0 %v3632
        %4001 = vmatmul.mubr.bf16.gmra.mxu0 %v3631
        %v4002 = vpop.f32.mrf.mxu0
        %v4003 = vadd.f32 %v3962, %v4002
        %v4004 = vpop.f32.mrf.mxu0
        %v4005 = vadd.f32 %v3964, %v4004
        %v4006 = vpop.f32.mrf.mxu0
        %v4007 = vpop.f32.mrf.mxu0
        %4008 = vdwg.mxu0
        %4009 = vmatprep.subr.bf16.mxu0 %v2586
        %4010 = vmatpush1.bf16.msra.mxu0 %v2585
        %4011 = vmatprep.subr.bf16.mxu0 %v2578
        %4012 = vmatpush1.bf16.msra.mxu0 %v2577
        %4013 = vmatprep.subr.bf16.mxu0 %v2570
        %4014 = vmatpush1.bf16.msra.mxu0 %v2569
        %4015 = vmatprep.subr.bf16.mxu0 %v2562
        %4016 = vmatpush1.bf16.msra.mxu0 %v2561
        %4017 = vmatprep.subr.bf16.mxu0 %v2554
        %4018 = vmatpush1.bf16.msra.mxu0 %v2553
        %4019 = vmatprep.subr.bf16.mxu0 %v2546
        %4020 = vmatpush1.bf16.msra.mxu0 %v2545
        %4021 = vmatprep.subr.bf16.mxu0 %v2538
        %4022 = vmatpush1.bf16.msra.mxu0 %v2537
        %4023 = vmatprep.subr.bf16.mxu0 %v2530
        %4024 = vmatpush1.bf16.msra.mxu0 %v2529
        %4025 = vmatprep.subr.bf16.mxu0 %v2650
        %4026 = vmatpush2.bf16.msra.mxu0 %v2649
        %4027 = vmatprep.subr.bf16.mxu0 %v2642
        %4028 = vmatpush2.bf16.msra.mxu0 %v2641
        %4029 = vmatprep.subr.bf16.mxu0 %v2634
        %4030 = vmatpush2.bf16.msra.mxu0 %v2633
        %4031 = vmatprep.subr.bf16.mxu0 %v2626
        %4032 = vmatpush2.bf16.msra.mxu0 %v2625
        %4033 = vmatprep.subr.bf16.mxu0 %v2618
        %4034 = vmatpush2.bf16.msra.mxu0 %v2617
        %4035 = vmatprep.subr.bf16.mxu0 %v2610
        %4036 = vmatpush2.bf16.msra.mxu0 %v2609
        %4037 = vmatprep.subr.bf16.mxu0 %v2602
        %4038 = vmatpush2.bf16.msra.mxu0 %v2601
        %4039 = vmatprep.subr.bf16.mxu0 %v2594
        %4040 = vmatpush2.bf16.msra.mxu0 %v2593
        %4041 = vmatprep.mubr.bf16.mxu0 %v3634
        %4042 = vmatmul.mubr.bf16.gmra.mxu0 %v3633
        %v4043 = vpop.f32.mrf.mxu0
        %v4044 = vadd.f32 %v4003, %v4043
        %v4045 = vpop.f32.mrf.mxu0
        %v4046 = vadd.f32 %v4005, %v4045
        %v4047 = vpop.f32.mrf.mxu0
        %v4048 = vpop.f32.mrf.mxu0
        %4049 = vdwg.mxu0
        %4050 = vmatprep.subr.bf16.mxu0 %v2714
        %4051 = vmatpush1.bf16.msra.mxu0 %v2713
        %4052 = vmatprep.subr.bf16.mxu0 %v2706
        %4053 = vmatpush1.bf16.msra.mxu0 %v2705
        %4054 = vmatprep.subr.bf16.mxu0 %v2698
        %4055 = vmatpush1.bf16.msra.mxu0 %v2697
        %4056 = vmatprep.subr.bf16.mxu0 %v2690
        %4057 = vmatpush1.bf16.msra.mxu0 %v2689
        %4058 = vmatprep.subr.bf16.mxu0 %v2682
        %4059 = vmatpush1.bf16.msra.mxu0 %v2681
        %4060 = vmatprep.subr.bf16.mxu0 %v2674
        %4061 = vmatpush1.bf16.msra.mxu0 %v2673
        %4062 = vmatprep.subr.bf16.mxu0 %v2666
        %4063 = vmatpush1.bf16.msra.mxu0 %v2665
        %4064 = vmatprep.subr.bf16.mxu0 %v2658
        %4065 = vmatpush1.bf16.msra.mxu0 %v2657
        %4066 = vmatprep.subr.bf16.mxu0 %v2778
        %4067 = vmatpush2.bf16.msra.mxu0 %v2777
        %4068 = vmatprep.subr.bf16.mxu0 %v2770
        %4069 = vmatpush2.bf16.msra.mxu0 %v2769
        %4070 = vmatprep.subr.bf16.mxu0 %v2762
        %4071 = vmatpush2.bf16.msra.mxu0 %v2761
        %4072 = vmatprep.subr.bf16.mxu0 %v2754
        %4073 = vmatpush2.bf16.msra.mxu0 %v2753
        %4074 = vmatprep.subr.bf16.mxu0 %v2746
        %4075 = vmatpush2.bf16.msra.mxu0 %v2745
        %4076 = vmatprep.subr.bf16.mxu0 %v2738
        %4077 = vmatpush2.bf16.msra.mxu0 %v2737
        %4078 = vmatprep.subr.bf16.mxu0 %v2730
        %4079 = vmatpush2.bf16.msra.mxu0 %v2729
        %4080 = vmatprep.subr.bf16.mxu0 %v2722
        %4081 = vmatpush2.bf16.msra.mxu0 %v2721
        %4082 = vmatprep.mubr.bf16.mxu0 %v3636
        %4083 = vmatmul.mubr.bf16.gmra.mxu0 %v3635
        %v4084 = vpop.f32.mrf.mxu0
        %v4085 = vadd.f32 %v4044, %v4084
        %v4086 = vpop.f32.mrf.mxu0
        %v4087 = vadd.f32 %v4046, %v4086
        %v4088 = vpop.f32.mrf.mxu0
        %v4089 = vpop.f32.mrf.mxu0
        %4090 = vdwg.mxu0
        %4091 = vmatprep.subr.bf16.mxu0 %v2842
        %4092 = vmatpush1.bf16.msra.mxu0 %v2841
        %4093 = vmatprep.subr.bf16.mxu0 %v2834
        %4094 = vmatpush1.bf16.msra.mxu0 %v2833
        %4095 = vmatprep.subr.bf16.mxu0 %v2826
        %4096 = vmatpush1.bf16.msra.mxu0 %v2825
        %4097 = vmatprep.subr.bf16.mxu0 %v2818
        %4098 = vmatpush1.bf16.msra.mxu0 %v2817
        %4099 = vmatprep.subr.bf16.mxu0 %v2810
        %4100 = vmatpush1.bf16.msra.mxu0 %v2809
        %4101 = vmatprep.subr.bf16.mxu0 %v2802
        %4102 = vmatpush1.bf16.msra.mxu0 %v2801
        %4103 = vmatprep.subr.bf16.mxu0 %v2794
        %4104 = vmatpush1.bf16.msra.mxu0 %v2793
        %4105 = vmatprep.subr.bf16.mxu0 %v2786
        %4106 = vmatpush1.bf16.msra.mxu0 %v2785
        %4107 = vmatprep.subr.bf16.mxu0 %v2906
        %4108 = vmatpush2.bf16.msra.mxu0 %v2905
        %4109 = vmatprep.subr.bf16.mxu0 %v2898
        %4110 = vmatpush2.bf16.msra.mxu0 %v2897
        %4111 = vmatprep.subr.bf16.mxu0 %v2890
        %4112 = vmatpush2.bf16.msra.mxu0 %v2889
        %4113 = vmatprep.subr.bf16.mxu0 %v2882
        %4114 = vmatpush2.bf16.msra.mxu0 %v2881
        %4115 = vmatprep.subr.bf16.mxu0 %v2874
        %4116 = vmatpush2.bf16.msra.mxu0 %v2873
        %4117 = vmatprep.subr.bf16.mxu0 %v2866
        %4118 = vmatpush2.bf16.msra.mxu0 %v2865
        %4119 = vmatprep.subr.bf16.mxu0 %v2858
        %4120 = vmatpush2.bf16.msra.mxu0 %v2857
        %4121 = vmatprep.subr.bf16.mxu0 %v2850
        %4122 = vmatpush2.bf16.msra.mxu0 %v2849
        %4123 = vmatprep.mubr.bf16.mxu0 %v3638
        %4124 = vmatmul.mubr.bf16.gmra.mxu0 %v3637
        %v4125 = vpop.f32.mrf.mxu0
        %v4126 = vadd.f32 %v4085, %v4125
        %v4127 = vpop.f32.mrf.mxu0
        %v4128 = vadd.f32 %v4087, %v4127
        %v4129 = vpop.f32.mrf.mxu0
        %v4130 = vpop.f32.mrf.mxu0
        %4131 = vdwg.mxu0
        %4132 = vmatprep.subr.bf16.mxu0 %v2970
        %4133 = vmatpush1.bf16.msra.mxu0 %v2969
        %4134 = vmatprep.subr.bf16.mxu0 %v2962
        %4135 = vmatpush1.bf16.msra.mxu0 %v2961
        %4136 = vmatprep.subr.bf16.mxu0 %v2954
        %4137 = vmatpush1.bf16.msra.mxu0 %v2953
        %4138 = vmatprep.subr.bf16.mxu0 %v2946
        %4139 = vmatpush1.bf16.msra.mxu0 %v2945
        %4140 = vmatprep.subr.bf16.mxu0 %v2938
        %4141 = vmatpush1.bf16.msra.mxu0 %v2937
        %4142 = vmatprep.subr.bf16.mxu0 %v2930
        %4143 = vmatpush1.bf16.msra.mxu0 %v2929
        %4144 = vmatprep.subr.bf16.mxu0 %v2922
        %4145 = vmatpush1.bf16.msra.mxu0 %v2921
        %4146 = vmatprep.subr.bf16.mxu0 %v2914
        %4147 = vmatpush1.bf16.msra.mxu0 %v2913
        %4148 = vmatprep.subr.bf16.mxu0 %v3034
        %4149 = vmatpush2.bf16.msra.mxu0 %v3033
        %4150 = vmatprep.subr.bf16.mxu0 %v3026
        %4151 = vmatpush2.bf16.msra.mxu0 %v3025
        %4152 = vmatprep.subr.bf16.mxu0 %v3018
        %4153 = vmatpush2.bf16.msra.mxu0 %v3017
        %4154 = vmatprep.subr.bf16.mxu0 %v3010
        %4155 = vmatpush2.bf16.msra.mxu0 %v3009
        %4156 = vmatprep.subr.bf16.mxu0 %v3002
        %4157 = vmatpush2.bf16.msra.mxu0 %v3001
        %4158 = vmatprep.subr.bf16.mxu0 %v2994
        %4159 = vmatpush2.bf16.msra.mxu0 %v2993
        %4160 = vmatprep.subr.bf16.mxu0 %v2986
        %4161 = vmatpush2.bf16.msra.mxu0 %v2985
        %4162 = vmatprep.subr.bf16.mxu0 %v2978
        %4163 = vmatpush2.bf16.msra.mxu0 %v2977
        %4164 = vmatprep.mubr.bf16.mxu0 %v3640
        %4165 = vmatmul.mubr.bf16.gmra.mxu0 %v3639
        %v4166 = vpop.f32.mrf.mxu0
        %v4167 = vadd.f32 %v4126, %v4166
        %v4168 = vpop.f32.mrf.mxu0
        %v4169 = vadd.f32 %v4128, %v4168
        %v4170 = vpop.f32.mrf.mxu0
        %v4171 = vpop.f32.mrf.mxu0
        %4172 = vdwg.mxu0
        %4173 = vmatprep.subr.bf16.mxu0 %v3098
        %4174 = vmatpush1.bf16.msra.mxu0 %v3097
        %4175 = vmatprep.subr.bf16.mxu0 %v3090
        %4176 = vmatpush1.bf16.msra.mxu0 %v3089
        %4177 = vmatprep.subr.bf16.mxu0 %v3082
        %4178 = vmatpush1.bf16.msra.mxu0 %v3081
        %4179 = vmatprep.subr.bf16.mxu0 %v3074
        %4180 = vmatpush1.bf16.msra.mxu0 %v3073
        %4181 = vmatprep.subr.bf16.mxu0 %v3066
        %4182 = vmatpush1.bf16.msra.mxu0 %v3065
        %4183 = vmatprep.subr.bf16.mxu0 %v3058
        %4184 = vmatpush1.bf16.msra.mxu0 %v3057
        %4185 = vmatprep.subr.bf16.mxu0 %v3050
        %4186 = vmatpush1.bf16.msra.mxu0 %v3049
        %4187 = vmatprep.subr.bf16.mxu0 %v3042
        %4188 = vmatpush1.bf16.msra.mxu0 %v3041
        %4189 = vmatprep.subr.bf16.mxu0 %v3162
        %4190 = vmatpush2.bf16.msra.mxu0 %v3161
        %4191 = vmatprep.subr.bf16.mxu0 %v3154
        %4192 = vmatpush2.bf16.msra.mxu0 %v3153
        %4193 = vmatprep.subr.bf16.mxu0 %v3146
        %4194 = vmatpush2.bf16.msra.mxu0 %v3145
        %4195 = vmatprep.subr.bf16.mxu0 %v3138
        %4196 = vmatpush2.bf16.msra.mxu0 %v3137
        %4197 = vmatprep.subr.bf16.mxu0 %v3130
        %4198 = vmatpush2.bf16.msra.mxu0 %v3129
        %4199 = vmatprep.subr.bf16.mxu0 %v3122
        %4200 = vmatpush2.bf16.msra.mxu0 %v3121
        %4201 = vmatprep.subr.bf16.mxu0 %v3114
        %4202 = vmatpush2.bf16.msra.mxu0 %v3113
        %4203 = vmatprep.subr.bf16.mxu0 %v3106
        %4204 = vmatpush2.bf16.msra.mxu0 %v3105
        %4205 = vmatprep.mubr.bf16.mxu0 %v3642
        %4206 = vmatmul.mubr.bf16.gmra.mxu0 %v3641
        %v4207 = vpop.f32.mrf.mxu0
        %v4208 = vadd.f32 %v4167, %v4207
        %v4209 = vpop.f32.mrf.mxu0
        %v4210 = vadd.f32 %v4169, %v4209
        %v4211 = vpop.f32.mrf.mxu0
        %v4212 = vpop.f32.mrf.mxu0
        %4213 = vdwg.mxu0
        %4214 = vmatprep.subr.bf16.mxu0 %v3226
        %4215 = vmatpush1.bf16.msra.mxu0 %v3225
        %4216 = vmatprep.subr.bf16.mxu0 %v3218
        %4217 = vmatpush1.bf16.msra.mxu0 %v3217
        %4218 = vmatprep.subr.bf16.mxu0 %v3210
        %4219 = vmatpush1.bf16.msra.mxu0 %v3209
        %4220 = vmatprep.subr.bf16.mxu0 %v3202
        %4221 = vmatpush1.bf16.msra.mxu0 %v3201
        %4222 = vmatprep.subr.bf16.mxu0 %v3194
        %4223 = vmatpush1.bf16.msra.mxu0 %v3193
        %4224 = vmatprep.subr.bf16.mxu0 %v3186
        %4225 = vmatpush1.bf16.msra.mxu0 %v3185
        %4226 = vmatprep.subr.bf16.mxu0 %v3178
        %4227 = vmatpush1.bf16.msra.mxu0 %v3177
        %4228 = vmatprep.subr.bf16.mxu0 %v3170
        %4229 = vmatpush1.bf16.msra.mxu0 %v3169
        %4230 = vmatprep.subr.bf16.mxu0 %v3290
        %4231 = vmatpush2.bf16.msra.mxu0 %v3289
        %4232 = vmatprep.subr.bf16.mxu0 %v3282
        %4233 = vmatpush2.bf16.msra.mxu0 %v3281
        %4234 = vmatprep.subr.bf16.mxu0 %v3274
        %4235 = vmatpush2.bf16.msra.mxu0 %v3273
        %4236 = vmatprep.subr.bf16.mxu0 %v3266
        %4237 = vmatpush2.bf16.msra.mxu0 %v3265
        %4238 = vmatprep.subr.bf16.mxu0 %v3258
        %4239 = vmatpush2.bf16.msra.mxu0 %v3257
        %4240 = vmatprep.subr.bf16.mxu0 %v3250
        %4241 = vmatpush2.bf16.msra.mxu0 %v3249
        %4242 = vmatprep.subr.bf16.mxu0 %v3242
        %4243 = vmatpush2.bf16.msra.mxu0 %v3241
        %4244 = vmatprep.subr.bf16.mxu0 %v3234
        %4245 = vmatpush2.bf16.msra.mxu0 %v3233
        %4246 = vmatprep.mubr.bf16.mxu0 %v3644
        %4247 = vmatmul.mubr.bf16.gmra.mxu0 %v3643
        %v4248 = vpop.f32.mrf.mxu0
        %v4249 = vadd.f32 %v4208, %v4248
        %v4250 = vpop.f32.mrf.mxu0
        %v4251 = vadd.f32 %v4210, %v4250
        %v4252 = vpop.f32.mrf.mxu0
        %v4253 = vpop.f32.mrf.mxu0
        %4254 = vdwg.mxu0
        %4255 = vmatprep.subr.bf16.mxu0 %v3354
        %4256 = vmatpush1.bf16.msra.mxu0 %v3353
        %4257 = vmatprep.subr.bf16.mxu0 %v3346
        %4258 = vmatpush1.bf16.msra.mxu0 %v3345
        %4259 = vmatprep.subr.bf16.mxu0 %v3338
        %4260 = vmatpush1.bf16.msra.mxu0 %v3337
        %4261 = vmatprep.subr.bf16.mxu0 %v3330
        %4262 = vmatpush1.bf16.msra.mxu0 %v3329
        %4263 = vmatprep.subr.bf16.mxu0 %v3322
        %4264 = vmatpush1.bf16.msra.mxu0 %v3321
        %4265 = vmatprep.subr.bf16.mxu0 %v3314
        %4266 = vmatpush1.bf16.msra.mxu0 %v3313
        %4267 = vmatprep.subr.bf16.mxu0 %v3306
        %4268 = vmatpush1.bf16.msra.mxu0 %v3305
        %4269 = vmatprep.subr.bf16.mxu0 %v3298
        %4270 = vmatpush1.bf16.msra.mxu0 %v3297
        %4271 = vmatprep.subr.bf16.mxu0 %v3418
        %4272 = vmatpush2.bf16.msra.mxu0 %v3417
        %4273 = vmatprep.subr.bf16.mxu0 %v3410
        %4274 = vmatpush2.bf16.msra.mxu0 %v3409
        %4275 = vmatprep.subr.bf16.mxu0 %v3402
        %4276 = vmatpush2.bf16.msra.mxu0 %v3401
        %4277 = vmatprep.subr.bf16.mxu0 %v3394
        %4278 = vmatpush2.bf16.msra.mxu0 %v3393
        %4279 = vmatprep.subr.bf16.mxu0 %v3386
        %4280 = vmatpush2.bf16.msra.mxu0 %v3385
        %4281 = vmatprep.subr.bf16.mxu0 %v3378
        %4282 = vmatpush2.bf16.msra.mxu0 %v3377
        %4283 = vmatprep.subr.bf16.mxu0 %v3370
        %4284 = vmatpush2.bf16.msra.mxu0 %v3369
        %4285 = vmatprep.subr.bf16.mxu0 %v3362
        %4286 = vmatpush2.bf16.msra.mxu0 %v3361
        %4287 = vmatprep.mubr.bf16.mxu0 %v3646
        %4288 = vmatmul.mubr.bf16.gmra.mxu0 %v3645
        %v4289 = vpop.f32.mrf.mxu0
        %v4290 = vadd.f32 %v4249, %v4289
        %v4291 = vpop.f32.mrf.mxu0
        %v4292 = vadd.f32 %v4251, %v4291
        %v4293 = vpop.f32.mrf.mxu0
        %v4294 = vpop.f32.mrf.mxu0
        %4295 = vdwg.mxu0
        %4296 = vmatprep.subr.bf16.mxu0 %v3482
        %4297 = vmatpush1.bf16.msra.mxu0 %v3481
        %4298 = vmatprep.subr.bf16.mxu0 %v3474
        %4299 = vmatpush1.bf16.msra.mxu0 %v3473
        %4300 = vmatprep.subr.bf16.mxu0 %v3466
        %4301 = vmatpush1.bf16.msra.mxu0 %v3465
        %4302 = vmatprep.subr.bf16.mxu0 %v3458
        %4303 = vmatpush1.bf16.msra.mxu0 %v3457
        %4304 = vmatprep.subr.bf16.mxu0 %v3450
        %4305 = vmatpush1.bf16.msra.mxu0 %v3449
        %4306 = vmatprep.subr.bf16.mxu0 %v3442
        %4307 = vmatpush1.bf16.msra.mxu0 %v3441
        %4308 = vmatprep.subr.bf16.mxu0 %v3434
        %4309 = vmatpush1.bf16.msra.mxu0 %v3433
        %4310 = vmatprep.subr.bf16.mxu0 %v3426
        %4311 = vmatpush1.bf16.msra.mxu0 %v3425
        %4312 = vmatprep.subr.bf16.mxu0 %v3546
        %4313 = vmatpush2.bf16.msra.mxu0 %v3545
        %4314 = vmatprep.subr.bf16.mxu0 %v3538
        %4315 = vmatpush2.bf16.msra.mxu0 %v3537
        %4316 = vmatprep.subr.bf16.mxu0 %v3530
        %4317 = vmatpush2.bf16.msra.mxu0 %v3529
        %4318 = vmatprep.subr.bf16.mxu0 %v3522
        %4319 = vmatpush2.bf16.msra.mxu0 %v3521
        %4320 = vmatprep.subr.bf16.mxu0 %v3514
        %4321 = vmatpush2.bf16.msra.mxu0 %v3513
        %4322 = vmatprep.subr.bf16.mxu0 %v3506
        %4323 = vmatpush2.bf16.msra.mxu0 %v3505
        %4324 = vmatprep.subr.bf16.mxu0 %v3498
        %4325 = vmatpush2.bf16.msra.mxu0 %v3497
        %4326 = vmatprep.subr.bf16.mxu0 %v3490
        %4327 = vmatpush2.bf16.msra.mxu0 %v3489
        %4328 = vmatprep.mubr.bf16.mxu0 %v3648
        %4329 = vmatmul.mubr.bf16.gmra.mxu0 %v3647
        %v4330 = vpop.f32.mrf.mxu0
        %v4331 = vadd.f32 %v4290, %v4330
        %v4332 = vpop.f32.mrf.mxu0
        %v4333 = vadd.f32 %v4292, %v4332
        %v4334 = vpop.f32.mrf.mxu0
        %v4335 = vpop.f32.mrf.mxu0
        %4336 = vdwg.mxu0
        %4337 = vmatprep.subr.bf16.mxu0 %v1564
        %4338 = vmatpush1.bf16.msra.mxu0 %v1563
        %4339 = vmatprep.subr.bf16.mxu0 %v1556
        %4340 = vmatpush1.bf16.msra.mxu0 %v1555
        %4341 = vmatprep.subr.bf16.mxu0 %v1548
        %4342 = vmatpush1.bf16.msra.mxu0 %v1547
        %4343 = vmatprep.subr.bf16.mxu0 %v1540
        %4344 = vmatpush1.bf16.msra.mxu0 %v1539
        %4345 = vmatprep.subr.bf16.mxu0 %v1532
        %4346 = vmatpush1.bf16.msra.mxu0 %v1531
        %4347 = vmatprep.subr.bf16.mxu0 %v1524
        %4348 = vmatpush1.bf16.msra.mxu0 %v1523
        %4349 = vmatprep.subr.bf16.mxu0 %v1516
        %4350 = vmatpush1.bf16.msra.mxu0 %v1515
        %4351 = vmatprep.subr.bf16.mxu0 %v1508
        %4352 = vmatpush1.bf16.msra.mxu0 %v1507
        %4353 = vmatprep.subr.bf16.mxu0 %v1628
        %4354 = vmatpush2.bf16.msra.mxu0 %v1627
        %4355 = vmatprep.subr.bf16.mxu0 %v1620
        %4356 = vmatpush2.bf16.msra.mxu0 %v1619
        %4357 = vmatprep.subr.bf16.mxu0 %v1612
        %4358 = vmatpush2.bf16.msra.mxu0 %v1611
        %4359 = vmatprep.subr.bf16.mxu0 %v1604
        %4360 = vmatpush2.bf16.msra.mxu0 %v1603
        %4361 = vmatprep.subr.bf16.mxu0 %v1596
        %4362 = vmatpush2.bf16.msra.mxu0 %v1595
        %4363 = vmatprep.subr.bf16.mxu0 %v1588
        %4364 = vmatpush2.bf16.msra.mxu0 %v1587
        %4365 = vmatprep.subr.bf16.mxu0 %v1580
        %4366 = vmatpush2.bf16.msra.mxu0 %v1579
        %4367 = vmatprep.subr.bf16.mxu0 %v1572
        %4368 = vmatpush2.bf16.msra.mxu0 %v1571
        %4369 = vmatprep.mubr.bf16.mxu0 %v3618
        %4370 = vmatmul.mubr.bf16.gmra.mxu0 %v3617
        %v4371 = vpop.f32.mrf.mxu0
        %v4372 = vadd.f32 0.0, %v4371
        %v4373 = vpop.f32.mrf.mxu0
        %v4374 = vadd.f32 0.0, %v4373
        %v4375 = vpop.f32.mrf.mxu0
        %v4376 = vpop.f32.mrf.mxu0
        %4377 = vdwg.mxu0
        %4378 = vmatprep.subr.bf16.mxu0 %v1692
        %4379 = vmatpush1.bf16.msra.mxu0 %v1691
        %4380 = vmatprep.subr.bf16.mxu0 %v1684
        %4381 = vmatpush1.bf16.msra.mxu0 %v1683
        %4382 = vmatprep.subr.bf16.mxu0 %v1676
        %4383 = vmatpush1.bf16.msra.mxu0 %v1675
        %4384 = vmatprep.subr.bf16.mxu0 %v1668
        %4385 = vmatpush1.bf16.msra.mxu0 %v1667
        %4386 = vmatprep.subr.bf16.mxu0 %v1660
        %4387 = vmatpush1.bf16.msra.mxu0 %v1659
        %4388 = vmatprep.subr.bf16.mxu0 %v1652
        %4389 = vmatpush1.bf16.msra.mxu0 %v1651
        %4390 = vmatprep.subr.bf16.mxu0 %v1644
        %4391 = vmatpush1.bf16.msra.mxu0 %v1643
        %4392 = vmatprep.subr.bf16.mxu0 %v1636
        %4393 = vmatpush1.bf16.msra.mxu0 %v1635
        %4394 = vmatprep.subr.bf16.mxu0 %v1756
        %4395 = vmatpush2.bf16.msra.mxu0 %v1755
        %4396 = vmatprep.subr.bf16.mxu0 %v1748
        %4397 = vmatpush2.bf16.msra.mxu0 %v1747
        %4398 = vmatprep.subr.bf16.mxu0 %v1740
        %4399 = vmatpush2.bf16.msra.mxu0 %v1739
        %4400 = vmatprep.subr.bf16.mxu0 %v1732
        %4401 = vmatpush2.bf16.msra.mxu0 %v1731
        %4402 = vmatprep.subr.bf16.mxu0 %v1724
        %4403 = vmatpush2.bf16.msra.mxu0 %v1723
        %4404 = vmatprep.subr.bf16.mxu0 %v1716
        %4405 = vmatpush2.bf16.msra.mxu0 %v1715
        %4406 = vmatprep.subr.bf16.mxu0 %v1708
        %4407 = vmatpush2.bf16.msra.mxu0 %v1707
        %4408 = vmatprep.subr.bf16.mxu0 %v1700
        %4409 = vmatpush2.bf16.msra.mxu0 %v1699
        %4410 = vmatprep.mubr.bf16.mxu0 %v3620
        %4411 = vmatmul.mubr.bf16.gmra.mxu0 %v3619
        %v4412 = vpop.f32.mrf.mxu0
        %v4413 = vadd.f32 %v4372, %v4412
        %v4414 = vpop.f32.mrf.mxu0
        %v4415 = vadd.f32 %v4374, %v4414
        %v4416 = vpop.f32.mrf.mxu0
        %v4417 = vpop.f32.mrf.mxu0
        %4418 = vdwg.mxu0
        %4419 = vmatprep.subr.bf16.mxu0 %v1820
        %4420 = vmatpush1.bf16.msra.mxu0 %v1819
        %4421 = vmatprep.subr.bf16.mxu0 %v1812
        %4422 = vmatpush1.bf16.msra.mxu0 %v1811
        %4423 = vmatprep.subr.bf16.mxu0 %v1804
        %4424 = vmatpush1.bf16.msra.mxu0 %v1803
        %4425 = vmatprep.subr.bf16.mxu0 %v1796
        %4426 = vmatpush1.bf16.msra.mxu0 %v1795
        %4427 = vmatprep.subr.bf16.mxu0 %v1788
        %4428 = vmatpush1.bf16.msra.mxu0 %v1787
        %4429 = vmatprep.subr.bf16.mxu0 %v1780
        %4430 = vmatpush1.bf16.msra.mxu0 %v1779
        %4431 = vmatprep.subr.bf16.mxu0 %v1772
        %4432 = vmatpush1.bf16.msra.mxu0 %v1771
        %4433 = vmatprep.subr.bf16.mxu0 %v1764
        %4434 = vmatpush1.bf16.msra.mxu0 %v1763
        %4435 = vmatprep.subr.bf16.mxu0 %v1884
        %4436 = vmatpush2.bf16.msra.mxu0 %v1883
        %4437 = vmatprep.subr.bf16.mxu0 %v1876
        %4438 = vmatpush2.bf16.msra.mxu0 %v1875
        %4439 = vmatprep.subr.bf16.mxu0 %v1868
        %4440 = vmatpush2.bf16.msra.mxu0 %v1867
        %4441 = vmatprep.subr.bf16.mxu0 %v1860
        %4442 = vmatpush2.bf16.msra.mxu0 %v1859
        %4443 = vmatprep.subr.bf16.mxu0 %v1852
        %4444 = vmatpush2.bf16.msra.mxu0 %v1851
        %4445 = vmatprep.subr.bf16.mxu0 %v1844
        %4446 = vmatpush2.bf16.msra.mxu0 %v1843
        %4447 = vmatprep.subr.bf16.mxu0 %v1836
        %4448 = vmatpush2.bf16.msra.mxu0 %v1835
        %4449 = vmatprep.subr.bf16.mxu0 %v1828
        %4450 = vmatpush2.bf16.msra.mxu0 %v1827
        %4451 = vmatprep.mubr.bf16.mxu0 %v3622
        %4452 = vmatmul.mubr.bf16.gmra.mxu0 %v3621
        %v4453 = vpop.f32.mrf.mxu0
        %v4454 = vadd.f32 %v4413, %v4453
        %v4455 = vpop.f32.mrf.mxu0
        %v4456 = vadd.f32 %v4415, %v4455
        %v4457 = vpop.f32.mrf.mxu0
        %v4458 = vpop.f32.mrf.mxu0
        %4459 = vdwg.mxu0
        %4460 = vmatprep.subr.bf16.mxu0 %v1948
        %4461 = vmatpush1.bf16.msra.mxu0 %v1947
        %4462 = vmatprep.subr.bf16.mxu0 %v1940
        %4463 = vmatpush1.bf16.msra.mxu0 %v1939
        %4464 = vmatprep.subr.bf16.mxu0 %v1932
        %4465 = vmatpush1.bf16.msra.mxu0 %v1931
        %4466 = vmatprep.subr.bf16.mxu0 %v1924
        %4467 = vmatpush1.bf16.msra.mxu0 %v1923
        %4468 = vmatprep.subr.bf16.mxu0 %v1916
        %4469 = vmatpush1.bf16.msra.mxu0 %v1915
        %4470 = vmatprep.subr.bf16.mxu0 %v1908
        %4471 = vmatpush1.bf16.msra.mxu0 %v1907
        %4472 = vmatprep.subr.bf16.mxu0 %v1900
        %4473 = vmatpush1.bf16.msra.mxu0 %v1899
        %4474 = vmatprep.subr.bf16.mxu0 %v1892
        %4475 = vmatpush1.bf16.msra.mxu0 %v1891
        %4476 = vmatprep.subr.bf16.mxu0 %v2012
        %4477 = vmatpush2.bf16.msra.mxu0 %v2011
        %4478 = vmatprep.subr.bf16.mxu0 %v2004
        %4479 = vmatpush2.bf16.msra.mxu0 %v2003
        %4480 = vmatprep.subr.bf16.mxu0 %v1996
        %4481 = vmatpush2.bf16.msra.mxu0 %v1995
        %4482 = vmatprep.subr.bf16.mxu0 %v1988
        %4483 = vmatpush2.bf16.msra.mxu0 %v1987
        %4484 = vmatprep.subr.bf16.mxu0 %v1980
        %4485 = vmatpush2.bf16.msra.mxu0 %v1979
        %4486 = vmatprep.subr.bf16.mxu0 %v1972
        %4487 = vmatpush2.bf16.msra.mxu0 %v1971
        %4488 = vmatprep.subr.bf16.mxu0 %v1964
        %4489 = vmatpush2.bf16.msra.mxu0 %v1963
        %4490 = vmatprep.subr.bf16.mxu0 %v1956
        %4491 = vmatpush2.bf16.msra.mxu0 %v1955
        %4492 = vmatprep.mubr.bf16.mxu0 %v3624
        %4493 = vmatmul.mubr.bf16.gmra.mxu0 %v3623
        %v4494 = vpop.f32.mrf.mxu0
        %v4495 = vadd.f32 %v4454, %v4494
        %v4496 = vpop.f32.mrf.mxu0
        %v4497 = vadd.f32 %v4456, %v4496
        %v4498 = vpop.f32.mrf.mxu0
        %v4499 = vpop.f32.mrf.mxu0
        %4500 = vdwg.mxu0
        %4501 = vmatprep.subr.bf16.mxu0 %v2076
        %4502 = vmatpush1.bf16.msra.mxu0 %v2075
        %4503 = vmatprep.subr.bf16.mxu0 %v2068
        %4504 = vmatpush1.bf16.msra.mxu0 %v2067
        %4505 = vmatprep.subr.bf16.mxu0 %v2060
        %4506 = vmatpush1.bf16.msra.mxu0 %v2059
        %4507 = vmatprep.subr.bf16.mxu0 %v2052
        %4508 = vmatpush1.bf16.msra.mxu0 %v2051
        %4509 = vmatprep.subr.bf16.mxu0 %v2044
        %4510 = vmatpush1.bf16.msra.mxu0 %v2043
        %4511 = vmatprep.subr.bf16.mxu0 %v2036
        %4512 = vmatpush1.bf16.msra.mxu0 %v2035
        %4513 = vmatprep.subr.bf16.mxu0 %v2028
        %4514 = vmatpush1.bf16.msra.mxu0 %v2027
        %4515 = vmatprep.subr.bf16.mxu0 %v2020
        %4516 = vmatpush1.bf16.msra.mxu0 %v2019
        %4517 = vmatprep.subr.bf16.mxu0 %v2140
        %4518 = vmatpush2.bf16.msra.mxu0 %v2139
        %4519 = vmatprep.subr.bf16.mxu0 %v2132
        %4520 = vmatpush2.bf16.msra.mxu0 %v2131
        %4521 = vmatprep.subr.bf16.mxu0 %v2124
        %4522 = vmatpush2.bf16.msra.mxu0 %v2123
        %4523 = vmatprep.subr.bf16.mxu0 %v2116
        %4524 = vmatpush2.bf16.msra.mxu0 %v2115
        %4525 = vmatprep.subr.bf16.mxu0 %v2108
        %4526 = vmatpush2.bf16.msra.mxu0 %v2107
        %4527 = vmatprep.subr.bf16.mxu0 %v2100
        %4528 = vmatpush2.bf16.msra.mxu0 %v2099
        %4529 = vmatprep.subr.bf16.mxu0 %v2092
        %4530 = vmatpush2.bf16.msra.mxu0 %v2091
        %4531 = vmatprep.subr.bf16.mxu0 %v2084
        %4532 = vmatpush2.bf16.msra.mxu0 %v2083
        %4533 = vmatprep.mubr.bf16.mxu0 %v3626
        %4534 = vmatmul.mubr.bf16.gmra.mxu0 %v3625
        %v4535 = vpop.f32.mrf.mxu0
        %v4536 = vadd.f32 %v4495, %v4535
        %v4537 = vpop.f32.mrf.mxu0
        %v4538 = vadd.f32 %v4497, %v4537
        %v4539 = vpop.f32.mrf.mxu0
        %v4540 = vpop.f32.mrf.mxu0
        %4541 = vdwg.mxu0
        %4542 = vmatprep.subr.bf16.mxu0 %v2204
        %4543 = vmatpush1.bf16.msra.mxu0 %v2203
        %4544 = vmatprep.subr.bf16.mxu0 %v2196
        %4545 = vmatpush1.bf16.msra.mxu0 %v2195
        %4546 = vmatprep.subr.bf16.mxu0 %v2188
        %4547 = vmatpush1.bf16.msra.mxu0 %v2187
        %4548 = vmatprep.subr.bf16.mxu0 %v2180
        %4549 = vmatpush1.bf16.msra.mxu0 %v2179
        %4550 = vmatprep.subr.bf16.mxu0 %v2172
        %4551 = vmatpush1.bf16.msra.mxu0 %v2171
        %4552 = vmatprep.subr.bf16.mxu0 %v2164
        %4553 = vmatpush1.bf16.msra.mxu0 %v2163
        %4554 = vmatprep.subr.bf16.mxu0 %v2156
        %4555 = vmatpush1.bf16.msra.mxu0 %v2155
        %4556 = vmatprep.subr.bf16.mxu0 %v2148
        %4557 = vmatpush1.bf16.msra.mxu0 %v2147
        %4558 = vmatprep.subr.bf16.mxu0 %v2268
        %4559 = vmatpush2.bf16.msra.mxu0 %v2267
        %4560 = vmatprep.subr.bf16.mxu0 %v2260
        %4561 = vmatpush2.bf16.msra.mxu0 %v2259
        %4562 = vmatprep.subr.bf16.mxu0 %v2252
        %4563 = vmatpush2.bf16.msra.mxu0 %v2251
        %4564 = vmatprep.subr.bf16.mxu0 %v2244
        %4565 = vmatpush2.bf16.msra.mxu0 %v2243
        %4566 = vmatprep.subr.bf16.mxu0 %v2236
        %4567 = vmatpush2.bf16.msra.mxu0 %v2235
        %4568 = vmatprep.subr.bf16.mxu0 %v2228
        %4569 = vmatpush2.bf16.msra.mxu0 %v2227
        %4570 = vmatprep.subr.bf16.mxu0 %v2220
        %4571 = vmatpush2.bf16.msra.mxu0 %v2219
        %4572 = vmatprep.subr.bf16.mxu0 %v2212
        %4573 = vmatpush2.bf16.msra.mxu0 %v2211
        %4574 = vmatprep.mubr.bf16.mxu0 %v3628
        %4575 = vmatmul.mubr.bf16.gmra.mxu0 %v3627
        %v4576 = vpop.f32.mrf.mxu0
        %v4577 = vadd.f32 %v4536, %v4576
        %v4578 = vpop.f32.mrf.mxu0
        %v4579 = vadd.f32 %v4538, %v4578
        %v4580 = vpop.f32.mrf.mxu0
        %v4581 = vpop.f32.mrf.mxu0
        %4582 = vdwg.mxu0
        %4583 = vmatprep.subr.bf16.mxu0 %v2332
        %4584 = vmatpush1.bf16.msra.mxu0 %v2331
        %4585 = vmatprep.subr.bf16.mxu0 %v2324
        %4586 = vmatpush1.bf16.msra.mxu0 %v2323
        %4587 = vmatprep.subr.bf16.mxu0 %v2316
        %4588 = vmatpush1.bf16.msra.mxu0 %v2315
        %4589 = vmatprep.subr.bf16.mxu0 %v2308
        %4590 = vmatpush1.bf16.msra.mxu0 %v2307
        %4591 = vmatprep.subr.bf16.mxu0 %v2300
        %4592 = vmatpush1.bf16.msra.mxu0 %v2299
        %4593 = vmatprep.subr.bf16.mxu0 %v2292
        %4594 = vmatpush1.bf16.msra.mxu0 %v2291
        %4595 = vmatprep.subr.bf16.mxu0 %v2284
        %4596 = vmatpush1.bf16.msra.mxu0 %v2283
        %4597 = vmatprep.subr.bf16.mxu0 %v2276
        %4598 = vmatpush1.bf16.msra.mxu0 %v2275
        %4599 = vmatprep.subr.bf16.mxu0 %v2396
        %4600 = vmatpush2.bf16.msra.mxu0 %v2395
        %4601 = vmatprep.subr.bf16.mxu0 %v2388
        %4602 = vmatpush2.bf16.msra.mxu0 %v2387
        %4603 = vmatprep.subr.bf16.mxu0 %v2380
        %4604 = vmatpush2.bf16.msra.mxu0 %v2379
        %4605 = vmatprep.subr.bf16.mxu0 %v2372
        %4606 = vmatpush2.bf16.msra.mxu0 %v2371
        %4607 = vmatprep.subr.bf16.mxu0 %v2364
        %4608 = vmatpush2.bf16.msra.mxu0 %v2363
        %4609 = vmatprep.subr.bf16.mxu0 %v2356
        %4610 = vmatpush2.bf16.msra.mxu0 %v2355
        %4611 = vmatprep.subr.bf16.mxu0 %v2348
        %4612 = vmatpush2.bf16.msra.mxu0 %v2347
        %4613 = vmatprep.subr.bf16.mxu0 %v2340
        %4614 = vmatpush2.bf16.msra.mxu0 %v2339
        %4615 = vmatprep.mubr.bf16.mxu0 %v3630
        %4616 = vmatmul.mubr.bf16.gmra.mxu0 %v3629
        %v4617 = vpop.f32.mrf.mxu0
        %v4618 = vadd.f32 %v4577, %v4617
        %v4619 = vpop.f32.mrf.mxu0
        %v4620 = vadd.f32 %v4579, %v4619
        %v4621 = vpop.f32.mrf.mxu0
        %v4622 = vpop.f32.mrf.mxu0
        %4623 = vdwg.mxu0
        %4624 = vmatprep.subr.bf16.mxu0 %v2460
        %4625 = vmatpush1.bf16.msra.mxu0 %v2459
        %4626 = vmatprep.subr.bf16.mxu0 %v2452
        %4627 = vmatpush1.bf16.msra.mxu0 %v2451
        %4628 = vmatprep.subr.bf16.mxu0 %v2444
        %4629 = vmatpush1.bf16.msra.mxu0 %v2443
        %4630 = vmatprep.subr.bf16.mxu0 %v2436
        %4631 = vmatpush1.bf16.msra.mxu0 %v2435
        %4632 = vmatprep.subr.bf16.mxu0 %v2428
        %4633 = vmatpush1.bf16.msra.mxu0 %v2427
        %4634 = vmatprep.subr.bf16.mxu0 %v2420
        %4635 = vmatpush1.bf16.msra.mxu0 %v2419
        %4636 = vmatprep.subr.bf16.mxu0 %v2412
        %4637 = vmatpush1.bf16.msra.mxu0 %v2411
        %4638 = vmatprep.subr.bf16.mxu0 %v2404
        %4639 = vmatpush1.bf16.msra.mxu0 %v2403
        %4640 = vmatprep.subr.bf16.mxu0 %v2524
        %4641 = vmatpush2.bf16.msra.mxu0 %v2523
        %4642 = vmatprep.subr.bf16.mxu0 %v2516
        %4643 = vmatpush2.bf16.msra.mxu0 %v2515
        %4644 = vmatprep.subr.bf16.mxu0 %v2508
        %4645 = vmatpush2.bf16.msra.mxu0 %v2507
        %4646 = vmatprep.subr.bf16.mxu0 %v2500
        %4647 = vmatpush2.bf16.msra.mxu0 %v2499
        %4648 = vmatprep.subr.bf16.mxu0 %v2492
        %4649 = vmatpush2.bf16.msra.mxu0 %v2491
        %4650 = vmatprep.subr.bf16.mxu0 %v2484
        %4651 = vmatpush2.bf16.msra.mxu0 %v2483
        %4652 = vmatprep.subr.bf16.mxu0 %v2476
        %4653 = vmatpush2.bf16.msra.mxu0 %v2475
        %4654 = vmatprep.subr.bf16.mxu0 %v2468
        %4655 = vmatpush2.bf16.msra.mxu0 %v2467
        %4656 = vmatprep.mubr.bf16.mxu0 %v3632
        %4657 = vmatmul.mubr.bf16.gmra.mxu0 %v3631
        %v4658 = vpop.f32.mrf.mxu0
        %v4659 = vadd.f32 %v4618, %v4658
        %v4660 = vpop.f32.mrf.mxu0
        %v4661 = vadd.f32 %v4620, %v4660
        %v4662 = vpop.f32.mrf.mxu0
        %v4663 = vpop.f32.mrf.mxu0
        %4664 = vdwg.mxu0
        %4665 = vmatprep.subr.bf16.mxu0 %v2588
        %4666 = vmatpush1.bf16.msra.mxu0 %v2587
        %4667 = vmatprep.subr.bf16.mxu0 %v2580
        %4668 = vmatpush1.bf16.msra.mxu0 %v2579
        %4669 = vmatprep.subr.bf16.mxu0 %v2572
        %4670 = vmatpush1.bf16.msra.mxu0 %v2571
        %4671 = vmatprep.subr.bf16.mxu0 %v2564
        %4672 = vmatpush1.bf16.msra.mxu0 %v2563
        %4673 = vmatprep.subr.bf16.mxu0 %v2556
        %4674 = vmatpush1.bf16.msra.mxu0 %v2555
        %4675 = vmatprep.subr.bf16.mxu0 %v2548
        %4676 = vmatpush1.bf16.msra.mxu0 %v2547
        %4677 = vmatprep.subr.bf16.mxu0 %v2540
        %4678 = vmatpush1.bf16.msra.mxu0 %v2539
        %4679 = vmatprep.subr.bf16.mxu0 %v2532
        %4680 = vmatpush1.bf16.msra.mxu0 %v2531
        %4681 = vmatprep.subr.bf16.mxu0 %v2652
        %4682 = vmatpush2.bf16.msra.mxu0 %v2651
        %4683 = vmatprep.subr.bf16.mxu0 %v2644
        %4684 = vmatpush2.bf16.msra.mxu0 %v2643
        %4685 = vmatprep.subr.bf16.mxu0 %v2636
        %4686 = vmatpush2.bf16.msra.mxu0 %v2635
        %4687 = vmatprep.subr.bf16.mxu0 %v2628
        %4688 = vmatpush2.bf16.msra.mxu0 %v2627
        %4689 = vmatprep.subr.bf16.mxu0 %v2620
        %4690 = vmatpush2.bf16.msra.mxu0 %v2619
        %4691 = vmatprep.subr.bf16.mxu0 %v2612
        %4692 = vmatpush2.bf16.msra.mxu0 %v2611
        %4693 = vmatprep.subr.bf16.mxu0 %v2604
        %4694 = vmatpush2.bf16.msra.mxu0 %v2603
        %4695 = vmatprep.subr.bf16.mxu0 %v2596
        %4696 = vmatpush2.bf16.msra.mxu0 %v2595
        %4697 = vmatprep.mubr.bf16.mxu0 %v3634
        %4698 = vmatmul.mubr.bf16.gmra.mxu0 %v3633
        %v4699 = vpop.f32.mrf.mxu0
        %v4700 = vadd.f32 %v4659, %v4699
        %v4701 = vpop.f32.mrf.mxu0
        %v4702 = vadd.f32 %v4661, %v4701
        %v4703 = vpop.f32.mrf.mxu0
        %v4704 = vpop.f32.mrf.mxu0
        %4705 = vdwg.mxu0
        %4706 = vmatprep.subr.bf16.mxu0 %v2716
        %4707 = vmatpush1.bf16.msra.mxu0 %v2715
        %4708 = vmatprep.subr.bf16.mxu0 %v2708
        %4709 = vmatpush1.bf16.msra.mxu0 %v2707
        %4710 = vmatprep.subr.bf16.mxu0 %v2700
        %4711 = vmatpush1.bf16.msra.mxu0 %v2699
        %4712 = vmatprep.subr.bf16.mxu0 %v2692
        %4713 = vmatpush1.bf16.msra.mxu0 %v2691
        %4714 = vmatprep.subr.bf16.mxu0 %v2684
        %4715 = vmatpush1.bf16.msra.mxu0 %v2683
        %4716 = vmatprep.subr.bf16.mxu0 %v2676
        %4717 = vmatpush1.bf16.msra.mxu0 %v2675
        %4718 = vmatprep.subr.bf16.mxu0 %v2668
        %4719 = vmatpush1.bf16.msra.mxu0 %v2667
        %4720 = vmatprep.subr.bf16.mxu0 %v2660
        %4721 = vmatpush1.bf16.msra.mxu0 %v2659
        %4722 = vmatprep.subr.bf16.mxu0 %v2780
        %4723 = vmatpush2.bf16.msra.mxu0 %v2779
        %4724 = vmatprep.subr.bf16.mxu0 %v2772
        %4725 = vmatpush2.bf16.msra.mxu0 %v2771
        %4726 = vmatprep.subr.bf16.mxu0 %v2764
        %4727 = vmatpush2.bf16.msra.mxu0 %v2763
        %4728 = vmatprep.subr.bf16.mxu0 %v2756
        %4729 = vmatpush2.bf16.msra.mxu0 %v2755
        %4730 = vmatprep.subr.bf16.mxu0 %v2748
        %4731 = vmatpush2.bf16.msra.mxu0 %v2747
        %4732 = vmatprep.subr.bf16.mxu0 %v2740
        %4733 = vmatpush2.bf16.msra.mxu0 %v2739
        %4734 = vmatprep.subr.bf16.mxu0 %v2732
        %4735 = vmatpush2.bf16.msra.mxu0 %v2731
        %4736 = vmatprep.subr.bf16.mxu0 %v2724
        %4737 = vmatpush2.bf16.msra.mxu0 %v2723
        %4738 = vmatprep.mubr.bf16.mxu0 %v3636
        %4739 = vmatmul.mubr.bf16.gmra.mxu0 %v3635
        %v4740 = vpop.f32.mrf.mxu0
        %v4741 = vadd.f32 %v4700, %v4740
        %v4742 = vpop.f32.mrf.mxu0
        %v4743 = vadd.f32 %v4702, %v4742
        %v4744 = vpop.f32.mrf.mxu0
        %v4745 = vpop.f32.mrf.mxu0
        %4746 = vdwg.mxu0
        %4747 = vmatprep.subr.bf16.mxu0 %v2844
        %4748 = vmatpush1.bf16.msra.mxu0 %v2843
        %4749 = vmatprep.subr.bf16.mxu0 %v2836
        %4750 = vmatpush1.bf16.msra.mxu0 %v2835
        %4751 = vmatprep.subr.bf16.mxu0 %v2828
        %4752 = vmatpush1.bf16.msra.mxu0 %v2827
        %4753 = vmatprep.subr.bf16.mxu0 %v2820
        %4754 = vmatpush1.bf16.msra.mxu0 %v2819
        %4755 = vmatprep.subr.bf16.mxu0 %v2812
        %4756 = vmatpush1.bf16.msra.mxu0 %v2811
        %4757 = vmatprep.subr.bf16.mxu0 %v2804
        %4758 = vmatpush1.bf16.msra.mxu0 %v2803
        %4759 = vmatprep.subr.bf16.mxu0 %v2796
        %4760 = vmatpush1.bf16.msra.mxu0 %v2795
        %4761 = vmatprep.subr.bf16.mxu0 %v2788
        %4762 = vmatpush1.bf16.msra.mxu0 %v2787
        %4763 = vmatprep.subr.bf16.mxu0 %v2908
        %4764 = vmatpush2.bf16.msra.mxu0 %v2907
        %4765 = vmatprep.subr.bf16.mxu0 %v2900
        %4766 = vmatpush2.bf16.msra.mxu0 %v2899
        %4767 = vmatprep.subr.bf16.mxu0 %v2892
        %4768 = vmatpush2.bf16.msra.mxu0 %v2891
        %4769 = vmatprep.subr.bf16.mxu0 %v2884
        %4770 = vmatpush2.bf16.msra.mxu0 %v2883
        %4771 = vmatprep.subr.bf16.mxu0 %v2876
        %4772 = vmatpush2.bf16.msra.mxu0 %v2875
        %4773 = vmatprep.subr.bf16.mxu0 %v2868
        %4774 = vmatpush2.bf16.msra.mxu0 %v2867
        %4775 = vmatprep.subr.bf16.mxu0 %v2860
        %4776 = vmatpush2.bf16.msra.mxu0 %v2859
        %4777 = vmatprep.subr.bf16.mxu0 %v2852
        %4778 = vmatpush2.bf16.msra.mxu0 %v2851
        %4779 = vmatprep.mubr.bf16.mxu0 %v3638
        %4780 = vmatmul.mubr.bf16.gmra.mxu0 %v3637
        %v4781 = vpop.f32.mrf.mxu0
        %v4782 = vadd.f32 %v4741, %v4781
        %v4783 = vpop.f32.mrf.mxu0
        %v4784 = vadd.f32 %v4743, %v4783
        %v4785 = vpop.f32.mrf.mxu0
        %v4786 = vpop.f32.mrf.mxu0
        %4787 = vdwg.mxu0
        %4788 = vmatprep.subr.bf16.mxu0 %v2972
        %4789 = vmatpush1.bf16.msra.mxu0 %v2971
        %4790 = vmatprep.subr.bf16.mxu0 %v2964
        %4791 = vmatpush1.bf16.msra.mxu0 %v2963
        %4792 = vmatprep.subr.bf16.mxu0 %v2956
        %4793 = vmatpush1.bf16.msra.mxu0 %v2955
        %4794 = vmatprep.subr.bf16.mxu0 %v2948
        %4795 = vmatpush1.bf16.msra.mxu0 %v2947
        %4796 = vmatprep.subr.bf16.mxu0 %v2940
        %4797 = vmatpush1.bf16.msra.mxu0 %v2939
        %4798 = vmatprep.subr.bf16.mxu0 %v2932
        %4799 = vmatpush1.bf16.msra.mxu0 %v2931
        %4800 = vmatprep.subr.bf16.mxu0 %v2924
        %4801 = vmatpush1.bf16.msra.mxu0 %v2923
        %4802 = vmatprep.subr.bf16.mxu0 %v2916
        %4803 = vmatpush1.bf16.msra.mxu0 %v2915
        %4804 = vmatprep.subr.bf16.mxu0 %v3036
        %4805 = vmatpush2.bf16.msra.mxu0 %v3035
        %4806 = vmatprep.subr.bf16.mxu0 %v3028
        %4807 = vmatpush2.bf16.msra.mxu0 %v3027
        %4808 = vmatprep.subr.bf16.mxu0 %v3020
        %4809 = vmatpush2.bf16.msra.mxu0 %v3019
        %4810 = vmatprep.subr.bf16.mxu0 %v3012
        %4811 = vmatpush2.bf16.msra.mxu0 %v3011
        %4812 = vmatprep.subr.bf16.mxu0 %v3004
        %4813 = vmatpush2.bf16.msra.mxu0 %v3003
        %4814 = vmatprep.subr.bf16.mxu0 %v2996
        %4815 = vmatpush2.bf16.msra.mxu0 %v2995
        %4816 = vmatprep.subr.bf16.mxu0 %v2988
        %4817 = vmatpush2.bf16.msra.mxu0 %v2987
        %4818 = vmatprep.subr.bf16.mxu0 %v2980
        %4819 = vmatpush2.bf16.msra.mxu0 %v2979
        %4820 = vmatprep.mubr.bf16.mxu0 %v3640
        %4821 = vmatmul.mubr.bf16.gmra.mxu0 %v3639
        %v4822 = vpop.f32.mrf.mxu0
        %v4823 = vadd.f32 %v4782, %v4822
        %v4824 = vpop.f32.mrf.mxu0
        %v4825 = vadd.f32 %v4784, %v4824
        %v4826 = vpop.f32.mrf.mxu0
        %v4827 = vpop.f32.mrf.mxu0
        %4828 = vdwg.mxu0
        %4829 = vmatprep.subr.bf16.mxu0 %v3100
        %4830 = vmatpush1.bf16.msra.mxu0 %v3099
        %4831 = vmatprep.subr.bf16.mxu0 %v3092
        %4832 = vmatpush1.bf16.msra.mxu0 %v3091
        %4833 = vmatprep.subr.bf16.mxu0 %v3084
        %4834 = vmatpush1.bf16.msra.mxu0 %v3083
        %4835 = vmatprep.subr.bf16.mxu0 %v3076
        %4836 = vmatpush1.bf16.msra.mxu0 %v3075
        %4837 = vmatprep.subr.bf16.mxu0 %v3068
        %4838 = vmatpush1.bf16.msra.mxu0 %v3067
        %4839 = vmatprep.subr.bf16.mxu0 %v3060
        %4840 = vmatpush1.bf16.msra.mxu0 %v3059
        %4841 = vmatprep.subr.bf16.mxu0 %v3052
        %4842 = vmatpush1.bf16.msra.mxu0 %v3051
        %4843 = vmatprep.subr.bf16.mxu0 %v3044
        %4844 = vmatpush1.bf16.msra.mxu0 %v3043
        %4845 = vmatprep.subr.bf16.mxu0 %v3164
        %4846 = vmatpush2.bf16.msra.mxu0 %v3163
        %4847 = vmatprep.subr.bf16.mxu0 %v3156
        %4848 = vmatpush2.bf16.msra.mxu0 %v3155
        %4849 = vmatprep.subr.bf16.mxu0 %v3148
        %4850 = vmatpush2.bf16.msra.mxu0 %v3147
        %4851 = vmatprep.subr.bf16.mxu0 %v3140
        %4852 = vmatpush2.bf16.msra.mxu0 %v3139
        %4853 = vmatprep.subr.bf16.mxu0 %v3132
        %4854 = vmatpush2.bf16.msra.mxu0 %v3131
        %4855 = vmatprep.subr.bf16.mxu0 %v3124
        %4856 = vmatpush2.bf16.msra.mxu0 %v3123
        %4857 = vmatprep.subr.bf16.mxu0 %v3116
        %4858 = vmatpush2.bf16.msra.mxu0 %v3115
        %4859 = vmatprep.subr.bf16.mxu0 %v3108
        %4860 = vmatpush2.bf16.msra.mxu0 %v3107
        %4861 = vmatprep.mubr.bf16.mxu0 %v3642
        %4862 = vmatmul.mubr.bf16.gmra.mxu0 %v3641
        %v4863 = vpop.f32.mrf.mxu0
        %v4864 = vadd.f32 %v4823, %v4863
        %v4865 = vpop.f32.mrf.mxu0
        %v4866 = vadd.f32 %v4825, %v4865
        %v4867 = vpop.f32.mrf.mxu0
        %v4868 = vpop.f32.mrf.mxu0
        %4869 = vdwg.mxu0
        %4870 = vmatprep.subr.bf16.mxu0 %v3228
        %4871 = vmatpush1.bf16.msra.mxu0 %v3227
        %4872 = vmatprep.subr.bf16.mxu0 %v3220
        %4873 = vmatpush1.bf16.msra.mxu0 %v3219
        %4874 = vmatprep.subr.bf16.mxu0 %v3212
        %4875 = vmatpush1.bf16.msra.mxu0 %v3211
        %4876 = vmatprep.subr.bf16.mxu0 %v3204
        %4877 = vmatpush1.bf16.msra.mxu0 %v3203
        %4878 = vmatprep.subr.bf16.mxu0 %v3196
        %4879 = vmatpush1.bf16.msra.mxu0 %v3195
        %4880 = vmatprep.subr.bf16.mxu0 %v3188
        %4881 = vmatpush1.bf16.msra.mxu0 %v3187
        %4882 = vmatprep.subr.bf16.mxu0 %v3180
        %4883 = vmatpush1.bf16.msra.mxu0 %v3179
        %4884 = vmatprep.subr.bf16.mxu0 %v3172
        %4885 = vmatpush1.bf16.msra.mxu0 %v3171
        %4886 = vmatprep.subr.bf16.mxu0 %v3292
        %4887 = vmatpush2.bf16.msra.mxu0 %v3291
        %4888 = vmatprep.subr.bf16.mxu0 %v3284
        %4889 = vmatpush2.bf16.msra.mxu0 %v3283
        %4890 = vmatprep.subr.bf16.mxu0 %v3276
        %4891 = vmatpush2.bf16.msra.mxu0 %v3275
        %4892 = vmatprep.subr.bf16.mxu0 %v3268
        %4893 = vmatpush2.bf16.msra.mxu0 %v3267
        %4894 = vmatprep.subr.bf16.mxu0 %v3260
        %4895 = vmatpush2.bf16.msra.mxu0 %v3259
        %4896 = vmatprep.subr.bf16.mxu0 %v3252
        %4897 = vmatpush2.bf16.msra.mxu0 %v3251
        %4898 = vmatprep.subr.bf16.mxu0 %v3244
        %4899 = vmatpush2.bf16.msra.mxu0 %v3243
        %4900 = vmatprep.subr.bf16.mxu0 %v3236
        %4901 = vmatpush2.bf16.msra.mxu0 %v3235
        %4902 = vmatprep.mubr.bf16.mxu0 %v3644
        %4903 = vmatmul.mubr.bf16.gmra.mxu0 %v3643
        %v4904 = vpop.f32.mrf.mxu0
        %v4905 = vadd.f32 %v4864, %v4904
        %v4906 = vpop.f32.mrf.mxu0
        %v4907 = vadd.f32 %v4866, %v4906
        %v4908 = vpop.f32.mrf.mxu0
        %v4909 = vpop.f32.mrf.mxu0
        %4910 = vdwg.mxu0
        %4911 = vmatprep.subr.bf16.mxu0 %v3356
        %4912 = vmatpush1.bf16.msra.mxu0 %v3355
        %4913 = vmatprep.subr.bf16.mxu0 %v3348
        %4914 = vmatpush1.bf16.msra.mxu0 %v3347
        %4915 = vmatprep.subr.bf16.mxu0 %v3340
        %4916 = vmatpush1.bf16.msra.mxu0 %v3339
        %4917 = vmatprep.subr.bf16.mxu0 %v3332
        %4918 = vmatpush1.bf16.msra.mxu0 %v3331
        %4919 = vmatprep.subr.bf16.mxu0 %v3324
        %4920 = vmatpush1.bf16.msra.mxu0 %v3323
        %4921 = vmatprep.subr.bf16.mxu0 %v3316
        %4922 = vmatpush1.bf16.msra.mxu0 %v3315
        %4923 = vmatprep.subr.bf16.mxu0 %v3308
        %4924 = vmatpush1.bf16.msra.mxu0 %v3307
        %4925 = vmatprep.subr.bf16.mxu0 %v3300
        %4926 = vmatpush1.bf16.msra.mxu0 %v3299
        %4927 = vmatprep.subr.bf16.mxu0 %v3420
        %4928 = vmatpush2.bf16.msra.mxu0 %v3419
        %4929 = vmatprep.subr.bf16.mxu0 %v3412
        %4930 = vmatpush2.bf16.msra.mxu0 %v3411
        %4931 = vmatprep.subr.bf16.mxu0 %v3404
        %4932 = vmatpush2.bf16.msra.mxu0 %v3403
        %4933 = vmatprep.subr.bf16.mxu0 %v3396
        %4934 = vmatpush2.bf16.msra.mxu0 %v3395
        %4935 = vmatprep.subr.bf16.mxu0 %v3388
        %4936 = vmatpush2.bf16.msra.mxu0 %v3387
        %4937 = vmatprep.subr.bf16.mxu0 %v3380
        %4938 = vmatpush2.bf16.msra.mxu0 %v3379
        %4939 = vmatprep.subr.bf16.mxu0 %v3372
        %4940 = vmatpush2.bf16.msra.mxu0 %v3371
        %4941 = vmatprep.subr.bf16.mxu0 %v3364
        %4942 = vmatpush2.bf16.msra.mxu0 %v3363
        %4943 = vmatprep.mubr.bf16.mxu0 %v3646
        %4944 = vmatmul.mubr.bf16.gmra.mxu0 %v3645
        %v4945 = vpop.f32.mrf.mxu0
        %v4946 = vadd.f32 %v4905, %v4945
        %v4947 = vpop.f32.mrf.mxu0
        %v4948 = vadd.f32 %v4907, %v4947
        %v4949 = vpop.f32.mrf.mxu0
        %v4950 = vpop.f32.mrf.mxu0
        %4951 = vdwg.mxu0
        %4952 = vmatprep.subr.bf16.mxu0 %v3484
        %4953 = vmatpush1.bf16.msra.mxu0 %v3483
        %4954 = vmatprep.subr.bf16.mxu0 %v3476
        %4955 = vmatpush1.bf16.msra.mxu0 %v3475
        %4956 = vmatprep.subr.bf16.mxu0 %v3468
        %4957 = vmatpush1.bf16.msra.mxu0 %v3467
        %4958 = vmatprep.subr.bf16.mxu0 %v3460
        %4959 = vmatpush1.bf16.msra.mxu0 %v3459
        %4960 = vmatprep.subr.bf16.mxu0 %v3452
        %4961 = vmatpush1.bf16.msra.mxu0 %v3451
        %4962 = vmatprep.subr.bf16.mxu0 %v3444
        %4963 = vmatpush1.bf16.msra.mxu0 %v3443
        %4964 = vmatprep.subr.bf16.mxu0 %v3436
        %4965 = vmatpush1.bf16.msra.mxu0 %v3435
        %4966 = vmatprep.subr.bf16.mxu0 %v3428
        %4967 = vmatpush1.bf16.msra.mxu0 %v3427
        %4968 = vmatprep.subr.bf16.mxu0 %v3548
        %4969 = vmatpush2.bf16.msra.mxu0 %v3547
        %4970 = vmatprep.subr.bf16.mxu0 %v3540
        %4971 = vmatpush2.bf16.msra.mxu0 %v3539
        %4972 = vmatprep.subr.bf16.mxu0 %v3532
        %4973 = vmatpush2.bf16.msra.mxu0 %v3531
        %4974 = vmatprep.subr.bf16.mxu0 %v3524
        %4975 = vmatpush2.bf16.msra.mxu0 %v3523
        %4976 = vmatprep.subr.bf16.mxu0 %v3516
        %4977 = vmatpush2.bf16.msra.mxu0 %v3515
        %4978 = vmatprep.subr.bf16.mxu0 %v3508
        %4979 = vmatpush2.bf16.msra.mxu0 %v3507
        %4980 = vmatprep.subr.bf16.mxu0 %v3500
        %4981 = vmatpush2.bf16.msra.mxu0 %v3499
        %4982 = vmatprep.subr.bf16.mxu0 %v3492
        %4983 = vmatpush2.bf16.msra.mxu0 %v3491
        %4984 = vmatprep.mubr.bf16.mxu0 %v3648
        %4985 = vmatmul.mubr.bf16.gmra.mxu0 %v3647
        %v4986 = vpop.f32.mrf.mxu0
        %v4987 = vadd.f32 %v4946, %v4986
        %v4988 = vpop.f32.mrf.mxu0
        %v4989 = vadd.f32 %v4948, %v4988
        %v4990 = vpop.f32.mrf.mxu0
        %v4991 = vpop.f32.mrf.mxu0
        %4992 = vdwg.mxu0
        %4993 = vmatprep.subr.bf16.mxu0 %v1566
        %4994 = vmatpush1.bf16.msra.mxu0 %v1565
        %4995 = vmatprep.subr.bf16.mxu0 %v1558
        %4996 = vmatpush1.bf16.msra.mxu0 %v1557
        %4997 = vmatprep.subr.bf16.mxu0 %v1550
        %4998 = vmatpush1.bf16.msra.mxu0 %v1549
        %4999 = vmatprep.subr.bf16.mxu0 %v1542
        %5000 = vmatpush1.bf16.msra.mxu0 %v1541
        %5001 = vmatprep.subr.bf16.mxu0 %v1534
        %5002 = vmatpush1.bf16.msra.mxu0 %v1533
        %5003 = vmatprep.subr.bf16.mxu0 %v1526
        %5004 = vmatpush1.bf16.msra.mxu0 %v1525
        %5005 = vmatprep.subr.bf16.mxu0 %v1518
        %5006 = vmatpush1.bf16.msra.mxu0 %v1517
        %5007 = vmatprep.subr.bf16.mxu0 %v1510
        %5008 = vmatpush1.bf16.msra.mxu0 %v1509
        %5009 = vmatprep.subr.bf16.mxu0 %v1630
        %5010 = vmatpush2.bf16.msra.mxu0 %v1629
        %5011 = vmatprep.subr.bf16.mxu0 %v1622
        %5012 = vmatpush2.bf16.msra.mxu0 %v1621
        %5013 = vmatprep.subr.bf16.mxu0 %v1614
        %5014 = vmatpush2.bf16.msra.mxu0 %v1613
        %5015 = vmatprep.subr.bf16.mxu0 %v1606
        %5016 = vmatpush2.bf16.msra.mxu0 %v1605
        %5017 = vmatprep.subr.bf16.mxu0 %v1598
        %5018 = vmatpush2.bf16.msra.mxu0 %v1597
        %5019 = vmatprep.subr.bf16.mxu0 %v1590
        %5020 = vmatpush2.bf16.msra.mxu0 %v1589
        %5021 = vmatprep.subr.bf16.mxu0 %v1582
        %5022 = vmatpush2.bf16.msra.mxu0 %v1581
        %5023 = vmatprep.subr.bf16.mxu0 %v1574
        %5024 = vmatpush2.bf16.msra.mxu0 %v1573
        %5025 = vmatprep.mubr.bf16.mxu0 %v3618
        %5026 = vmatmul.mubr.bf16.gmra.mxu0 %v3617
        %v5027 = vpop.f32.mrf.mxu0
        %v5028 = vadd.f32 0.0, %v5027
        %v5029 = vpop.f32.mrf.mxu0
        %v5030 = vadd.f32 0.0, %v5029
        %v5031 = vpop.f32.mrf.mxu0
        %v5032 = vpop.f32.mrf.mxu0
        %5033 = vdwg.mxu0
        %5034 = vmatprep.subr.bf16.mxu0 %v1694
        %5035 = vmatpush1.bf16.msra.mxu0 %v1693
        %5036 = vmatprep.subr.bf16.mxu0 %v1686
        %5037 = vmatpush1.bf16.msra.mxu0 %v1685
        %5038 = vmatprep.subr.bf16.mxu0 %v1678
        %5039 = vmatpush1.bf16.msra.mxu0 %v1677
        %5040 = vmatprep.subr.bf16.mxu0 %v1670
        %5041 = vmatpush1.bf16.msra.mxu0 %v1669
        %5042 = vmatprep.subr.bf16.mxu0 %v1662
        %5043 = vmatpush1.bf16.msra.mxu0 %v1661
        %5044 = vmatprep.subr.bf16.mxu0 %v1654
        %5045 = vmatpush1.bf16.msra.mxu0 %v1653
        %5046 = vmatprep.subr.bf16.mxu0 %v1646
        %5047 = vmatpush1.bf16.msra.mxu0 %v1645
        %5048 = vmatprep.subr.bf16.mxu0 %v1638
        %5049 = vmatpush1.bf16.msra.mxu0 %v1637
        %5050 = vmatprep.subr.bf16.mxu0 %v1758
        %5051 = vmatpush2.bf16.msra.mxu0 %v1757
        %5052 = vmatprep.subr.bf16.mxu0 %v1750
        %5053 = vmatpush2.bf16.msra.mxu0 %v1749
        %5054 = vmatprep.subr.bf16.mxu0 %v1742
        %5055 = vmatpush2.bf16.msra.mxu0 %v1741
        %5056 = vmatprep.subr.bf16.mxu0 %v1734
        %5057 = vmatpush2.bf16.msra.mxu0 %v1733
        %5058 = vmatprep.subr.bf16.mxu0 %v1726
        %5059 = vmatpush2.bf16.msra.mxu0 %v1725
        %5060 = vmatprep.subr.bf16.mxu0 %v1718
        %5061 = vmatpush2.bf16.msra.mxu0 %v1717
        %5062 = vmatprep.subr.bf16.mxu0 %v1710
        %5063 = vmatpush2.bf16.msra.mxu0 %v1709
        %5064 = vmatprep.subr.bf16.mxu0 %v1702
        %5065 = vmatpush2.bf16.msra.mxu0 %v1701
        %5066 = vmatprep.mubr.bf16.mxu0 %v3620
        %5067 = vmatmul.mubr.bf16.gmra.mxu0 %v3619
        %v5068 = vpop.f32.mrf.mxu0
        %v5069 = vadd.f32 %v5028, %v5068
        %v5070 = vpop.f32.mrf.mxu0
        %v5071 = vadd.f32 %v5030, %v5070
        %v5072 = vpop.f32.mrf.mxu0
        %v5073 = vpop.f32.mrf.mxu0
        %5074 = vdwg.mxu0
        %5075 = vmatprep.subr.bf16.mxu0 %v1822
        %5076 = vmatpush1.bf16.msra.mxu0 %v1821
        %5077 = vmatprep.subr.bf16.mxu0 %v1814
        %5078 = vmatpush1.bf16.msra.mxu0 %v1813
        %5079 = vmatprep.subr.bf16.mxu0 %v1806
        %5080 = vmatpush1.bf16.msra.mxu0 %v1805
        %5081 = vmatprep.subr.bf16.mxu0 %v1798
        %5082 = vmatpush1.bf16.msra.mxu0 %v1797
        %5083 = vmatprep.subr.bf16.mxu0 %v1790
        %5084 = vmatpush1.bf16.msra.mxu0 %v1789
        %5085 = vmatprep.subr.bf16.mxu0 %v1782
        %5086 = vmatpush1.bf16.msra.mxu0 %v1781
        %5087 = vmatprep.subr.bf16.mxu0 %v1774
        %5088 = vmatpush1.bf16.msra.mxu0 %v1773
        %5089 = vmatprep.subr.bf16.mxu0 %v1766
        %5090 = vmatpush1.bf16.msra.mxu0 %v1765
        %5091 = vmatprep.subr.bf16.mxu0 %v1886
        %5092 = vmatpush2.bf16.msra.mxu0 %v1885
        %5093 = vmatprep.subr.bf16.mxu0 %v1878
        %5094 = vmatpush2.bf16.msra.mxu0 %v1877
        %5095 = vmatprep.subr.bf16.mxu0 %v1870
        %5096 = vmatpush2.bf16.msra.mxu0 %v1869
        %5097 = vmatprep.subr.bf16.mxu0 %v1862
        %5098 = vmatpush2.bf16.msra.mxu0 %v1861
        %5099 = vmatprep.subr.bf16.mxu0 %v1854
        %5100 = vmatpush2.bf16.msra.mxu0 %v1853
        %5101 = vmatprep.subr.bf16.mxu0 %v1846
        %5102 = vmatpush2.bf16.msra.mxu0 %v1845
        %5103 = vmatprep.subr.bf16.mxu0 %v1838
        %5104 = vmatpush2.bf16.msra.mxu0 %v1837
        %5105 = vmatprep.subr.bf16.mxu0 %v1830
        %5106 = vmatpush2.bf16.msra.mxu0 %v1829
        %5107 = vmatprep.mubr.bf16.mxu0 %v3622
        %5108 = vmatmul.mubr.bf16.gmra.mxu0 %v3621
        %v5109 = vpop.f32.mrf.mxu0
        %v5110 = vadd.f32 %v5069, %v5109
        %v5111 = vpop.f32.mrf.mxu0
        %v5112 = vadd.f32 %v5071, %v5111
        %v5113 = vpop.f32.mrf.mxu0
        %v5114 = vpop.f32.mrf.mxu0
        %5115 = vdwg.mxu0
        %5116 = vmatprep.subr.bf16.mxu0 %v1950
        %5117 = vmatpush1.bf16.msra.mxu0 %v1949
        %5118 = vmatprep.subr.bf16.mxu0 %v1942
        %5119 = vmatpush1.bf16.msra.mxu0 %v1941
        %5120 = vmatprep.subr.bf16.mxu0 %v1934
        %5121 = vmatpush1.bf16.msra.mxu0 %v1933
        %5122 = vmatprep.subr.bf16.mxu0 %v1926
        %5123 = vmatpush1.bf16.msra.mxu0 %v1925
        %5124 = vmatprep.subr.bf16.mxu0 %v1918
        %5125 = vmatpush1.bf16.msra.mxu0 %v1917
        %5126 = vmatprep.subr.bf16.mxu0 %v1910
        %5127 = vmatpush1.bf16.msra.mxu0 %v1909
        %5128 = vmatprep.subr.bf16.mxu0 %v1902
        %5129 = vmatpush1.bf16.msra.mxu0 %v1901
        %5130 = vmatprep.subr.bf16.mxu0 %v1894
        %5131 = vmatpush1.bf16.msra.mxu0 %v1893
        %5132 = vmatprep.subr.bf16.mxu0 %v2014
        %5133 = vmatpush2.bf16.msra.mxu0 %v2013
        %5134 = vmatprep.subr.bf16.mxu0 %v2006
        %5135 = vmatpush2.bf16.msra.mxu0 %v2005
        %5136 = vmatprep.subr.bf16.mxu0 %v1998
        %5137 = vmatpush2.bf16.msra.mxu0 %v1997
        %5138 = vmatprep.subr.bf16.mxu0 %v1990
        %5139 = vmatpush2.bf16.msra.mxu0 %v1989
        %5140 = vmatprep.subr.bf16.mxu0 %v1982
        %5141 = vmatpush2.bf16.msra.mxu0 %v1981
        %5142 = vmatprep.subr.bf16.mxu0 %v1974
        %5143 = vmatpush2.bf16.msra.mxu0 %v1973
        %5144 = vmatprep.subr.bf16.mxu0 %v1966
        %5145 = vmatpush2.bf16.msra.mxu0 %v1965
        %5146 = vmatprep.subr.bf16.mxu0 %v1958
        %5147 = vmatpush2.bf16.msra.mxu0 %v1957
        %5148 = vmatprep.mubr.bf16.mxu0 %v3624
        %5149 = vmatmul.mubr.bf16.gmra.mxu0 %v3623
        %v5150 = vpop.f32.mrf.mxu0
        %v5151 = vadd.f32 %v5110, %v5150
        %v5152 = vpop.f32.mrf.mxu0
        %v5153 = vadd.f32 %v5112, %v5152
        %v5154 = vpop.f32.mrf.mxu0
        %v5155 = vpop.f32.mrf.mxu0
        %5156 = vdwg.mxu0
        %5157 = vmatprep.subr.bf16.mxu0 %v2078
        %5158 = vmatpush1.bf16.msra.mxu0 %v2077
        %5159 = vmatprep.subr.bf16.mxu0 %v2070
        %5160 = vmatpush1.bf16.msra.mxu0 %v2069
        %5161 = vmatprep.subr.bf16.mxu0 %v2062
        %5162 = vmatpush1.bf16.msra.mxu0 %v2061
        %5163 = vmatprep.subr.bf16.mxu0 %v2054
        %5164 = vmatpush1.bf16.msra.mxu0 %v2053
        %5165 = vmatprep.subr.bf16.mxu0 %v2046
        %5166 = vmatpush1.bf16.msra.mxu0 %v2045
        %5167 = vmatprep.subr.bf16.mxu0 %v2038
        %5168 = vmatpush1.bf16.msra.mxu0 %v2037
        %5169 = vmatprep.subr.bf16.mxu0 %v2030
        %5170 = vmatpush1.bf16.msra.mxu0 %v2029
        %5171 = vmatprep.subr.bf16.mxu0 %v2022
        %5172 = vmatpush1.bf16.msra.mxu0 %v2021
        %5173 = vmatprep.subr.bf16.mxu0 %v2142
        %5174 = vmatpush2.bf16.msra.mxu0 %v2141
        %5175 = vmatprep.subr.bf16.mxu0 %v2134
        %5176 = vmatpush2.bf16.msra.mxu0 %v2133
        %5177 = vmatprep.subr.bf16.mxu0 %v2126
        %5178 = vmatpush2.bf16.msra.mxu0 %v2125
        %5179 = vmatprep.subr.bf16.mxu0 %v2118
        %5180 = vmatpush2.bf16.msra.mxu0 %v2117
        %5181 = vmatprep.subr.bf16.mxu0 %v2110
        %5182 = vmatpush2.bf16.msra.mxu0 %v2109
        %5183 = vmatprep.subr.bf16.mxu0 %v2102
        %5184 = vmatpush2.bf16.msra.mxu0 %v2101
        %5185 = vmatprep.subr.bf16.mxu0 %v2094
        %5186 = vmatpush2.bf16.msra.mxu0 %v2093
        %5187 = vmatprep.subr.bf16.mxu0 %v2086
        %5188 = vmatpush2.bf16.msra.mxu0 %v2085
        %5189 = vmatprep.mubr.bf16.mxu0 %v3626
        %5190 = vmatmul.mubr.bf16.gmra.mxu0 %v3625
        %v5191 = vpop.f32.mrf.mxu0
        %v5192 = vadd.f32 %v5151, %v5191
        %v5193 = vpop.f32.mrf.mxu0
        %v5194 = vadd.f32 %v5153, %v5193
        %v5195 = vpop.f32.mrf.mxu0
        %v5196 = vpop.f32.mrf.mxu0
        %5197 = vdwg.mxu0
        %5198 = vmatprep.subr.bf16.mxu0 %v2206
        %5199 = vmatpush1.bf16.msra.mxu0 %v2205
        %5200 = vmatprep.subr.bf16.mxu0 %v2198
        %5201 = vmatpush1.bf16.msra.mxu0 %v2197
        %5202 = vmatprep.subr.bf16.mxu0 %v2190
        %5203 = vmatpush1.bf16.msra.mxu0 %v2189
        %5204 = vmatprep.subr.bf16.mxu0 %v2182
        %5205 = vmatpush1.bf16.msra.mxu0 %v2181
        %5206 = vmatprep.subr.bf16.mxu0 %v2174
        %5207 = vmatpush1.bf16.msra.mxu0 %v2173
        %5208 = vmatprep.subr.bf16.mxu0 %v2166
        %5209 = vmatpush1.bf16.msra.mxu0 %v2165
        %5210 = vmatprep.subr.bf16.mxu0 %v2158
        %5211 = vmatpush1.bf16.msra.mxu0 %v2157
        %5212 = vmatprep.subr.bf16.mxu0 %v2150
        %5213 = vmatpush1.bf16.msra.mxu0 %v2149
        %5214 = vmatprep.subr.bf16.mxu0 %v2270
        %5215 = vmatpush2.bf16.msra.mxu0 %v2269
        %5216 = vmatprep.subr.bf16.mxu0 %v2262
        %5217 = vmatpush2.bf16.msra.mxu0 %v2261
        %5218 = vmatprep.subr.bf16.mxu0 %v2254
        %5219 = vmatpush2.bf16.msra.mxu0 %v2253
        %5220 = vmatprep.subr.bf16.mxu0 %v2246
        %5221 = vmatpush2.bf16.msra.mxu0 %v2245
        %5222 = vmatprep.subr.bf16.mxu0 %v2238
        %5223 = vmatpush2.bf16.msra.mxu0 %v2237
        %5224 = vmatprep.subr.bf16.mxu0 %v2230
        %5225 = vmatpush2.bf16.msra.mxu0 %v2229
        %5226 = vmatprep.subr.bf16.mxu0 %v2222
        %5227 = vmatpush2.bf16.msra.mxu0 %v2221
        %5228 = vmatprep.subr.bf16.mxu0 %v2214
        %5229 = vmatpush2.bf16.msra.mxu0 %v2213
        %5230 = vmatprep.mubr.bf16.mxu0 %v3628
        %5231 = vmatmul.mubr.bf16.gmra.mxu0 %v3627
        %v5232 = vpop.f32.mrf.mxu0
        %v5233 = vadd.f32 %v5192, %v5232
        %v5234 = vpop.f32.mrf.mxu0
        %v5235 = vadd.f32 %v5194, %v5234
        %v5236 = vpop.f32.mrf.mxu0
        %v5237 = vpop.f32.mrf.mxu0
        %5238 = vdwg.mxu0
        %5239 = vmatprep.subr.bf16.mxu0 %v2334
        %5240 = vmatpush1.bf16.msra.mxu0 %v2333
        %5241 = vmatprep.subr.bf16.mxu0 %v2326
        %5242 = vmatpush1.bf16.msra.mxu0 %v2325
        %5243 = vmatprep.subr.bf16.mxu0 %v2318
        %5244 = vmatpush1.bf16.msra.mxu0 %v2317
        %5245 = vmatprep.subr.bf16.mxu0 %v2310
        %5246 = vmatpush1.bf16.msra.mxu0 %v2309
        %5247 = vmatprep.subr.bf16.mxu0 %v2302
        %5248 = vmatpush1.bf16.msra.mxu0 %v2301
        %5249 = vmatprep.subr.bf16.mxu0 %v2294
        %5250 = vmatpush1.bf16.msra.mxu0 %v2293
        %5251 = vmatprep.subr.bf16.mxu0 %v2286
        %5252 = vmatpush1.bf16.msra.mxu0 %v2285
        %5253 = vmatprep.subr.bf16.mxu0 %v2278
        %5254 = vmatpush1.bf16.msra.mxu0 %v2277
        %5255 = vmatprep.subr.bf16.mxu0 %v2398
        %5256 = vmatpush2.bf16.msra.mxu0 %v2397
        %5257 = vmatprep.subr.bf16.mxu0 %v2390
        %5258 = vmatpush2.bf16.msra.mxu0 %v2389
        %5259 = vmatprep.subr.bf16.mxu0 %v2382
        %5260 = vmatpush2.bf16.msra.mxu0 %v2381
        %5261 = vmatprep.subr.bf16.mxu0 %v2374
        %5262 = vmatpush2.bf16.msra.mxu0 %v2373
        %5263 = vmatprep.subr.bf16.mxu0 %v2366
        %5264 = vmatpush2.bf16.msra.mxu0 %v2365
        %5265 = vmatprep.subr.bf16.mxu0 %v2358
        %5266 = vmatpush2.bf16.msra.mxu0 %v2357
        %5267 = vmatprep.subr.bf16.mxu0 %v2350
        %5268 = vmatpush2.bf16.msra.mxu0 %v2349
        %5269 = vmatprep.subr.bf16.mxu0 %v2342
        %5270 = vmatpush2.bf16.msra.mxu0 %v2341
        %5271 = vmatprep.mubr.bf16.mxu0 %v3630
        %5272 = vmatmul.mubr.bf16.gmra.mxu0 %v3629
        %v5273 = vpop.f32.mrf.mxu0
        %v5274 = vadd.f32 %v5233, %v5273
        %v5275 = vpop.f32.mrf.mxu0
        %v5276 = vadd.f32 %v5235, %v5275
        %v5277 = vpop.f32.mrf.mxu0
        %v5278 = vpop.f32.mrf.mxu0
        %5279 = vdwg.mxu0
        %5280 = vmatprep.subr.bf16.mxu0 %v2462
        %5281 = vmatpush1.bf16.msra.mxu0 %v2461
        %5282 = vmatprep.subr.bf16.mxu0 %v2454
        %5283 = vmatpush1.bf16.msra.mxu0 %v2453
        %5284 = vmatprep.subr.bf16.mxu0 %v2446
        %5285 = vmatpush1.bf16.msra.mxu0 %v2445
        %5286 = vmatprep.subr.bf16.mxu0 %v2438
        %5287 = vmatpush1.bf16.msra.mxu0 %v2437
        %5288 = vmatprep.subr.bf16.mxu0 %v2430
        %5289 = vmatpush1.bf16.msra.mxu0 %v2429
        %5290 = vmatprep.subr.bf16.mxu0 %v2422
        %5291 = vmatpush1.bf16.msra.mxu0 %v2421
        %5292 = vmatprep.subr.bf16.mxu0 %v2414
        %5293 = vmatpush1.bf16.msra.mxu0 %v2413
        %5294 = vmatprep.subr.bf16.mxu0 %v2406
        %5295 = vmatpush1.bf16.msra.mxu0 %v2405
        %5296 = vmatprep.subr.bf16.mxu0 %v2526
        %5297 = vmatpush2.bf16.msra.mxu0 %v2525
        %5298 = vmatprep.subr.bf16.mxu0 %v2518
        %5299 = vmatpush2.bf16.msra.mxu0 %v2517
        %5300 = vmatprep.subr.bf16.mxu0 %v2510
        %5301 = vmatpush2.bf16.msra.mxu0 %v2509
        %5302 = vmatprep.subr.bf16.mxu0 %v2502
        %5303 = vmatpush2.bf16.msra.mxu0 %v2501
        %5304 = vmatprep.subr.bf16.mxu0 %v2494
        %5305 = vmatpush2.bf16.msra.mxu0 %v2493
        %5306 = vmatprep.subr.bf16.mxu0 %v2486
        %5307 = vmatpush2.bf16.msra.mxu0 %v2485
        %5308 = vmatprep.subr.bf16.mxu0 %v2478
        %5309 = vmatpush2.bf16.msra.mxu0 %v2477
        %5310 = vmatprep.subr.bf16.mxu0 %v2470
        %5311 = vmatpush2.bf16.msra.mxu0 %v2469
        %5312 = vmatprep.mubr.bf16.mxu0 %v3632
        %5313 = vmatmul.mubr.bf16.gmra.mxu0 %v3631
        %v5314 = vpop.f32.mrf.mxu0
        %v5315 = vadd.f32 %v5274, %v5314
        %v5316 = vpop.f32.mrf.mxu0
        %v5317 = vadd.f32 %v5276, %v5316
        %v5318 = vpop.f32.mrf.mxu0
        %v5319 = vpop.f32.mrf.mxu0
        %5320 = vdwg.mxu0
        %5321 = vmatprep.subr.bf16.mxu0 %v2590
        %5322 = vmatpush1.bf16.msra.mxu0 %v2589
        %5323 = vmatprep.subr.bf16.mxu0 %v2582
        %5324 = vmatpush1.bf16.msra.mxu0 %v2581
        %5325 = vmatprep.subr.bf16.mxu0 %v2574
        %5326 = vmatpush1.bf16.msra.mxu0 %v2573
        %5327 = vmatprep.subr.bf16.mxu0 %v2566
        %5328 = vmatpush1.bf16.msra.mxu0 %v2565
        %5329 = vmatprep.subr.bf16.mxu0 %v2558
        %5330 = vmatpush1.bf16.msra.mxu0 %v2557
        %5331 = vmatprep.subr.bf16.mxu0 %v2550
        %5332 = vmatpush1.bf16.msra.mxu0 %v2549
        %5333 = vmatprep.subr.bf16.mxu0 %v2542
        %5334 = vmatpush1.bf16.msra.mxu0 %v2541
        %5335 = vmatprep.subr.bf16.mxu0 %v2534
        %5336 = vmatpush1.bf16.msra.mxu0 %v2533
        %5337 = vmatprep.subr.bf16.mxu0 %v2654
        %5338 = vmatpush2.bf16.msra.mxu0 %v2653
        %5339 = vmatprep.subr.bf16.mxu0 %v2646
        %5340 = vmatpush2.bf16.msra.mxu0 %v2645
        %5341 = vmatprep.subr.bf16.mxu0 %v2638
        %5342 = vmatpush2.bf16.msra.mxu0 %v2637
        %5343 = vmatprep.subr.bf16.mxu0 %v2630
        %5344 = vmatpush2.bf16.msra.mxu0 %v2629
        %5345 = vmatprep.subr.bf16.mxu0 %v2622
        %5346 = vmatpush2.bf16.msra.mxu0 %v2621
        %5347 = vmatprep.subr.bf16.mxu0 %v2614
        %5348 = vmatpush2.bf16.msra.mxu0 %v2613
        %5349 = vmatprep.subr.bf16.mxu0 %v2606
        %5350 = vmatpush2.bf16.msra.mxu0 %v2605
        %5351 = vmatprep.subr.bf16.mxu0 %v2598
        %5352 = vmatpush2.bf16.msra.mxu0 %v2597
        %5353 = vmatprep.mubr.bf16.mxu0 %v3634
        %5354 = vmatmul.mubr.bf16.gmra.mxu0 %v3633
        %v5355 = vpop.f32.mrf.mxu0
        %v5356 = vadd.f32 %v5315, %v5355
        %v5357 = vpop.f32.mrf.mxu0
        %v5358 = vadd.f32 %v5317, %v5357
        %v5359 = vpop.f32.mrf.mxu0
        %v5360 = vpop.f32.mrf.mxu0
        %5361 = vdwg.mxu0
        %5362 = vmatprep.subr.bf16.mxu0 %v2718
        %5363 = vmatpush1.bf16.msra.mxu0 %v2717
        %5364 = vmatprep.subr.bf16.mxu0 %v2710
        %5365 = vmatpush1.bf16.msra.mxu0 %v2709
        %5366 = vmatprep.subr.bf16.mxu0 %v2702
        %5367 = vmatpush1.bf16.msra.mxu0 %v2701
        %5368 = vmatprep.subr.bf16.mxu0 %v2694
        %5369 = vmatpush1.bf16.msra.mxu0 %v2693
        %5370 = vmatprep.subr.bf16.mxu0 %v2686
        %5371 = vmatpush1.bf16.msra.mxu0 %v2685
        %5372 = vmatprep.subr.bf16.mxu0 %v2678
        %5373 = vmatpush1.bf16.msra.mxu0 %v2677
        %5374 = vmatprep.subr.bf16.mxu0 %v2670
        %5375 = vmatpush1.bf16.msra.mxu0 %v2669
        %5376 = vmatprep.subr.bf16.mxu0 %v2662
        %5377 = vmatpush1.bf16.msra.mxu0 %v2661
        %5378 = vmatprep.subr.bf16.mxu0 %v2782
        %5379 = vmatpush2.bf16.msra.mxu0 %v2781
        %5380 = vmatprep.subr.bf16.mxu0 %v2774
        %5381 = vmatpush2.bf16.msra.mxu0 %v2773
        %5382 = vmatprep.subr.bf16.mxu0 %v2766
        %5383 = vmatpush2.bf16.msra.mxu0 %v2765
        %5384 = vmatprep.subr.bf16.mxu0 %v2758
        %5385 = vmatpush2.bf16.msra.mxu0 %v2757
        %5386 = vmatprep.subr.bf16.mxu0 %v2750
        %5387 = vmatpush2.bf16.msra.mxu0 %v2749
        %5388 = vmatprep.subr.bf16.mxu0 %v2742
        %5389 = vmatpush2.bf16.msra.mxu0 %v2741
        %5390 = vmatprep.subr.bf16.mxu0 %v2734
        %5391 = vmatpush2.bf16.msra.mxu0 %v2733
        %5392 = vmatprep.subr.bf16.mxu0 %v2726
        %5393 = vmatpush2.bf16.msra.mxu0 %v2725
        %5394 = vmatprep.mubr.bf16.mxu0 %v3636
        %5395 = vmatmul.mubr.bf16.gmra.mxu0 %v3635
        %v5396 = vpop.f32.mrf.mxu0
        %v5397 = vadd.f32 %v5356, %v5396
        %v5398 = vpop.f32.mrf.mxu0
        %v5399 = vadd.f32 %v5358, %v5398
        %v5400 = vpop.f32.mrf.mxu0
        %v5401 = vpop.f32.mrf.mxu0
        %5402 = vdwg.mxu0
        %5403 = vmatprep.subr.bf16.mxu0 %v2846
        %5404 = vmatpush1.bf16.msra.mxu0 %v2845
        %5405 = vmatprep.subr.bf16.mxu0 %v2838
        %5406 = vmatpush1.bf16.msra.mxu0 %v2837
        %5407 = vmatprep.subr.bf16.mxu0 %v2830
        %5408 = vmatpush1.bf16.msra.mxu0 %v2829
        %5409 = vmatprep.subr.bf16.mxu0 %v2822
        %5410 = vmatpush1.bf16.msra.mxu0 %v2821
        %5411 = vmatprep.subr.bf16.mxu0 %v2814
        %5412 = vmatpush1.bf16.msra.mxu0 %v2813
        %5413 = vmatprep.subr.bf16.mxu0 %v2806
        %5414 = vmatpush1.bf16.msra.mxu0 %v2805
        %5415 = vmatprep.subr.bf16.mxu0 %v2798
        %5416 = vmatpush1.bf16.msra.mxu0 %v2797
        %5417 = vmatprep.subr.bf16.mxu0 %v2790
        %5418 = vmatpush1.bf16.msra.mxu0 %v2789
        %5419 = vmatprep.subr.bf16.mxu0 %v2910
        %5420 = vmatpush2.bf16.msra.mxu0 %v2909
        %5421 = vmatprep.subr.bf16.mxu0 %v2902
        %5422 = vmatpush2.bf16.msra.mxu0 %v2901
        %5423 = vmatprep.subr.bf16.mxu0 %v2894
        %5424 = vmatpush2.bf16.msra.mxu0 %v2893
        %5425 = vmatprep.subr.bf16.mxu0 %v2886
        %5426 = vmatpush2.bf16.msra.mxu0 %v2885
        %5427 = vmatprep.subr.bf16.mxu0 %v2878
        %5428 = vmatpush2.bf16.msra.mxu0 %v2877
        %5429 = vmatprep.subr.bf16.mxu0 %v2870
        %5430 = vmatpush2.bf16.msra.mxu0 %v2869
        %5431 = vmatprep.subr.bf16.mxu0 %v2862
        %5432 = vmatpush2.bf16.msra.mxu0 %v2861
        %5433 = vmatprep.subr.bf16.mxu0 %v2854
        %5434 = vmatpush2.bf16.msra.mxu0 %v2853
        %5435 = vmatprep.mubr.bf16.mxu0 %v3638
        %5436 = vmatmul.mubr.bf16.gmra.mxu0 %v3637
        %v5437 = vpop.f32.mrf.mxu0
        %v5438 = vadd.f32 %v5397, %v5437
        %v5439 = vpop.f32.mrf.mxu0
        %v5440 = vadd.f32 %v5399, %v5439
        %v5441 = vpop.f32.mrf.mxu0
        %v5442 = vpop.f32.mrf.mxu0
        %5443 = vdwg.mxu0
        %5444 = vmatprep.subr.bf16.mxu0 %v2974
        %5445 = vmatpush1.bf16.msra.mxu0 %v2973
        %5446 = vmatprep.subr.bf16.mxu0 %v2966
        %5447 = vmatpush1.bf16.msra.mxu0 %v2965
        %5448 = vmatprep.subr.bf16.mxu0 %v2958
        %5449 = vmatpush1.bf16.msra.mxu0 %v2957
        %5450 = vmatprep.subr.bf16.mxu0 %v2950
        %5451 = vmatpush1.bf16.msra.mxu0 %v2949
        %5452 = vmatprep.subr.bf16.mxu0 %v2942
        %5453 = vmatpush1.bf16.msra.mxu0 %v2941
        %5454 = vmatprep.subr.bf16.mxu0 %v2934
        %5455 = vmatpush1.bf16.msra.mxu0 %v2933
        %5456 = vmatprep.subr.bf16.mxu0 %v2926
        %5457 = vmatpush1.bf16.msra.mxu0 %v2925
        %5458 = vmatprep.subr.bf16.mxu0 %v2918
        %5459 = vmatpush1.bf16.msra.mxu0 %v2917
        %5460 = vmatprep.subr.bf16.mxu0 %v3038
        %5461 = vmatpush2.bf16.msra.mxu0 %v3037
        %5462 = vmatprep.subr.bf16.mxu0 %v3030
        %5463 = vmatpush2.bf16.msra.mxu0 %v3029
        %5464 = vmatprep.subr.bf16.mxu0 %v3022
        %5465 = vmatpush2.bf16.msra.mxu0 %v3021
        %5466 = vmatprep.subr.bf16.mxu0 %v3014
        %5467 = vmatpush2.bf16.msra.mxu0 %v3013
        %5468 = vmatprep.subr.bf16.mxu0 %v3006
        %5469 = vmatpush2.bf16.msra.mxu0 %v3005
        %5470 = vmatprep.subr.bf16.mxu0 %v2998
        %5471 = vmatpush2.bf16.msra.mxu0 %v2997
        %5472 = vmatprep.subr.bf16.mxu0 %v2990
        %5473 = vmatpush2.bf16.msra.mxu0 %v2989
        %5474 = vmatprep.subr.bf16.mxu0 %v2982
        %5475 = vmatpush2.bf16.msra.mxu0 %v2981
        %5476 = vmatprep.mubr.bf16.mxu0 %v3640
        %5477 = vmatmul.mubr.bf16.gmra.mxu0 %v3639
        %v5478 = vpop.f32.mrf.mxu0
        %v5479 = vadd.f32 %v5438, %v5478
        %v5480 = vpop.f32.mrf.mxu0
        %v5481 = vadd.f32 %v5440, %v5480
        %v5482 = vpop.f32.mrf.mxu0
        %v5483 = vpop.f32.mrf.mxu0
        %5484 = vdwg.mxu0
        %5485 = vmatprep.subr.bf16.mxu0 %v3102
        %5486 = vmatpush1.bf16.msra.mxu0 %v3101
        %5487 = vmatprep.subr.bf16.mxu0 %v3094
        %5488 = vmatpush1.bf16.msra.mxu0 %v3093
        %5489 = vmatprep.subr.bf16.mxu0 %v3086
        %5490 = vmatpush1.bf16.msra.mxu0 %v3085
        %5491 = vmatprep.subr.bf16.mxu0 %v3078
        %5492 = vmatpush1.bf16.msra.mxu0 %v3077
        %5493 = vmatprep.subr.bf16.mxu0 %v3070
        %5494 = vmatpush1.bf16.msra.mxu0 %v3069
        %5495 = vmatprep.subr.bf16.mxu0 %v3062
        %5496 = vmatpush1.bf16.msra.mxu0 %v3061
        %5497 = vmatprep.subr.bf16.mxu0 %v3054
        %5498 = vmatpush1.bf16.msra.mxu0 %v3053
        %5499 = vmatprep.subr.bf16.mxu0 %v3046
        %5500 = vmatpush1.bf16.msra.mxu0 %v3045
        %5501 = vmatprep.subr.bf16.mxu0 %v3166
        %5502 = vmatpush2.bf16.msra.mxu0 %v3165
        %5503 = vmatprep.subr.bf16.mxu0 %v3158
        %5504 = vmatpush2.bf16.msra.mxu0 %v3157
        %5505 = vmatprep.subr.bf16.mxu0 %v3150
        %5506 = vmatpush2.bf16.msra.mxu0 %v3149
        %5507 = vmatprep.subr.bf16.mxu0 %v3142
        %5508 = vmatpush2.bf16.msra.mxu0 %v3141
        %5509 = vmatprep.subr.bf16.mxu0 %v3134
        %5510 = vmatpush2.bf16.msra.mxu0 %v3133
        %5511 = vmatprep.subr.bf16.mxu0 %v3126
        %5512 = vmatpush2.bf16.msra.mxu0 %v3125
        %5513 = vmatprep.subr.bf16.mxu0 %v3118
        %5514 = vmatpush2.bf16.msra.mxu0 %v3117
        %5515 = vmatprep.subr.bf16.mxu0 %v3110
        %5516 = vmatpush2.bf16.msra.mxu0 %v3109
        %5517 = vmatprep.mubr.bf16.mxu0 %v3642
        %5518 = vmatmul.mubr.bf16.gmra.mxu0 %v3641
        %v5519 = vpop.f32.mrf.mxu0
        %v5520 = vadd.f32 %v5479, %v5519
        %v5521 = vpop.f32.mrf.mxu0
        %v5522 = vadd.f32 %v5481, %v5521
        %v5523 = vpop.f32.mrf.mxu0
        %v5524 = vpop.f32.mrf.mxu0
        %5525 = vdwg.mxu0
        %5526 = vmatprep.subr.bf16.mxu0 %v3230
        %5527 = vmatpush1.bf16.msra.mxu0 %v3229
        %5528 = vmatprep.subr.bf16.mxu0 %v3222
        %5529 = vmatpush1.bf16.msra.mxu0 %v3221
        %5530 = vmatprep.subr.bf16.mxu0 %v3214
        %5531 = vmatpush1.bf16.msra.mxu0 %v3213
        %5532 = vmatprep.subr.bf16.mxu0 %v3206
        %5533 = vmatpush1.bf16.msra.mxu0 %v3205
        %5534 = vmatprep.subr.bf16.mxu0 %v3198
        %5535 = vmatpush1.bf16.msra.mxu0 %v3197
        %5536 = vmatprep.subr.bf16.mxu0 %v3190
        %5537 = vmatpush1.bf16.msra.mxu0 %v3189
        %5538 = vmatprep.subr.bf16.mxu0 %v3182
        %5539 = vmatpush1.bf16.msra.mxu0 %v3181
        %5540 = vmatprep.subr.bf16.mxu0 %v3174
        %5541 = vmatpush1.bf16.msra.mxu0 %v3173
        %5542 = vmatprep.subr.bf16.mxu0 %v3294
        %5543 = vmatpush2.bf16.msra.mxu0 %v3293
        %5544 = vmatprep.subr.bf16.mxu0 %v3286
        %5545 = vmatpush2.bf16.msra.mxu0 %v3285
        %5546 = vmatprep.subr.bf16.mxu0 %v3278
        %5547 = vmatpush2.bf16.msra.mxu0 %v3277
        %5548 = vmatprep.subr.bf16.mxu0 %v3270
        %5549 = vmatpush2.bf16.msra.mxu0 %v3269
        %5550 = vmatprep.subr.bf16.mxu0 %v3262
        %5551 = vmatpush2.bf16.msra.mxu0 %v3261
        %5552 = vmatprep.subr.bf16.mxu0 %v3254
        %5553 = vmatpush2.bf16.msra.mxu0 %v3253
        %5554 = vmatprep.subr.bf16.mxu0 %v3246
        %5555 = vmatpush2.bf16.msra.mxu0 %v3245
        %5556 = vmatprep.subr.bf16.mxu0 %v3238
        %5557 = vmatpush2.bf16.msra.mxu0 %v3237
        %5558 = vmatprep.mubr.bf16.mxu0 %v3644
        %5559 = vmatmul.mubr.bf16.gmra.mxu0 %v3643
        %v5560 = vpop.f32.mrf.mxu0
        %v5561 = vadd.f32 %v5520, %v5560
        %v5562 = vpop.f32.mrf.mxu0
        %v5563 = vadd.f32 %v5522, %v5562
        %v5564 = vpop.f32.mrf.mxu0
        %v5565 = vpop.f32.mrf.mxu0
        %5566 = vdwg.mxu0
        %5567 = vmatprep.subr.bf16.mxu0 %v3358
        %5568 = vmatpush1.bf16.msra.mxu0 %v3357
        %5569 = vmatprep.subr.bf16.mxu0 %v3350
        %5570 = vmatpush1.bf16.msra.mxu0 %v3349
        %5571 = vmatprep.subr.bf16.mxu0 %v3342
        %5572 = vmatpush1.bf16.msra.mxu0 %v3341
        %5573 = vmatprep.subr.bf16.mxu0 %v3334
        %5574 = vmatpush1.bf16.msra.mxu0 %v3333
        %5575 = vmatprep.subr.bf16.mxu0 %v3326
        %5576 = vmatpush1.bf16.msra.mxu0 %v3325
        %5577 = vmatprep.subr.bf16.mxu0 %v3318
        %5578 = vmatpush1.bf16.msra.mxu0 %v3317
        %5579 = vmatprep.subr.bf16.mxu0 %v3310
        %5580 = vmatpush1.bf16.msra.mxu0 %v3309
        %5581 = vmatprep.subr.bf16.mxu0 %v3302
        %5582 = vmatpush1.bf16.msra.mxu0 %v3301
        %5583 = vmatprep.subr.bf16.mxu0 %v3422
        %5584 = vmatpush2.bf16.msra.mxu0 %v3421
        %5585 = vmatprep.subr.bf16.mxu0 %v3414
        %5586 = vmatpush2.bf16.msra.mxu0 %v3413
        %5587 = vmatprep.subr.bf16.mxu0 %v3406
        %5588 = vmatpush2.bf16.msra.mxu0 %v3405
        %5589 = vmatprep.subr.bf16.mxu0 %v3398
        %5590 = vmatpush2.bf16.msra.mxu0 %v3397
        %5591 = vmatprep.subr.bf16.mxu0 %v3390
        %5592 = vmatpush2.bf16.msra.mxu0 %v3389
        %5593 = vmatprep.subr.bf16.mxu0 %v3382
        %5594 = vmatpush2.bf16.msra.mxu0 %v3381
        %5595 = vmatprep.subr.bf16.mxu0 %v3374
        %5596 = vmatpush2.bf16.msra.mxu0 %v3373
        %5597 = vmatprep.subr.bf16.mxu0 %v3366
        %5598 = vmatpush2.bf16.msra.mxu0 %v3365
        %5599 = vmatprep.mubr.bf16.mxu0 %v3646
        %5600 = vmatmul.mubr.bf16.gmra.mxu0 %v3645
        %v5601 = vpop.f32.mrf.mxu0
        %v5602 = vadd.f32 %v5561, %v5601
        %v5603 = vpop.f32.mrf.mxu0
        %v5604 = vadd.f32 %v5563, %v5603
        %v5605 = vpop.f32.mrf.mxu0
        %v5606 = vpop.f32.mrf.mxu0
        %5607 = vdwg.mxu0
        %5608 = vmatprep.subr.bf16.mxu0 %v3486
        %5609 = vmatpush1.bf16.msra.mxu0 %v3485
        %5610 = vmatprep.subr.bf16.mxu0 %v3478
        %5611 = vmatpush1.bf16.msra.mxu0 %v3477
        %5612 = vmatprep.subr.bf16.mxu0 %v3470
        %5613 = vmatpush1.bf16.msra.mxu0 %v3469
        %5614 = vmatprep.subr.bf16.mxu0 %v3462
        %5615 = vmatpush1.bf16.msra.mxu0 %v3461
        %5616 = vmatprep.subr.bf16.mxu0 %v3454
        %5617 = vmatpush1.bf16.msra.mxu0 %v3453
        %5618 = vmatprep.subr.bf16.mxu0 %v3446
        %5619 = vmatpush1.bf16.msra.mxu0 %v3445
        %5620 = vmatprep.subr.bf16.mxu0 %v3438
        %5621 = vmatpush1.bf16.msra.mxu0 %v3437
        %5622 = vmatprep.subr.bf16.mxu0 %v3430
        %5623 = vmatpush1.bf16.msra.mxu0 %v3429
        %5624 = vmatprep.subr.bf16.mxu0 %v3550
        %5625 = vmatpush2.bf16.msra.mxu0 %v3549
        %5626 = vmatprep.subr.bf16.mxu0 %v3542
        %5627 = vmatpush2.bf16.msra.mxu0 %v3541
        %5628 = vmatprep.subr.bf16.mxu0 %v3534
        %5629 = vmatpush2.bf16.msra.mxu0 %v3533
        %5630 = vmatprep.subr.bf16.mxu0 %v3526
        %5631 = vmatpush2.bf16.msra.mxu0 %v3525
        %5632 = vmatprep.subr.bf16.mxu0 %v3518
        %5633 = vmatpush2.bf16.msra.mxu0 %v3517
        %5634 = vmatprep.subr.bf16.mxu0 %v3510
        %5635 = vmatpush2.bf16.msra.mxu0 %v3509
        %5636 = vmatprep.subr.bf16.mxu0 %v3502
        %5637 = vmatpush2.bf16.msra.mxu0 %v3501
        %5638 = vmatprep.subr.bf16.mxu0 %v3494
        %5639 = vmatpush2.bf16.msra.mxu0 %v3493
        %5640 = vmatprep.mubr.bf16.mxu0 %v3648
        %5641 = vmatmul.mubr.bf16.gmra.mxu0 %v3647
        %v5642 = vpop.f32.mrf.mxu0
        %v5643 = vadd.f32 %v5602, %v5642
        %v5644 = vpop.f32.mrf.mxu0
        %v5645 = vadd.f32 %v5604, %v5644
        %v5646 = vpop.f32.mrf.mxu0
        %v5647 = vpop.f32.mrf.mxu0
        %5648 = vdwg.mxu0
        %5649 = vmatprep.subr.bf16.mxu0 %v1568
        %5650 = vmatpush1.bf16.msra.mxu0 %v1567
        %5651 = vmatprep.subr.bf16.mxu0 %v1560
        %5652 = vmatpush1.bf16.msra.mxu0 %v1559
        %5653 = vmatprep.subr.bf16.mxu0 %v1552
        %5654 = vmatpush1.bf16.msra.mxu0 %v1551
        %5655 = vmatprep.subr.bf16.mxu0 %v1544
        %5656 = vmatpush1.bf16.msra.mxu0 %v1543
        %5657 = vmatprep.subr.bf16.mxu0 %v1536
        %5658 = vmatpush1.bf16.msra.mxu0 %v1535
        %5659 = vmatprep.subr.bf16.mxu0 %v1528
        %5660 = vmatpush1.bf16.msra.mxu0 %v1527
        %5661 = vmatprep.subr.bf16.mxu0 %v1520
        %5662 = vmatpush1.bf16.msra.mxu0 %v1519
        %5663 = vmatprep.subr.bf16.mxu0 %v1512
        %5664 = vmatpush1.bf16.msra.mxu0 %v1511
        %5665 = vmatprep.subr.bf16.mxu0 %v1632
        %5666 = vmatpush2.bf16.msra.mxu0 %v1631
        %5667 = vmatprep.subr.bf16.mxu0 %v1624
        %5668 = vmatpush2.bf16.msra.mxu0 %v1623
        %5669 = vmatprep.subr.bf16.mxu0 %v1616
        %5670 = vmatpush2.bf16.msra.mxu0 %v1615
        %5671 = vmatprep.subr.bf16.mxu0 %v1608
        %5672 = vmatpush2.bf16.msra.mxu0 %v1607
        %5673 = vmatprep.subr.bf16.mxu0 %v1600
        %5674 = vmatpush2.bf16.msra.mxu0 %v1599
        %5675 = vmatprep.subr.bf16.mxu0 %v1592
        %5676 = vmatpush2.bf16.msra.mxu0 %v1591
        %5677 = vmatprep.subr.bf16.mxu0 %v1584
        %5678 = vmatpush2.bf16.msra.mxu0 %v1583
        %5679 = vmatprep.subr.bf16.mxu0 %v1576
        %5680 = vmatpush2.bf16.msra.mxu0 %v1575
        %5681 = vmatprep.mubr.bf16.mxu0 %v3618
        %5682 = vmatmul.mubr.bf16.gmra.mxu0 %v3617
        %v5683 = vpop.f32.mrf.mxu0
        %v5684 = vadd.f32 0.0, %v5683
        %v5685 = vpop.f32.mrf.mxu0
        %v5686 = vadd.f32 0.0, %v5685
        %v5687 = vpop.f32.mrf.mxu0
        %v5688 = vpop.f32.mrf.mxu0
        %5689 = vdwg.mxu0
        %5690 = vmatprep.subr.bf16.mxu0 %v1696
        %5691 = vmatpush1.bf16.msra.mxu0 %v1695
        %5692 = vmatprep.subr.bf16.mxu0 %v1688
        %5693 = vmatpush1.bf16.msra.mxu0 %v1687
        %5694 = vmatprep.subr.bf16.mxu0 %v1680
        %5695 = vmatpush1.bf16.msra.mxu0 %v1679
        %5696 = vmatprep.subr.bf16.mxu0 %v1672
        %5697 = vmatpush1.bf16.msra.mxu0 %v1671
        %5698 = vmatprep.subr.bf16.mxu0 %v1664
        %5699 = vmatpush1.bf16.msra.mxu0 %v1663
        %5700 = vmatprep.subr.bf16.mxu0 %v1656
        %5701 = vmatpush1.bf16.msra.mxu0 %v1655
        %5702 = vmatprep.subr.bf16.mxu0 %v1648
        %5703 = vmatpush1.bf16.msra.mxu0 %v1647
        %5704 = vmatprep.subr.bf16.mxu0 %v1640
        %5705 = vmatpush1.bf16.msra.mxu0 %v1639
        %5706 = vmatprep.subr.bf16.mxu0 %v1760
        %5707 = vmatpush2.bf16.msra.mxu0 %v1759
        %5708 = vmatprep.subr.bf16.mxu0 %v1752
        %5709 = vmatpush2.bf16.msra.mxu0 %v1751
        %5710 = vmatprep.subr.bf16.mxu0 %v1744
        %5711 = vmatpush2.bf16.msra.mxu0 %v1743
        %5712 = vmatprep.subr.bf16.mxu0 %v1736
        %5713 = vmatpush2.bf16.msra.mxu0 %v1735
        %5714 = vmatprep.subr.bf16.mxu0 %v1728
        %5715 = vmatpush2.bf16.msra.mxu0 %v1727
        %5716 = vmatprep.subr.bf16.mxu0 %v1720
        %5717 = vmatpush2.bf16.msra.mxu0 %v1719
        %5718 = vmatprep.subr.bf16.mxu0 %v1712
        %5719 = vmatpush2.bf16.msra.mxu0 %v1711
        %5720 = vmatprep.subr.bf16.mxu0 %v1704
        %5721 = vmatpush2.bf16.msra.mxu0 %v1703
        %5722 = vmatprep.mubr.bf16.mxu0 %v3620
        %5723 = vmatmul.mubr.bf16.gmra.mxu0 %v3619
        %v5724 = vpop.f32.mrf.mxu0
        %v5725 = vadd.f32 %v5684, %v5724
        %v5726 = vpop.f32.mrf.mxu0
        %v5727 = vadd.f32 %v5686, %v5726
        %v5728 = vpop.f32.mrf.mxu0
        %v5729 = vpop.f32.mrf.mxu0
        %5730 = vdwg.mxu0
        %5731 = vmatprep.subr.bf16.mxu0 %v1824
        %5732 = vmatpush1.bf16.msra.mxu0 %v1823
        %5733 = vmatprep.subr.bf16.mxu0 %v1816
        %5734 = vmatpush1.bf16.msra.mxu0 %v1815
        %5735 = vmatprep.subr.bf16.mxu0 %v1808
        %5736 = vmatpush1.bf16.msra.mxu0 %v1807
        %5737 = vmatprep.subr.bf16.mxu0 %v1800
        %5738 = vmatpush1.bf16.msra.mxu0 %v1799
        %5739 = vmatprep.subr.bf16.mxu0 %v1792
        %5740 = vmatpush1.bf16.msra.mxu0 %v1791
        %5741 = vmatprep.subr.bf16.mxu0 %v1784
        %5742 = vmatpush1.bf16.msra.mxu0 %v1783
        %5743 = vmatprep.subr.bf16.mxu0 %v1776
        %5744 = vmatpush1.bf16.msra.mxu0 %v1775
        %5745 = vmatprep.subr.bf16.mxu0 %v1768
        %5746 = vmatpush1.bf16.msra.mxu0 %v1767
        %5747 = vmatprep.subr.bf16.mxu0 %v1888
        %5748 = vmatpush2.bf16.msra.mxu0 %v1887
        %5749 = vmatprep.subr.bf16.mxu0 %v1880
        %5750 = vmatpush2.bf16.msra.mxu0 %v1879
        %5751 = vmatprep.subr.bf16.mxu0 %v1872
        %5752 = vmatpush2.bf16.msra.mxu0 %v1871
        %5753 = vmatprep.subr.bf16.mxu0 %v1864
        %5754 = vmatpush2.bf16.msra.mxu0 %v1863
        %5755 = vmatprep.subr.bf16.mxu0 %v1856
        %5756 = vmatpush2.bf16.msra.mxu0 %v1855
        %5757 = vmatprep.subr.bf16.mxu0 %v1848
        %5758 = vmatpush2.bf16.msra.mxu0 %v1847
        %5759 = vmatprep.subr.bf16.mxu0 %v1840
        %5760 = vmatpush2.bf16.msra.mxu0 %v1839
        %5761 = vmatprep.subr.bf16.mxu0 %v1832
        %5762 = vmatpush2.bf16.msra.mxu0 %v1831
        %5763 = vmatprep.mubr.bf16.mxu0 %v3622
        %5764 = vmatmul.mubr.bf16.gmra.mxu0 %v3621
        %v5765 = vpop.f32.mrf.mxu0
        %v5766 = vadd.f32 %v5725, %v5765
        %v5767 = vpop.f32.mrf.mxu0
        %v5768 = vadd.f32 %v5727, %v5767
        %v5769 = vpop.f32.mrf.mxu0
        %v5770 = vpop.f32.mrf.mxu0
        %5771 = vdwg.mxu0
        %5772 = vmatprep.subr.bf16.mxu0 %v1952
        %5773 = vmatpush1.bf16.msra.mxu0 %v1951
        %5774 = vmatprep.subr.bf16.mxu0 %v1944
        %5775 = vmatpush1.bf16.msra.mxu0 %v1943
        %5776 = vmatprep.subr.bf16.mxu0 %v1936
        %5777 = vmatpush1.bf16.msra.mxu0 %v1935
        %5778 = vmatprep.subr.bf16.mxu0 %v1928
        %5779 = vmatpush1.bf16.msra.mxu0 %v1927
        %5780 = vmatprep.subr.bf16.mxu0 %v1920
        %5781 = vmatpush1.bf16.msra.mxu0 %v1919
        %5782 = vmatprep.subr.bf16.mxu0 %v1912
        %5783 = vmatpush1.bf16.msra.mxu0 %v1911
        %5784 = vmatprep.subr.bf16.mxu0 %v1904
        %5785 = vmatpush1.bf16.msra.mxu0 %v1903
        %5786 = vmatprep.subr.bf16.mxu0 %v1896
        %5787 = vmatpush1.bf16.msra.mxu0 %v1895
        %5788 = vmatprep.subr.bf16.mxu0 %v2016
        %5789 = vmatpush2.bf16.msra.mxu0 %v2015
        %5790 = vmatprep.subr.bf16.mxu0 %v2008
        %5791 = vmatpush2.bf16.msra.mxu0 %v2007
        %5792 = vmatprep.subr.bf16.mxu0 %v2000
        %5793 = vmatpush2.bf16.msra.mxu0 %v1999
        %5794 = vmatprep.subr.bf16.mxu0 %v1992
        %5795 = vmatpush2.bf16.msra.mxu0 %v1991
        %5796 = vmatprep.subr.bf16.mxu0 %v1984
        %5797 = vmatpush2.bf16.msra.mxu0 %v1983
        %5798 = vmatprep.subr.bf16.mxu0 %v1976
        %5799 = vmatpush2.bf16.msra.mxu0 %v1975
        %5800 = vmatprep.subr.bf16.mxu0 %v1968
        %5801 = vmatpush2.bf16.msra.mxu0 %v1967
        %5802 = vmatprep.subr.bf16.mxu0 %v1960
        %5803 = vmatpush2.bf16.msra.mxu0 %v1959
        %5804 = vmatprep.mubr.bf16.mxu0 %v3624
        %5805 = vmatmul.mubr.bf16.gmra.mxu0 %v3623
        %v5806 = vpop.f32.mrf.mxu0
        %v5807 = vadd.f32 %v5766, %v5806
        %v5808 = vpop.f32.mrf.mxu0
        %v5809 = vadd.f32 %v5768, %v5808
        %v5810 = vpop.f32.mrf.mxu0
        %v5811 = vpop.f32.mrf.mxu0
        %5812 = vdwg.mxu0
        %5813 = vmatprep.subr.bf16.mxu0 %v2080
        %5814 = vmatpush1.bf16.msra.mxu0 %v2079
        %5815 = vmatprep.subr.bf16.mxu0 %v2072
        %5816 = vmatpush1.bf16.msra.mxu0 %v2071
        %5817 = vmatprep.subr.bf16.mxu0 %v2064
        %5818 = vmatpush1.bf16.msra.mxu0 %v2063
        %5819 = vmatprep.subr.bf16.mxu0 %v2056
        %5820 = vmatpush1.bf16.msra.mxu0 %v2055
        %5821 = vmatprep.subr.bf16.mxu0 %v2048
        %5822 = vmatpush1.bf16.msra.mxu0 %v2047
        %5823 = vmatprep.subr.bf16.mxu0 %v2040
        %5824 = vmatpush1.bf16.msra.mxu0 %v2039
        %5825 = vmatprep.subr.bf16.mxu0 %v2032
        %5826 = vmatpush1.bf16.msra.mxu0 %v2031
        %5827 = vmatprep.subr.bf16.mxu0 %v2024
        %5828 = vmatpush1.bf16.msra.mxu0 %v2023
        %5829 = vmatprep.subr.bf16.mxu0 %v2144
        %5830 = vmatpush2.bf16.msra.mxu0 %v2143
        %5831 = vmatprep.subr.bf16.mxu0 %v2136
        %5832 = vmatpush2.bf16.msra.mxu0 %v2135
        %5833 = vmatprep.subr.bf16.mxu0 %v2128
        %5834 = vmatpush2.bf16.msra.mxu0 %v2127
        %5835 = vmatprep.subr.bf16.mxu0 %v2120
        %5836 = vmatpush2.bf16.msra.mxu0 %v2119
        %5837 = vmatprep.subr.bf16.mxu0 %v2112
        %5838 = vmatpush2.bf16.msra.mxu0 %v2111
        %5839 = vmatprep.subr.bf16.mxu0 %v2104
        %5840 = vmatpush2.bf16.msra.mxu0 %v2103
        %5841 = vmatprep.subr.bf16.mxu0 %v2096
        %5842 = vmatpush2.bf16.msra.mxu0 %v2095
        %5843 = vmatprep.subr.bf16.mxu0 %v2088
        %5844 = vmatpush2.bf16.msra.mxu0 %v2087
        %5845 = vmatprep.mubr.bf16.mxu0 %v3626
        %5846 = vmatmul.mubr.bf16.gmra.mxu0 %v3625
        %v5847 = vpop.f32.mrf.mxu0
        %v5848 = vadd.f32 %v5807, %v5847
        %v5849 = vpop.f32.mrf.mxu0
        %v5850 = vadd.f32 %v5809, %v5849
        %v5851 = vpop.f32.mrf.mxu0
        %v5852 = vpop.f32.mrf.mxu0
        %5853 = vdwg.mxu0
        %5854 = vmatprep.subr.bf16.mxu0 %v2208
        %5855 = vmatpush1.bf16.msra.mxu0 %v2207
        %5856 = vmatprep.subr.bf16.mxu0 %v2200
        %5857 = vmatpush1.bf16.msra.mxu0 %v2199
        %5858 = vmatprep.subr.bf16.mxu0 %v2192
        %5859 = vmatpush1.bf16.msra.mxu0 %v2191
        %5860 = vmatprep.subr.bf16.mxu0 %v2184
        %5861 = vmatpush1.bf16.msra.mxu0 %v2183
        %5862 = vmatprep.subr.bf16.mxu0 %v2176
        %5863 = vmatpush1.bf16.msra.mxu0 %v2175
        %5864 = vmatprep.subr.bf16.mxu0 %v2168
        %5865 = vmatpush1.bf16.msra.mxu0 %v2167
        %5866 = vmatprep.subr.bf16.mxu0 %v2160
        %5867 = vmatpush1.bf16.msra.mxu0 %v2159
        %5868 = vmatprep.subr.bf16.mxu0 %v2152
        %5869 = vmatpush1.bf16.msra.mxu0 %v2151
        %5870 = vmatprep.subr.bf16.mxu0 %v2272
        %5871 = vmatpush2.bf16.msra.mxu0 %v2271
        %5872 = vmatprep.subr.bf16.mxu0 %v2264
        %5873 = vmatpush2.bf16.msra.mxu0 %v2263
        %5874 = vmatprep.subr.bf16.mxu0 %v2256
        %5875 = vmatpush2.bf16.msra.mxu0 %v2255
        %5876 = vmatprep.subr.bf16.mxu0 %v2248
        %5877 = vmatpush2.bf16.msra.mxu0 %v2247
        %5878 = vmatprep.subr.bf16.mxu0 %v2240
        %5879 = vmatpush2.bf16.msra.mxu0 %v2239
        %5880 = vmatprep.subr.bf16.mxu0 %v2232
        %5881 = vmatpush2.bf16.msra.mxu0 %v2231
        %5882 = vmatprep.subr.bf16.mxu0 %v2224
        %5883 = vmatpush2.bf16.msra.mxu0 %v2223
        %5884 = vmatprep.subr.bf16.mxu0 %v2216
        %5885 = vmatpush2.bf16.msra.mxu0 %v2215
        %5886 = vmatprep.mubr.bf16.mxu0 %v3628
        %5887 = vmatmul.mubr.bf16.gmra.mxu0 %v3627
        %v5888 = vpop.f32.mrf.mxu0
        %v5889 = vadd.f32 %v5848, %v5888
        %v5890 = vpop.f32.mrf.mxu0
        %v5891 = vadd.f32 %v5850, %v5890
        %v5892 = vpop.f32.mrf.mxu0
        %v5893 = vpop.f32.mrf.mxu0
        %5894 = vdwg.mxu0
        %5895 = vmatprep.subr.bf16.mxu0 %v2336
        %5896 = vmatpush1.bf16.msra.mxu0 %v2335
        %5897 = vmatprep.subr.bf16.mxu0 %v2328
        %5898 = vmatpush1.bf16.msra.mxu0 %v2327
        %5899 = vmatprep.subr.bf16.mxu0 %v2320
        %5900 = vmatpush1.bf16.msra.mxu0 %v2319
        %5901 = vmatprep.subr.bf16.mxu0 %v2312
        %5902 = vmatpush1.bf16.msra.mxu0 %v2311
        %5903 = vmatprep.subr.bf16.mxu0 %v2304
        %5904 = vmatpush1.bf16.msra.mxu0 %v2303
        %5905 = vmatprep.subr.bf16.mxu0 %v2296
        %5906 = vmatpush1.bf16.msra.mxu0 %v2295
        %5907 = vmatprep.subr.bf16.mxu0 %v2288
        %5908 = vmatpush1.bf16.msra.mxu0 %v2287
        %5909 = vmatprep.subr.bf16.mxu0 %v2280
        %5910 = vmatpush1.bf16.msra.mxu0 %v2279
        %5911 = vmatprep.subr.bf16.mxu0 %v2400
        %5912 = vmatpush2.bf16.msra.mxu0 %v2399
        %5913 = vmatprep.subr.bf16.mxu0 %v2392
        %5914 = vmatpush2.bf16.msra.mxu0 %v2391
        %5915 = vmatprep.subr.bf16.mxu0 %v2384
        %5916 = vmatpush2.bf16.msra.mxu0 %v2383
        %5917 = vmatprep.subr.bf16.mxu0 %v2376
        %5918 = vmatpush2.bf16.msra.mxu0 %v2375
        %5919 = vmatprep.subr.bf16.mxu0 %v2368
        %5920 = vmatpush2.bf16.msra.mxu0 %v2367
        %5921 = vmatprep.subr.bf16.mxu0 %v2360
        %5922 = vmatpush2.bf16.msra.mxu0 %v2359
        %5923 = vmatprep.subr.bf16.mxu0 %v2352
        %5924 = vmatpush2.bf16.msra.mxu0 %v2351
        %5925 = vmatprep.subr.bf16.mxu0 %v2344
        %5926 = vmatpush2.bf16.msra.mxu0 %v2343
        %5927 = vmatprep.mubr.bf16.mxu0 %v3630
        %5928 = vmatmul.mubr.bf16.gmra.mxu0 %v3629
        %v5929 = vpop.f32.mrf.mxu0
        %v5930 = vadd.f32 %v5889, %v5929
        %v5931 = vpop.f32.mrf.mxu0
        %v5932 = vadd.f32 %v5891, %v5931
        %v5933 = vpop.f32.mrf.mxu0
        %v5934 = vpop.f32.mrf.mxu0
        %5935 = vdwg.mxu0
        %5936 = vmatprep.subr.bf16.mxu0 %v2464
        %5937 = vmatpush1.bf16.msra.mxu0 %v2463
        %5938 = vmatprep.subr.bf16.mxu0 %v2456
        %5939 = vmatpush1.bf16.msra.mxu0 %v2455
        %5940 = vmatprep.subr.bf16.mxu0 %v2448
        %5941 = vmatpush1.bf16.msra.mxu0 %v2447
        %5942 = vmatprep.subr.bf16.mxu0 %v2440
        %5943 = vmatpush1.bf16.msra.mxu0 %v2439
        %5944 = vmatprep.subr.bf16.mxu0 %v2432
        %5945 = vmatpush1.bf16.msra.mxu0 %v2431
        %5946 = vmatprep.subr.bf16.mxu0 %v2424
        %5947 = vmatpush1.bf16.msra.mxu0 %v2423
        %5948 = vmatprep.subr.bf16.mxu0 %v2416
        %5949 = vmatpush1.bf16.msra.mxu0 %v2415
        %5950 = vmatprep.subr.bf16.mxu0 %v2408
        %5951 = vmatpush1.bf16.msra.mxu0 %v2407
        %5952 = vmatprep.subr.bf16.mxu0 %v2528
        %5953 = vmatpush2.bf16.msra.mxu0 %v2527
        %5954 = vmatprep.subr.bf16.mxu0 %v2520
        %5955 = vmatpush2.bf16.msra.mxu0 %v2519
        %5956 = vmatprep.subr.bf16.mxu0 %v2512
        %5957 = vmatpush2.bf16.msra.mxu0 %v2511
        %5958 = vmatprep.subr.bf16.mxu0 %v2504
        %5959 = vmatpush2.bf16.msra.mxu0 %v2503
        %5960 = vmatprep.subr.bf16.mxu0 %v2496
        %5961 = vmatpush2.bf16.msra.mxu0 %v2495
        %5962 = vmatprep.subr.bf16.mxu0 %v2488
        %5963 = vmatpush2.bf16.msra.mxu0 %v2487
        %5964 = vmatprep.subr.bf16.mxu0 %v2480
        %5965 = vmatpush2.bf16.msra.mxu0 %v2479
        %5966 = vmatprep.subr.bf16.mxu0 %v2472
        %5967 = vmatpush2.bf16.msra.mxu0 %v2471
        %5968 = vmatprep.mubr.bf16.mxu0 %v3632
        %5969 = vmatmul.mubr.bf16.gmra.mxu0 %v3631
        %v5970 = vpop.f32.mrf.mxu0
        %v5971 = vadd.f32 %v5930, %v5970
        %v5972 = vpop.f32.mrf.mxu0
        %v5973 = vadd.f32 %v5932, %v5972
        %v5974 = vpop.f32.mrf.mxu0
        %v5975 = vpop.f32.mrf.mxu0
        %5976 = vdwg.mxu0
        %5977 = vmatprep.subr.bf16.mxu0 %v2592
        %5978 = vmatpush1.bf16.msra.mxu0 %v2591
        %5979 = vmatprep.subr.bf16.mxu0 %v2584
        %5980 = vmatpush1.bf16.msra.mxu0 %v2583
        %5981 = vmatprep.subr.bf16.mxu0 %v2576
        %5982 = vmatpush1.bf16.msra.mxu0 %v2575
        %5983 = vmatprep.subr.bf16.mxu0 %v2568
        %5984 = vmatpush1.bf16.msra.mxu0 %v2567
        %5985 = vmatprep.subr.bf16.mxu0 %v2560
        %5986 = vmatpush1.bf16.msra.mxu0 %v2559
        %5987 = vmatprep.subr.bf16.mxu0 %v2552
        %5988 = vmatpush1.bf16.msra.mxu0 %v2551
        %5989 = vmatprep.subr.bf16.mxu0 %v2544
        %5990 = vmatpush1.bf16.msra.mxu0 %v2543
        %5991 = vmatprep.subr.bf16.mxu0 %v2536
        %5992 = vmatpush1.bf16.msra.mxu0 %v2535
        %5993 = vmatprep.subr.bf16.mxu0 %v2656
        %5994 = vmatpush2.bf16.msra.mxu0 %v2655
        %5995 = vmatprep.subr.bf16.mxu0 %v2648
        %5996 = vmatpush2.bf16.msra.mxu0 %v2647
        %5997 = vmatprep.subr.bf16.mxu0 %v2640
        %5998 = vmatpush2.bf16.msra.mxu0 %v2639
        %5999 = vmatprep.subr.bf16.mxu0 %v2632
        %6000 = vmatpush2.bf16.msra.mxu0 %v2631
        %6001 = vmatprep.subr.bf16.mxu0 %v2624
        %6002 = vmatpush2.bf16.msra.mxu0 %v2623
        %6003 = vmatprep.subr.bf16.mxu0 %v2616
        %6004 = vmatpush2.bf16.msra.mxu0 %v2615
        %6005 = vmatprep.subr.bf16.mxu0 %v2608
        %6006 = vmatpush2.bf16.msra.mxu0 %v2607
        %6007 = vmatprep.subr.bf16.mxu0 %v2600
        %6008 = vmatpush2.bf16.msra.mxu0 %v2599
        %6009 = vmatprep.mubr.bf16.mxu0 %v3634
        %6010 = vmatmul.mubr.bf16.gmra.mxu0 %v3633
        %v6011 = vpop.f32.mrf.mxu0
        %v6012 = vadd.f32 %v5971, %v6011
        %v6013 = vpop.f32.mrf.mxu0
        %v6014 = vadd.f32 %v5973, %v6013
        %v6015 = vpop.f32.mrf.mxu0
        %v6016 = vpop.f32.mrf.mxu0
        %6017 = vdwg.mxu0
        %6018 = vmatprep.subr.bf16.mxu0 %v2720
        %6019 = vmatpush1.bf16.msra.mxu0 %v2719
        %6020 = vmatprep.subr.bf16.mxu0 %v2712
        %6021 = vmatpush1.bf16.msra.mxu0 %v2711
        %6022 = vmatprep.subr.bf16.mxu0 %v2704
        %6023 = vmatpush1.bf16.msra.mxu0 %v2703
        %6024 = vmatprep.subr.bf16.mxu0 %v2696
        %6025 = vmatpush1.bf16.msra.mxu0 %v2695
        %6026 = vmatprep.subr.bf16.mxu0 %v2688
        %6027 = vmatpush1.bf16.msra.mxu0 %v2687
        %6028 = vmatprep.subr.bf16.mxu0 %v2680
        %6029 = vmatpush1.bf16.msra.mxu0 %v2679
        %6030 = vmatprep.subr.bf16.mxu0 %v2672
        %6031 = vmatpush1.bf16.msra.mxu0 %v2671
        %6032 = vmatprep.subr.bf16.mxu0 %v2664
        %6033 = vmatpush1.bf16.msra.mxu0 %v2663
        %6034 = vmatprep.subr.bf16.mxu0 %v2784
        %6035 = vmatpush2.bf16.msra.mxu0 %v2783
        %6036 = vmatprep.subr.bf16.mxu0 %v2776
        %6037 = vmatpush2.bf16.msra.mxu0 %v2775
        %6038 = vmatprep.subr.bf16.mxu0 %v2768
        %6039 = vmatpush2.bf16.msra.mxu0 %v2767
        %6040 = vmatprep.subr.bf16.mxu0 %v2760
        %6041 = vmatpush2.bf16.msra.mxu0 %v2759
        %6042 = vmatprep.subr.bf16.mxu0 %v2752
        %6043 = vmatpush2.bf16.msra.mxu0 %v2751
        %6044 = vmatprep.subr.bf16.mxu0 %v2744
        %6045 = vmatpush2.bf16.msra.mxu0 %v2743
        %6046 = vmatprep.subr.bf16.mxu0 %v2736
        %6047 = vmatpush2.bf16.msra.mxu0 %v2735
        %6048 = vmatprep.subr.bf16.mxu0 %v2728
        %6049 = vmatpush2.bf16.msra.mxu0 %v2727
        %6050 = vmatprep.mubr.bf16.mxu0 %v3636
        %6051 = vmatmul.mubr.bf16.gmra.mxu0 %v3635
        %v6052 = vpop.f32.mrf.mxu0
        %v6053 = vadd.f32 %v6012, %v6052
        %v6054 = vpop.f32.mrf.mxu0
        %v6055 = vadd.f32 %v6014, %v6054
        %v6056 = vpop.f32.mrf.mxu0
        %v6057 = vpop.f32.mrf.mxu0
        %6058 = vdwg.mxu0
        %6059 = vmatprep.subr.bf16.mxu0 %v2848
        %6060 = vmatpush1.bf16.msra.mxu0 %v2847
        %6061 = vmatprep.subr.bf16.mxu0 %v2840
        %6062 = vmatpush1.bf16.msra.mxu0 %v2839
        %6063 = vmatprep.subr.bf16.mxu0 %v2832
        %6064 = vmatpush1.bf16.msra.mxu0 %v2831
        %6065 = vmatprep.subr.bf16.mxu0 %v2824
        %6066 = vmatpush1.bf16.msra.mxu0 %v2823
        %6067 = vmatprep.subr.bf16.mxu0 %v2816
        %6068 = vmatpush1.bf16.msra.mxu0 %v2815
        %6069 = vmatprep.subr.bf16.mxu0 %v2808
        %6070 = vmatpush1.bf16.msra.mxu0 %v2807
        %6071 = vmatprep.subr.bf16.mxu0 %v2800
        %6072 = vmatpush1.bf16.msra.mxu0 %v2799
        %6073 = vmatprep.subr.bf16.mxu0 %v2792
        %6074 = vmatpush1.bf16.msra.mxu0 %v2791
        %6075 = vmatprep.subr.bf16.mxu0 %v2912
        %6076 = vmatpush2.bf16.msra.mxu0 %v2911
        %6077 = vmatprep.subr.bf16.mxu0 %v2904
        %6078 = vmatpush2.bf16.msra.mxu0 %v2903
        %6079 = vmatprep.subr.bf16.mxu0 %v2896
        %6080 = vmatpush2.bf16.msra.mxu0 %v2895
        %6081 = vmatprep.subr.bf16.mxu0 %v2888
        %6082 = vmatpush2.bf16.msra.mxu0 %v2887
        %6083 = vmatprep.subr.bf16.mxu0 %v2880
        %6084 = vmatpush2.bf16.msra.mxu0 %v2879
        %6085 = vmatprep.subr.bf16.mxu0 %v2872
        %6086 = vmatpush2.bf16.msra.mxu0 %v2871
        %6087 = vmatprep.subr.bf16.mxu0 %v2864
        %6088 = vmatpush2.bf16.msra.mxu0 %v2863
        %6089 = vmatprep.subr.bf16.mxu0 %v2856
        %6090 = vmatpush2.bf16.msra.mxu0 %v2855
        %6091 = vmatprep.mubr.bf16.mxu0 %v3638
        %6092 = vmatmul.mubr.bf16.gmra.mxu0 %v3637
        %v6093 = vpop.f32.mrf.mxu0
        %v6094 = vadd.f32 %v6053, %v6093
        %v6095 = vpop.f32.mrf.mxu0
        %v6096 = vadd.f32 %v6055, %v6095
        %v6097 = vpop.f32.mrf.mxu0
        %v6098 = vpop.f32.mrf.mxu0
        %6099 = vdwg.mxu0
        %6100 = vmatprep.subr.bf16.mxu0 %v2976
        %6101 = vmatpush1.bf16.msra.mxu0 %v2975
        %6102 = vmatprep.subr.bf16.mxu0 %v2968
        %6103 = vmatpush1.bf16.msra.mxu0 %v2967
        %6104 = vmatprep.subr.bf16.mxu0 %v2960
        %6105 = vmatpush1.bf16.msra.mxu0 %v2959
        %6106 = vmatprep.subr.bf16.mxu0 %v2952
        %6107 = vmatpush1.bf16.msra.mxu0 %v2951
        %6108 = vmatprep.subr.bf16.mxu0 %v2944
        %6109 = vmatpush1.bf16.msra.mxu0 %v2943
        %6110 = vmatprep.subr.bf16.mxu0 %v2936
        %6111 = vmatpush1.bf16.msra.mxu0 %v2935
        %6112 = vmatprep.subr.bf16.mxu0 %v2928
        %6113 = vmatpush1.bf16.msra.mxu0 %v2927
        %6114 = vmatprep.subr.bf16.mxu0 %v2920
        %6115 = vmatpush1.bf16.msra.mxu0 %v2919
        %6116 = vmatprep.subr.bf16.mxu0 %v3040
        %6117 = vmatpush2.bf16.msra.mxu0 %v3039
        %6118 = vmatprep.subr.bf16.mxu0 %v3032
        %6119 = vmatpush2.bf16.msra.mxu0 %v3031
        %6120 = vmatprep.subr.bf16.mxu0 %v3024
        %6121 = vmatpush2.bf16.msra.mxu0 %v3023
        %6122 = vmatprep.subr.bf16.mxu0 %v3016
        %6123 = vmatpush2.bf16.msra.mxu0 %v3015
        %6124 = vmatprep.subr.bf16.mxu0 %v3008
        %6125 = vmatpush2.bf16.msra.mxu0 %v3007
        %6126 = vmatprep.subr.bf16.mxu0 %v3000
        %6127 = vmatpush2.bf16.msra.mxu0 %v2999
        %6128 = vmatprep.subr.bf16.mxu0 %v2992
        %6129 = vmatpush2.bf16.msra.mxu0 %v2991
        %6130 = vmatprep.subr.bf16.mxu0 %v2984
        %6131 = vmatpush2.bf16.msra.mxu0 %v2983
        %6132 = vmatprep.mubr.bf16.mxu0 %v3640
        %6133 = vmatmul.mubr.bf16.gmra.mxu0 %v3639
        %v6134 = vpop.f32.mrf.mxu0
        %v6135 = vadd.f32 %v6094, %v6134
        %v6136 = vpop.f32.mrf.mxu0
        %v6137 = vadd.f32 %v6096, %v6136
        %v6138 = vpop.f32.mrf.mxu0
        %v6139 = vpop.f32.mrf.mxu0
        %6140 = vdwg.mxu0
        %6141 = vmatprep.subr.bf16.mxu0 %v3104
        %6142 = vmatpush1.bf16.msra.mxu0 %v3103
        %6143 = vmatprep.subr.bf16.mxu0 %v3096
        %6144 = vmatpush1.bf16.msra.mxu0 %v3095
        %6145 = vmatprep.subr.bf16.mxu0 %v3088
        %6146 = vmatpush1.bf16.msra.mxu0 %v3087
        %6147 = vmatprep.subr.bf16.mxu0 %v3080
        %6148 = vmatpush1.bf16.msra.mxu0 %v3079
        %6149 = vmatprep.subr.bf16.mxu0 %v3072
        %6150 = vmatpush1.bf16.msra.mxu0 %v3071
        %6151 = vmatprep.subr.bf16.mxu0 %v3064
        %6152 = vmatpush1.bf16.msra.mxu0 %v3063
        %6153 = vmatprep.subr.bf16.mxu0 %v3056
        %6154 = vmatpush1.bf16.msra.mxu0 %v3055
        %6155 = vmatprep.subr.bf16.mxu0 %v3048
        %6156 = vmatpush1.bf16.msra.mxu0 %v3047
        %6157 = vmatprep.subr.bf16.mxu0 %v3168
        %6158 = vmatpush2.bf16.msra.mxu0 %v3167
        %6159 = vmatprep.subr.bf16.mxu0 %v3160
        %6160 = vmatpush2.bf16.msra.mxu0 %v3159
        %6161 = vmatprep.subr.bf16.mxu0 %v3152
        %6162 = vmatpush2.bf16.msra.mxu0 %v3151
        %6163 = vmatprep.subr.bf16.mxu0 %v3144
        %6164 = vmatpush2.bf16.msra.mxu0 %v3143
        %6165 = vmatprep.subr.bf16.mxu0 %v3136
        %6166 = vmatpush2.bf16.msra.mxu0 %v3135
        %6167 = vmatprep.subr.bf16.mxu0 %v3128
        %6168 = vmatpush2.bf16.msra.mxu0 %v3127
        %6169 = vmatprep.subr.bf16.mxu0 %v3120
        %6170 = vmatpush2.bf16.msra.mxu0 %v3119
        %6171 = vmatprep.subr.bf16.mxu0 %v3112
        %6172 = vmatpush2.bf16.msra.mxu0 %v3111
        %6173 = vmatprep.mubr.bf16.mxu0 %v3642
        %6174 = vmatmul.mubr.bf16.gmra.mxu0 %v3641
        %v6175 = vpop.f32.mrf.mxu0
        %v6176 = vadd.f32 %v6135, %v6175
        %v6177 = vpop.f32.mrf.mxu0
        %v6178 = vadd.f32 %v6137, %v6177
        %v6179 = vpop.f32.mrf.mxu0
        %v6180 = vpop.f32.mrf.mxu0
        %6181 = vdwg.mxu0
        %6182 = vmatprep.subr.bf16.mxu0 %v3232
        %6183 = vmatpush1.bf16.msra.mxu0 %v3231
        %6184 = vmatprep.subr.bf16.mxu0 %v3224
        %6185 = vmatpush1.bf16.msra.mxu0 %v3223
        %6186 = vmatprep.subr.bf16.mxu0 %v3216
        %6187 = vmatpush1.bf16.msra.mxu0 %v3215
        %6188 = vmatprep.subr.bf16.mxu0 %v3208
        %6189 = vmatpush1.bf16.msra.mxu0 %v3207
        %6190 = vmatprep.subr.bf16.mxu0 %v3200
        %6191 = vmatpush1.bf16.msra.mxu0 %v3199
        %6192 = vmatprep.subr.bf16.mxu0 %v3192
        %6193 = vmatpush1.bf16.msra.mxu0 %v3191
        %6194 = vmatprep.subr.bf16.mxu0 %v3184
        %6195 = vmatpush1.bf16.msra.mxu0 %v3183
        %6196 = vmatprep.subr.bf16.mxu0 %v3176
        %6197 = vmatpush1.bf16.msra.mxu0 %v3175
        %6198 = vmatprep.subr.bf16.mxu0 %v3296
        %6199 = vmatpush2.bf16.msra.mxu0 %v3295
        %6200 = vmatprep.subr.bf16.mxu0 %v3288
        %6201 = vmatpush2.bf16.msra.mxu0 %v3287
        %6202 = vmatprep.subr.bf16.mxu0 %v3280
        %6203 = vmatpush2.bf16.msra.mxu0 %v3279
        %6204 = vmatprep.subr.bf16.mxu0 %v3272
        %6205 = vmatpush2.bf16.msra.mxu0 %v3271
        %6206 = vmatprep.subr.bf16.mxu0 %v3264
        %6207 = vmatpush2.bf16.msra.mxu0 %v3263
        %6208 = vmatprep.subr.bf16.mxu0 %v3256
        %6209 = vmatpush2.bf16.msra.mxu0 %v3255
        %6210 = vmatprep.subr.bf16.mxu0 %v3248
        %6211 = vmatpush2.bf16.msra.mxu0 %v3247
        %6212 = vmatprep.subr.bf16.mxu0 %v3240
        %6213 = vmatpush2.bf16.msra.mxu0 %v3239
        %6214 = vmatprep.mubr.bf16.mxu0 %v3644
        %6215 = vmatmul.mubr.bf16.gmra.mxu0 %v3643
        %v6216 = vpop.f32.mrf.mxu0
        %v6217 = vadd.f32 %v6176, %v6216
        %v6218 = vpop.f32.mrf.mxu0
        %v6219 = vadd.f32 %v6178, %v6218
        %v6220 = vpop.f32.mrf.mxu0
        %v6221 = vpop.f32.mrf.mxu0
        %6222 = vdwg.mxu0
        %6223 = vmatprep.subr.bf16.mxu0 %v3360
        %6224 = vmatpush1.bf16.msra.mxu0 %v3359
        %6225 = vmatprep.subr.bf16.mxu0 %v3352
        %6226 = vmatpush1.bf16.msra.mxu0 %v3351
        %6227 = vmatprep.subr.bf16.mxu0 %v3344
        %6228 = vmatpush1.bf16.msra.mxu0 %v3343
        %6229 = vmatprep.subr.bf16.mxu0 %v3336
        %6230 = vmatpush1.bf16.msra.mxu0 %v3335
        %6231 = vmatprep.subr.bf16.mxu0 %v3328
        %6232 = vmatpush1.bf16.msra.mxu0 %v3327
        %6233 = vmatprep.subr.bf16.mxu0 %v3320
        %6234 = vmatpush1.bf16.msra.mxu0 %v3319
        %6235 = vmatprep.subr.bf16.mxu0 %v3312
        %6236 = vmatpush1.bf16.msra.mxu0 %v3311
        %6237 = vmatprep.subr.bf16.mxu0 %v3304
        %6238 = vmatpush1.bf16.msra.mxu0 %v3303
        %6239 = vmatprep.subr.bf16.mxu0 %v3424
        %6240 = vmatpush2.bf16.msra.mxu0 %v3423
        %6241 = vmatprep.subr.bf16.mxu0 %v3416
        %6242 = vmatpush2.bf16.msra.mxu0 %v3415
        %6243 = vmatprep.subr.bf16.mxu0 %v3408
        %6244 = vmatpush2.bf16.msra.mxu0 %v3407
        %6245 = vmatprep.subr.bf16.mxu0 %v3400
        %6246 = vmatpush2.bf16.msra.mxu0 %v3399
        %6247 = vmatprep.subr.bf16.mxu0 %v3392
        %6248 = vmatpush2.bf16.msra.mxu0 %v3391
        %6249 = vmatprep.subr.bf16.mxu0 %v3384
        %6250 = vmatpush2.bf16.msra.mxu0 %v3383
        %6251 = vmatprep.subr.bf16.mxu0 %v3376
        %6252 = vmatpush2.bf16.msra.mxu0 %v3375
        %6253 = vmatprep.subr.bf16.mxu0 %v3368
        %6254 = vmatpush2.bf16.msra.mxu0 %v3367
        %6255 = vmatprep.mubr.bf16.mxu0 %v3646
        %6256 = vmatmul.mubr.bf16.gmra.mxu0 %v3645
        %v6257 = vpop.f32.mrf.mxu0
        %v6258 = vadd.f32 %v6217, %v6257
        %v6259 = vpop.f32.mrf.mxu0
        %v6260 = vadd.f32 %v6219, %v6259
        %v6261 = vpop.f32.mrf.mxu0
        %v6262 = vpop.f32.mrf.mxu0
        %6263 = vdwg.mxu0
        %6264 = vmatprep.subr.bf16.mxu0 %v3488
        %6265 = vmatpush1.bf16.msra.mxu0 %v3487
        %6266 = vmatprep.subr.bf16.mxu0 %v3480
        %6267 = vmatpush1.bf16.msra.mxu0 %v3479
        %6268 = vmatprep.subr.bf16.mxu0 %v3472
        %6269 = vmatpush1.bf16.msra.mxu0 %v3471
        %6270 = vmatprep.subr.bf16.mxu0 %v3464
        %6271 = vmatpush1.bf16.msra.mxu0 %v3463
        %6272 = vmatprep.subr.bf16.mxu0 %v3456
        %6273 = vmatpush1.bf16.msra.mxu0 %v3455
        %6274 = vmatprep.subr.bf16.mxu0 %v3448
        %6275 = vmatpush1.bf16.msra.mxu0 %v3447
        %6276 = vmatprep.subr.bf16.mxu0 %v3440
        %6277 = vmatpush1.bf16.msra.mxu0 %v3439
        %6278 = vmatprep.subr.bf16.mxu0 %v3432
        %6279 = vmatpush1.bf16.msra.mxu0 %v3431
        %6280 = vmatprep.subr.bf16.mxu0 %v3552
        %6281 = vmatpush2.bf16.msra.mxu0 %v3551
        %6282 = vmatprep.subr.bf16.mxu0 %v3544
        %6283 = vmatpush2.bf16.msra.mxu0 %v3543
        %6284 = vmatprep.subr.bf16.mxu0 %v3536
        %6285 = vmatpush2.bf16.msra.mxu0 %v3535
        %6286 = vmatprep.subr.bf16.mxu0 %v3528
        %6287 = vmatpush2.bf16.msra.mxu0 %v3527
        %6288 = vmatprep.subr.bf16.mxu0 %v3520
        %6289 = vmatpush2.bf16.msra.mxu0 %v3519
        %6290 = vmatprep.subr.bf16.mxu0 %v3512
        %6291 = vmatpush2.bf16.msra.mxu0 %v3511
        %6292 = vmatprep.subr.bf16.mxu0 %v3504
        %6293 = vmatpush2.bf16.msra.mxu0 %v3503
        %6294 = vmatprep.subr.bf16.mxu0 %v3496
        %6295 = vmatpush2.bf16.msra.mxu0 %v3495
        %6296 = vmatprep.mubr.bf16.mxu0 %v3648
        %6297 = vmatmul.mubr.bf16.gmra.mxu0 %v3647
        %v6298 = vpop.f32.mrf.mxu0
        %v6299 = vadd.f32 %v6258, %v6298
        %v6300 = vpop.f32.mrf.mxu0
        %v6301 = vadd.f32 %v6260, %v6300
        %v6302 = vpop.f32.mrf.mxu0
        %v6303 = vpop.f32.mrf.mxu0
        %6304 = vdwg.mxu0
        %v6305 = vld [vmem:[%s406] sm:$0xff]
        %v6307 = vlaneseq
        %v6308 = vshrl.u32 %v6307, 7
        %v6309 = vsub.s32 0, %v6308
        %v6310 = vrot.slane %v6305, %v6309
        %v6311 = vlaneseq
        %v6312 = vshrl.u32 %v6311, 7
        %v6313 = vsub.s32 1, %v6312
        %v6314 = vrot.slane %v6305, %v6313
        %v6315 = vlaneseq
        %v6316 = vshrl.u32 %v6315, 7
        %v6317 = vsub.s32 2, %v6316
        %v6318 = vrot.slane %v6305, %v6317
        %v6319 = vlaneseq
        %v6320 = vshrl.u32 %v6319, 7
        %v6321 = vsub.s32 3, %v6320
        %v6322 = vrot.slane %v6305, %v6321
        %v6323 = vlaneseq
        %v6324 = vshrl.u32 %v6323, 7
        %v6325 = vsub.s32 4, %v6324
        %v6326 = vrot.slane %v6305, %v6325
        %v6327 = vlaneseq
        %v6328 = vshrl.u32 %v6327, 7
        %v6329 = vsub.s32 5, %v6328
        %v6330 = vrot.slane %v6305, %v6329
        %v6331 = vlaneseq
        %v6332 = vshrl.u32 %v6331, 7
        %v6333 = vsub.s32 6, %v6332
        %v6334 = vrot.slane %v6305, %v6333
        %v6335 = vlaneseq
        %v6336 = vshrl.u32 %v6335, 7
        %v6337 = vsub.s32 7, %v6336
        %v6338 = vrot.slane %v6305, %v6337
        %v6347 = vmul.f32 %v4331, %v6310
        %v6348 = vmul.f32 %v4333, %v6314
        %v6349 = vmul.f32 %v4987, %v6318
        %v6350 = vmul.f32 %v4989, %v6322
        %v6351 = vmul.f32 %v5643, %v6326
        %v6352 = vmul.f32 %v5645, %v6330
        %v6353 = vmul.f32 %v6299, %v6334
        %v6354 = vmul.f32 %v6301, %v6338
        %v6355 = vld [vmem:[%s397] sm:$0xff]
        %v6357 = vlaneseq
        %v6358 = vshrl.u32 %v6357, 7
        %v6359 = vsub.s32 0, %v6358
        %v6360 = vrot.slane %v6355, %v6359
        %v6361 = vlaneseq
        %v6362 = vshrl.u32 %v6361, 7
        %v6363 = vsub.s32 1, %v6362
        %v6364 = vrot.slane %v6355, %v6363
        %v6365 = vlaneseq
        %v6366 = vshrl.u32 %v6365, 7
        %v6367 = vsub.s32 2, %v6366
        %v6368 = vrot.slane %v6355, %v6367
        %v6369 = vlaneseq
        %v6370 = vshrl.u32 %v6369, 7
        %v6371 = vsub.s32 3, %v6370
        %v6372 = vrot.slane %v6355, %v6371
        %v6373 = vlaneseq
        %v6374 = vshrl.u32 %v6373, 7
        %v6375 = vsub.s32 4, %v6374
        %v6376 = vrot.slane %v6355, %v6375
        %v6377 = vlaneseq
        %v6378 = vshrl.u32 %v6377, 7
        %v6379 = vsub.s32 5, %v6378
        %v6380 = vrot.slane %v6355, %v6379
        %v6381 = vlaneseq
        %v6382 = vshrl.u32 %v6381, 7
        %v6383 = vsub.s32 6, %v6382
        %v6384 = vrot.slane %v6355, %v6383
        %v6385 = vlaneseq
        %v6386 = vshrl.u32 %v6385, 7
        %v6387 = vsub.s32 7, %v6386
        %v6388 = vrot.slane %v6355, %v6387
        %v6397 = vadd.f32 %v6347, %v6360
        %v6398 = vadd.f32 %v6348, %v6364
        %v6399 = vadd.f32 %v6349, %v6368
        %v6400 = vadd.f32 %v6350, %v6372
        %v6401 = vadd.f32 %v6351, %v6376
        %v6402 = vadd.f32 %v6352, %v6380
        %v6403 = vadd.f32 %v6353, %v6384
        %v6404 = vadd.f32 %v6354, %v6388
        %v6405 = vxor.u32 %v6397, 2147483648
        %v6406 = vxor.u32 %v6398, 2147483648
        %v6407 = vxor.u32 %v6399, 2147483648
        %v6408 = vxor.u32 %v6400, 2147483648
        %v6409 = vxor.u32 %v6401, 2147483648
        %v6410 = vxor.u32 %v6402, 2147483648
        %v6411 = vxor.u32 %v6403, 2147483648
        %v6412 = vxor.u32 %v6404, 2147483648
        %v6413 = vmul.f32 %v6405, 1.442695
        %v6414 = vpow.pop %v6413
        %v6415 = vmul.f32 %v6406, 1.442695
        %v6416 = vpow.pop %v6415
        %v6417 = vmul.f32 %v6407, 1.442695
        %v6418 = vpow.pop %v6417
        %v6419 = vmul.f32 %v6408, 1.442695
        %v6420 = vpow.pop %v6419
        %v6421 = vmul.f32 %v6409, 1.442695
        %v6422 = vpow.pop %v6421
        %v6423 = vmul.f32 %v6410, 1.442695
        %v6424 = vpow.pop %v6423
        %v6425 = vmul.f32 %v6411, 1.442695
        %v6426 = vpow.pop %v6425
        %v6427 = vmul.f32 %v6412, 1.442695
        %v6428 = vpow.pop %v6427
        %v6429 = vadd.f32 %v6414, 1.0
        %v6430 = vadd.f32 %v6416, 1.0
        %v6431 = vadd.f32 %v6418, 1.0
        %v6432 = vadd.f32 %v6420, 1.0
        %v6433 = vadd.f32 %v6422, 1.0
        %v6434 = vadd.f32 %v6424, 1.0
        %v6435 = vadd.f32 %v6426, 1.0
        %v6436 = vadd.f32 %v6428, 1.0
        %v6437 = vrcp.pop %v6429
        %v6438 = vmul.f32 1.0, %v6437
        %v6439 = vrcp.pop %v6430
        %v6440 = vmul.f32 1.0, %v6439
        %v6441 = vrcp.pop %v6431
        %v6442 = vmul.f32 1.0, %v6441
        %v6443 = vrcp.pop %v6432
        %v6444 = vmul.f32 1.0, %v6443
        %v6445 = vrcp.pop %v6433
        %v6446 = vmul.f32 1.0, %v6445
        %v6447 = vrcp.pop %v6434
        %v6448 = vmul.f32 1.0, %v6447
        %v6449 = vrcp.pop %v6435
        %v6450 = vmul.f32 1.0, %v6449
        %v6451 = vrcp.pop %v6436
        %v6452 = vmul.f32 1.0, %v6451
        %v6453 = vld [vmem:[%s415] sm:$0xff]
        %v6454 = vld [vmem:[%s415 + $0x8] sm:$0xff]
        %v6455 = vld [vmem:[%s415 + $0x10] sm:$0xff]
        %v6456 = vld [vmem:[%s415 + $0x18] sm:$0xff]
        %v6457 = vld [vmem:[%s415 + $0x20] sm:$0xff]
        %v6458 = vld [vmem:[%s415 + $0x28] sm:$0xff]
        %v6459 = vld [vmem:[%s415 + $0x30] sm:$0xff]
        %v6460 = vld [vmem:[%s415 + $0x38] sm:$0xff]
        %v6461 = vld [vmem:[%s415 + $0x40] sm:$0xff]
        %v6462 = vld [vmem:[%s415 + $0x48] sm:$0xff]
        %v6463 = vld [vmem:[%s415 + $0x50] sm:$0xff]
        %v6464 = vld [vmem:[%s415 + $0x58] sm:$0xff]
        %v6465 = vld [vmem:[%s415 + $0x60] sm:$0xff]
        %v6466 = vld [vmem:[%s415 + $0x68] sm:$0xff]
        %v6467 = vld [vmem:[%s415 + $0x70] sm:$0xff]
        %v6468 = vld [vmem:[%s415 + $0x78] sm:$0xff]
        %v6469 = vld [vmem:[%s415 + $0x80] sm:$0xff]
        %v6470 = vld [vmem:[%s415 + $0x88] sm:$0xff]
        %v6471 = vld [vmem:[%s415 + $0x90] sm:$0xff]
        %v6472 = vld [vmem:[%s415 + $0x98] sm:$0xff]
        %v6473 = vld [vmem:[%s415 + $0xa0] sm:$0xff]
        %v6474 = vld [vmem:[%s415 + $0xa8] sm:$0xff]
        %v6475 = vld [vmem:[%s415 + $0xb0] sm:$0xff]
        %v6476 = vld [vmem:[%s415 + $0xb8] sm:$0xff]
        %v6477 = vld [vmem:[%s415 + $0xc0] sm:$0xff]
        %v6478 = vld [vmem:[%s415 + $0xc8] sm:$0xff]
        %v6479 = vld [vmem:[%s415 + $0xd0] sm:$0xff]
        %v6480 = vld [vmem:[%s415 + $0xd8] sm:$0xff]
        %v6481 = vld [vmem:[%s415 + $0xe0] sm:$0xff]
        %v6482 = vld [vmem:[%s415 + $0xe8] sm:$0xff]
        %v6483 = vld [vmem:[%s415 + $0xf0] sm:$0xff]
        %v6484 = vld [vmem:[%s415 + $0xf8] sm:$0xff]
        %v6485 = vunpack.c.l.s8.bf16 %v6453
        %v6486 = vunpack.c.h.s8.bf16 %v6453
        %v6487 = vunpack.c.l.s8.bf16 %v6454
        %v6488 = vunpack.c.h.s8.bf16 %v6454
        %v6489 = vunpack.c.l.s8.bf16 %v6455
        %v6490 = vunpack.c.h.s8.bf16 %v6455
        %v6491 = vunpack.c.l.s8.bf16 %v6456
        %v6492 = vunpack.c.h.s8.bf16 %v6456
        %v6493 = vunpack.c.l.s8.bf16 %v6457
        %v6494 = vunpack.c.h.s8.bf16 %v6457
        %v6495 = vunpack.c.l.s8.bf16 %v6458
        %v6496 = vunpack.c.h.s8.bf16 %v6458
        %v6497 = vunpack.c.l.s8.bf16 %v6459
        %v6498 = vunpack.c.h.s8.bf16 %v6459
        %v6499 = vunpack.c.l.s8.bf16 %v6460
        %v6500 = vunpack.c.h.s8.bf16 %v6460
        %v6501 = vunpack.c.l.s8.bf16 %v6461
        %v6502 = vunpack.c.h.s8.bf16 %v6461
        %v6503 = vunpack.c.l.s8.bf16 %v6462
        %v6504 = vunpack.c.h.s8.bf16 %v6462
        %v6505 = vunpack.c.l.s8.bf16 %v6463
        %v6506 = vunpack.c.h.s8.bf16 %v6463
        %v6507 = vunpack.c.l.s8.bf16 %v6464
        %v6508 = vunpack.c.h.s8.bf16 %v6464
        %v6509 = vunpack.c.l.s8.bf16 %v6465
        %v6510 = vunpack.c.h.s8.bf16 %v6465
        %v6511 = vunpack.c.l.s8.bf16 %v6466
        %v6512 = vunpack.c.h.s8.bf16 %v6466
        %v6513 = vunpack.c.l.s8.bf16 %v6467
        %v6514 = vunpack.c.h.s8.bf16 %v6467
        %v6515 = vunpack.c.l.s8.bf16 %v6468
        %v6516 = vunpack.c.h.s8.bf16 %v6468
        %v6517 = vunpack.c.l.s8.bf16 %v6469
        %v6518 = vunpack.c.h.s8.bf16 %v6469
        %v6519 = vunpack.c.l.s8.bf16 %v6470
        %v6520 = vunpack.c.h.s8.bf16 %v6470
        %v6521 = vunpack.c.l.s8.bf16 %v6471
        %v6522 = vunpack.c.h.s8.bf16 %v6471
        %v6523 = vunpack.c.l.s8.bf16 %v6472
        %v6524 = vunpack.c.h.s8.bf16 %v6472
        %v6525 = vunpack.c.l.s8.bf16 %v6473
        %v6526 = vunpack.c.h.s8.bf16 %v6473
        %v6527 = vunpack.c.l.s8.bf16 %v6474
        %v6528 = vunpack.c.h.s8.bf16 %v6474
        %v6529 = vunpack.c.l.s8.bf16 %v6475
        %v6530 = vunpack.c.h.s8.bf16 %v6475
        %v6531 = vunpack.c.l.s8.bf16 %v6476
        %v6532 = vunpack.c.h.s8.bf16 %v6476
        %v6533 = vunpack.c.l.s8.bf16 %v6477
        %v6534 = vunpack.c.h.s8.bf16 %v6477
        %v6535 = vunpack.c.l.s8.bf16 %v6478
        %v6536 = vunpack.c.h.s8.bf16 %v6478
        %v6537 = vunpack.c.l.s8.bf16 %v6479
        %v6538 = vunpack.c.h.s8.bf16 %v6479
        %v6539 = vunpack.c.l.s8.bf16 %v6480
        %v6540 = vunpack.c.h.s8.bf16 %v6480
        %v6541 = vunpack.c.l.s8.bf16 %v6481
        %v6542 = vunpack.c.h.s8.bf16 %v6481
        %v6543 = vunpack.c.l.s8.bf16 %v6482
        %v6544 = vunpack.c.h.s8.bf16 %v6482
        %v6545 = vunpack.c.l.s8.bf16 %v6483
        %v6546 = vunpack.c.h.s8.bf16 %v6483
        %v6547 = vunpack.c.l.s8.bf16 %v6484
        %v6548 = vunpack.c.h.s8.bf16 %v6484
        %v6549 = vld [vmem:[#allocation13] sm:$0xff]
        %v6550 = vpack.c.bf16 %v6438, %v6438
        %v6551 = vpack.c.bf16 %v6440, %v6440
        %v6552 = vpack.c.bf16 %v6442, %v6442
        %v6553 = vpack.c.bf16 %v6444, %v6444
        %v6554 = vpack.c.bf16 %v6446, %v6446
        %v6555 = vpack.c.bf16 %v6448, %v6448
        %v6556 = vpack.c.bf16 %v6450, %v6450
        %v6557 = vpack.c.bf16 %v6452, %v6452
        %6558 = vmatprep.subr.bf16.mxu0 0
        %6559 = vmatpush1.bf16.msra.mxu0 %v6492
        %6560 = vmatprep.subr.bf16.mxu0 0
        %6561 = vmatpush1.bf16.msra.mxu0 %v6491
        %6562 = vmatprep.subr.bf16.mxu0 0
        %6563 = vmatpush1.bf16.msra.mxu0 %v6490
        %6564 = vmatprep.subr.bf16.mxu0 0
        %6565 = vmatpush1.bf16.msra.mxu0 %v6489
        %6566 = vmatprep.subr.bf16.mxu0 0
        %6567 = vmatpush1.bf16.msra.mxu0 %v6488
        %6568 = vmatprep.subr.bf16.mxu0 0
        %6569 = vmatpush1.bf16.msra.mxu0 %v6487
        %6570 = vmatprep.subr.bf16.mxu0 0
        %6571 = vmatpush1.bf16.msra.mxu0 %v6486
        %6572 = vmatprep.subr.bf16.mxu0 0
        %6573 = vmatpush1.bf16.msra.mxu0 %v6485
        %6574 = vmatprep.subr.bf16.mxu0 0
        %6575 = vmatpush2.bf16.msra.mxu0 %v6500
        %6576 = vmatprep.subr.bf16.mxu0 0
        %6577 = vmatpush2.bf16.msra.mxu0 %v6499
        %6578 = vmatprep.subr.bf16.mxu0 0
        %6579 = vmatpush2.bf16.msra.mxu0 %v6498
        %6580 = vmatprep.subr.bf16.mxu0 0
        %6581 = vmatpush2.bf16.msra.mxu0 %v6497
        %6582 = vmatprep.subr.bf16.mxu0 0
        %6583 = vmatpush2.bf16.msra.mxu0 %v6496
        %6584 = vmatprep.subr.bf16.mxu0 0
        %6585 = vmatpush2.bf16.msra.mxu0 %v6495
        %6586 = vmatprep.subr.bf16.mxu0 0
        %6587 = vmatpush2.bf16.msra.mxu0 %v6494
        %6588 = vmatprep.subr.bf16.mxu0 0
        %6589 = vmatpush2.bf16.msra.mxu0 %v6493
        %6590 = vmatprep.mubr.bf16.mxu0 %v6551
        %6591 = vmatmul.mubr.bf16.gmra.mxu0 %v6550
        %v6592 = vpop.f32.mrf.mxu0
        %v6593 = vadd.f32 0.0, %v6592
        %v6594 = vpop.f32.mrf.mxu0
        %v6595 = vpop.f32.mrf.mxu0
        %v6596 = vpop.f32.mrf.mxu0
        %6597 = vdwg.mxu0
        %6598 = vmatprep.subr.bf16.mxu0 0
        %6599 = vmatpush1.bf16.msra.mxu0 %v6508
        %6600 = vmatprep.subr.bf16.mxu0 0
        %6601 = vmatpush1.bf16.msra.mxu0 %v6507
        %6602 = vmatprep.subr.bf16.mxu0 0
        %6603 = vmatpush1.bf16.msra.mxu0 %v6506
        %6604 = vmatprep.subr.bf16.mxu0 0
        %6605 = vmatpush1.bf16.msra.mxu0 %v6505
        %6606 = vmatprep.subr.bf16.mxu0 0
        %6607 = vmatpush1.bf16.msra.mxu0 %v6504
        %6608 = vmatprep.subr.bf16.mxu0 0
        %6609 = vmatpush1.bf16.msra.mxu0 %v6503
        %6610 = vmatprep.subr.bf16.mxu0 0
        %6611 = vmatpush1.bf16.msra.mxu0 %v6502
        %6612 = vmatprep.subr.bf16.mxu0 0
        %6613 = vmatpush1.bf16.msra.mxu0 %v6501
        %6614 = vmatprep.subr.bf16.mxu0 0
        %6615 = vmatpush2.bf16.msra.mxu0 %v6516
        %6616 = vmatprep.subr.bf16.mxu0 0
        %6617 = vmatpush2.bf16.msra.mxu0 %v6515
        %6618 = vmatprep.subr.bf16.mxu0 0
        %6619 = vmatpush2.bf16.msra.mxu0 %v6514
        %6620 = vmatprep.subr.bf16.mxu0 0
        %6621 = vmatpush2.bf16.msra.mxu0 %v6513
        %6622 = vmatprep.subr.bf16.mxu0 0
        %6623 = vmatpush2.bf16.msra.mxu0 %v6512
        %6624 = vmatprep.subr.bf16.mxu0 0
        %6625 = vmatpush2.bf16.msra.mxu0 %v6511
        %6626 = vmatprep.subr.bf16.mxu0 0
        %6627 = vmatpush2.bf16.msra.mxu0 %v6510
        %6628 = vmatprep.subr.bf16.mxu0 0
        %6629 = vmatpush2.bf16.msra.mxu0 %v6509
        %6630 = vmatprep.mubr.bf16.mxu0 %v6553
        %6631 = vmatmul.mubr.bf16.gmra.mxu0 %v6552
        %v6632 = vpop.f32.mrf.mxu0
        %v6633 = vadd.f32 %v6593, %v6632
        %v6634 = vpop.f32.mrf.mxu0
        %v6635 = vpop.f32.mrf.mxu0
        %v6636 = vpop.f32.mrf.mxu0
        %6637 = vdwg.mxu0
        %6638 = vmatprep.subr.bf16.mxu0 0
        %6639 = vmatpush1.bf16.msra.mxu0 %v6524
        %6640 = vmatprep.subr.bf16.mxu0 0
        %6641 = vmatpush1.bf16.msra.mxu0 %v6523
        %6642 = vmatprep.subr.bf16.mxu0 0
        %6643 = vmatpush1.bf16.msra.mxu0 %v6522
        %6644 = vmatprep.subr.bf16.mxu0 0
        %6645 = vmatpush1.bf16.msra.mxu0 %v6521
        %6646 = vmatprep.subr.bf16.mxu0 0
        %6647 = vmatpush1.bf16.msra.mxu0 %v6520
        %6648 = vmatprep.subr.bf16.mxu0 0
        %6649 = vmatpush1.bf16.msra.mxu0 %v6519
        %6650 = vmatprep.subr.bf16.mxu0 0
        %6651 = vmatpush1.bf16.msra.mxu0 %v6518
        %6652 = vmatprep.subr.bf16.mxu0 0
        %6653 = vmatpush1.bf16.msra.mxu0 %v6517
        %6654 = vmatprep.subr.bf16.mxu0 0
        %6655 = vmatpush2.bf16.msra.mxu0 %v6532
        %6656 = vmatprep.subr.bf16.mxu0 0
        %6657 = vmatpush2.bf16.msra.mxu0 %v6531
        %6658 = vmatprep.subr.bf16.mxu0 0
        %6659 = vmatpush2.bf16.msra.mxu0 %v6530
        %6660 = vmatprep.subr.bf16.mxu0 0
        %6661 = vmatpush2.bf16.msra.mxu0 %v6529
        %6662 = vmatprep.subr.bf16.mxu0 0
        %6663 = vmatpush2.bf16.msra.mxu0 %v6528
        %6664 = vmatprep.subr.bf16.mxu0 0
        %6665 = vmatpush2.bf16.msra.mxu0 %v6527
        %6666 = vmatprep.subr.bf16.mxu0 0
        %6667 = vmatpush2.bf16.msra.mxu0 %v6526
        %6668 = vmatprep.subr.bf16.mxu0 0
        %6669 = vmatpush2.bf16.msra.mxu0 %v6525
        %6670 = vmatprep.mubr.bf16.mxu0 %v6555
        %6671 = vmatmul.mubr.bf16.gmra.mxu0 %v6554
        %v6672 = vpop.f32.mrf.mxu0
        %v6673 = vadd.f32 %v6633, %v6672
        %v6674 = vpop.f32.mrf.mxu0
        %v6675 = vpop.f32.mrf.mxu0
        %v6676 = vpop.f32.mrf.mxu0
        %6677 = vdwg.mxu0
        %6678 = vmatprep.subr.bf16.mxu0 0
        %6679 = vmatpush1.bf16.msra.mxu0 %v6540
        %6680 = vmatprep.subr.bf16.mxu0 0
        %6681 = vmatpush1.bf16.msra.mxu0 %v6539
        %6682 = vmatprep.subr.bf16.mxu0 0
        %6683 = vmatpush1.bf16.msra.mxu0 %v6538
        %6684 = vmatprep.subr.bf16.mxu0 0
        %6685 = vmatpush1.bf16.msra.mxu0 %v6537
        %6686 = vmatprep.subr.bf16.mxu0 0
        %6687 = vmatpush1.bf16.msra.mxu0 %v6536
        %6688 = vmatprep.subr.bf16.mxu0 0
        %6689 = vmatpush1.bf16.msra.mxu0 %v6535
        %6690 = vmatprep.subr.bf16.mxu0 0
        %6691 = vmatpush1.bf16.msra.mxu0 %v6534
        %6692 = vmatprep.subr.bf16.mxu0 0
        %6693 = vmatpush1.bf16.msra.mxu0 %v6533
        %6694 = vmatprep.subr.bf16.mxu0 0
        %6695 = vmatpush2.bf16.msra.mxu0 %v6548
        %6696 = vmatprep.subr.bf16.mxu0 0
        %6697 = vmatpush2.bf16.msra.mxu0 %v6547
        %6698 = vmatprep.subr.bf16.mxu0 0
        %6699 = vmatpush2.bf16.msra.mxu0 %v6546
        %6700 = vmatprep.subr.bf16.mxu0 0
        %6701 = vmatpush2.bf16.msra.mxu0 %v6545
        %6702 = vmatprep.subr.bf16.mxu0 0
        %6703 = vmatpush2.bf16.msra.mxu0 %v6544
        %6704 = vmatprep.subr.bf16.mxu0 0
        %6705 = vmatpush2.bf16.msra.mxu0 %v6543
        %6706 = vmatprep.subr.bf16.mxu0 0
        %6707 = vmatpush2.bf16.msra.mxu0 %v6542
        %6708 = vmatprep.subr.bf16.mxu0 0
        %6709 = vmatpush2.bf16.msra.mxu0 %v6541
        %6710 = vmatprep.mubr.bf16.mxu0 %v6557
        %6711 = vmatmul.mubr.bf16.gmra.mxu0 %v6556
        %v6712 = vpop.f32.mrf.mxu0
        %v6713 = vadd.f32 %v6673, %v6712
        %v6714 = vpop.f32.mrf.mxu0
        %v6715 = vpop.f32.mrf.mxu0
        %v6716 = vpop.f32.mrf.mxu0
        %6717 = vdwg.mxu0
        %v6718 = vadd.f32 %v6549, %v6713
        %6719 = vst [vmem:[#allocation13] sm:$0xff] %v6718
        %p6720 = scmp.eq.s32.totalorder %s34, 3
        // Predicated region
        $region77: #{regression_model.1} parent=47 // pred_check
          %p6721 = pneg %p6720
        $region78: #{regression_model.1} parent=47 // pred_check_branch
          %6723 = sbr.rel (%p6721) target = $region80
        $region79: #{regression_model.1} parent=47 // pred_region
          %p6724 = scmp.eq.s32.totalorder %s33, 0
          %v6725 = vld [vmem:[#allocation11] sm:$0x1]
          %s6726 = scalar_select %p6724, 1, 0
          %v6727 = vstv %s6726
          %vm6728 = vcmp.eq.s32.totalorder %v6727, 1
          %v6729 = vsel %vm6728, %v6725, 0.0
          %v6730 = vld [vmem:[#allocation13] sm:$0xff]
          %v6731 = vld [vmem:[#allocation10] sm:$0x1]
          %v6733 = vlaneseq
          %v6734 = vshrl.u32 %v6733, 7
          %v6735 = vsub.s32 0, %v6734
          %v6736 = vrot.slane %v6731, %v6735
          %v6738 = vmul.f32 %v6730, %v6736
          %v6740 = vlaneseq
          %v6741 = vshrl.u32 %v6740, 7
          %v6742 = vsub.s32 0, %v6741
          %v6743 = vrot.slane %v6729, %v6742
          %v6745 = vadd.f32 %v6738, %v6743
          %6746 = vst [vmem:[#allocation13] sm:$0xff] %v6745
        $region80: #{regression_model.1} parent=47 // pred_fallthru
          _
        // Predicated region
        $region81: #{regression_model.1} parent=47 // pred_check
          %p6747 = pneg %p242
        $region82: #{regression_model.1} parent=47 // pred_check_branch
          %6749 = sbr.rel (%p6747) target = $region84
        $region83: #{regression_model.1} parent=47 // pred_region
          %s6751 = ssub.s32 128, 128
          %6752 = vsyncadd [#allocation4], %s6751
          %s6753 = smul.addr %s33, 128
          %s6754 = scalar_lea.hbm %s7, %s6753
          %s6756 = sshll.u32 [#allocation13], 4
          %s6757 = int_to_ptr.vmem [resolvable:$true] %s6756
          %6759 = dma.vmem_to_hbm [thread:$0]  %s6757, 128, %s6754, [#allocation4]
        $region84: #{regression_model.1} parent=47 // pred_fallthru
          _
        // Predicated region
        $region85: #{regression_model.1} parent=47 // pred_check
          %p6760 = pneg %p242
        $region86: #{regression_model.1} parent=47 // pred_check_branch
          %6762 = sbr.rel (%p6760) target = $region88
        $region87: #{regression_model.1} parent=47 // pred_region
          %6763 = dma.done [#allocation4], 128
        $region88: #{regression_model.1} parent=47 // pred_fallthru
          _
      $region48: #{regression_model.1} parent=5 // pred_fallthru
        _
      %p6764 = scmp.le.s32.totalorder 2, %s24
      // Predicated region
      $region89: #{regression_model.1} parent=5 // pred_check
        %p6765 = pneg %p6764
      $region90: #{regression_model.1} parent=5 // pred_check_branch
        %6767 = sbr.rel (%p6765) target = $region92
      $region91: #{regression_model.1} parent=5 // pred_region
        %s6768 = ssub.s32 %s24, 2
      $region92: #{regression_model.1} parent=5 // pred_fallthru
        _
    $region6: #{regression_model.1} parent=1 // loop_footer
      %s28 = sadd.s32 1, %s24
    $region7: #{regression_model.1} parent=1 // loop_footer_branch
      %23 = sbr.rel target = $region3
    $region8: #{regression_model.1} parent=1 // loop_exit
      _
    %6769 = vsyncpa [#allocation3], 1
    %s6770 = scalar_lea.sflag [#allocation3], 1
    %6771 = vsyncpa %s6770, 1
    %6772 = vsyncpa [#allocation6], 1
    %s6773 = scalar_lea.sflag [#allocation6], 1
    %6774 = vsyncpa %s6773, 1
    %6775 = vsyncpa [#allocation9], 1
    %s6776 = scalar_lea.sflag [#allocation9], 1
    %6777 = vsyncpa %s6776, 1
    %6778 = vsyncpa [#allocation12], 1
    %6779 = vsyncpa [#allocation4], 1
    %s6780 = scalar_lea.sflag [#allocation4], 1
    %6781 = vsyncpa %s6780, 1

</llo_original>
